<compile_context>
chip_gen: v7x
topology: tpu7x:2x2x1
jax: 0.10.0
libtpu: 0.0.40
codegen_flags: <defaults>
</compile_context>

<pallas_src>
from functools import partial

import jax
import jax.numpy as jnp
from jax.experimental import pallas as pl
from jax.experimental.pallas import tpu as pltpu

CIN, COUT, KH, KW = 3, 3, 3, 3
_MAX_STRIP = 16   # rows per strip; keeps the 9 accumulators at ~18 vregs


def _strip_plan(H):
    """Row strips (r0, rh); rh capped at _MAX_STRIP, remainder strip explicit."""
    rh = min(_MAX_STRIP, H)
    strips = []
    r0 = 0
    while r0 < H:
        strips.append((r0, min(rh, H - r0)))
        r0 += rh
    return tuple(strips)


def _make_kernel(H, W, split_sizes, split_offsets):
    strips = _strip_plan(H)

    def kernel(x_ref, w_ref, b_ref, o_ref, *split_refs):
        # x_ref: (CIN, H, W) f32 VMEM (unpadded); w_ref/b_ref: flat f32 SMEM.
        # o_ref: (COUT, H, W) f32 VMEM; split_refs[j]: (COUT, sizes[j], W) VMEM.

        # --- hoisted scalar reads: 81 weights + 3 biases, once per kernel ---
        wv = [[[[w_ref[((co * CIN + ci) * KH + kh) * KW + kw]
                 for kw in range(KW)] for kh in range(KH)]
               for ci in range(CIN)] for co in range(COUT)]
        bv = [b_ref[co] for co in range(COUT)]

        # --- hoisted per-strip-height constants (masks / zero / bias tiles) ---
        consts = {}

        def get_consts(rh):
            if rh not in consts:
                col = jax.lax.broadcasted_iota(jnp.int32, (rh, W), 1)
                row = jax.lax.broadcasted_iota(jnp.int32, (rh, W), 0)
                consts[rh] = dict(
                    col_ok_m=col >= 1,        # output column valid for dw = -1
                    col_ok_p=col < W - 1,     # output column valid for dw = +1
                    row_ok_top=row >= 1,      # first-strip (top halo) row mask
                    row_ok_bot=row < rh - 1,  # last-strip (bottom halo) row mask
                    zero=jnp.zeros((rh, W), jnp.float32),
                    bias=[jnp.full((rh, W), bv[co], jnp.float32)
                          for co in range(COUT)],
                )
            return consts[rh]

        for r0, rh in strips:
            c = get_consts(rh)
            # 9 accumulators: accs[co][kw], kw = 0/1/2 <-> column shift -1/0/+1.
            accs = [[c["zero"], c["bias"][co], c["zero"]] for co in range(COUT)]
            for ci in range(CIN):
                for kh in range(KH):
                    dh = kh - 1
                    lo = r0 + dh
                    if lo < 0:
                        # First strip, kh=0: need rows r0+i-1; aligned load of
                        # rows [0, rh), sublane-roll down by 1, mask halo row 0.
                        raw = x_ref[ci, 0:rh, :]
                        band = jnp.where(c["row_ok_top"],
                                         pltpu.roll(raw, 1, axis=0), 0.0)
                    elif lo + rh > H:
                        # Last strip, kh=2: need rows r0+i+1; aligned load of
                        # rows [H-rh, H), sublane-roll up by 1, mask last row.
                        raw = x_ref[ci, H - rh:H, :]
                        band = jnp.where(c["row_ok_bot"],
                                         pltpu.roll(raw, rh - 1, axis=0), 0.0)
                    else:
                        # Interior: one lane-dense (rh, W) load per (ci, kh).
                        band = x_ref[ci, lo:lo + rh, :]
                    for kw in range(KW):
                        for co in range(COUT):
                            accs[co][kw] = accs[co][kw] + wv[co][ci][kh][kw] * band
            # Deferred column handling: one XLU roll + one select per
            # (channel, direction) instead of per tap.
            for co in range(COUT):
                res = (accs[co][1]
                       + jnp.where(c["col_ok_m"],
                                   pltpu.roll(accs[co][0], 1, axis=1), 0.0)
                       + jnp.where(c["col_ok_p"],
                                   pltpu.roll(accs[co][2], W - 1, axis=1), 0.0))
                o_ref[co, r0:r0 + rh, :] = res

        # Fused split outputs: cheap VMEM->VMEM row-range copies of the conv
        # output (no extra XLA dispatches or HBM re-reads for the splits).
        for sref, off, sz in zip(split_refs, split_offsets, split_sizes):
            for co in range(COUT):
                sref[co, :, :] = o_ref[co, off:off + sz, :]

    return kernel


def conv2d_3x3_same_with_splits(x_chw, weight, bias, split_sizes):
    """x_chw: (CIN, H, W); weight: (COUT, CIN, 3, 3); bias: (COUT,).

    Returns (conv_out (COUT,H,W), tuple of dim-1 splits of conv_out)."""
    _, H, W = x_chw.shape
    offs, o = [], 0
    for s in split_sizes:
        offs.append(o)
        o += s
    kernel = _make_kernel(H, W, tuple(split_sizes), tuple(offs))

    vmem = pl.BlockSpec(memory_space=pltpu.MemorySpace.VMEM)
    smem = pl.BlockSpec(memory_space=pltpu.MemorySpace.SMEM)
    out_shape = (jax.ShapeDtypeStruct((COUT, H, W), jnp.float32),) + tuple(
        jax.ShapeDtypeStruct((COUT, s, W), jnp.float32) for s in split_sizes)

    outs = pl.pallas_call(
        kernel,
        out_shape=out_shape,
        in_specs=[vmem, smem, smem],
        out_specs=(vmem,) * (1 + len(split_sizes)),
    )(x_chw.astype(jnp.float32),
      weight.reshape(-1).astype(jnp.float32),
      bias.astype(jnp.float32))
    return outs[0], tuple(outs[1:])


@partial(jax.jit, static_argnames=("split_sizes",))
def model_forward(x1, weight, bias, split_sizes):
    """x1: (1, CIN, H, W) NCHW, like the PyTorch module's input."""
    H = x1.shape[2]
    if sum(split_sizes) != H:
        # Match torch.split strictness instead of silently truncating.
        raise ValueError(f"split_sizes {split_sizes} must sum to dim-2 size {H}")
    v1, splits = conv2d_3x3_same_with_splits(x1[0], weight, bias, split_sizes)
    v1 = v1[None]                                   # (1, COUT, H, W)
    splits = tuple(s[None] for s in splits)
    # torch.cat(torch.split(v1, sizes, 2), 2) == v1: return v1 directly, no
    # extra concatenate copy.
    return v1, splits


if __name__ == "__main__":
    key = jax.random.PRNGKey(0)
    k_x, k_w, k_b = jax.random.split(key, 3)

    # The module's natural spatial size; W=128 keeps loads/stores lane-dense.
    H = W = 128
    x1 = jax.random.normal(k_x, (1, CIN, H, W), dtype=jnp.float32)

    # Deterministic Conv2d(3, 3, 3) params (PyTorch-style uniform init).
    fan_in = CIN * KH * KW
    bound = 1.0 / (fan_in ** 0.5)
    weight = jax.random.uniform(k_w, (COUT, CIN, KH, KW), jnp.float32, -bound, bound)
    bias = jax.random.uniform(k_b, (COUT,), jnp.float32, -bound, bound)

    # TODO(synk): original split sizes [6, 100, 133] sum to 239 != 128 and would
    # raise in PyTorch; use a valid partition of H=128 instead.
    split_sizes = (6, 100, 22)

    concat, splits = model_forward(x1, weight, bias, split_sizes)
    concat = jax.block_until_ready(concat)
    splits = jax.block_until_ready(splits)

    # Sanity check against XLA's reference conv.
    ref = jax.lax.conv_general_dilated(
        x1, weight, window_strides=(1, 1), padding=((1, 1), (1, 1)),
        dimension_numbers=("NCHW", "OIHW", "NCHW")) + bias[None, :, None, None]
    assert concat.shape == (1, COUT, H, W)
    assert jnp.allclose(concat, ref, atol=1e-4), "conv mismatch vs reference"
    assert all(s.shape[2] == n for s, n in zip(splits, split_sizes))
    assert jnp.array_equal(jnp.concatenate(splits, axis=2), concat)

    print("KERNEL_OK")
</pallas_src>

<mosaic_0001>
module attributes {stable_mosaic.version = 11 : i64} {
  func.func @kernel(%arg0: memref<3x128x128xf32, #tpu.memory_space<vmem>>, %arg1: memref<81xf32, #tpu.memory_space<smem>>, %arg2: memref<3xf32, #tpu.memory_space<smem>>, %arg3: memref<3x128x128xf32, #tpu.memory_space<vmem>>, %arg4: memref<3x6x128xf32, #tpu.memory_space<vmem>>, %arg5: memref<3x100x128xf32, #tpu.memory_space<vmem>>, %arg6: memref<3x22x128xf32, #tpu.memory_space<vmem>>) attributes {dimension_semantics = [], scalar_prefetch = 0 : i64, scratch_operands = 0 : i64, tpu.core_type = #tpu.core_type<tc>} {
    %c0 = arith.constant 0 : index
    %0 = memref.load %arg1[%c0] : memref<81xf32, #tpu.memory_space<smem>>
    %c1 = arith.constant 1 : index
    %1 = memref.load %arg1[%c1] : memref<81xf32, #tpu.memory_space<smem>>
    %c2 = arith.constant 2 : index
    %2 = memref.load %arg1[%c2] : memref<81xf32, #tpu.memory_space<smem>>
    %c3 = arith.constant 3 : index
    %3 = memref.load %arg1[%c3] : memref<81xf32, #tpu.memory_space<smem>>
    %c4 = arith.constant 4 : index
    %4 = memref.load %arg1[%c4] : memref<81xf32, #tpu.memory_space<smem>>
    %c5 = arith.constant 5 : index
    %5 = memref.load %arg1[%c5] : memref<81xf32, #tpu.memory_space<smem>>
    %c6 = arith.constant 6 : index
    %6 = memref.load %arg1[%c6] : memref<81xf32, #tpu.memory_space<smem>>
    %c7 = arith.constant 7 : index
    %7 = memref.load %arg1[%c7] : memref<81xf32, #tpu.memory_space<smem>>
    %c8 = arith.constant 8 : index
    %8 = memref.load %arg1[%c8] : memref<81xf32, #tpu.memory_space<smem>>
    %c9 = arith.constant 9 : index
    %9 = memref.load %arg1[%c9] : memref<81xf32, #tpu.memory_space<smem>>
    %c10 = arith.constant 10 : index
    %10 = memref.load %arg1[%c10] : memref<81xf32, #tpu.memory_space<smem>>
    %c11 = arith.constant 11 : index
    %11 = memref.load %arg1[%c11] : memref<81xf32, #tpu.memory_space<smem>>
    %c12 = arith.constant 12 : index
    %12 = memref.load %arg1[%c12] : memref<81xf32, #tpu.memory_space<smem>>
    %c13 = arith.constant 13 : index
    %13 = memref.load %arg1[%c13] : memref<81xf32, #tpu.memory_space<smem>>
    %c14 = arith.constant 14 : index
    %14 = memref.load %arg1[%c14] : memref<81xf32, #tpu.memory_space<smem>>
    %c15 = arith.constant 15 : index
    %15 = memref.load %arg1[%c15] : memref<81xf32, #tpu.memory_space<smem>>
    %c16 = arith.constant 16 : index
    %16 = memref.load %arg1[%c16] : memref<81xf32, #tpu.memory_space<smem>>
    %c17 = arith.constant 17 : index
    %17 = memref.load %arg1[%c17] : memref<81xf32, #tpu.memory_space<smem>>
    %c18 = arith.constant 18 : index
    %18 = memref.load %arg1[%c18] : memref<81xf32, #tpu.memory_space<smem>>
    %c19 = arith.constant 19 : index
    %19 = memref.load %arg1[%c19] : memref<81xf32, #tpu.memory_space<smem>>
    %c20 = arith.constant 20 : index
    %20 = memref.load %arg1[%c20] : memref<81xf32, #tpu.memory_space<smem>>
    %c21 = arith.constant 21 : index
    %21 = memref.load %arg1[%c21] : memref<81xf32, #tpu.memory_space<smem>>
    %c22 = arith.constant 22 : index
    %22 = memref.load %arg1[%c22] : memref<81xf32, #tpu.memory_space<smem>>
    %c23 = arith.constant 23 : index
    %23 = memref.load %arg1[%c23] : memref<81xf32, #tpu.memory_space<smem>>
    %c24 = arith.constant 24 : index
    %24 = memref.load %arg1[%c24] : memref<81xf32, #tpu.memory_space<smem>>
    %c25 = arith.constant 25 : index
    %25 = memref.load %arg1[%c25] : memref<81xf32, #tpu.memory_space<smem>>
    %c26 = arith.constant 26 : index
    %26 = memref.load %arg1[%c26] : memref<81xf32, #tpu.memory_space<smem>>
    %c27 = arith.constant 27 : index
    %27 = memref.load %arg1[%c27] : memref<81xf32, #tpu.memory_space<smem>>
    %c28 = arith.constant 28 : index
    %28 = memref.load %arg1[%c28] : memref<81xf32, #tpu.memory_space<smem>>
    %c29 = arith.constant 29 : index
    %29 = memref.load %arg1[%c29] : memref<81xf32, #tpu.memory_space<smem>>
    %c30 = arith.constant 30 : index
    %30 = memref.load %arg1[%c30] : memref<81xf32, #tpu.memory_space<smem>>
    %c31 = arith.constant 31 : index
    %31 = memref.load %arg1[%c31] : memref<81xf32, #tpu.memory_space<smem>>
    %c32 = arith.constant 32 : index
    %32 = memref.load %arg1[%c32] : memref<81xf32, #tpu.memory_space<smem>>
    %c33 = arith.constant 33 : index
    %33 = memref.load %arg1[%c33] : memref<81xf32, #tpu.memory_space<smem>>
    %c34 = arith.constant 34 : index
    %34 = memref.load %arg1[%c34] : memref<81xf32, #tpu.memory_space<smem>>
    %c35 = arith.constant 35 : index
    %35 = memref.load %arg1[%c35] : memref<81xf32, #tpu.memory_space<smem>>
    %c36 = arith.constant 36 : index
    %36 = memref.load %arg1[%c36] : memref<81xf32, #tpu.memory_space<smem>>
    %c37 = arith.constant 37 : index
    %37 = memref.load %arg1[%c37] : memref<81xf32, #tpu.memory_space<smem>>
    %c38 = arith.constant 38 : index
    %38 = memref.load %arg1[%c38] : memref<81xf32, #tpu.memory_space<smem>>
    %c39 = arith.constant 39 : index
    %39 = memref.load %arg1[%c39] : memref<81xf32, #tpu.memory_space<smem>>
    %c40 = arith.constant 40 : index
    %40 = memref.load %arg1[%c40] : memref<81xf32, #tpu.memory_space<smem>>
    %c41 = arith.constant 41 : index
    %41 = memref.load %arg1[%c41] : memref<81xf32, #tpu.memory_space<smem>>
    %c42 = arith.constant 42 : index
    %42 = memref.load %arg1[%c42] : memref<81xf32, #tpu.memory_space<smem>>
    %c43 = arith.constant 43 : index
    %43 = memref.load %arg1[%c43] : memref<81xf32, #tpu.memory_space<smem>>
    %c44 = arith.constant 44 : index
    %44 = memref.load %arg1[%c44] : memref<81xf32, #tpu.memory_space<smem>>
    %c45 = arith.constant 45 : index
    %45 = memref.load %arg1[%c45] : memref<81xf32, #tpu.memory_space<smem>>
    %c46 = arith.constant 46 : index
    %46 = memref.load %arg1[%c46] : memref<81xf32, #tpu.memory_space<smem>>
    %c47 = arith.constant 47 : index
    %47 = memref.load %arg1[%c47] : memref<81xf32, #tpu.memory_space<smem>>
    %c48 = arith.constant 48 : index
    %48 = memref.load %arg1[%c48] : memref<81xf32, #tpu.memory_space<smem>>
    %c49 = arith.constant 49 : index
    %49 = memref.load %arg1[%c49] : memref<81xf32, #tpu.memory_space<smem>>
    %c50 = arith.constant 50 : index
    %50 = memref.load %arg1[%c50] : memref<81xf32, #tpu.memory_space<smem>>
    %c51 = arith.constant 51 : index
    %51 = memref.load %arg1[%c51] : memref<81xf32, #tpu.memory_space<smem>>
    %c52 = arith.constant 52 : index
    %52 = memref.load %arg1[%c52] : memref<81xf32, #tpu.memory_space<smem>>
    %c53 = arith.constant 53 : index
    %53 = memref.load %arg1[%c53] : memref<81xf32, #tpu.memory_space<smem>>
    %c54 = arith.constant 54 : index
    %54 = memref.load %arg1[%c54] : memref<81xf32, #tpu.memory_space<smem>>
    %c55 = arith.constant 55 : index
    %55 = memref.load %arg1[%c55] : memref<81xf32, #tpu.memory_space<smem>>
    %c56 = arith.constant 56 : index
    %56 = memref.load %arg1[%c56] : memref<81xf32, #tpu.memory_space<smem>>
    %c57 = arith.constant 57 : index
    %57 = memref.load %arg1[%c57] : memref<81xf32, #tpu.memory_space<smem>>
    %c58 = arith.constant 58 : index
    %58 = memref.load %arg1[%c58] : memref<81xf32, #tpu.memory_space<smem>>
    %c59 = arith.constant 59 : index
    %59 = memref.load %arg1[%c59] : memref<81xf32, #tpu.memory_space<smem>>
    %c60 = arith.constant 60 : index
    %60 = memref.load %arg1[%c60] : memref<81xf32, #tpu.memory_space<smem>>
    %c61 = arith.constant 61 : index
    %61 = memref.load %arg1[%c61] : memref<81xf32, #tpu.memory_space<smem>>
    %c62 = arith.constant 62 : index
    %62 = memref.load %arg1[%c62] : memref<81xf32, #tpu.memory_space<smem>>
    %c63 = arith.constant 63 : index
    %63 = memref.load %arg1[%c63] : memref<81xf32, #tpu.memory_space<smem>>
    %c64 = arith.constant 64 : index
    %64 = memref.load %arg1[%c64] : memref<81xf32, #tpu.memory_space<smem>>
    %c65 = arith.constant 65 : index
    %65 = memref.load %arg1[%c65] : memref<81xf32, #tpu.memory_space<smem>>
    %c66 = arith.constant 66 : index
    %66 = memref.load %arg1[%c66] : memref<81xf32, #tpu.memory_space<smem>>
    %c67 = arith.constant 67 : index
    %67 = memref.load %arg1[%c67] : memref<81xf32, #tpu.memory_space<smem>>
    %c68 = arith.constant 68 : index
    %68 = memref.load %arg1[%c68] : memref<81xf32, #tpu.memory_space<smem>>
    %c69 = arith.constant 69 : index
    %69 = memref.load %arg1[%c69] : memref<81xf32, #tpu.memory_space<smem>>
    %c70 = arith.constant 70 : index
    %70 = memref.load %arg1[%c70] : memref<81xf32, #tpu.memory_space<smem>>
    %c71 = arith.constant 71 : index
    %71 = memref.load %arg1[%c71] : memref<81xf32, #tpu.memory_space<smem>>
    %c72 = arith.constant 72 : index
    %72 = memref.load %arg1[%c72] : memref<81xf32, #tpu.memory_space<smem>>
    %c73 = arith.constant 73 : index
    %73 = memref.load %arg1[%c73] : memref<81xf32, #tpu.memory_space<smem>>
    %c74 = arith.constant 74 : index
    %74 = memref.load %arg1[%c74] : memref<81xf32, #tpu.memory_space<smem>>
    %c75 = arith.constant 75 : index
    %75 = memref.load %arg1[%c75] : memref<81xf32, #tpu.memory_space<smem>>
    %c76 = arith.constant 76 : index
    %76 = memref.load %arg1[%c76] : memref<81xf32, #tpu.memory_space<smem>>
    %c77 = arith.constant 77 : index
    %77 = memref.load %arg1[%c77] : memref<81xf32, #tpu.memory_space<smem>>
    %c78 = arith.constant 78 : index
    %78 = memref.load %arg1[%c78] : memref<81xf32, #tpu.memory_space<smem>>
    %c79 = arith.constant 79 : index
    %79 = memref.load %arg1[%c79] : memref<81xf32, #tpu.memory_space<smem>>
    %c80 = arith.constant 80 : index
    %80 = memref.load %arg1[%c80] : memref<81xf32, #tpu.memory_space<smem>>
    %c0_0 = arith.constant 0 : index
    %81 = memref.load %arg2[%c0_0] : memref<3xf32, #tpu.memory_space<smem>>
    %c1_1 = arith.constant 1 : index
    %82 = memref.load %arg2[%c1_1] : memref<3xf32, #tpu.memory_space<smem>>
    %c2_2 = arith.constant 2 : index
    %83 = memref.load %arg2[%c2_2] : memref<3xf32, #tpu.memory_space<smem>>
    %84 = tpu.iota {dimensions = array<i32: 1>} : vector<16x128xi32>
    %85 = tpu.iota {dimensions = array<i32: 0>} : vector<16x128xi32>
    %c1_i32 = arith.constant 1 : i32
    %86 = vector.broadcast %c1_i32 : i32 to vector<16x128xi32>
    %87 = arith.cmpi sge, %84, %86 : vector<16x128xi32>
    %c127_i32 = arith.constant 127 : i32
    %88 = vector.broadcast %c127_i32 : i32 to vector<16x128xi32>
    %89 = arith.cmpi slt, %84, %88 : vector<16x128xi32>
    %c1_i32_3 = arith.constant 1 : i32
    %90 = vector.broadcast %c1_i32_3 : i32 to vector<16x128xi32>
    %91 = arith.cmpi sge, %85, %90 : vector<16x128xi32>
    %c15_i32 = arith.constant 15 : i32
    %92 = vector.broadcast %c15_i32 : i32 to vector<16x128xi32>
    %93 = arith.cmpi slt, %85, %92 : vector<16x128xi32>
    %cst = arith.constant 0.000000e+00 : f32
    %94 = vector.broadcast %cst : f32 to vector<16x128xf32>
    %95 = vector.broadcast %81 : f32 to vector<16x128xf32>
    %96 = vector.broadcast %82 : f32 to vector<16x128xf32>
    %97 = vector.broadcast %83 : f32 to vector<16x128xf32>
    %c0_4 = arith.constant 0 : index
    %c0_5 = arith.constant 0 : index
    %c0_6 = arith.constant 0 : index
    %98 = vector.load %arg0[%c0_4, %c0_5, %c0_6] : memref<3x128x128xf32, #tpu.memory_space<vmem>>, vector<1x16x128xf32>
    %99 = vector.shape_cast %98 : vector<1x16x128xf32> to vector<16x128xf32>
    %c1_i32_7 = arith.constant 1 : i32
    %100 = tpu.dynamic_rotate %99 by %c1_i32_7 dim 0 : vector<16x128xf32>, i32 -> vector<16x128xf32>
    %cst_8 = arith.constant 0.000000e+00 : f32
    %101 = vector.broadcast %cst_8 : f32 to vector<16x128xf32>
    %102 = arith.select %91, %100, %101 : vector<16x128xi1>, vector<16x128xf32>
    %103 = vector.broadcast %0 : f32 to vector<16x128xf32>
    %104 = arith.mulf %103, %102 : vector<16x128xf32>
    %105 = arith.addf %94, %104 : vector<16x128xf32>
    %106 = vector.broadcast %27 : f32 to vector<16x128xf32>
    %107 = arith.mulf %106, %102 : vector<16x128xf32>
    %108 = arith.addf %94, %107 : vector<16x128xf32>
    %109 = vector.broadcast %54 : f32 to vector<16x128xf32>
    %110 = arith.mulf %109, %102 : vector<16x128xf32>
    %111 = arith.addf %94, %110 : vector<16x128xf32>
    %112 = vector.broadcast %1 : f32 to vector<16x128xf32>
    %113 = arith.mulf %112, %102 : vector<16x128xf32>
    %114 = arith.addf %95, %113 : vector<16x128xf32>
    %115 = vector.broadcast %28 : f32 to vector<16x128xf32>
    %116 = arith.mulf %115, %102 : vector<16x128xf32>
    %117 = arith.addf %96, %116 : vector<16x128xf32>
    %118 = vector.broadcast %55 : f32 to vector<16x128xf32>
    %119 = arith.mulf %118, %102 : vector<16x128xf32>
    %120 = arith.addf %97, %119 : vector<16x128xf32>
    %121 = vector.broadcast %2 : f32 to vector<16x128xf32>
    %122 = arith.mulf %121, %102 : vector<16x128xf32>
    %123 = arith.addf %94, %122 : vector<16x128xf32>
    %124 = vector.broadcast %29 : f32 to vector<16x128xf32>
    %125 = arith.mulf %124, %102 : vector<16x128xf32>
    %126 = arith.addf %94, %125 : vector<16x128xf32>
    %127 = vector.broadcast %56 : f32 to vector<16x128xf32>
    %128 = arith.mulf %127, %102 : vector<16x128xf32>
    %129 = arith.addf %94, %128 : vector<16x128xf32>
    %c0_9 = arith.constant 0 : index
    %c0_10 = arith.constant 0 : index
    %c0_11 = arith.constant 0 : index
    %130 = vector.load %arg0[%c0_9, %c0_10, %c0_11] : memref<3x128x128xf32, #tpu.memory_space<vmem>>, vector<1x16x128xf32>
    %131 = vector.shape_cast %130 : vector<1x16x128xf32> to vector<16x128xf32>
    %132 = vector.broadcast %3 : f32 to vector<16x128xf32>
    %133 = arith.mulf %132, %131 : vector<16x128xf32>
    %134 = arith.addf %105, %133 : vector<16x128xf32>
    %135 = vector.broadcast %30 : f32 to vector<16x128xf32>
    %136 = arith.mulf %135, %131 : vector<16x128xf32>
    %137 = arith.addf %108, %136 : vector<16x128xf32>
    %138 = vector.broadcast %57 : f32 to vector<16x128xf32>
    %139 = arith.mulf %138, %131 : vector<16x128xf32>
    %140 = arith.addf %111, %139 : vector<16x128xf32>
    %141 = vector.broadcast %4 : f32 to vector<16x128xf32>
    %142 = arith.mulf %141, %131 : vector<16x128xf32>
    %143 = arith.addf %114, %142 : vector<16x128xf32>
    %144 = vector.broadcast %31 : f32 to vector<16x128xf32>
    %145 = arith.mulf %144, %131 : vector<16x128xf32>
    %146 = arith.addf %117, %145 : vector<16x128xf32>
    %147 = vector.broadcast %58 : f32 to vector<16x128xf32>
    %148 = arith.mulf %147, %131 : vector<16x128xf32>
    %149 = arith.addf %120, %148 : vector<16x128xf32>
    %150 = vector.broadcast %5 : f32 to vector<16x128xf32>
    %151 = arith.mulf %150, %131 : vector<16x128xf32>
    %152 = arith.addf %123, %151 : vector<16x128xf32>
    %153 = vector.broadcast %32 : f32 to vector<16x128xf32>
    %154 = arith.mulf %153, %131 : vector<16x128xf32>
    %155 = arith.addf %126, %154 : vector<16x128xf32>
    %156 = vector.broadcast %59 : f32 to vector<16x128xf32>
    %157 = arith.mulf %156, %131 : vector<16x128xf32>
    %158 = arith.addf %129, %157 : vector<16x128xf32>
    %c0_12 = arith.constant 0 : index
    %c1_13 = arith.constant 1 : index
    %c0_14 = arith.constant 0 : index
    %159 = vector.load %arg0[%c0_12, %c1_13, %c0_14] : memref<3x128x128xf32, #tpu.memory_space<vmem>>, vector<1x16x128xf32>
    %160 = vector.shape_cast %159 : vector<1x16x128xf32> to vector<16x128xf32>
    %161 = vector.broadcast %6 : f32 to vector<16x128xf32>
    %162 = arith.mulf %161, %160 : vector<16x128xf32>
    %163 = arith.addf %134, %162 : vector<16x128xf32>
    %164 = vector.broadcast %33 : f32 to vector<16x128xf32>
    %165 = arith.mulf %164, %160 : vector<16x128xf32>
    %166 = arith.addf %137, %165 : vector<16x128xf32>
    %167 = vector.broadcast %60 : f32 to vector<16x128xf32>
    %168 = arith.mulf %167, %160 : vector<16x128xf32>
    %169 = arith.addf %140, %168 : vector<16x128xf32>
    %170 = vector.broadcast %7 : f32 to vector<16x128xf32>
    %171 = arith.mulf %170, %160 : vector<16x128xf32>
    %172 = arith.addf %143, %171 : vector<16x128xf32>
    %173 = vector.broadcast %34 : f32 to vector<16x128xf32>
    %174 = arith.mulf %173, %160 : vector<16x128xf32>
    %175 = arith.addf %146, %174 : vector<16x128xf32>
    %176 = vector.broadcast %61 : f32 to vector<16x128xf32>
    %177 = arith.mulf %176, %160 : vector<16x128xf32>
    %178 = arith.addf %149, %177 : vector<16x128xf32>
    %179 = vector.broadcast %8 : f32 to vector<16x128xf32>
    %180 = arith.mulf %179, %160 : vector<16x128xf32>
    %181 = arith.addf %152, %180 : vector<16x128xf32>
    %182 = vector.broadcast %35 : f32 to vector<16x128xf32>
    %183 = arith.mulf %182, %160 : vector<16x128xf32>
    %184 = arith.addf %155, %183 : vector<16x128xf32>
    %185 = vector.broadcast %62 : f32 to vector<16x128xf32>
    %186 = arith.mulf %185, %160 : vector<16x128xf32>
    %187 = arith.addf %158, %186 : vector<16x128xf32>
    %c1_15 = arith.constant 1 : index
    %c0_16 = arith.constant 0 : index
    %c0_17 = arith.constant 0 : index
    %188 = vector.load %arg0[%c1_15, %c0_16, %c0_17] : memref<3x128x128xf32, #tpu.memory_space<vmem>>, vector<1x16x128xf32>
    %189 = vector.shape_cast %188 : vector<1x16x128xf32> to vector<16x128xf32>
    %c1_i32_18 = arith.constant 1 : i32
    %190 = tpu.dynamic_rotate %189 by %c1_i32_18 dim 0 : vector<16x128xf32>, i32 -> vector<16x128xf32>
    %cst_19 = arith.constant 0.000000e+00 : f32
    %191 = vector.broadcast %cst_19 : f32 to vector<16x128xf32>
    %192 = arith.select %91, %190, %191 : vector<16x128xi1>, vector<16x128xf32>
    %193 = vector.broadcast %9 : f32 to vector<16x128xf32>
    %194 = arith.mulf %193, %192 : vector<16x128xf32>
    %195 = arith.addf %163, %194 : vector<16x128xf32>
    %196 = vector.broadcast %36 : f32 to vector<16x128xf32>
    %197 = arith.mulf %196, %192 : vector<16x128xf32>
    %198 = arith.addf %166, %197 : vector<16x128xf32>
    %199 = vector.broadcast %63 : f32 to vector<16x128xf32>
    %200 = arith.mulf %199, %192 : vector<16x128xf32>
    %201 = arith.addf %169, %200 : vector<16x128xf32>
    %202 = vector.broadcast %10 : f32 to vector<16x128xf32>
    %203 = arith.mulf %202, %192 : vector<16x128xf32>
    %204 = arith.addf %172, %203 : vector<16x128xf32>
    %205 = vector.broadcast %37 : f32 to vector<16x128xf32>
    %206 = arith.mulf %205, %192 : vector<16x128xf32>
    %207 = arith.addf %175, %206 : vector<16x128xf32>
    %208 = vector.broadcast %64 : f32 to vector<16x128xf32>
    %209 = arith.mulf %208, %192 : vector<16x128xf32>
    %210 = arith.addf %178, %209 : vector<16x128xf32>
    %211 = vector.broadcast %11 : f32 to vector<16x128xf32>
    %212 = arith.mulf %211, %192 : vector<16x128xf32>
    %213 = arith.addf %181, %212 : vector<16x128xf32>
    %214 = vector.broadcast %38 : f32 to vector<16x128xf32>
    %215 = arith.mulf %214, %192 : vector<16x128xf32>
    %216 = arith.addf %184, %215 : vector<16x128xf32>
    %217 = vector.broadcast %65 : f32 to vector<16x128xf32>
    %218 = arith.mulf %217, %192 : vector<16x128xf32>
    %219 = arith.addf %187, %218 : vector<16x128xf32>
    %c1_20 = arith.constant 1 : index
    %c0_21 = arith.constant 0 : index
    %c0_22 = arith.constant 0 : index
    %220 = vector.load %arg0[%c1_20, %c0_21, %c0_22] : memref<3x128x128xf32, #tpu.memory_space<vmem>>, vector<1x16x128xf32>
    %221 = vector.shape_cast %220 : vector<1x16x128xf32> to vector<16x128xf32>
    %222 = vector.broadcast %12 : f32 to vector<16x128xf32>
    %223 = arith.mulf %222, %221 : vector<16x128xf32>
    %224 = arith.addf %195, %223 : vector<16x128xf32>
    %225 = vector.broadcast %39 : f32 to vector<16x128xf32>
    %226 = arith.mulf %225, %221 : vector<16x128xf32>
    %227 = arith.addf %198, %226 : vector<16x128xf32>
    %228 = vector.broadcast %66 : f32 to vector<16x128xf32>
    %229 = arith.mulf %228, %221 : vector<16x128xf32>
    %230 = arith.addf %201, %229 : vector<16x128xf32>
    %231 = vector.broadcast %13 : f32 to vector<16x128xf32>
    %232 = arith.mulf %231, %221 : vector<16x128xf32>
    %233 = arith.addf %204, %232 : vector<16x128xf32>
    %234 = vector.broadcast %40 : f32 to vector<16x128xf32>
    %235 = arith.mulf %234, %221 : vector<16x128xf32>
    %236 = arith.addf %207, %235 : vector<16x128xf32>
    %237 = vector.broadcast %67 : f32 to vector<16x128xf32>
    %238 = arith.mulf %237, %221 : vector<16x128xf32>
    %239 = arith.addf %210, %238 : vector<16x128xf32>
    %240 = vector.broadcast %14 : f32 to vector<16x128xf32>
    %241 = arith.mulf %240, %221 : vector<16x128xf32>
    %242 = arith.addf %213, %241 : vector<16x128xf32>
    %243 = vector.broadcast %41 : f32 to vector<16x128xf32>
    %244 = arith.mulf %243, %221 : vector<16x128xf32>
    %245 = arith.addf %216, %244 : vector<16x128xf32>
    %246 = vector.broadcast %68 : f32 to vector<16x128xf32>
    %247 = arith.mulf %246, %221 : vector<16x128xf32>
    %248 = arith.addf %219, %247 : vector<16x128xf32>
    %c1_23 = arith.constant 1 : index
    %c1_24 = arith.constant 1 : index
    %c0_25 = arith.constant 0 : index
    %249 = vector.load %arg0[%c1_23, %c1_24, %c0_25] : memref<3x128x128xf32, #tpu.memory_space<vmem>>, vector<1x16x128xf32>
    %250 = vector.shape_cast %249 : vector<1x16x128xf32> to vector<16x128xf32>
    %251 = vector.broadcast %15 : f32 to vector<16x128xf32>
    %252 = arith.mulf %251, %250 : vector<16x128xf32>
    %253 = arith.addf %224, %252 : vector<16x128xf32>
    %254 = vector.broadcast %42 : f32 to vector<16x128xf32>
    %255 = arith.mulf %254, %250 : vector<16x128xf32>
    %256 = arith.addf %227, %255 : vector<16x128xf32>
    %257 = vector.broadcast %69 : f32 to vector<16x128xf32>
    %258 = arith.mulf %257, %250 : vector<16x128xf32>
    %259 = arith.addf %230, %258 : vector<16x128xf32>
    %260 = vector.broadcast %16 : f32 to vector<16x128xf32>
    %261 = arith.mulf %260, %250 : vector<16x128xf32>
    %262 = arith.addf %233, %261 : vector<16x128xf32>
    %263 = vector.broadcast %43 : f32 to vector<16x128xf32>
    %264 = arith.mulf %263, %250 : vector<16x128xf32>
    %265 = arith.addf %236, %264 : vector<16x128xf32>
    %266 = vector.broadcast %70 : f32 to vector<16x128xf32>
    %267 = arith.mulf %266, %250 : vector<16x128xf32>
    %268 = arith.addf %239, %267 : vector<16x128xf32>
    %269 = vector.broadcast %17 : f32 to vector<16x128xf32>
    %270 = arith.mulf %269, %250 : vector<16x128xf32>
    %271 = arith.addf %242, %270 : vector<16x128xf32>
    %272 = vector.broadcast %44 : f32 to vector<16x128xf32>
    %273 = arith.mulf %272, %250 : vector<16x128xf32>
    %274 = arith.addf %245, %273 : vector<16x128xf32>
    %275 = vector.broadcast %71 : f32 to vector<16x128xf32>
    %276 = arith.mulf %275, %250 : vector<16x128xf32>
    %277 = arith.addf %248, %276 : vector<16x128xf32>
    %c2_26 = arith.constant 2 : index
    %c0_27 = arith.constant 0 : index
    %c0_28 = arith.constant 0 : index
    %278 = vector.load %arg0[%c2_26, %c0_27, %c0_28] : memref<3x128x128xf32, #tpu.memory_space<vmem>>, vector<1x16x128xf32>
    %279 = vector.shape_cast %278 : vector<1x16x128xf32> to vector<16x128xf32>
    %c1_i32_29 = arith.constant 1 : i32
    %280 = tpu.dynamic_rotate %279 by %c1_i32_29 dim 0 : vector<16x128xf32>, i32 -> vector<16x128xf32>
    %cst_30 = arith.constant 0.000000e+00 : f32
    %281 = vector.broadcast %cst_30 : f32 to vector<16x128xf32>
    %282 = arith.select %91, %280, %281 : vector<16x128xi1>, vector<16x128xf32>
    %283 = vector.broadcast %18 : f32 to vector<16x128xf32>
    %284 = arith.mulf %283, %282 : vector<16x128xf32>
    %285 = arith.addf %253, %284 : vector<16x128xf32>
    %286 = vector.broadcast %45 : f32 to vector<16x128xf32>
    %287 = arith.mulf %286, %282 : vector<16x128xf32>
    %288 = arith.addf %256, %287 : vector<16x128xf32>
    %289 = vector.broadcast %72 : f32 to vector<16x128xf32>
    %290 = arith.mulf %289, %282 : vector<16x128xf32>
    %291 = arith.addf %259, %290 : vector<16x128xf32>
    %292 = vector.broadcast %19 : f32 to vector<16x128xf32>
    %293 = arith.mulf %292, %282 : vector<16x128xf32>
    %294 = arith.addf %262, %293 : vector<16x128xf32>
    %295 = vector.broadcast %46 : f32 to vector<16x128xf32>
    %296 = arith.mulf %295, %282 : vector<16x128xf32>
    %297 = arith.addf %265, %296 : vector<16x128xf32>
    %298 = vector.broadcast %73 : f32 to vector<16x128xf32>
    %299 = arith.mulf %298, %282 : vector<16x128xf32>
    %300 = arith.addf %268, %299 : vector<16x128xf32>
    %301 = vector.broadcast %20 : f32 to vector<16x128xf32>
    %302 = arith.mulf %301, %282 : vector<16x128xf32>
    %303 = arith.addf %271, %302 : vector<16x128xf32>
    %304 = vector.broadcast %47 : f32 to vector<16x128xf32>
    %305 = arith.mulf %304, %282 : vector<16x128xf32>
    %306 = arith.addf %274, %305 : vector<16x128xf32>
    %307 = vector.broadcast %74 : f32 to vector<16x128xf32>
    %308 = arith.mulf %307, %282 : vector<16x128xf32>
    %309 = arith.addf %277, %308 : vector<16x128xf32>
    %c2_31 = arith.constant 2 : index
    %c0_32 = arith.constant 0 : index
    %c0_33 = arith.constant 0 : index
    %310 = vector.load %arg0[%c2_31, %c0_32, %c0_33] : memref<3x128x128xf32, #tpu.memory_space<vmem>>, vector<1x16x128xf32>
    %311 = vector.shape_cast %310 : vector<1x16x128xf32> to vector<16x128xf32>
    %312 = vector.broadcast %21 : f32 to vector<16x128xf32>
    %313 = arith.mulf %312, %311 : vector<16x128xf32>
    %314 = arith.addf %285, %313 : vector<16x128xf32>
    %315 = vector.broadcast %48 : f32 to vector<16x128xf32>
    %316 = arith.mulf %315, %311 : vector<16x128xf32>
    %317 = arith.addf %288, %316 : vector<16x128xf32>
    %318 = vector.broadcast %75 : f32 to vector<16x128xf32>
    %319 = arith.mulf %318, %311 : vector<16x128xf32>
    %320 = arith.addf %291, %319 : vector<16x128xf32>
    %321 = vector.broadcast %22 : f32 to vector<16x128xf32>
    %322 = arith.mulf %321, %311 : vector<16x128xf32>
    %323 = arith.addf %294, %322 : vector<16x128xf32>
    %324 = vector.broadcast %49 : f32 to vector<16x128xf32>
    %325 = arith.mulf %324, %311 : vector<16x128xf32>
    %326 = arith.addf %297, %325 : vector<16x128xf32>
    %327 = vector.broadcast %76 : f32 to vector<16x128xf32>
    %328 = arith.mulf %327, %311 : vector<16x128xf32>
    %329 = arith.addf %300, %328 : vector<16x128xf32>
    %330 = vector.broadcast %23 : f32 to vector<16x128xf32>
    %331 = arith.mulf %330, %311 : vector<16x128xf32>
    %332 = arith.addf %303, %331 : vector<16x128xf32>
    %333 = vector.broadcast %50 : f32 to vector<16x128xf32>
    %334 = arith.mulf %333, %311 : vector<16x128xf32>
    %335 = arith.addf %306, %334 : vector<16x128xf32>
    %336 = vector.broadcast %77 : f32 to vector<16x128xf32>
    %337 = arith.mulf %336, %311 : vector<16x128xf32>
    %338 = arith.addf %309, %337 : vector<16x128xf32>
    %c2_34 = arith.constant 2 : index
    %c1_35 = arith.constant 1 : index
    %c0_36 = arith.constant 0 : index
    %339 = vector.load %arg0[%c2_34, %c1_35, %c0_36] : memref<3x128x128xf32, #tpu.memory_space<vmem>>, vector<1x16x128xf32>
    %340 = vector.shape_cast %339 : vector<1x16x128xf32> to vector<16x128xf32>
    %341 = vector.broadcast %24 : f32 to vector<16x128xf32>
    %342 = arith.mulf %341, %340 : vector<16x128xf32>
    %343 = arith.addf %314, %342 : vector<16x128xf32>
    %344 = vector.broadcast %51 : f32 to vector<16x128xf32>
    %345 = arith.mulf %344, %340 : vector<16x128xf32>
    %346 = arith.addf %317, %345 : vector<16x128xf32>
    %347 = vector.broadcast %78 : f32 to vector<16x128xf32>
    %348 = arith.mulf %347, %340 : vector<16x128xf32>
    %349 = arith.addf %320, %348 : vector<16x128xf32>
    %350 = vector.broadcast %25 : f32 to vector<16x128xf32>
    %351 = arith.mulf %350, %340 : vector<16x128xf32>
    %352 = arith.addf %323, %351 : vector<16x128xf32>
    %353 = vector.broadcast %52 : f32 to vector<16x128xf32>
    %354 = arith.mulf %353, %340 : vector<16x128xf32>
    %355 = arith.addf %326, %354 : vector<16x128xf32>
    %356 = vector.broadcast %79 : f32 to vector<16x128xf32>
    %357 = arith.mulf %356, %340 : vector<16x128xf32>
    %358 = arith.addf %329, %357 : vector<16x128xf32>
    %359 = vector.broadcast %26 : f32 to vector<16x128xf32>
    %360 = arith.mulf %359, %340 : vector<16x128xf32>
    %361 = arith.addf %332, %360 : vector<16x128xf32>
    %362 = vector.broadcast %53 : f32 to vector<16x128xf32>
    %363 = arith.mulf %362, %340 : vector<16x128xf32>
    %364 = arith.addf %335, %363 : vector<16x128xf32>
    %365 = vector.broadcast %80 : f32 to vector<16x128xf32>
    %366 = arith.mulf %365, %340 : vector<16x128xf32>
    %367 = arith.addf %338, %366 : vector<16x128xf32>
    %c1_i32_37 = arith.constant 1 : i32
    %368 = tpu.dynamic_rotate %343 by %c1_i32_37 dim 1 : vector<16x128xf32>, i32 -> vector<16x128xf32>
    %cst_38 = arith.constant 0.000000e+00 : f32
    %369 = vector.broadcast %cst_38 : f32 to vector<16x128xf32>
    %370 = arith.select %87, %368, %369 : vector<16x128xi1>, vector<16x128xf32>
    %371 = arith.addf %352, %370 : vector<16x128xf32>
    %c127_i32_39 = arith.constant 127 : i32
    %372 = tpu.dynamic_rotate %361 by %c127_i32_39 dim 1 : vector<16x128xf32>, i32 -> vector<16x128xf32>
    %cst_40 = arith.constant 0.000000e+00 : f32
    %373 = vector.broadcast %cst_40 : f32 to vector<16x128xf32>
    %374 = arith.select %89, %372, %373 : vector<16x128xi1>, vector<16x128xf32>
    %375 = arith.addf %371, %374 : vector<16x128xf32>
    %c0_41 = arith.constant 0 : index
    %c0_42 = arith.constant 0 : index
    %c0_43 = arith.constant 0 : index
    %376 = vector.load %arg3[%c0_41, %c0_42, %c0_43] : memref<3x128x128xf32, #tpu.memory_space<vmem>>, vector<1x16x128xf32>
    %377 = vector.shape_cast %376 : vector<1x16x128xf32> to vector<16x128xf32>
    %378 = vector.shape_cast %375 : vector<16x128xf32> to vector<1x16x128xf32>
    tpu.vector_store %arg3[%c0_41, %c0_42, %c0_43], %378 {strides = array<i32>} : memref<3x128x128xf32, #tpu.memory_space<vmem>>, vector<1x16x128xf32>,
    %c1_i32_44 = arith.constant 1 : i32
    %379 = tpu.dynamic_rotate %346 by %c1_i32_44 dim 1 : vector<16x128xf32>, i32 -> vector<16x128xf32>
    %cst_45 = arith.constant 0.000000e+00 : f32
    %380 = vector.broadcast %cst_45 : f32 to vector<16x128xf32>
    %381 = arith.select %87, %379, %380 : vector<16x128xi1>, vector<16x128xf32>
    %382 = arith.addf %355, %381 : vector<16x128xf32>
    %c127_i32_46 = arith.constant 127 : i32
    %383 = tpu.dynamic_rotate %364 by %c127_i32_46 dim 1 : vector<16x128xf32>, i32 -> vector<16x128xf32>
    %cst_47 = arith.constant 0.000000e+00 : f32
    %384 = vector.broadcast %cst_47 : f32 to vector<16x128xf32>
    %385 = arith.select %89, %383, %384 : vector<16x128xi1>, vector<16x128xf32>
    %386 = arith.addf %382, %385 : vector<16x128xf32>
    %c1_48 = arith.constant 1 : index
    %c0_49 = arith.constant 0 : index
    %c0_50 = arith.constant 0 : index
    %387 = vector.load %arg3[%c1_48, %c0_49, %c0_50] : memref<3x128x128xf32, #tpu.memory_space<vmem>>, vector<1x16x128xf32>
    %388 = vector.shape_cast %387 : vector<1x16x128xf32> to vector<16x128xf32>
    %389 = vector.shape_cast %386 : vector<16x128xf32> to vector<1x16x128xf32>
    tpu.vector_store %arg3[%c1_48, %c0_49, %c0_50], %389 {strides = array<i32>} : memref<3x128x128xf32, #tpu.memory_space<vmem>>, vector<1x16x128xf32>,
    %c1_i32_51 = arith.constant 1 : i32
    %390 = tpu.dynamic_rotate %349 by %c1_i32_51 dim 1 : vector<16x128xf32>, i32 -> vector<16x128xf32>
    %cst_52 = arith.constant 0.000000e+00 : f32
    %391 = vector.broadcast %cst_52 : f32 to vector<16x128xf32>
    %392 = arith.select %87, %390, %391 : vector<16x128xi1>, vector<16x128xf32>
    %393 = arith.addf %358, %392 : vector<16x128xf32>
    %c127_i32_53 = arith.constant 127 : i32
    %394 = tpu.dynamic_rotate %367 by %c127_i32_53 dim 1 : vector<16x128xf32>, i32 -> vector<16x128xf32>
    %cst_54 = arith.constant 0.000000e+00 : f32
    %395 = vector.broadcast %cst_54 : f32 to vector<16x128xf32>
    %396 = arith.select %89, %394, %395 : vector<16x128xi1>, vector<16x128xf32>
    %397 = arith.addf %393, %396 : vector<16x128xf32>
    %c2_55 = arith.constant 2 : index
    %c0_56 = arith.constant 0 : index
    %c0_57 = arith.constant 0 : index
    %398 = vector.load %arg3[%c2_55, %c0_56, %c0_57] : memref<3x128x128xf32, #tpu.memory_space<vmem>>, vector<1x16x128xf32>
    %399 = vector.shape_cast %398 : vector<1x16x128xf32> to vector<16x128xf32>
    %400 = vector.shape_cast %397 : vector<16x128xf32> to vector<1x16x128xf32>
    tpu.vector_store %arg3[%c2_55, %c0_56, %c0_57], %400 {strides = array<i32>} : memref<3x128x128xf32, #tpu.memory_space<vmem>>, vector<1x16x128xf32>,
    %c0_58 = arith.constant 0 : index
    %c15_59 = arith.constant 15 : index
    %c0_60 = arith.constant 0 : index
    %401 = vector.load %arg0[%c0_58, %c15_59, %c0_60] : memref<3x128x128xf32, #tpu.memory_space<vmem>>, vector<1x16x128xf32>
    %402 = vector.shape_cast %401 : vector<1x16x128xf32> to vector<16x128xf32>
    %403 = vector.broadcast %0 : f32 to vector<16x128xf32>
    %404 = arith.mulf %403, %402 : vector<16x128xf32>
    %405 = arith.addf %94, %404 : vector<16x128xf32>
    %406 = vector.broadcast %27 : f32 to vector<16x128xf32>
    %407 = arith.mulf %406, %402 : vector<16x128xf32>
    %408 = arith.addf %94, %407 : vector<16x128xf32>
    %409 = vector.broadcast %54 : f32 to vector<16x128xf32>
    %410 = arith.mulf %409, %402 : vector<16x128xf32>
    %411 = arith.addf %94, %410 : vector<16x128xf32>
    %412 = vector.broadcast %1 : f32 to vector<16x128xf32>
    %413 = arith.mulf %412, %402 : vector<16x128xf32>
    %414 = arith.addf %95, %413 : vector<16x128xf32>
    %415 = vector.broadcast %28 : f32 to vector<16x128xf32>
    %416 = arith.mulf %415, %402 : vector<16x128xf32>
    %417 = arith.addf %96, %416 : vector<16x128xf32>
    %418 = vector.broadcast %55 : f32 to vector<16x128xf32>
    %419 = arith.mulf %418, %402 : vector<16x128xf32>
    %420 = arith.addf %97, %419 : vector<16x128xf32>
    %421 = vector.broadcast %2 : f32 to vector<16x128xf32>
    %422 = arith.mulf %421, %402 : vector<16x128xf32>
    %423 = arith.addf %94, %422 : vector<16x128xf32>
    %424 = vector.broadcast %29 : f32 to vector<16x128xf32>
    %425 = arith.mulf %424, %402 : vector<16x128xf32>
    %426 = arith.addf %94, %425 : vector<16x128xf32>
    %427 = vector.broadcast %56 : f32 to vector<16x128xf32>
    %428 = arith.mulf %427, %402 : vector<16x128xf32>
    %429 = arith.addf %94, %428 : vector<16x128xf32>
    %c0_61 = arith.constant 0 : index
    %c16_62 = arith.constant 16 : index
    %c0_63 = arith.constant 0 : index
    %430 = vector.load %arg0[%c0_61, %c16_62, %c0_63] : memref<3x128x128xf32, #tpu.memory_space<vmem>>, vector<1x16x128xf32>
    %431 = vector.shape_cast %430 : vector<1x16x128xf32> to vector<16x128xf32>
    %432 = vector.broadcast %3 : f32 to vector<16x128xf32>
    %433 = arith.mulf %432, %431 : vector<16x128xf32>
    %434 = arith.addf %405, %433 : vector<16x128xf32>
    %435 = vector.broadcast %30 : f32 to vector<16x128xf32>
    %436 = arith.mulf %435, %431 : vector<16x128xf32>
    %437 = arith.addf %408, %436 : vector<16x128xf32>
    %438 = vector.broadcast %57 : f32 to vector<16x128xf32>
    %439 = arith.mulf %438, %431 : vector<16x128xf32>
    %440 = arith.addf %411, %439 : vector<16x128xf32>
    %441 = vector.broadcast %4 : f32 to vector<16x128xf32>
    %442 = arith.mulf %441, %431 : vector<16x128xf32>
    %443 = arith.addf %414, %442 : vector<16x128xf32>
    %444 = vector.broadcast %31 : f32 to vector<16x128xf32>
    %445 = arith.mulf %444, %431 : vector<16x128xf32>
    %446 = arith.addf %417, %445 : vector<16x128xf32>
    %447 = vector.broadcast %58 : f32 to vector<16x128xf32>
    %448 = arith.mulf %447, %431 : vector<16x128xf32>
    %449 = arith.addf %420, %448 : vector<16x128xf32>
    %450 = vector.broadcast %5 : f32 to vector<16x128xf32>
    %451 = arith.mulf %450, %431 : vector<16x128xf32>
    %452 = arith.addf %423, %451 : vector<16x128xf32>
    %453 = vector.broadcast %32 : f32 to vector<16x128xf32>
    %454 = arith.mulf %453, %431 : vector<16x128xf32>
    %455 = arith.addf %426, %454 : vector<16x128xf32>
    %456 = vector.broadcast %59 : f32 to vector<16x128xf32>
    %457 = arith.mulf %456, %431 : vector<16x128xf32>
    %458 = arith.addf %429, %457 : vector<16x128xf32>
    %c0_64 = arith.constant 0 : index
    %c17_65 = arith.constant 17 : index
    %c0_66 = arith.constant 0 : index
    %459 = vector.load %arg0[%c0_64, %c17_65, %c0_66] : memref<3x128x128xf32, #tpu.memory_space<vmem>>, vector<1x16x128xf32>
    %460 = vector.shape_cast %459 : vector<1x16x128xf32> to vector<16x128xf32>
    %461 = vector.broadcast %6 : f32 to vector<16x128xf32>
    %462 = arith.mulf %461, %460 : vector<16x128xf32>
    %463 = arith.addf %434, %462 : vector<16x128xf32>
    %464 = vector.broadcast %33 : f32 to vector<16x128xf32>
    %465 = arith.mulf %464, %460 : vector<16x128xf32>
    %466 = arith.addf %437, %465 : vector<16x128xf32>
    %467 = vector.broadcast %60 : f32 to vector<16x128xf32>
    %468 = arith.mulf %467, %460 : vector<16x128xf32>
    %469 = arith.addf %440, %468 : vector<16x128xf32>
    %470 = vector.broadcast %7 : f32 to vector<16x128xf32>
    %471 = arith.mulf %470, %460 : vector<16x128xf32>
    %472 = arith.addf %443, %471 : vector<16x128xf32>
    %473 = vector.broadcast %34 : f32 to vector<16x128xf32>
    %474 = arith.mulf %473, %460 : vector<16x128xf32>
    %475 = arith.addf %446, %474 : vector<16x128xf32>
    %476 = vector.broadcast %61 : f32 to vector<16x128xf32>
    %477 = arith.mulf %476, %460 : vector<16x128xf32>
    %478 = arith.addf %449, %477 : vector<16x128xf32>
    %479 = vector.broadcast %8 : f32 to vector<16x128xf32>
    %480 = arith.mulf %479, %460 : vector<16x128xf32>
    %481 = arith.addf %452, %480 : vector<16x128xf32>
    %482 = vector.broadcast %35 : f32 to vector<16x128xf32>
    %483 = arith.mulf %482, %460 : vector<16x128xf32>
    %484 = arith.addf %455, %483 : vector<16x128xf32>
    %485 = vector.broadcast %62 : f32 to vector<16x128xf32>
    %486 = arith.mulf %485, %460 : vector<16x128xf32>
    %487 = arith.addf %458, %486 : vector<16x128xf32>
    %c1_67 = arith.constant 1 : index
    %c15_68 = arith.constant 15 : index
    %c0_69 = arith.constant 0 : index
    %488 = vector.load %arg0[%c1_67, %c15_68, %c0_69] : memref<3x128x128xf32, #tpu.memory_space<vmem>>, vector<1x16x128xf32>
    %489 = vector.shape_cast %488 : vector<1x16x128xf32> to vector<16x128xf32>
    %490 = vector.broadcast %9 : f32 to vector<16x128xf32>
    %491 = arith.mulf %490, %489 : vector<16x128xf32>
    %492 = arith.addf %463, %491 : vector<16x128xf32>
    %493 = vector.broadcast %36 : f32 to vector<16x128xf32>
    %494 = arith.mulf %493, %489 : vector<16x128xf32>
    %495 = arith.addf %466, %494 : vector<16x128xf32>
    %496 = vector.broadcast %63 : f32 to vector<16x128xf32>
    %497 = arith.mulf %496, %489 : vector<16x128xf32>
    %498 = arith.addf %469, %497 : vector<16x128xf32>
    %499 = vector.broadcast %10 : f32 to vector<16x128xf32>
    %500 = arith.mulf %499, %489 : vector<16x128xf32>
    %501 = arith.addf %472, %500 : vector<16x128xf32>
    %502 = vector.broadcast %37 : f32 to vector<16x128xf32>
    %503 = arith.mulf %502, %489 : vector<16x128xf32>
    %504 = arith.addf %475, %503 : vector<16x128xf32>
    %505 = vector.broadcast %64 : f32 to vector<16x128xf32>
    %506 = arith.mulf %505, %489 : vector<16x128xf32>
    %507 = arith.addf %478, %506 : vector<16x128xf32>
    %508 = vector.broadcast %11 : f32 to vector<16x128xf32>
    %509 = arith.mulf %508, %489 : vector<16x128xf32>
    %510 = arith.addf %481, %509 : vector<16x128xf32>
    %511 = vector.broadcast %38 : f32 to vector<16x128xf32>
    %512 = arith.mulf %511, %489 : vector<16x128xf32>
    %513 = arith.addf %484, %512 : vector<16x128xf32>
    %514 = vector.broadcast %65 : f32 to vector<16x128xf32>
    %515 = arith.mulf %514, %489 : vector<16x128xf32>
    %516 = arith.addf %487, %515 : vector<16x128xf32>
    %c1_70 = arith.constant 1 : index
    %c16_71 = arith.constant 16 : index
    %c0_72 = arith.constant 0 : index
    %517 = vector.load %arg0[%c1_70, %c16_71, %c0_72] : memref<3x128x128xf32, #tpu.memory_space<vmem>>, vector<1x16x128xf32>
    %518 = vector.shape_cast %517 : vector<1x16x128xf32> to vector<16x128xf32>
    %519 = vector.broadcast %12 : f32 to vector<16x128xf32>
    %520 = arith.mulf %519, %518 : vector<16x128xf32>
    %521 = arith.addf %492, %520 : vector<16x128xf32>
    %522 = vector.broadcast %39 : f32 to vector<16x128xf32>
    %523 = arith.mulf %522, %518 : vector<16x128xf32>
    %524 = arith.addf %495, %523 : vector<16x128xf32>
    %525 = vector.broadcast %66 : f32 to vector<16x128xf32>
    %526 = arith.mulf %525, %518 : vector<16x128xf32>
    %527 = arith.addf %498, %526 : vector<16x128xf32>
    %528 = vector.broadcast %13 : f32 to vector<16x128xf32>
    %529 = arith.mulf %528, %518 : vector<16x128xf32>
    %530 = arith.addf %501, %529 : vector<16x128xf32>
    %531 = vector.broadcast %40 : f32 to vector<16x128xf32>
    %532 = arith.mulf %531, %518 : vector<16x128xf32>
    %533 = arith.addf %504, %532 : vector<16x128xf32>
    %534 = vector.broadcast %67 : f32 to vector<16x128xf32>
    %535 = arith.mulf %534, %518 : vector<16x128xf32>
    %536 = arith.addf %507, %535 : vector<16x128xf32>
    %537 = vector.broadcast %14 : f32 to vector<16x128xf32>
    %538 = arith.mulf %537, %518 : vector<16x128xf32>
    %539 = arith.addf %510, %538 : vector<16x128xf32>
    %540 = vector.broadcast %41 : f32 to vector<16x128xf32>
    %541 = arith.mulf %540, %518 : vector<16x128xf32>
    %542 = arith.addf %513, %541 : vector<16x128xf32>
    %543 = vector.broadcast %68 : f32 to vector<16x128xf32>
    %544 = arith.mulf %543, %518 : vector<16x128xf32>
    %545 = arith.addf %516, %544 : vector<16x128xf32>
    %c1_73 = arith.constant 1 : index
    %c17_74 = arith.constant 17 : index
    %c0_75 = arith.constant 0 : index
    %546 = vector.load %arg0[%c1_73, %c17_74, %c0_75] : memref<3x128x128xf32, #tpu.memory_space<vmem>>, vector<1x16x128xf32>
    %547 = vector.shape_cast %546 : vector<1x16x128xf32> to vector<16x128xf32>
    %548 = vector.broadcast %15 : f32 to vector<16x128xf32>
    %549 = arith.mulf %548, %547 : vector<16x128xf32>
    %550 = arith.addf %521, %549 : vector<16x128xf32>
    %551 = vector.broadcast %42 : f32 to vector<16x128xf32>
    %552 = arith.mulf %551, %547 : vector<16x128xf32>
    %553 = arith.addf %524, %552 : vector<16x128xf32>
    %554 = vector.broadcast %69 : f32 to vector<16x128xf32>
    %555 = arith.mulf %554, %547 : vector<16x128xf32>
    %556 = arith.addf %527, %555 : vector<16x128xf32>
    %557 = vector.broadcast %16 : f32 to vector<16x128xf32>
    %558 = arith.mulf %557, %547 : vector<16x128xf32>
    %559 = arith.addf %530, %558 : vector<16x128xf32>
    %560 = vector.broadcast %43 : f32 to vector<16x128xf32>
    %561 = arith.mulf %560, %547 : vector<16x128xf32>
    %562 = arith.addf %533, %561 : vector<16x128xf32>
    %563 = vector.broadcast %70 : f32 to vector<16x128xf32>
    %564 = arith.mulf %563, %547 : vector<16x128xf32>
    %565 = arith.addf %536, %564 : vector<16x128xf32>
    %566 = vector.broadcast %17 : f32 to vector<16x128xf32>
    %567 = arith.mulf %566, %547 : vector<16x128xf32>
    %568 = arith.addf %539, %567 : vector<16x128xf32>
    %569 = vector.broadcast %44 : f32 to vector<16x128xf32>
    %570 = arith.mulf %569, %547 : vector<16x128xf32>
    %571 = arith.addf %542, %570 : vector<16x128xf32>
    %572 = vector.broadcast %71 : f32 to vector<16x128xf32>
    %573 = arith.mulf %572, %547 : vector<16x128xf32>
    %574 = arith.addf %545, %573 : vector<16x128xf32>
    %c2_76 = arith.constant 2 : index
    %c15_77 = arith.constant 15 : index
    %c0_78 = arith.constant 0 : index
    %575 = vector.load %arg0[%c2_76, %c15_77, %c0_78] : memref<3x128x128xf32, #tpu.memory_space<vmem>>, vector<1x16x128xf32>
    %576 = vector.shape_cast %575 : vector<1x16x128xf32> to vector<16x128xf32>
    %577 = vector.broadcast %18 : f32 to vector<16x128xf32>
    %578 = arith.mulf %577, %576 : vector<16x128xf32>
    %579 = arith.addf %550, %578 : vector<16x128xf32>
    %580 = vector.broadcast %45 : f32 to vector<16x128xf32>
    %581 = arith.mulf %580, %576 : vector<16x128xf32>
    %582 = arith.addf %553, %581 : vector<16x128xf32>
    %583 = vector.broadcast %72 : f32 to vector<16x128xf32>
    %584 = arith.mulf %583, %576 : vector<16x128xf32>
    %585 = arith.addf %556, %584 : vector<16x128xf32>
    %586 = vector.broadcast %19 : f32 to vector<16x128xf32>
    %587 = arith.mulf %586, %576 : vector<16x128xf32>
    %588 = arith.addf %559, %587 : vector<16x128xf32>
    %589 = vector.broadcast %46 : f32 to vector<16x128xf32>
    %590 = arith.mulf %589, %576 : vector<16x128xf32>
    %591 = arith.addf %562, %590 : vector<16x128xf32>
    %592 = vector.broadcast %73 : f32 to vector<16x128xf32>
    %593 = arith.mulf %592, %576 : vector<16x128xf32>
    %594 = arith.addf %565, %593 : vector<16x128xf32>
    %595 = vector.broadcast %20 : f32 to vector<16x128xf32>
    %596 = arith.mulf %595, %576 : vector<16x128xf32>
    %597 = arith.addf %568, %596 : vector<16x128xf32>
    %598 = vector.broadcast %47 : f32 to vector<16x128xf32>
    %599 = arith.mulf %598, %576 : vector<16x128xf32>
    %600 = arith.addf %571, %599 : vector<16x128xf32>
    %601 = vector.broadcast %74 : f32 to vector<16x128xf32>
    %602 = arith.mulf %601, %576 : vector<16x128xf32>
    %603 = arith.addf %574, %602 : vector<16x128xf32>
    %c2_79 = arith.constant 2 : index
    %c16_80 = arith.constant 16 : index
    %c0_81 = arith.constant 0 : index
    %604 = vector.load %arg0[%c2_79, %c16_80, %c0_81] : memref<3x128x128xf32, #tpu.memory_space<vmem>>, vector<1x16x128xf32>
    %605 = vector.shape_cast %604 : vector<1x16x128xf32> to vector<16x128xf32>
    %606 = vector.broadcast %21 : f32 to vector<16x128xf32>
    %607 = arith.mulf %606, %605 : vector<16x128xf32>
    %608 = arith.addf %579, %607 : vector<16x128xf32>
    %609 = vector.broadcast %48 : f32 to vector<16x128xf32>
    %610 = arith.mulf %609, %605 : vector<16x128xf32>
    %611 = arith.addf %582, %610 : vector<16x128xf32>
    %612 = vector.broadcast %75 : f32 to vector<16x128xf32>
    %613 = arith.mulf %612, %605 : vector<16x128xf32>
    %614 = arith.addf %585, %613 : vector<16x128xf32>
    %615 = vector.broadcast %22 : f32 to vector<16x128xf32>
    %616 = arith.mulf %615, %605 : vector<16x128xf32>
    %617 = arith.addf %588, %616 : vector<16x128xf32>
    %618 = vector.broadcast %49 : f32 to vector<16x128xf32>
    %619 = arith.mulf %618, %605 : vector<16x128xf32>
    %620 = arith.addf %591, %619 : vector<16x128xf32>
    %621 = vector.broadcast %76 : f32 to vector<16x128xf32>
    %622 = arith.mulf %621, %605 : vector<16x128xf32>
    %623 = arith.addf %594, %622 : vector<16x128xf32>
    %624 = vector.broadcast %23 : f32 to vector<16x128xf32>
    %625 = arith.mulf %624, %605 : vector<16x128xf32>
    %626 = arith.addf %597, %625 : vector<16x128xf32>
    %627 = vector.broadcast %50 : f32 to vector<16x128xf32>
    %628 = arith.mulf %627, %605 : vector<16x128xf32>
    %629 = arith.addf %600, %628 : vector<16x128xf32>
    %630 = vector.broadcast %77 : f32 to vector<16x128xf32>
    %631 = arith.mulf %630, %605 : vector<16x128xf32>
    %632 = arith.addf %603, %631 : vector<16x128xf32>
    %c2_82 = arith.constant 2 : index
    %c17_83 = arith.constant 17 : index
    %c0_84 = arith.constant 0 : index
    %633 = vector.load %arg0[%c2_82, %c17_83, %c0_84] : memref<3x128x128xf32, #tpu.memory_space<vmem>>, vector<1x16x128xf32>
    %634 = vector.shape_cast %633 : vector<1x16x128xf32> to vector<16x128xf32>
    %635 = vector.broadcast %24 : f32 to vector<16x128xf32>
    %636 = arith.mulf %635, %634 : vector<16x128xf32>
    %637 = arith.addf %608, %636 : vector<16x128xf32>
    %638 = vector.broadcast %51 : f32 to vector<16x128xf32>
    %639 = arith.mulf %638, %634 : vector<16x128xf32>
    %640 = arith.addf %611, %639 : vector<16x128xf32>
    %641 = vector.broadcast %78 : f32 to vector<16x128xf32>
    %642 = arith.mulf %641, %634 : vector<16x128xf32>
    %643 = arith.addf %614, %642 : vector<16x128xf32>
    %644 = vector.broadcast %25 : f32 to vector<16x128xf32>
    %645 = arith.mulf %644, %634 : vector<16x128xf32>
    %646 = arith.addf %617, %645 : vector<16x128xf32>
    %647 = vector.broadcast %52 : f32 to vector<16x128xf32>
    %648 = arith.mulf %647, %634 : vector<16x128xf32>
    %649 = arith.addf %620, %648 : vector<16x128xf32>
    %650 = vector.broadcast %79 : f32 to vector<16x128xf32>
    %651 = arith.mulf %650, %634 : vector<16x128xf32>
    %652 = arith.addf %623, %651 : vector<16x128xf32>
    %653 = vector.broadcast %26 : f32 to vector<16x128xf32>
    %654 = arith.mulf %653, %634 : vector<16x128xf32>
    %655 = arith.addf %626, %654 : vector<16x128xf32>
    %656 = vector.broadcast %53 : f32 to vector<16x128xf32>
    %657 = arith.mulf %656, %634 : vector<16x128xf32>
    %658 = arith.addf %629, %657 : vector<16x128xf32>
    %659 = vector.broadcast %80 : f32 to vector<16x128xf32>
    %660 = arith.mulf %659, %634 : vector<16x128xf32>
    %661 = arith.addf %632, %660 : vector<16x128xf32>
    %c1_i32_85 = arith.constant 1 : i32
    %662 = tpu.dynamic_rotate %637 by %c1_i32_85 dim 1 : vector<16x128xf32>, i32 -> vector<16x128xf32>
    %cst_86 = arith.constant 0.000000e+00 : f32
    %663 = vector.broadcast %cst_86 : f32 to vector<16x128xf32>
    %664 = arith.select %87, %662, %663 : vector<16x128xi1>, vector<16x128xf32>
    %665 = arith.addf %646, %664 : vector<16x128xf32>
    %c127_i32_87 = arith.constant 127 : i32
    %666 = tpu.dynamic_rotate %655 by %c127_i32_87 dim 1 : vector<16x128xf32>, i32 -> vector<16x128xf32>
    %cst_88 = arith.constant 0.000000e+00 : f32
    %667 = vector.broadcast %cst_88 : f32 to vector<16x128xf32>
    %668 = arith.select %89, %666, %667 : vector<16x128xi1>, vector<16x128xf32>
    %669 = arith.addf %665, %668 : vector<16x128xf32>
    %c0_89 = arith.constant 0 : index
    %c16_90 = arith.constant 16 : index
    %c0_91 = arith.constant 0 : index
    %670 = vector.load %arg3[%c0_89, %c16_90, %c0_91] : memref<3x128x128xf32, #tpu.memory_space<vmem>>, vector<1x16x128xf32>
    %671 = vector.shape_cast %670 : vector<1x16x128xf32> to vector<16x128xf32>
    %672 = vector.shape_cast %669 : vector<16x128xf32> to vector<1x16x128xf32>
    tpu.vector_store %arg3[%c0_89, %c16_90, %c0_91], %672 {strides = array<i32>} : memref<3x128x128xf32, #tpu.memory_space<vmem>>, vector<1x16x128xf32>,
    %c1_i32_92 = arith.constant 1 : i32
    %673 = tpu.dynamic_rotate %640 by %c1_i32_92 dim 1 : vector<16x128xf32>, i32 -> vector<16x128xf32>
    %cst_93 = arith.constant 0.000000e+00 : f32
    %674 = vector.broadcast %cst_93 : f32 to vector<16x128xf32>
    %675 = arith.select %87, %673, %674 : vector<16x128xi1>, vector<16x128xf32>
    %676 = arith.addf %649, %675 : vector<16x128xf32>
    %c127_i32_94 = arith.constant 127 : i32
    %677 = tpu.dynamic_rotate %658 by %c127_i32_94 dim 1 : vector<16x128xf32>, i32 -> vector<16x128xf32>
    %cst_95 = arith.constant 0.000000e+00 : f32
    %678 = vector.broadcast %cst_95 : f32 to vector<16x128xf32>
    %679 = arith.select %89, %677, %678 : vector<16x128xi1>, vector<16x128xf32>
    %680 = arith.addf %676, %679 : vector<16x128xf32>
    %c1_96 = arith.constant 1 : index
    %c16_97 = arith.constant 16 : index
    %c0_98 = arith.constant 0 : index
    %681 = vector.load %arg3[%c1_96, %c16_97, %c0_98] : memref<3x128x128xf32, #tpu.memory_space<vmem>>, vector<1x16x128xf32>
    %682 = vector.shape_cast %681 : vector<1x16x128xf32> to vector<16x128xf32>
    %683 = vector.shape_cast %680 : vector<16x128xf32> to vector<1x16x128xf32>
    tpu.vector_store %arg3[%c1_96, %c16_97, %c0_98], %683 {strides = array<i32>} : memref<3x128x128xf32, #tpu.memory_space<vmem>>, vector<1x16x128xf32>,
    %c1_i32_99 = arith.constant 1 : i32
    %684 = tpu.dynamic_rotate %643 by %c1_i32_99 dim 1 : vector<16x128xf32>, i32 -> vector<16x128xf32>
    %cst_100 = arith.constant 0.000000e+00 : f32
    %685 = vector.broadcast %cst_100 : f32 to vector<16x128xf32>
    %686 = arith.select %87, %684, %685 : vector<16x128xi1>, vector<16x128xf32>
    %687 = arith.addf %652, %686 : vector<16x128xf32>
    %c127_i32_101 = arith.constant 127 : i32
    %688 = tpu.dynamic_rotate %661 by %c127_i32_101 dim 1 : vector<16x128xf32>, i32 -> vector<16x128xf32>
    %cst_102 = arith.constant 0.000000e+00 : f32
    %689 = vector.broadcast %cst_102 : f32 to vector<16x128xf32>
    %690 = arith.select %89, %688, %689 : vector<16x128xi1>, vector<16x128xf32>
    %691 = arith.addf %687, %690 : vector<16x128xf32>
    %c2_103 = arith.constant 2 : index
    %c16_104 = arith.constant 16 : index
    %c0_105 = arith.constant 0 : index
    %692 = vector.load %arg3[%c2_103, %c16_104, %c0_105] : memref<3x128x128xf32, #tpu.memory_space<vmem>>, vector<1x16x128xf32>
    %693 = vector.shape_cast %692 : vector<1x16x128xf32> to vector<16x128xf32>
    %694 = vector.shape_cast %691 : vector<16x128xf32> to vector<1x16x128xf32>
    tpu.vector_store %arg3[%c2_103, %c16_104, %c0_105], %694 {strides = array<i32>} : memref<3x128x128xf32, #tpu.memory_space<vmem>>, vector<1x16x128xf32>,
    %c0_106 = arith.constant 0 : index
    %c31_107 = arith.constant 31 : index
    %c0_108 = arith.constant 0 : index
    %695 = vector.load %arg0[%c0_106, %c31_107, %c0_108] : memref<3x128x128xf32, #tpu.memory_space<vmem>>, vector<1x16x128xf32>
    %696 = vector.shape_cast %695 : vector<1x16x128xf32> to vector<16x128xf32>
    %697 = vector.broadcast %0 : f32 to vector<16x128xf32>
    %698 = arith.mulf %697, %696 : vector<16x128xf32>
    %699 = arith.addf %94, %698 : vector<16x128xf32>
    %700 = vector.broadcast %27 : f32 to vector<16x128xf32>
    %701 = arith.mulf %700, %696 : vector<16x128xf32>
    %702 = arith.addf %94, %701 : vector<16x128xf32>
    %703 = vector.broadcast %54 : f32 to vector<16x128xf32>
    %704 = arith.mulf %703, %696 : vector<16x128xf32>
    %705 = arith.addf %94, %704 : vector<16x128xf32>
    %706 = vector.broadcast %1 : f32 to vector<16x128xf32>
    %707 = arith.mulf %706, %696 : vector<16x128xf32>
    %708 = arith.addf %95, %707 : vector<16x128xf32>
    %709 = vector.broadcast %28 : f32 to vector<16x128xf32>
    %710 = arith.mulf %709, %696 : vector<16x128xf32>
    %711 = arith.addf %96, %710 : vector<16x128xf32>
    %712 = vector.broadcast %55 : f32 to vector<16x128xf32>
    %713 = arith.mulf %712, %696 : vector<16x128xf32>
    %714 = arith.addf %97, %713 : vector<16x128xf32>
    %715 = vector.broadcast %2 : f32 to vector<16x128xf32>
    %716 = arith.mulf %715, %696 : vector<16x128xf32>
    %717 = arith.addf %94, %716 : vector<16x128xf32>
    %718 = vector.broadcast %29 : f32 to vector<16x128xf32>
    %719 = arith.mulf %718, %696 : vector<16x128xf32>
    %720 = arith.addf %94, %719 : vector<16x128xf32>
    %721 = vector.broadcast %56 : f32 to vector<16x128xf32>
    %722 = arith.mulf %721, %696 : vector<16x128xf32>
    %723 = arith.addf %94, %722 : vector<16x128xf32>
    %c0_109 = arith.constant 0 : index
    %c32_110 = arith.constant 32 : index
    %c0_111 = arith.constant 0 : index
    %724 = vector.load %arg0[%c0_109, %c32_110, %c0_111] : memref<3x128x128xf32, #tpu.memory_space<vmem>>, vector<1x16x128xf32>
    %725 = vector.shape_cast %724 : vector<1x16x128xf32> to vector<16x128xf32>
    %726 = vector.broadcast %3 : f32 to vector<16x128xf32>
    %727 = arith.mulf %726, %725 : vector<16x128xf32>
    %728 = arith.addf %699, %727 : vector<16x128xf32>
    %729 = vector.broadcast %30 : f32 to vector<16x128xf32>
    %730 = arith.mulf %729, %725 : vector<16x128xf32>
    %731 = arith.addf %702, %730 : vector<16x128xf32>
    %732 = vector.broadcast %57 : f32 to vector<16x128xf32>
    %733 = arith.mulf %732, %725 : vector<16x128xf32>
    %734 = arith.addf %705, %733 : vector<16x128xf32>
    %735 = vector.broadcast %4 : f32 to vector<16x128xf32>
    %736 = arith.mulf %735, %725 : vector<16x128xf32>
    %737 = arith.addf %708, %736 : vector<16x128xf32>
    %738 = vector.broadcast %31 : f32 to vector<16x128xf32>
    %739 = arith.mulf %738, %725 : vector<16x128xf32>
    %740 = arith.addf %711, %739 : vector<16x128xf32>
    %741 = vector.broadcast %58 : f32 to vector<16x128xf32>
    %742 = arith.mulf %741, %725 : vector<16x128xf32>
    %743 = arith.addf %714, %742 : vector<16x128xf32>
    %744 = vector.broadcast %5 : f32 to vector<16x128xf32>
    %745 = arith.mulf %744, %725 : vector<16x128xf32>
    %746 = arith.addf %717, %745 : vector<16x128xf32>
    %747 = vector.broadcast %32 : f32 to vector<16x128xf32>
    %748 = arith.mulf %747, %725 : vector<16x128xf32>
    %749 = arith.addf %720, %748 : vector<16x128xf32>
    %750 = vector.broadcast %59 : f32 to vector<16x128xf32>
    %751 = arith.mulf %750, %725 : vector<16x128xf32>
    %752 = arith.addf %723, %751 : vector<16x128xf32>
    %c0_112 = arith.constant 0 : index
    %c33_113 = arith.constant 33 : index
    %c0_114 = arith.constant 0 : index
    %753 = vector.load %arg0[%c0_112, %c33_113, %c0_114] : memref<3x128x128xf32, #tpu.memory_space<vmem>>, vector<1x16x128xf32>
    %754 = vector.shape_cast %753 : vector<1x16x128xf32> to vector<16x128xf32>
    %755 = vector.broadcast %6 : f32 to vector<16x128xf32>
    %756 = arith.mulf %755, %754 : vector<16x128xf32>
    %757 = arith.addf %728, %756 : vector<16x128xf32>
    %758 = vector.broadcast %33 : f32 to vector<16x128xf32>
    %759 = arith.mulf %758, %754 : vector<16x128xf32>
    %760 = arith.addf %731, %759 : vector<16x128xf32>
    %761 = vector.broadcast %60 : f32 to vector<16x128xf32>
    %762 = arith.mulf %761, %754 : vector<16x128xf32>
    %763 = arith.addf %734, %762 : vector<16x128xf32>
    %764 = vector.broadcast %7 : f32 to vector<16x128xf32>
    %765 = arith.mulf %764, %754 : vector<16x128xf32>
    %766 = arith.addf %737, %765 : vector<16x128xf32>
    %767 = vector.broadcast %34 : f32 to vector<16x128xf32>
    %768 = arith.mulf %767, %754 : vector<16x128xf32>
    %769 = arith.addf %740, %768 : vector<16x128xf32>
    %770 = vector.broadcast %61 : f32 to vector<16x128xf32>
    %771 = arith.mulf %770, %754 : vector<16x128xf32>
    %772 = arith.addf %743, %771 : vector<16x128xf32>
    %773 = vector.broadcast %8 : f32 to vector<16x128xf32>
    %774 = arith.mulf %773, %754 : vector<16x128xf32>
    %775 = arith.addf %746, %774 : vector<16x128xf32>
    %776 = vector.broadcast %35 : f32 to vector<16x128xf32>
    %777 = arith.mulf %776, %754 : vector<16x128xf32>
    %778 = arith.addf %749, %777 : vector<16x128xf32>
    %779 = vector.broadcast %62 : f32 to vector<16x128xf32>
    %780 = arith.mulf %779, %754 : vector<16x128xf32>
    %781 = arith.addf %752, %780 : vector<16x128xf32>
    %c1_115 = arith.constant 1 : index
    %c31_116 = arith.constant 31 : index
    %c0_117 = arith.constant 0 : index
    %782 = vector.load %arg0[%c1_115, %c31_116, %c0_117] : memref<3x128x128xf32, #tpu.memory_space<vmem>>, vector<1x16x128xf32>
    %783 = vector.shape_cast %782 : vector<1x16x128xf32> to vector<16x128xf32>
    %784 = vector.broadcast %9 : f32 to vector<16x128xf32>
    %785 = arith.mulf %784, %783 : vector<16x128xf32>
    %786 = arith.addf %757, %785 : vector<16x128xf32>
    %787 = vector.broadcast %36 : f32 to vector<16x128xf32>
    %788 = arith.mulf %787, %783 : vector<16x128xf32>
    %789 = arith.addf %760, %788 : vector<16x128xf32>
    %790 = vector.broadcast %63 : f32 to vector<16x128xf32>
    %791 = arith.mulf %790, %783 : vector<16x128xf32>
    %792 = arith.addf %763, %791 : vector<16x128xf32>
    %793 = vector.broadcast %10 : f32 to vector<16x128xf32>
    %794 = arith.mulf %793, %783 : vector<16x128xf32>
    %795 = arith.addf %766, %794 : vector<16x128xf32>
    %796 = vector.broadcast %37 : f32 to vector<16x128xf32>
    %797 = arith.mulf %796, %783 : vector<16x128xf32>
    %798 = arith.addf %769, %797 : vector<16x128xf32>
    %799 = vector.broadcast %64 : f32 to vector<16x128xf32>
    %800 = arith.mulf %799, %783 : vector<16x128xf32>
    %801 = arith.addf %772, %800 : vector<16x128xf32>
    %802 = vector.broadcast %11 : f32 to vector<16x128xf32>
    %803 = arith.mulf %802, %783 : vector<16x128xf32>
    %804 = arith.addf %775, %803 : vector<16x128xf32>
    %805 = vector.broadcast %38 : f32 to vector<16x128xf32>
    %806 = arith.mulf %805, %783 : vector<16x128xf32>
    %807 = arith.addf %778, %806 : vector<16x128xf32>
    %808 = vector.broadcast %65 : f32 to vector<16x128xf32>
    %809 = arith.mulf %808, %783 : vector<16x128xf32>
    %810 = arith.addf %781, %809 : vector<16x128xf32>
    %c1_118 = arith.constant 1 : index
    %c32_119 = arith.constant 32 : index
    %c0_120 = arith.constant 0 : index
    %811 = vector.load %arg0[%c1_118, %c32_119, %c0_120] : memref<3x128x128xf32, #tpu.memory_space<vmem>>, vector<1x16x128xf32>
    %812 = vector.shape_cast %811 : vector<1x16x128xf32> to vector<16x128xf32>
    %813 = vector.broadcast %12 : f32 to vector<16x128xf32>
    %814 = arith.mulf %813, %812 : vector<16x128xf32>
    %815 = arith.addf %786, %814 : vector<16x128xf32>
    %816 = vector.broadcast %39 : f32 to vector<16x128xf32>
    %817 = arith.mulf %816, %812 : vector<16x128xf32>
    %818 = arith.addf %789, %817 : vector<16x128xf32>
    %819 = vector.broadcast %66 : f32 to vector<16x128xf32>
    %820 = arith.mulf %819, %812 : vector<16x128xf32>
    %821 = arith.addf %792, %820 : vector<16x128xf32>
    %822 = vector.broadcast %13 : f32 to vector<16x128xf32>
    %823 = arith.mulf %822, %812 : vector<16x128xf32>
    %824 = arith.addf %795, %823 : vector<16x128xf32>
    %825 = vector.broadcast %40 : f32 to vector<16x128xf32>
    %826 = arith.mulf %825, %812 : vector<16x128xf32>
    %827 = arith.addf %798, %826 : vector<16x128xf32>
    %828 = vector.broadcast %67 : f32 to vector<16x128xf32>
    %829 = arith.mulf %828, %812 : vector<16x128xf32>
    %830 = arith.addf %801, %829 : vector<16x128xf32>
    %831 = vector.broadcast %14 : f32 to vector<16x128xf32>
    %832 = arith.mulf %831, %812 : vector<16x128xf32>
    %833 = arith.addf %804, %832 : vector<16x128xf32>
    %834 = vector.broadcast %41 : f32 to vector<16x128xf32>
    %835 = arith.mulf %834, %812 : vector<16x128xf32>
    %836 = arith.addf %807, %835 : vector<16x128xf32>
    %837 = vector.broadcast %68 : f32 to vector<16x128xf32>
    %838 = arith.mulf %837, %812 : vector<16x128xf32>
    %839 = arith.addf %810, %838 : vector<16x128xf32>
    %c1_121 = arith.constant 1 : index
    %c33_122 = arith.constant 33 : index
    %c0_123 = arith.constant 0 : index
    %840 = vector.load %arg0[%c1_121, %c33_122, %c0_123] : memref<3x128x128xf32, #tpu.memory_space<vmem>>, vector<1x16x128xf32>
    %841 = vector.shape_cast %840 : vector<1x16x128xf32> to vector<16x128xf32>
    %842 = vector.broadcast %15 : f32 to vector<16x128xf32>
    %843 = arith.mulf %842, %841 : vector<16x128xf32>
    %844 = arith.addf %815, %843 : vector<16x128xf32>
    %845 = vector.broadcast %42 : f32 to vector<16x128xf32>
    %846 = arith.mulf %845, %841 : vector<16x128xf32>
    %847 = arith.addf %818, %846 : vector<16x128xf32>
    %848 = vector.broadcast %69 : f32 to vector<16x128xf32>
    %849 = arith.mulf %848, %841 : vector<16x128xf32>
    %850 = arith.addf %821, %849 : vector<16x128xf32>
    %851 = vector.broadcast %16 : f32 to vector<16x128xf32>
    %852 = arith.mulf %851, %841 : vector<16x128xf32>
    %853 = arith.addf %824, %852 : vector<16x128xf32>
    %854 = vector.broadcast %43 : f32 to vector<16x128xf32>
    %855 = arith.mulf %854, %841 : vector<16x128xf32>
    %856 = arith.addf %827, %855 : vector<16x128xf32>
    %857 = vector.broadcast %70 : f32 to vector<16x128xf32>
    %858 = arith.mulf %857, %841 : vector<16x128xf32>
    %859 = arith.addf %830, %858 : vector<16x128xf32>
    %860 = vector.broadcast %17 : f32 to vector<16x128xf32>
    %861 = arith.mulf %860, %841 : vector<16x128xf32>
    %862 = arith.addf %833, %861 : vector<16x128xf32>
    %863 = vector.broadcast %44 : f32 to vector<16x128xf32>
    %864 = arith.mulf %863, %841 : vector<16x128xf32>
    %865 = arith.addf %836, %864 : vector<16x128xf32>
    %866 = vector.broadcast %71 : f32 to vector<16x128xf32>
    %867 = arith.mulf %866, %841 : vector<16x128xf32>
    %868 = arith.addf %839, %867 : vector<16x128xf32>
    %c2_124 = arith.constant 2 : index
    %c31_125 = arith.constant 31 : index
    %c0_126 = arith.constant 0 : index
    %869 = vector.load %arg0[%c2_124, %c31_125, %c0_126] : memref<3x128x128xf32, #tpu.memory_space<vmem>>, vector<1x16x128xf32>
    %870 = vector.shape_cast %869 : vector<1x16x128xf32> to vector<16x128xf32>
    %871 = vector.broadcast %18 : f32 to vector<16x128xf32>
    %872 = arith.mulf %871, %870 : vector<16x128xf32>
    %873 = arith.addf %844, %872 : vector<16x128xf32>
    %874 = vector.broadcast %45 : f32 to vector<16x128xf32>
    %875 = arith.mulf %874, %870 : vector<16x128xf32>
    %876 = arith.addf %847, %875 : vector<16x128xf32>
    %877 = vector.broadcast %72 : f32 to vector<16x128xf32>
    %878 = arith.mulf %877, %870 : vector<16x128xf32>
    %879 = arith.addf %850, %878 : vector<16x128xf32>
    %880 = vector.broadcast %19 : f32 to vector<16x128xf32>
    %881 = arith.mulf %880, %870 : vector<16x128xf32>
    %882 = arith.addf %853, %881 : vector<16x128xf32>
    %883 = vector.broadcast %46 : f32 to vector<16x128xf32>
    %884 = arith.mulf %883, %870 : vector<16x128xf32>
    %885 = arith.addf %856, %884 : vector<16x128xf32>
    %886 = vector.broadcast %73 : f32 to vector<16x128xf32>
    %887 = arith.mulf %886, %870 : vector<16x128xf32>
    %888 = arith.addf %859, %887 : vector<16x128xf32>
    %889 = vector.broadcast %20 : f32 to vector<16x128xf32>
    %890 = arith.mulf %889, %870 : vector<16x128xf32>
    %891 = arith.addf %862, %890 : vector<16x128xf32>
    %892 = vector.broadcast %47 : f32 to vector<16x128xf32>
    %893 = arith.mulf %892, %870 : vector<16x128xf32>
    %894 = arith.addf %865, %893 : vector<16x128xf32>
    %895 = vector.broadcast %74 : f32 to vector<16x128xf32>
    %896 = arith.mulf %895, %870 : vector<16x128xf32>
    %897 = arith.addf %868, %896 : vector<16x128xf32>
    %c2_127 = arith.constant 2 : index
    %c32_128 = arith.constant 32 : index
    %c0_129 = arith.constant 0 : index
    %898 = vector.load %arg0[%c2_127, %c32_128, %c0_129] : memref<3x128x128xf32, #tpu.memory_space<vmem>>, vector<1x16x128xf32>
    %899 = vector.shape_cast %898 : vector<1x16x128xf32> to vector<16x128xf32>
    %900 = vector.broadcast %21 : f32 to vector<16x128xf32>
    %901 = arith.mulf %900, %899 : vector<16x128xf32>
    %902 = arith.addf %873, %901 : vector<16x128xf32>
    %903 = vector.broadcast %48 : f32 to vector<16x128xf32>
    %904 = arith.mulf %903, %899 : vector<16x128xf32>
    %905 = arith.addf %876, %904 : vector<16x128xf32>
    %906 = vector.broadcast %75 : f32 to vector<16x128xf32>
    %907 = arith.mulf %906, %899 : vector<16x128xf32>
    %908 = arith.addf %879, %907 : vector<16x128xf32>
    %909 = vector.broadcast %22 : f32 to vector<16x128xf32>
    %910 = arith.mulf %909, %899 : vector<16x128xf32>
    %911 = arith.addf %882, %910 : vector<16x128xf32>
    %912 = vector.broadcast %49 : f32 to vector<16x128xf32>
    %913 = arith.mulf %912, %899 : vector<16x128xf32>
    %914 = arith.addf %885, %913 : vector<16x128xf32>
    %915 = vector.broadcast %76 : f32 to vector<16x128xf32>
    %916 = arith.mulf %915, %899 : vector<16x128xf32>
    %917 = arith.addf %888, %916 : vector<16x128xf32>
    %918 = vector.broadcast %23 : f32 to vector<16x128xf32>
    %919 = arith.mulf %918, %899 : vector<16x128xf32>
    %920 = arith.addf %891, %919 : vector<16x128xf32>
    %921 = vector.broadcast %50 : f32 to vector<16x128xf32>
    %922 = arith.mulf %921, %899 : vector<16x128xf32>
    %923 = arith.addf %894, %922 : vector<16x128xf32>
    %924 = vector.broadcast %77 : f32 to vector<16x128xf32>
    %925 = arith.mulf %924, %899 : vector<16x128xf32>
    %926 = arith.addf %897, %925 : vector<16x128xf32>
    %c2_130 = arith.constant 2 : index
    %c33_131 = arith.constant 33 : index
    %c0_132 = arith.constant 0 : index
    %927 = vector.load %arg0[%c2_130, %c33_131, %c0_132] : memref<3x128x128xf32, #tpu.memory_space<vmem>>, vector<1x16x128xf32>
    %928 = vector.shape_cast %927 : vector<1x16x128xf32> to vector<16x128xf32>
    %929 = vector.broadcast %24 : f32 to vector<16x128xf32>
    %930 = arith.mulf %929, %928 : vector<16x128xf32>
    %931 = arith.addf %902, %930 : vector<16x128xf32>
    %932 = vector.broadcast %51 : f32 to vector<16x128xf32>
    %933 = arith.mulf %932, %928 : vector<16x128xf32>
    %934 = arith.addf %905, %933 : vector<16x128xf32>
    %935 = vector.broadcast %78 : f32 to vector<16x128xf32>
    %936 = arith.mulf %935, %928 : vector<16x128xf32>
    %937 = arith.addf %908, %936 : vector<16x128xf32>
    %938 = vector.broadcast %25 : f32 to vector<16x128xf32>
    %939 = arith.mulf %938, %928 : vector<16x128xf32>
    %940 = arith.addf %911, %939 : vector<16x128xf32>
    %941 = vector.broadcast %52 : f32 to vector<16x128xf32>
    %942 = arith.mulf %941, %928 : vector<16x128xf32>
    %943 = arith.addf %914, %942 : vector<16x128xf32>
    %944 = vector.broadcast %79 : f32 to vector<16x128xf32>
    %945 = arith.mulf %944, %928 : vector<16x128xf32>
    %946 = arith.addf %917, %945 : vector<16x128xf32>
    %947 = vector.broadcast %26 : f32 to vector<16x128xf32>
    %948 = arith.mulf %947, %928 : vector<16x128xf32>
    %949 = arith.addf %920, %948 : vector<16x128xf32>
    %950 = vector.broadcast %53 : f32 to vector<16x128xf32>
    %951 = arith.mulf %950, %928 : vector<16x128xf32>
    %952 = arith.addf %923, %951 : vector<16x128xf32>
    %953 = vector.broadcast %80 : f32 to vector<16x128xf32>
    %954 = arith.mulf %953, %928 : vector<16x128xf32>
    %955 = arith.addf %926, %954 : vector<16x128xf32>
    %c1_i32_133 = arith.constant 1 : i32
    %956 = tpu.dynamic_rotate %931 by %c1_i32_133 dim 1 : vector<16x128xf32>, i32 -> vector<16x128xf32>
    %cst_134 = arith.constant 0.000000e+00 : f32
    %957 = vector.broadcast %cst_134 : f32 to vector<16x128xf32>
    %958 = arith.select %87, %956, %957 : vector<16x128xi1>, vector<16x128xf32>
    %959 = arith.addf %940, %958 : vector<16x128xf32>
    %c127_i32_135 = arith.constant 127 : i32
    %960 = tpu.dynamic_rotate %949 by %c127_i32_135 dim 1 : vector<16x128xf32>, i32 -> vector<16x128xf32>
    %cst_136 = arith.constant 0.000000e+00 : f32
    %961 = vector.broadcast %cst_136 : f32 to vector<16x128xf32>
    %962 = arith.select %89, %960, %961 : vector<16x128xi1>, vector<16x128xf32>
    %963 = arith.addf %959, %962 : vector<16x128xf32>
    %c0_137 = arith.constant 0 : index
    %c32_138 = arith.constant 32 : index
    %c0_139 = arith.constant 0 : index
    %964 = vector.load %arg3[%c0_137, %c32_138, %c0_139] : memref<3x128x128xf32, #tpu.memory_space<vmem>>, vector<1x16x128xf32>
    %965 = vector.shape_cast %964 : vector<1x16x128xf32> to vector<16x128xf32>
    %966 = vector.shape_cast %963 : vector<16x128xf32> to vector<1x16x128xf32>
    tpu.vector_store %arg3[%c0_137, %c32_138, %c0_139], %966 {strides = array<i32>} : memref<3x128x128xf32, #tpu.memory_space<vmem>>, vector<1x16x128xf32>,
    %c1_i32_140 = arith.constant 1 : i32
    %967 = tpu.dynamic_rotate %934 by %c1_i32_140 dim 1 : vector<16x128xf32>, i32 -> vector<16x128xf32>
    %cst_141 = arith.constant 0.000000e+00 : f32
    %968 = vector.broadcast %cst_141 : f32 to vector<16x128xf32>
    %969 = arith.select %87, %967, %968 : vector<16x128xi1>, vector<16x128xf32>
    %970 = arith.addf %943, %969 : vector<16x128xf32>
    %c127_i32_142 = arith.constant 127 : i32
    %971 = tpu.dynamic_rotate %952 by %c127_i32_142 dim 1 : vector<16x128xf32>, i32 -> vector<16x128xf32>
    %cst_143 = arith.constant 0.000000e+00 : f32
    %972 = vector.broadcast %cst_143 : f32 to vector<16x128xf32>
    %973 = arith.select %89, %971, %972 : vector<16x128xi1>, vector<16x128xf32>
    %974 = arith.addf %970, %973 : vector<16x128xf32>
    %c1_144 = arith.constant 1 : index
    %c32_145 = arith.constant 32 : index
    %c0_146 = arith.constant 0 : index
    %975 = vector.load %arg3[%c1_144, %c32_145, %c0_146] : memref<3x128x128xf32, #tpu.memory_space<vmem>>, vector<1x16x128xf32>
    %976 = vector.shape_cast %975 : vector<1x16x128xf32> to vector<16x128xf32>
    %977 = vector.shape_cast %974 : vector<16x128xf32> to vector<1x16x128xf32>
    tpu.vector_store %arg3[%c1_144, %c32_145, %c0_146], %977 {strides = array<i32>} : memref<3x128x128xf32, #tpu.memory_space<vmem>>, vector<1x16x128xf32>,
    %c1_i32_147 = arith.constant 1 : i32
    %978 = tpu.dynamic_rotate %937 by %c1_i32_147 dim 1 : vector<16x128xf32>, i32 -> vector<16x128xf32>
    %cst_148 = arith.constant 0.000000e+00 : f32
    %979 = vector.broadcast %cst_148 : f32 to vector<16x128xf32>
    %980 = arith.select %87, %978, %979 : vector<16x128xi1>, vector<16x128xf32>
    %981 = arith.addf %946, %980 : vector<16x128xf32>
    %c127_i32_149 = arith.constant 127 : i32
    %982 = tpu.dynamic_rotate %955 by %c127_i32_149 dim 1 : vector<16x128xf32>, i32 -> vector<16x128xf32>
    %cst_150 = arith.constant 0.000000e+00 : f32
    %983 = vector.broadcast %cst_150 : f32 to vector<16x128xf32>
    %984 = arith.select %89, %982, %983 : vector<16x128xi1>, vector<16x128xf32>
    %985 = arith.addf %981, %984 : vector<16x128xf32>
    %c2_151 = arith.constant 2 : index
    %c32_152 = arith.constant 32 : index
    %c0_153 = arith.constant 0 : index
    %986 = vector.load %arg3[%c2_151, %c32_152, %c0_153] : memref<3x128x128xf32, #tpu.memory_space<vmem>>, vector<1x16x128xf32>
    %987 = vector.shape_cast %986 : vector<1x16x128xf32> to vector<16x128xf32>
    %988 = vector.shape_cast %985 : vector<16x128xf32> to vector<1x16x128xf32>
    tpu.vector_store %arg3[%c2_151, %c32_152, %c0_153], %988 {strides = array<i32>} : memref<3x128x128xf32, #tpu.memory_space<vmem>>, vector<1x16x128xf32>,
    %c0_154 = arith.constant 0 : index
    %c47_155 = arith.constant 47 : index
    %c0_156 = arith.constant 0 : index
    %989 = vector.load %arg0[%c0_154, %c47_155, %c0_156] : memref<3x128x128xf32, #tpu.memory_space<vmem>>, vector<1x16x128xf32>
    %990 = vector.shape_cast %989 : vector<1x16x128xf32> to vector<16x128xf32>
    %991 = vector.broadcast %0 : f32 to vector<16x128xf32>
    %992 = arith.mulf %991, %990 : vector<16x128xf32>
    %993 = arith.addf %94, %992 : vector<16x128xf32>
    %994 = vector.broadcast %27 : f32 to vector<16x128xf32>
    %995 = arith.mulf %994, %990 : vector<16x128xf32>
    %996 = arith.addf %94, %995 : vector<16x128xf32>
    %997 = vector.broadcast %54 : f32 to vector<16x128xf32>
    %998 = arith.mulf %997, %990 : vector<16x128xf32>
    %999 = arith.addf %94, %998 : vector<16x128xf32>
    %1000 = vector.broadcast %1 : f32 to vector<16x128xf32>
    %1001 = arith.mulf %1000, %990 : vector<16x128xf32>
    %1002 = arith.addf %95, %1001 : vector<16x128xf32>
    %1003 = vector.broadcast %28 : f32 to vector<16x128xf32>
    %1004 = arith.mulf %1003, %990 : vector<16x128xf32>
    %1005 = arith.addf %96, %1004 : vector<16x128xf32>
    %1006 = vector.broadcast %55 : f32 to vector<16x128xf32>
    %1007 = arith.mulf %1006, %990 : vector<16x128xf32>
    %1008 = arith.addf %97, %1007 : vector<16x128xf32>
    %1009 = vector.broadcast %2 : f32 to vector<16x128xf32>
    %1010 = arith.mulf %1009, %990 : vector<16x128xf32>
    %1011 = arith.addf %94, %1010 : vector<16x128xf32>
    %1012 = vector.broadcast %29 : f32 to vector<16x128xf32>
    %1013 = arith.mulf %1012, %990 : vector<16x128xf32>
    %1014 = arith.addf %94, %1013 : vector<16x128xf32>
    %1015 = vector.broadcast %56 : f32 to vector<16x128xf32>
    %1016 = arith.mulf %1015, %990 : vector<16x128xf32>
    %1017 = arith.addf %94, %1016 : vector<16x128xf32>
    %c0_157 = arith.constant 0 : index
    %c48_158 = arith.constant 48 : index
    %c0_159 = arith.constant 0 : index
    %1018 = vector.load %arg0[%c0_157, %c48_158, %c0_159] : memref<3x128x128xf32, #tpu.memory_space<vmem>>, vector<1x16x128xf32>
    %1019 = vector.shape_cast %1018 : vector<1x16x128xf32> to vector<16x128xf32>
    %1020 = vector.broadcast %3 : f32 to vector<16x128xf32>
    %1021 = arith.mulf %1020, %1019 : vector<16x128xf32>
    %1022 = arith.addf %993, %1021 : vector<16x128xf32>
    %1023 = vector.broadcast %30 : f32 to vector<16x128xf32>
    %1024 = arith.mulf %1023, %1019 : vector<16x128xf32>
    %1025 = arith.addf %996, %1024 : vector<16x128xf32>
    %1026 = vector.broadcast %57 : f32 to vector<16x128xf32>
    %1027 = arith.mulf %1026, %1019 : vector<16x128xf32>
    %1028 = arith.addf %999, %1027 : vector<16x128xf32>
    %1029 = vector.broadcast %4 : f32 to vector<16x128xf32>
    %1030 = arith.mulf %1029, %1019 : vector<16x128xf32>
    %1031 = arith.addf %1002, %1030 : vector<16x128xf32>
    %1032 = vector.broadcast %31 : f32 to vector<16x128xf32>
    %1033 = arith.mulf %1032, %1019 : vector<16x128xf32>
    %1034 = arith.addf %1005, %1033 : vector<16x128xf32>
    %1035 = vector.broadcast %58 : f32 to vector<16x128xf32>
    %1036 = arith.mulf %1035, %1019 : vector<16x128xf32>
    %1037 = arith.addf %1008, %1036 : vector<16x128xf32>
    %1038 = vector.broadcast %5 : f32 to vector<16x128xf32>
    %1039 = arith.mulf %1038, %1019 : vector<16x128xf32>
    %1040 = arith.addf %1011, %1039 : vector<16x128xf32>
    %1041 = vector.broadcast %32 : f32 to vector<16x128xf32>
    %1042 = arith.mulf %1041, %1019 : vector<16x128xf32>
    %1043 = arith.addf %1014, %1042 : vector<16x128xf32>
    %1044 = vector.broadcast %59 : f32 to vector<16x128xf32>
    %1045 = arith.mulf %1044, %1019 : vector<16x128xf32>
    %1046 = arith.addf %1017, %1045 : vector<16x128xf32>
    %c0_160 = arith.constant 0 : index
    %c49_161 = arith.constant 49 : index
    %c0_162 = arith.constant 0 : index
    %1047 = vector.load %arg0[%c0_160, %c49_161, %c0_162] : memref<3x128x128xf32, #tpu.memory_space<vmem>>, vector<1x16x128xf32>
    %1048 = vector.shape_cast %1047 : vector<1x16x128xf32> to vector<16x128xf32>
    %1049 = vector.broadcast %6 : f32 to vector<16x128xf32>
    %1050 = arith.mulf %1049, %1048 : vector<16x128xf32>
    %1051 = arith.addf %1022, %1050 : vector<16x128xf32>
    %1052 = vector.broadcast %33 : f32 to vector<16x128xf32>
    %1053 = arith.mulf %1052, %1048 : vector<16x128xf32>
    %1054 = arith.addf %1025, %1053 : vector<16x128xf32>
    %1055 = vector.broadcast %60 : f32 to vector<16x128xf32>
    %1056 = arith.mulf %1055, %1048 : vector<16x128xf32>
    %1057 = arith.addf %1028, %1056 : vector<16x128xf32>
    %1058 = vector.broadcast %7 : f32 to vector<16x128xf32>
    %1059 = arith.mulf %1058, %1048 : vector<16x128xf32>
    %1060 = arith.addf %1031, %1059 : vector<16x128xf32>
    %1061 = vector.broadcast %34 : f32 to vector<16x128xf32>
    %1062 = arith.mulf %1061, %1048 : vector<16x128xf32>
    %1063 = arith.addf %1034, %1062 : vector<16x128xf32>
    %1064 = vector.broadcast %61 : f32 to vector<16x128xf32>
    %1065 = arith.mulf %1064, %1048 : vector<16x128xf32>
    %1066 = arith.addf %1037, %1065 : vector<16x128xf32>
    %1067 = vector.broadcast %8 : f32 to vector<16x128xf32>
    %1068 = arith.mulf %1067, %1048 : vector<16x128xf32>
    %1069 = arith.addf %1040, %1068 : vector<16x128xf32>
    %1070 = vector.broadcast %35 : f32 to vector<16x128xf32>
    %1071 = arith.mulf %1070, %1048 : vector<16x128xf32>
    %1072 = arith.addf %1043, %1071 : vector<16x128xf32>
    %1073 = vector.broadcast %62 : f32 to vector<16x128xf32>
    %1074 = arith.mulf %1073, %1048 : vector<16x128xf32>
    %1075 = arith.addf %1046, %1074 : vector<16x128xf32>
    %c1_163 = arith.constant 1 : index
    %c47_164 = arith.constant 47 : index
    %c0_165 = arith.constant 0 : index
    %1076 = vector.load %arg0[%c1_163, %c47_164, %c0_165] : memref<3x128x128xf32, #tpu.memory_space<vmem>>, vector<1x16x128xf32>
    %1077 = vector.shape_cast %1076 : vector<1x16x128xf32> to vector<16x128xf32>
    %1078 = vector.broadcast %9 : f32 to vector<16x128xf32>
    %1079 = arith.mulf %1078, %1077 : vector<16x128xf32>
    %1080 = arith.addf %1051, %1079 : vector<16x128xf32>
    %1081 = vector.broadcast %36 : f32 to vector<16x128xf32>
    %1082 = arith.mulf %1081, %1077 : vector<16x128xf32>
    %1083 = arith.addf %1054, %1082 : vector<16x128xf32>
    %1084 = vector.broadcast %63 : f32 to vector<16x128xf32>
    %1085 = arith.mulf %1084, %1077 : vector<16x128xf32>
    %1086 = arith.addf %1057, %1085 : vector<16x128xf32>
    %1087 = vector.broadcast %10 : f32 to vector<16x128xf32>
    %1088 = arith.mulf %1087, %1077 : vector<16x128xf32>
    %1089 = arith.addf %1060, %1088 : vector<16x128xf32>
    %1090 = vector.broadcast %37 : f32 to vector<16x128xf32>
    %1091 = arith.mulf %1090, %1077 : vector<16x128xf32>
    %1092 = arith.addf %1063, %1091 : vector<16x128xf32>
    %1093 = vector.broadcast %64 : f32 to vector<16x128xf32>
    %1094 = arith.mulf %1093, %1077 : vector<16x128xf32>
    %1095 = arith.addf %1066, %1094 : vector<16x128xf32>
    %1096 = vector.broadcast %11 : f32 to vector<16x128xf32>
    %1097 = arith.mulf %1096, %1077 : vector<16x128xf32>
    %1098 = arith.addf %1069, %1097 : vector<16x128xf32>
    %1099 = vector.broadcast %38 : f32 to vector<16x128xf32>
    %1100 = arith.mulf %1099, %1077 : vector<16x128xf32>
    %1101 = arith.addf %1072, %1100 : vector<16x128xf32>
    %1102 = vector.broadcast %65 : f32 to vector<16x128xf32>
    %1103 = arith.mulf %1102, %1077 : vector<16x128xf32>
    %1104 = arith.addf %1075, %1103 : vector<16x128xf32>
    %c1_166 = arith.constant 1 : index
    %c48_167 = arith.constant 48 : index
    %c0_168 = arith.constant 0 : index
    %1105 = vector.load %arg0[%c1_166, %c48_167, %c0_168] : memref<3x128x128xf32, #tpu.memory_space<vmem>>, vector<1x16x128xf32>
    %1106 = vector.shape_cast %1105 : vector<1x16x128xf32> to vector<16x128xf32>
    %1107 = vector.broadcast %12 : f32 to vector<16x128xf32>
    %1108 = arith.mulf %1107, %1106 : vector<16x128xf32>
    %1109 = arith.addf %1080, %1108 : vector<16x128xf32>
    %1110 = vector.broadcast %39 : f32 to vector<16x128xf32>
    %1111 = arith.mulf %1110, %1106 : vector<16x128xf32>
    %1112 = arith.addf %1083, %1111 : vector<16x128xf32>
    %1113 = vector.broadcast %66 : f32 to vector<16x128xf32>
    %1114 = arith.mulf %1113, %1106 : vector<16x128xf32>
    %1115 = arith.addf %1086, %1114 : vector<16x128xf32>
    %1116 = vector.broadcast %13 : f32 to vector<16x128xf32>
    %1117 = arith.mulf %1116, %1106 : vector<16x128xf32>
    %1118 = arith.addf %1089, %1117 : vector<16x128xf32>
    %1119 = vector.broadcast %40 : f32 to vector<16x128xf32>
    %1120 = arith.mulf %1119, %1106 : vector<16x128xf32>
    %1121 = arith.addf %1092, %1120 : vector<16x128xf32>
    %1122 = vector.broadcast %67 : f32 to vector<16x128xf32>
    %1123 = arith.mulf %1122, %1106 : vector<16x128xf32>
    %1124 = arith.addf %1095, %1123 : vector<16x128xf32>
    %1125 = vector.broadcast %14 : f32 to vector<16x128xf32>
    %1126 = arith.mulf %1125, %1106 : vector<16x128xf32>
    %1127 = arith.addf %1098, %1126 : vector<16x128xf32>
    %1128 = vector.broadcast %41 : f32 to vector<16x128xf32>
    %1129 = arith.mulf %1128, %1106 : vector<16x128xf32>
    %1130 = arith.addf %1101, %1129 : vector<16x128xf32>
    %1131 = vector.broadcast %68 : f32 to vector<16x128xf32>
    %1132 = arith.mulf %1131, %1106 : vector<16x128xf32>
    %1133 = arith.addf %1104, %1132 : vector<16x128xf32>
    %c1_169 = arith.constant 1 : index
    %c49_170 = arith.constant 49 : index
    %c0_171 = arith.constant 0 : index
    %1134 = vector.load %arg0[%c1_169, %c49_170, %c0_171] : memref<3x128x128xf32, #tpu.memory_space<vmem>>, vector<1x16x128xf32>
    %1135 = vector.shape_cast %1134 : vector<1x16x128xf32> to vector<16x128xf32>
    %1136 = vector.broadcast %15 : f32 to vector<16x128xf32>
    %1137 = arith.mulf %1136, %1135 : vector<16x128xf32>
    %1138 = arith.addf %1109, %1137 : vector<16x128xf32>
    %1139 = vector.broadcast %42 : f32 to vector<16x128xf32>
    %1140 = arith.mulf %1139, %1135 : vector<16x128xf32>
    %1141 = arith.addf %1112, %1140 : vector<16x128xf32>
    %1142 = vector.broadcast %69 : f32 to vector<16x128xf32>
    %1143 = arith.mulf %1142, %1135 : vector<16x128xf32>
    %1144 = arith.addf %1115, %1143 : vector<16x128xf32>
    %1145 = vector.broadcast %16 : f32 to vector<16x128xf32>
    %1146 = arith.mulf %1145, %1135 : vector<16x128xf32>
    %1147 = arith.addf %1118, %1146 : vector<16x128xf32>
    %1148 = vector.broadcast %43 : f32 to vector<16x128xf32>
    %1149 = arith.mulf %1148, %1135 : vector<16x128xf32>
    %1150 = arith.addf %1121, %1149 : vector<16x128xf32>
    %1151 = vector.broadcast %70 : f32 to vector<16x128xf32>
    %1152 = arith.mulf %1151, %1135 : vector<16x128xf32>
    %1153 = arith.addf %1124, %1152 : vector<16x128xf32>
    %1154 = vector.broadcast %17 : f32 to vector<16x128xf32>
    %1155 = arith.mulf %1154, %1135 : vector<16x128xf32>
    %1156 = arith.addf %1127, %1155 : vector<16x128xf32>
    %1157 = vector.broadcast %44 : f32 to vector<16x128xf32>
    %1158 = arith.mulf %1157, %1135 : vector<16x128xf32>
    %1159 = arith.addf %1130, %1158 : vector<16x128xf32>
    %1160 = vector.broadcast %71 : f32 to vector<16x128xf32>
    %1161 = arith.mulf %1160, %1135 : vector<16x128xf32>
    %1162 = arith.addf %1133, %1161 : vector<16x128xf32>
    %c2_172 = arith.constant 2 : index
    %c47_173 = arith.constant 47 : index
    %c0_174 = arith.constant 0 : index
    %1163 = vector.load %arg0[%c2_172, %c47_173, %c0_174] : memref<3x128x128xf32, #tpu.memory_space<vmem>>, vector<1x16x128xf32>
    %1164 = vector.shape_cast %1163 : vector<1x16x128xf32> to vector<16x128xf32>
    %1165 = vector.broadcast %18 : f32 to vector<16x128xf32>
    %1166 = arith.mulf %1165, %1164 : vector<16x128xf32>
    %1167 = arith.addf %1138, %1166 : vector<16x128xf32>
    %1168 = vector.broadcast %45 : f32 to vector<16x128xf32>
    %1169 = arith.mulf %1168, %1164 : vector<16x128xf32>
    %1170 = arith.addf %1141, %1169 : vector<16x128xf32>
    %1171 = vector.broadcast %72 : f32 to vector<16x128xf32>
    %1172 = arith.mulf %1171, %1164 : vector<16x128xf32>
    %1173 = arith.addf %1144, %1172 : vector<16x128xf32>
    %1174 = vector.broadcast %19 : f32 to vector<16x128xf32>
    %1175 = arith.mulf %1174, %1164 : vector<16x128xf32>
    %1176 = arith.addf %1147, %1175 : vector<16x128xf32>
    %1177 = vector.broadcast %46 : f32 to vector<16x128xf32>
    %1178 = arith.mulf %1177, %1164 : vector<16x128xf32>
    %1179 = arith.addf %1150, %1178 : vector<16x128xf32>
    %1180 = vector.broadcast %73 : f32 to vector<16x128xf32>
    %1181 = arith.mulf %1180, %1164 : vector<16x128xf32>
    %1182 = arith.addf %1153, %1181 : vector<16x128xf32>
    %1183 = vector.broadcast %20 : f32 to vector<16x128xf32>
    %1184 = arith.mulf %1183, %1164 : vector<16x128xf32>
    %1185 = arith.addf %1156, %1184 : vector<16x128xf32>
    %1186 = vector.broadcast %47 : f32 to vector<16x128xf32>
    %1187 = arith.mulf %1186, %1164 : vector<16x128xf32>
    %1188 = arith.addf %1159, %1187 : vector<16x128xf32>
    %1189 = vector.broadcast %74 : f32 to vector<16x128xf32>
    %1190 = arith.mulf %1189, %1164 : vector<16x128xf32>
    %1191 = arith.addf %1162, %1190 : vector<16x128xf32>
    %c2_175 = arith.constant 2 : index
    %c48_176 = arith.constant 48 : index
    %c0_177 = arith.constant 0 : index
    %1192 = vector.load %arg0[%c2_175, %c48_176, %c0_177] : memref<3x128x128xf32, #tpu.memory_space<vmem>>, vector<1x16x128xf32>
    %1193 = vector.shape_cast %1192 : vector<1x16x128xf32> to vector<16x128xf32>
    %1194 = vector.broadcast %21 : f32 to vector<16x128xf32>
    %1195 = arith.mulf %1194, %1193 : vector<16x128xf32>
    %1196 = arith.addf %1167, %1195 : vector<16x128xf32>
    %1197 = vector.broadcast %48 : f32 to vector<16x128xf32>
    %1198 = arith.mulf %1197, %1193 : vector<16x128xf32>
    %1199 = arith.addf %1170, %1198 : vector<16x128xf32>
    %1200 = vector.broadcast %75 : f32 to vector<16x128xf32>
    %1201 = arith.mulf %1200, %1193 : vector<16x128xf32>
    %1202 = arith.addf %1173, %1201 : vector<16x128xf32>
    %1203 = vector.broadcast %22 : f32 to vector<16x128xf32>
    %1204 = arith.mulf %1203, %1193 : vector<16x128xf32>
    %1205 = arith.addf %1176, %1204 : vector<16x128xf32>
    %1206 = vector.broadcast %49 : f32 to vector<16x128xf32>
    %1207 = arith.mulf %1206, %1193 : vector<16x128xf32>
    %1208 = arith.addf %1179, %1207 : vector<16x128xf32>
    %1209 = vector.broadcast %76 : f32 to vector<16x128xf32>
    %1210 = arith.mulf %1209, %1193 : vector<16x128xf32>
    %1211 = arith.addf %1182, %1210 : vector<16x128xf32>
    %1212 = vector.broadcast %23 : f32 to vector<16x128xf32>
    %1213 = arith.mulf %1212, %1193 : vector<16x128xf32>
    %1214 = arith.addf %1185, %1213 : vector<16x128xf32>
    %1215 = vector.broadcast %50 : f32 to vector<16x128xf32>
    %1216 = arith.mulf %1215, %1193 : vector<16x128xf32>
    %1217 = arith.addf %1188, %1216 : vector<16x128xf32>
    %1218 = vector.broadcast %77 : f32 to vector<16x128xf32>
    %1219 = arith.mulf %1218, %1193 : vector<16x128xf32>
    %1220 = arith.addf %1191, %1219 : vector<16x128xf32>
    %c2_178 = arith.constant 2 : index
    %c49_179 = arith.constant 49 : index
    %c0_180 = arith.constant 0 : index
    %1221 = vector.load %arg0[%c2_178, %c49_179, %c0_180] : memref<3x128x128xf32, #tpu.memory_space<vmem>>, vector<1x16x128xf32>
    %1222 = vector.shape_cast %1221 : vector<1x16x128xf32> to vector<16x128xf32>
    %1223 = vector.broadcast %24 : f32 to vector<16x128xf32>
    %1224 = arith.mulf %1223, %1222 : vector<16x128xf32>
    %1225 = arith.addf %1196, %1224 : vector<16x128xf32>
    %1226 = vector.broadcast %51 : f32 to vector<16x128xf32>
    %1227 = arith.mulf %1226, %1222 : vector<16x128xf32>
    %1228 = arith.addf %1199, %1227 : vector<16x128xf32>
    %1229 = vector.broadcast %78 : f32 to vector<16x128xf32>
    %1230 = arith.mulf %1229, %1222 : vector<16x128xf32>
    %1231 = arith.addf %1202, %1230 : vector<16x128xf32>
    %1232 = vector.broadcast %25 : f32 to vector<16x128xf32>
    %1233 = arith.mulf %1232, %1222 : vector<16x128xf32>
    %1234 = arith.addf %1205, %1233 : vector<16x128xf32>
    %1235 = vector.broadcast %52 : f32 to vector<16x128xf32>
    %1236 = arith.mulf %1235, %1222 : vector<16x128xf32>
    %1237 = arith.addf %1208, %1236 : vector<16x128xf32>
    %1238 = vector.broadcast %79 : f32 to vector<16x128xf32>
    %1239 = arith.mulf %1238, %1222 : vector<16x128xf32>
    %1240 = arith.addf %1211, %1239 : vector<16x128xf32>
    %1241 = vector.broadcast %26 : f32 to vector<16x128xf32>
    %1242 = arith.mulf %1241, %1222 : vector<16x128xf32>
    %1243 = arith.addf %1214, %1242 : vector<16x128xf32>
    %1244 = vector.broadcast %53 : f32 to vector<16x128xf32>
    %1245 = arith.mulf %1244, %1222 : vector<16x128xf32>
    %1246 = arith.addf %1217, %1245 : vector<16x128xf32>
    %1247 = vector.broadcast %80 : f32 to vector<16x128xf32>
    %1248 = arith.mulf %1247, %1222 : vector<16x128xf32>
    %1249 = arith.addf %1220, %1248 : vector<16x128xf32>
    %c1_i32_181 = arith.constant 1 : i32
    %1250 = tpu.dynamic_rotate %1225 by %c1_i32_181 dim 1 : vector<16x128xf32>, i32 -> vector<16x128xf32>
    %cst_182 = arith.constant 0.000000e+00 : f32
    %1251 = vector.broadcast %cst_182 : f32 to vector<16x128xf32>
    %1252 = arith.select %87, %1250, %1251 : vector<16x128xi1>, vector<16x128xf32>
    %1253 = arith.addf %1234, %1252 : vector<16x128xf32>
    %c127_i32_183 = arith.constant 127 : i32
    %1254 = tpu.dynamic_rotate %1243 by %c127_i32_183 dim 1 : vector<16x128xf32>, i32 -> vector<16x128xf32>
    %cst_184 = arith.constant 0.000000e+00 : f32
    %1255 = vector.broadcast %cst_184 : f32 to vector<16x128xf32>
    %1256 = arith.select %89, %1254, %1255 : vector<16x128xi1>, vector<16x128xf32>
    %1257 = arith.addf %1253, %1256 : vector<16x128xf32>
    %c0_185 = arith.constant 0 : index
    %c48_186 = arith.constant 48 : index
    %c0_187 = arith.constant 0 : index
    %1258 = vector.load %arg3[%c0_185, %c48_186, %c0_187] : memref<3x128x128xf32, #tpu.memory_space<vmem>>, vector<1x16x128xf32>
    %1259 = vector.shape_cast %1258 : vector<1x16x128xf32> to vector<16x128xf32>
    %1260 = vector.shape_cast %1257 : vector<16x128xf32> to vector<1x16x128xf32>
    tpu.vector_store %arg3[%c0_185, %c48_186, %c0_187], %1260 {strides = array<i32>} : memref<3x128x128xf32, #tpu.memory_space<vmem>>, vector<1x16x128xf32>,
    %c1_i32_188 = arith.constant 1 : i32
    %1261 = tpu.dynamic_rotate %1228 by %c1_i32_188 dim 1 : vector<16x128xf32>, i32 -> vector<16x128xf32>
    %cst_189 = arith.constant 0.000000e+00 : f32
    %1262 = vector.broadcast %cst_189 : f32 to vector<16x128xf32>
    %1263 = arith.select %87, %1261, %1262 : vector<16x128xi1>, vector<16x128xf32>
    %1264 = arith.addf %1237, %1263 : vector<16x128xf32>
    %c127_i32_190 = arith.constant 127 : i32
    %1265 = tpu.dynamic_rotate %1246 by %c127_i32_190 dim 1 : vector<16x128xf32>, i32 -> vector<16x128xf32>
    %cst_191 = arith.constant 0.000000e+00 : f32
    %1266 = vector.broadcast %cst_191 : f32 to vector<16x128xf32>
    %1267 = arith.select %89, %1265, %1266 : vector<16x128xi1>, vector<16x128xf32>
    %1268 = arith.addf %1264, %1267 : vector<16x128xf32>
    %c1_192 = arith.constant 1 : index
    %c48_193 = arith.constant 48 : index
    %c0_194 = arith.constant 0 : index
    %1269 = vector.load %arg3[%c1_192, %c48_193, %c0_194] : memref<3x128x128xf32, #tpu.memory_space<vmem>>, vector<1x16x128xf32>
    %1270 = vector.shape_cast %1269 : vector<1x16x128xf32> to vector<16x128xf32>
    %1271 = vector.shape_cast %1268 : vector<16x128xf32> to vector<1x16x128xf32>
    tpu.vector_store %arg3[%c1_192, %c48_193, %c0_194], %1271 {strides = array<i32>} : memref<3x128x128xf32, #tpu.memory_space<vmem>>, vector<1x16x128xf32>,
    %c1_i32_195 = arith.constant 1 : i32
    %1272 = tpu.dynamic_rotate %1231 by %c1_i32_195 dim 1 : vector<16x128xf32>, i32 -> vector<16x128xf32>
    %cst_196 = arith.constant 0.000000e+00 : f32
    %1273 = vector.broadcast %cst_196 : f32 to vector<16x128xf32>
    %1274 = arith.select %87, %1272, %1273 : vector<16x128xi1>, vector<16x128xf32>
    %1275 = arith.addf %1240, %1274 : vector<16x128xf32>
    %c127_i32_197 = arith.constant 127 : i32
    %1276 = tpu.dynamic_rotate %1249 by %c127_i32_197 dim 1 : vector<16x128xf32>, i32 -> vector<16x128xf32>
    %cst_198 = arith.constant 0.000000e+00 : f32
    %1277 = vector.broadcast %cst_198 : f32 to vector<16x128xf32>
    %1278 = arith.select %89, %1276, %1277 : vector<16x128xi1>, vector<16x128xf32>
    %1279 = arith.addf %1275, %1278 : vector<16x128xf32>
    %c2_199 = arith.constant 2 : index
    %c48_200 = arith.constant 48 : index
    %c0_201 = arith.constant 0 : index
    %1280 = vector.load %arg3[%c2_199, %c48_200, %c0_201] : memref<3x128x128xf32, #tpu.memory_space<vmem>>, vector<1x16x128xf32>
    %1281 = vector.shape_cast %1280 : vector<1x16x128xf32> to vector<16x128xf32>
    %1282 = vector.shape_cast %1279 : vector<16x128xf32> to vector<1x16x128xf32>
    tpu.vector_store %arg3[%c2_199, %c48_200, %c0_201], %1282 {strides = array<i32>} : memref<3x128x128xf32, #tpu.memory_space<vmem>>, vector<1x16x128xf32>,
    %c0_202 = arith.constant 0 : index
    %c63_203 = arith.constant 63 : index
    %c0_204 = arith.constant 0 : index
    %1283 = vector.load %arg0[%c0_202, %c63_203, %c0_204] : memref<3x128x128xf32, #tpu.memory_space<vmem>>, vector<1x16x128xf32>
    %1284 = vector.shape_cast %1283 : vector<1x16x128xf32> to vector<16x128xf32>
    %1285 = vector.broadcast %0 : f32 to vector<16x128xf32>
    %1286 = arith.mulf %1285, %1284 : vector<16x128xf32>
    %1287 = arith.addf %94, %1286 : vector<16x128xf32>
    %1288 = vector.broadcast %27 : f32 to vector<16x128xf32>
    %1289 = arith.mulf %1288, %1284 : vector<16x128xf32>
    %1290 = arith.addf %94, %1289 : vector<16x128xf32>
    %1291 = vector.broadcast %54 : f32 to vector<16x128xf32>
    %1292 = arith.mulf %1291, %1284 : vector<16x128xf32>
    %1293 = arith.addf %94, %1292 : vector<16x128xf32>
    %1294 = vector.broadcast %1 : f32 to vector<16x128xf32>
    %1295 = arith.mulf %1294, %1284 : vector<16x128xf32>
    %1296 = arith.addf %95, %1295 : vector<16x128xf32>
    %1297 = vector.broadcast %28 : f32 to vector<16x128xf32>
    %1298 = arith.mulf %1297, %1284 : vector<16x128xf32>
    %1299 = arith.addf %96, %1298 : vector<16x128xf32>
    %1300 = vector.broadcast %55 : f32 to vector<16x128xf32>
    %1301 = arith.mulf %1300, %1284 : vector<16x128xf32>
    %1302 = arith.addf %97, %1301 : vector<16x128xf32>
    %1303 = vector.broadcast %2 : f32 to vector<16x128xf32>
    %1304 = arith.mulf %1303, %1284 : vector<16x128xf32>
    %1305 = arith.addf %94, %1304 : vector<16x128xf32>
    %1306 = vector.broadcast %29 : f32 to vector<16x128xf32>
    %1307 = arith.mulf %1306, %1284 : vector<16x128xf32>
    %1308 = arith.addf %94, %1307 : vector<16x128xf32>
    %1309 = vector.broadcast %56 : f32 to vector<16x128xf32>
    %1310 = arith.mulf %1309, %1284 : vector<16x128xf32>
    %1311 = arith.addf %94, %1310 : vector<16x128xf32>
    %c0_205 = arith.constant 0 : index
    %c64_206 = arith.constant 64 : index
    %c0_207 = arith.constant 0 : index
    %1312 = vector.load %arg0[%c0_205, %c64_206, %c0_207] : memref<3x128x128xf32, #tpu.memory_space<vmem>>, vector<1x16x128xf32>
    %1313 = vector.shape_cast %1312 : vector<1x16x128xf32> to vector<16x128xf32>
    %1314 = vector.broadcast %3 : f32 to vector<16x128xf32>
    %1315 = arith.mulf %1314, %1313 : vector<16x128xf32>
    %1316 = arith.addf %1287, %1315 : vector<16x128xf32>
    %1317 = vector.broadcast %30 : f32 to vector<16x128xf32>
    %1318 = arith.mulf %1317, %1313 : vector<16x128xf32>
    %1319 = arith.addf %1290, %1318 : vector<16x128xf32>
    %1320 = vector.broadcast %57 : f32 to vector<16x128xf32>
    %1321 = arith.mulf %1320, %1313 : vector<16x128xf32>
    %1322 = arith.addf %1293, %1321 : vector<16x128xf32>
    %1323 = vector.broadcast %4 : f32 to vector<16x128xf32>
    %1324 = arith.mulf %1323, %1313 : vector<16x128xf32>
    %1325 = arith.addf %1296, %1324 : vector<16x128xf32>
    %1326 = vector.broadcast %31 : f32 to vector<16x128xf32>
    %1327 = arith.mulf %1326, %1313 : vector<16x128xf32>
    %1328 = arith.addf %1299, %1327 : vector<16x128xf32>
    %1329 = vector.broadcast %58 : f32 to vector<16x128xf32>
    %1330 = arith.mulf %1329, %1313 : vector<16x128xf32>
    %1331 = arith.addf %1302, %1330 : vector<16x128xf32>
    %1332 = vector.broadcast %5 : f32 to vector<16x128xf32>
    %1333 = arith.mulf %1332, %1313 : vector<16x128xf32>
    %1334 = arith.addf %1305, %1333 : vector<16x128xf32>
    %1335 = vector.broadcast %32 : f32 to vector<16x128xf32>
    %1336 = arith.mulf %1335, %1313 : vector<16x128xf32>
    %1337 = arith.addf %1308, %1336 : vector<16x128xf32>
    %1338 = vector.broadcast %59 : f32 to vector<16x128xf32>
    %1339 = arith.mulf %1338, %1313 : vector<16x128xf32>
    %1340 = arith.addf %1311, %1339 : vector<16x128xf32>
    %c0_208 = arith.constant 0 : index
    %c65_209 = arith.constant 65 : index
    %c0_210 = arith.constant 0 : index
    %1341 = vector.load %arg0[%c0_208, %c65_209, %c0_210] : memref<3x128x128xf32, #tpu.memory_space<vmem>>, vector<1x16x128xf32>
    %1342 = vector.shape_cast %1341 : vector<1x16x128xf32> to vector<16x128xf32>
    %1343 = vector.broadcast %6 : f32 to vector<16x128xf32>
    %1344 = arith.mulf %1343, %1342 : vector<16x128xf32>
    %1345 = arith.addf %1316, %1344 : vector<16x128xf32>
    %1346 = vector.broadcast %33 : f32 to vector<16x128xf32>
    %1347 = arith.mulf %1346, %1342 : vector<16x128xf32>
    %1348 = arith.addf %1319, %1347 : vector<16x128xf32>
    %1349 = vector.broadcast %60 : f32 to vector<16x128xf32>
    %1350 = arith.mulf %1349, %1342 : vector<16x128xf32>
    %1351 = arith.addf %1322, %1350 : vector<16x128xf32>
    %1352 = vector.broadcast %7 : f32 to vector<16x128xf32>
    %1353 = arith.mulf %1352, %1342 : vector<16x128xf32>
    %1354 = arith.addf %1325, %1353 : vector<16x128xf32>
    %1355 = vector.broadcast %34 : f32 to vector<16x128xf32>
    %1356 = arith.mulf %1355, %1342 : vector<16x128xf32>
    %1357 = arith.addf %1328, %1356 : vector<16x128xf32>
    %1358 = vector.broadcast %61 : f32 to vector<16x128xf32>
    %1359 = arith.mulf %1358, %1342 : vector<16x128xf32>
    %1360 = arith.addf %1331, %1359 : vector<16x128xf32>
    %1361 = vector.broadcast %8 : f32 to vector<16x128xf32>
    %1362 = arith.mulf %1361, %1342 : vector<16x128xf32>
    %1363 = arith.addf %1334, %1362 : vector<16x128xf32>
    %1364 = vector.broadcast %35 : f32 to vector<16x128xf32>
    %1365 = arith.mulf %1364, %1342 : vector<16x128xf32>
    %1366 = arith.addf %1337, %1365 : vector<16x128xf32>
    %1367 = vector.broadcast %62 : f32 to vector<16x128xf32>
    %1368 = arith.mulf %1367, %1342 : vector<16x128xf32>
    %1369 = arith.addf %1340, %1368 : vector<16x128xf32>
    %c1_211 = arith.constant 1 : index
    %c63_212 = arith.constant 63 : index
    %c0_213 = arith.constant 0 : index
    %1370 = vector.load %arg0[%c1_211, %c63_212, %c0_213] : memref<3x128x128xf32, #tpu.memory_space<vmem>>, vector<1x16x128xf32>
    %1371 = vector.shape_cast %1370 : vector<1x16x128xf32> to vector<16x128xf32>
    %1372 = vector.broadcast %9 : f32 to vector<16x128xf32>
    %1373 = arith.mulf %1372, %1371 : vector<16x128xf32>
    %1374 = arith.addf %1345, %1373 : vector<16x128xf32>
    %1375 = vector.broadcast %36 : f32 to vector<16x128xf32>
    %1376 = arith.mulf %1375, %1371 : vector<16x128xf32>
    %1377 = arith.addf %1348, %1376 : vector<16x128xf32>
    %1378 = vector.broadcast %63 : f32 to vector<16x128xf32>
    %1379 = arith.mulf %1378, %1371 : vector<16x128xf32>
    %1380 = arith.addf %1351, %1379 : vector<16x128xf32>
    %1381 = vector.broadcast %10 : f32 to vector<16x128xf32>
    %1382 = arith.mulf %1381, %1371 : vector<16x128xf32>
    %1383 = arith.addf %1354, %1382 : vector<16x128xf32>
    %1384 = vector.broadcast %37 : f32 to vector<16x128xf32>
    %1385 = arith.mulf %1384, %1371 : vector<16x128xf32>
    %1386 = arith.addf %1357, %1385 : vector<16x128xf32>
    %1387 = vector.broadcast %64 : f32 to vector<16x128xf32>
    %1388 = arith.mulf %1387, %1371 : vector<16x128xf32>
    %1389 = arith.addf %1360, %1388 : vector<16x128xf32>
    %1390 = vector.broadcast %11 : f32 to vector<16x128xf32>
    %1391 = arith.mulf %1390, %1371 : vector<16x128xf32>
    %1392 = arith.addf %1363, %1391 : vector<16x128xf32>
    %1393 = vector.broadcast %38 : f32 to vector<16x128xf32>
    %1394 = arith.mulf %1393, %1371 : vector<16x128xf32>
    %1395 = arith.addf %1366, %1394 : vector<16x128xf32>
    %1396 = vector.broadcast %65 : f32 to vector<16x128xf32>
    %1397 = arith.mulf %1396, %1371 : vector<16x128xf32>
    %1398 = arith.addf %1369, %1397 : vector<16x128xf32>
    %c1_214 = arith.constant 1 : index
    %c64_215 = arith.constant 64 : index
    %c0_216 = arith.constant 0 : index
    %1399 = vector.load %arg0[%c1_214, %c64_215, %c0_216] : memref<3x128x128xf32, #tpu.memory_space<vmem>>, vector<1x16x128xf32>
    %1400 = vector.shape_cast %1399 : vector<1x16x128xf32> to vector<16x128xf32>
    %1401 = vector.broadcast %12 : f32 to vector<16x128xf32>
    %1402 = arith.mulf %1401, %1400 : vector<16x128xf32>
    %1403 = arith.addf %1374, %1402 : vector<16x128xf32>
    %1404 = vector.broadcast %39 : f32 to vector<16x128xf32>
    %1405 = arith.mulf %1404, %1400 : vector<16x128xf32>
    %1406 = arith.addf %1377, %1405 : vector<16x128xf32>
    %1407 = vector.broadcast %66 : f32 to vector<16x128xf32>
    %1408 = arith.mulf %1407, %1400 : vector<16x128xf32>
    %1409 = arith.addf %1380, %1408 : vector<16x128xf32>
    %1410 = vector.broadcast %13 : f32 to vector<16x128xf32>
    %1411 = arith.mulf %1410, %1400 : vector<16x128xf32>
    %1412 = arith.addf %1383, %1411 : vector<16x128xf32>
    %1413 = vector.broadcast %40 : f32 to vector<16x128xf32>
    %1414 = arith.mulf %1413, %1400 : vector<16x128xf32>
    %1415 = arith.addf %1386, %1414 : vector<16x128xf32>
    %1416 = vector.broadcast %67 : f32 to vector<16x128xf32>
    %1417 = arith.mulf %1416, %1400 : vector<16x128xf32>
    %1418 = arith.addf %1389, %1417 : vector<16x128xf32>
    %1419 = vector.broadcast %14 : f32 to vector<16x128xf32>
    %1420 = arith.mulf %1419, %1400 : vector<16x128xf32>
    %1421 = arith.addf %1392, %1420 : vector<16x128xf32>
    %1422 = vector.broadcast %41 : f32 to vector<16x128xf32>
    %1423 = arith.mulf %1422, %1400 : vector<16x128xf32>
    %1424 = arith.addf %1395, %1423 : vector<16x128xf32>
    %1425 = vector.broadcast %68 : f32 to vector<16x128xf32>
    %1426 = arith.mulf %1425, %1400 : vector<16x128xf32>
    %1427 = arith.addf %1398, %1426 : vector<16x128xf32>
    %c1_217 = arith.constant 1 : index
    %c65_218 = arith.constant 65 : index
    %c0_219 = arith.constant 0 : index
    %1428 = vector.load %arg0[%c1_217, %c65_218, %c0_219] : memref<3x128x128xf32, #tpu.memory_space<vmem>>, vector<1x16x128xf32>
    %1429 = vector.shape_cast %1428 : vector<1x16x128xf32> to vector<16x128xf32>
    %1430 = vector.broadcast %15 : f32 to vector<16x128xf32>
    %1431 = arith.mulf %1430, %1429 : vector<16x128xf32>
    %1432 = arith.addf %1403, %1431 : vector<16x128xf32>
    %1433 = vector.broadcast %42 : f32 to vector<16x128xf32>
    %1434 = arith.mulf %1433, %1429 : vector<16x128xf32>
    %1435 = arith.addf %1406, %1434 : vector<16x128xf32>
    %1436 = vector.broadcast %69 : f32 to vector<16x128xf32>
    %1437 = arith.mulf %1436, %1429 : vector<16x128xf32>
    %1438 = arith.addf %1409, %1437 : vector<16x128xf32>
    %1439 = vector.broadcast %16 : f32 to vector<16x128xf32>
    %1440 = arith.mulf %1439, %1429 : vector<16x128xf32>
    %1441 = arith.addf %1412, %1440 : vector<16x128xf32>
    %1442 = vector.broadcast %43 : f32 to vector<16x128xf32>
    %1443 = arith.mulf %1442, %1429 : vector<16x128xf32>
    %1444 = arith.addf %1415, %1443 : vector<16x128xf32>
    %1445 = vector.broadcast %70 : f32 to vector<16x128xf32>
    %1446 = arith.mulf %1445, %1429 : vector<16x128xf32>
    %1447 = arith.addf %1418, %1446 : vector<16x128xf32>
    %1448 = vector.broadcast %17 : f32 to vector<16x128xf32>
    %1449 = arith.mulf %1448, %1429 : vector<16x128xf32>
    %1450 = arith.addf %1421, %1449 : vector<16x128xf32>
    %1451 = vector.broadcast %44 : f32 to vector<16x128xf32>
    %1452 = arith.mulf %1451, %1429 : vector<16x128xf32>
    %1453 = arith.addf %1424, %1452 : vector<16x128xf32>
    %1454 = vector.broadcast %71 : f32 to vector<16x128xf32>
    %1455 = arith.mulf %1454, %1429 : vector<16x128xf32>
    %1456 = arith.addf %1427, %1455 : vector<16x128xf32>
    %c2_220 = arith.constant 2 : index
    %c63_221 = arith.constant 63 : index
    %c0_222 = arith.constant 0 : index
    %1457 = vector.load %arg0[%c2_220, %c63_221, %c0_222] : memref<3x128x128xf32, #tpu.memory_space<vmem>>, vector<1x16x128xf32>
    %1458 = vector.shape_cast %1457 : vector<1x16x128xf32> to vector<16x128xf32>
    %1459 = vector.broadcast %18 : f32 to vector<16x128xf32>
    %1460 = arith.mulf %1459, %1458 : vector<16x128xf32>
    %1461 = arith.addf %1432, %1460 : vector<16x128xf32>
    %1462 = vector.broadcast %45 : f32 to vector<16x128xf32>
    %1463 = arith.mulf %1462, %1458 : vector<16x128xf32>
    %1464 = arith.addf %1435, %1463 : vector<16x128xf32>
    %1465 = vector.broadcast %72 : f32 to vector<16x128xf32>
    %1466 = arith.mulf %1465, %1458 : vector<16x128xf32>
    %1467 = arith.addf %1438, %1466 : vector<16x128xf32>
    %1468 = vector.broadcast %19 : f32 to vector<16x128xf32>
    %1469 = arith.mulf %1468, %1458 : vector<16x128xf32>
    %1470 = arith.addf %1441, %1469 : vector<16x128xf32>
    %1471 = vector.broadcast %46 : f32 to vector<16x128xf32>
    %1472 = arith.mulf %1471, %1458 : vector<16x128xf32>
    %1473 = arith.addf %1444, %1472 : vector<16x128xf32>
    %1474 = vector.broadcast %73 : f32 to vector<16x128xf32>
    %1475 = arith.mulf %1474, %1458 : vector<16x128xf32>
    %1476 = arith.addf %1447, %1475 : vector<16x128xf32>
    %1477 = vector.broadcast %20 : f32 to vector<16x128xf32>
    %1478 = arith.mulf %1477, %1458 : vector<16x128xf32>
    %1479 = arith.addf %1450, %1478 : vector<16x128xf32>
    %1480 = vector.broadcast %47 : f32 to vector<16x128xf32>
    %1481 = arith.mulf %1480, %1458 : vector<16x128xf32>
    %1482 = arith.addf %1453, %1481 : vector<16x128xf32>
    %1483 = vector.broadcast %74 : f32 to vector<16x128xf32>
    %1484 = arith.mulf %1483, %1458 : vector<16x128xf32>
    %1485 = arith.addf %1456, %1484 : vector<16x128xf32>
    %c2_223 = arith.constant 2 : index
    %c64_224 = arith.constant 64 : index
    %c0_225 = arith.constant 0 : index
    %1486 = vector.load %arg0[%c2_223, %c64_224, %c0_225] : memref<3x128x128xf32, #tpu.memory_space<vmem>>, vector<1x16x128xf32>
    %1487 = vector.shape_cast %1486 : vector<1x16x128xf32> to vector<16x128xf32>
    %1488 = vector.broadcast %21 : f32 to vector<16x128xf32>
    %1489 = arith.mulf %1488, %1487 : vector<16x128xf32>
    %1490 = arith.addf %1461, %1489 : vector<16x128xf32>
    %1491 = vector.broadcast %48 : f32 to vector<16x128xf32>
    %1492 = arith.mulf %1491, %1487 : vector<16x128xf32>
    %1493 = arith.addf %1464, %1492 : vector<16x128xf32>
    %1494 = vector.broadcast %75 : f32 to vector<16x128xf32>
    %1495 = arith.mulf %1494, %1487 : vector<16x128xf32>
    %1496 = arith.addf %1467, %1495 : vector<16x128xf32>
    %1497 = vector.broadcast %22 : f32 to vector<16x128xf32>
    %1498 = arith.mulf %1497, %1487 : vector<16x128xf32>
    %1499 = arith.addf %1470, %1498 : vector<16x128xf32>
    %1500 = vector.broadcast %49 : f32 to vector<16x128xf32>
    %1501 = arith.mulf %1500, %1487 : vector<16x128xf32>
    %1502 = arith.addf %1473, %1501 : vector<16x128xf32>
    %1503 = vector.broadcast %76 : f32 to vector<16x128xf32>
    %1504 = arith.mulf %1503, %1487 : vector<16x128xf32>
    %1505 = arith.addf %1476, %1504 : vector<16x128xf32>
    %1506 = vector.broadcast %23 : f32 to vector<16x128xf32>
    %1507 = arith.mulf %1506, %1487 : vector<16x128xf32>
    %1508 = arith.addf %1479, %1507 : vector<16x128xf32>
    %1509 = vector.broadcast %50 : f32 to vector<16x128xf32>
    %1510 = arith.mulf %1509, %1487 : vector<16x128xf32>
    %1511 = arith.addf %1482, %1510 : vector<16x128xf32>
    %1512 = vector.broadcast %77 : f32 to vector<16x128xf32>
    %1513 = arith.mulf %1512, %1487 : vector<16x128xf32>
    %1514 = arith.addf %1485, %1513 : vector<16x128xf32>
    %c2_226 = arith.constant 2 : index
    %c65_227 = arith.constant 65 : index
    %c0_228 = arith.constant 0 : index
    %1515 = vector.load %arg0[%c2_226, %c65_227, %c0_228] : memref<3x128x128xf32, #tpu.memory_space<vmem>>, vector<1x16x128xf32>
    %1516 = vector.shape_cast %1515 : vector<1x16x128xf32> to vector<16x128xf32>
    %1517 = vector.broadcast %24 : f32 to vector<16x128xf32>
    %1518 = arith.mulf %1517, %1516 : vector<16x128xf32>
    %1519 = arith.addf %1490, %1518 : vector<16x128xf32>
    %1520 = vector.broadcast %51 : f32 to vector<16x128xf32>
    %1521 = arith.mulf %1520, %1516 : vector<16x128xf32>
    %1522 = arith.addf %1493, %1521 : vector<16x128xf32>
    %1523 = vector.broadcast %78 : f32 to vector<16x128xf32>
    %1524 = arith.mulf %1523, %1516 : vector<16x128xf32>
    %1525 = arith.addf %1496, %1524 : vector<16x128xf32>
    %1526 = vector.broadcast %25 : f32 to vector<16x128xf32>
    %1527 = arith.mulf %1526, %1516 : vector<16x128xf32>
    %1528 = arith.addf %1499, %1527 : vector<16x128xf32>
    %1529 = vector.broadcast %52 : f32 to vector<16x128xf32>
    %1530 = arith.mulf %1529, %1516 : vector<16x128xf32>
    %1531 = arith.addf %1502, %1530 : vector<16x128xf32>
    %1532 = vector.broadcast %79 : f32 to vector<16x128xf32>
    %1533 = arith.mulf %1532, %1516 : vector<16x128xf32>
    %1534 = arith.addf %1505, %1533 : vector<16x128xf32>
    %1535 = vector.broadcast %26 : f32 to vector<16x128xf32>
    %1536 = arith.mulf %1535, %1516 : vector<16x128xf32>
    %1537 = arith.addf %1508, %1536 : vector<16x128xf32>
    %1538 = vector.broadcast %53 : f32 to vector<16x128xf32>
    %1539 = arith.mulf %1538, %1516 : vector<16x128xf32>
    %1540 = arith.addf %1511, %1539 : vector<16x128xf32>
    %1541 = vector.broadcast %80 : f32 to vector<16x128xf32>
    %1542 = arith.mulf %1541, %1516 : vector<16x128xf32>
    %1543 = arith.addf %1514, %1542 : vector<16x128xf32>
    %c1_i32_229 = arith.constant 1 : i32
    %1544 = tpu.dynamic_rotate %1519 by %c1_i32_229 dim 1 : vector<16x128xf32>, i32 -> vector<16x128xf32>
    %cst_230 = arith.constant 0.000000e+00 : f32
    %1545 = vector.broadcast %cst_230 : f32 to vector<16x128xf32>
    %1546 = arith.select %87, %1544, %1545 : vector<16x128xi1>, vector<16x128xf32>
    %1547 = arith.addf %1528, %1546 : vector<16x128xf32>
    %c127_i32_231 = arith.constant 127 : i32
    %1548 = tpu.dynamic_rotate %1537 by %c127_i32_231 dim 1 : vector<16x128xf32>, i32 -> vector<16x128xf32>
    %cst_232 = arith.constant 0.000000e+00 : f32
    %1549 = vector.broadcast %cst_232 : f32 to vector<16x128xf32>
    %1550 = arith.select %89, %1548, %1549 : vector<16x128xi1>, vector<16x128xf32>
    %1551 = arith.addf %1547, %1550 : vector<16x128xf32>
    %c0_233 = arith.constant 0 : index
    %c64_234 = arith.constant 64 : index
    %c0_235 = arith.constant 0 : index
    %1552 = vector.load %arg3[%c0_233, %c64_234, %c0_235] : memref<3x128x128xf32, #tpu.memory_space<vmem>>, vector<1x16x128xf32>
    %1553 = vector.shape_cast %1552 : vector<1x16x128xf32> to vector<16x128xf32>
    %1554 = vector.shape_cast %1551 : vector<16x128xf32> to vector<1x16x128xf32>
    tpu.vector_store %arg3[%c0_233, %c64_234, %c0_235], %1554 {strides = array<i32>} : memref<3x128x128xf32, #tpu.memory_space<vmem>>, vector<1x16x128xf32>,
    %c1_i32_236 = arith.constant 1 : i32
    %1555 = tpu.dynamic_rotate %1522 by %c1_i32_236 dim 1 : vector<16x128xf32>, i32 -> vector<16x128xf32>
    %cst_237 = arith.constant 0.000000e+00 : f32
    %1556 = vector.broadcast %cst_237 : f32 to vector<16x128xf32>
    %1557 = arith.select %87, %1555, %1556 : vector<16x128xi1>, vector<16x128xf32>
    %1558 = arith.addf %1531, %1557 : vector<16x128xf32>
    %c127_i32_238 = arith.constant 127 : i32
    %1559 = tpu.dynamic_rotate %1540 by %c127_i32_238 dim 1 : vector<16x128xf32>, i32 -> vector<16x128xf32>
    %cst_239 = arith.constant 0.000000e+00 : f32
    %1560 = vector.broadcast %cst_239 : f32 to vector<16x128xf32>
    %1561 = arith.select %89, %1559, %1560 : vector<16x128xi1>, vector<16x128xf32>
    %1562 = arith.addf %1558, %1561 : vector<16x128xf32>
    %c1_240 = arith.constant 1 : index
    %c64_241 = arith.constant 64 : index
    %c0_242 = arith.constant 0 : index
    %1563 = vector.load %arg3[%c1_240, %c64_241, %c0_242] : memref<3x128x128xf32, #tpu.memory_space<vmem>>, vector<1x16x128xf32>
    %1564 = vector.shape_cast %1563 : vector<1x16x128xf32> to vector<16x128xf32>
    %1565 = vector.shape_cast %1562 : vector<16x128xf32> to vector<1x16x128xf32>
    tpu.vector_store %arg3[%c1_240, %c64_241, %c0_242], %1565 {strides = array<i32>} : memref<3x128x128xf32, #tpu.memory_space<vmem>>, vector<1x16x128xf32>,
    %c1_i32_243 = arith.constant 1 : i32
    %1566 = tpu.dynamic_rotate %1525 by %c1_i32_243 dim 1 : vector<16x128xf32>, i32 -> vector<16x128xf32>
    %cst_244 = arith.constant 0.000000e+00 : f32
    %1567 = vector.broadcast %cst_244 : f32 to vector<16x128xf32>
    %1568 = arith.select %87, %1566, %1567 : vector<16x128xi1>, vector<16x128xf32>
    %1569 = arith.addf %1534, %1568 : vector<16x128xf32>
    %c127_i32_245 = arith.constant 127 : i32
    %1570 = tpu.dynamic_rotate %1543 by %c127_i32_245 dim 1 : vector<16x128xf32>, i32 -> vector<16x128xf32>
    %cst_246 = arith.constant 0.000000e+00 : f32
    %1571 = vector.broadcast %cst_246 : f32 to vector<16x128xf32>
    %1572 = arith.select %89, %1570, %1571 : vector<16x128xi1>, vector<16x128xf32>
    %1573 = arith.addf %1569, %1572 : vector<16x128xf32>
    %c2_247 = arith.constant 2 : index
    %c64_248 = arith.constant 64 : index
    %c0_249 = arith.constant 0 : index
    %1574 = vector.load %arg3[%c2_247, %c64_248, %c0_249] : memref<3x128x128xf32, #tpu.memory_space<vmem>>, vector<1x16x128xf32>
    %1575 = vector.shape_cast %1574 : vector<1x16x128xf32> to vector<16x128xf32>
    %1576 = vector.shape_cast %1573 : vector<16x128xf32> to vector<1x16x128xf32>
    tpu.vector_store %arg3[%c2_247, %c64_248, %c0_249], %1576 {strides = array<i32>} : memref<3x128x128xf32, #tpu.memory_space<vmem>>, vector<1x16x128xf32>,
    %c0_250 = arith.constant 0 : index
    %c79_251 = arith.constant 79 : index
    %c0_252 = arith.constant 0 : index
    %1577 = vector.load %arg0[%c0_250, %c79_251, %c0_252] : memref<3x128x128xf32, #tpu.memory_space<vmem>>, vector<1x16x128xf32>
    %1578 = vector.shape_cast %1577 : vector<1x16x128xf32> to vector<16x128xf32>
    %1579 = vector.broadcast %0 : f32 to vector<16x128xf32>
    %1580 = arith.mulf %1579, %1578 : vector<16x128xf32>
    %1581 = arith.addf %94, %1580 : vector<16x128xf32>
    %1582 = vector.broadcast %27 : f32 to vector<16x128xf32>
    %1583 = arith.mulf %1582, %1578 : vector<16x128xf32>
    %1584 = arith.addf %94, %1583 : vector<16x128xf32>
    %1585 = vector.broadcast %54 : f32 to vector<16x128xf32>
    %1586 = arith.mulf %1585, %1578 : vector<16x128xf32>
    %1587 = arith.addf %94, %1586 : vector<16x128xf32>
    %1588 = vector.broadcast %1 : f32 to vector<16x128xf32>
    %1589 = arith.mulf %1588, %1578 : vector<16x128xf32>
    %1590 = arith.addf %95, %1589 : vector<16x128xf32>
    %1591 = vector.broadcast %28 : f32 to vector<16x128xf32>
    %1592 = arith.mulf %1591, %1578 : vector<16x128xf32>
    %1593 = arith.addf %96, %1592 : vector<16x128xf32>
    %1594 = vector.broadcast %55 : f32 to vector<16x128xf32>
    %1595 = arith.mulf %1594, %1578 : vector<16x128xf32>
    %1596 = arith.addf %97, %1595 : vector<16x128xf32>
    %1597 = vector.broadcast %2 : f32 to vector<16x128xf32>
    %1598 = arith.mulf %1597, %1578 : vector<16x128xf32>
    %1599 = arith.addf %94, %1598 : vector<16x128xf32>
    %1600 = vector.broadcast %29 : f32 to vector<16x128xf32>
    %1601 = arith.mulf %1600, %1578 : vector<16x128xf32>
    %1602 = arith.addf %94, %1601 : vector<16x128xf32>
    %1603 = vector.broadcast %56 : f32 to vector<16x128xf32>
    %1604 = arith.mulf %1603, %1578 : vector<16x128xf32>
    %1605 = arith.addf %94, %1604 : vector<16x128xf32>
    %c0_253 = arith.constant 0 : index
    %c80_254 = arith.constant 80 : index
    %c0_255 = arith.constant 0 : index
    %1606 = vector.load %arg0[%c0_253, %c80_254, %c0_255] : memref<3x128x128xf32, #tpu.memory_space<vmem>>, vector<1x16x128xf32>
    %1607 = vector.shape_cast %1606 : vector<1x16x128xf32> to vector<16x128xf32>
    %1608 = vector.broadcast %3 : f32 to vector<16x128xf32>
    %1609 = arith.mulf %1608, %1607 : vector<16x128xf32>
    %1610 = arith.addf %1581, %1609 : vector<16x128xf32>
    %1611 = vector.broadcast %30 : f32 to vector<16x128xf32>
    %1612 = arith.mulf %1611, %1607 : vector<16x128xf32>
    %1613 = arith.addf %1584, %1612 : vector<16x128xf32>
    %1614 = vector.broadcast %57 : f32 to vector<16x128xf32>
    %1615 = arith.mulf %1614, %1607 : vector<16x128xf32>
    %1616 = arith.addf %1587, %1615 : vector<16x128xf32>
    %1617 = vector.broadcast %4 : f32 to vector<16x128xf32>
    %1618 = arith.mulf %1617, %1607 : vector<16x128xf32>
    %1619 = arith.addf %1590, %1618 : vector<16x128xf32>
    %1620 = vector.broadcast %31 : f32 to vector<16x128xf32>
    %1621 = arith.mulf %1620, %1607 : vector<16x128xf32>
    %1622 = arith.addf %1593, %1621 : vector<16x128xf32>
    %1623 = vector.broadcast %58 : f32 to vector<16x128xf32>
    %1624 = arith.mulf %1623, %1607 : vector<16x128xf32>
    %1625 = arith.addf %1596, %1624 : vector<16x128xf32>
    %1626 = vector.broadcast %5 : f32 to vector<16x128xf32>
    %1627 = arith.mulf %1626, %1607 : vector<16x128xf32>
    %1628 = arith.addf %1599, %1627 : vector<16x128xf32>
    %1629 = vector.broadcast %32 : f32 to vector<16x128xf32>
    %1630 = arith.mulf %1629, %1607 : vector<16x128xf32>
    %1631 = arith.addf %1602, %1630 : vector<16x128xf32>
    %1632 = vector.broadcast %59 : f32 to vector<16x128xf32>
    %1633 = arith.mulf %1632, %1607 : vector<16x128xf32>
    %1634 = arith.addf %1605, %1633 : vector<16x128xf32>
    %c0_256 = arith.constant 0 : index
    %c81 = arith.constant 81 : index
    %c0_257 = arith.constant 0 : index
    %1635 = vector.load %arg0[%c0_256, %c81, %c0_257] : memref<3x128x128xf32, #tpu.memory_space<vmem>>, vector<1x16x128xf32>
    %1636 = vector.shape_cast %1635 : vector<1x16x128xf32> to vector<16x128xf32>
    %1637 = vector.broadcast %6 : f32 to vector<16x128xf32>
    %1638 = arith.mulf %1637, %1636 : vector<16x128xf32>
    %1639 = arith.addf %1610, %1638 : vector<16x128xf32>
    %1640 = vector.broadcast %33 : f32 to vector<16x128xf32>
    %1641 = arith.mulf %1640, %1636 : vector<16x128xf32>
    %1642 = arith.addf %1613, %1641 : vector<16x128xf32>
    %1643 = vector.broadcast %60 : f32 to vector<16x128xf32>
    %1644 = arith.mulf %1643, %1636 : vector<16x128xf32>
    %1645 = arith.addf %1616, %1644 : vector<16x128xf32>
    %1646 = vector.broadcast %7 : f32 to vector<16x128xf32>
    %1647 = arith.mulf %1646, %1636 : vector<16x128xf32>
    %1648 = arith.addf %1619, %1647 : vector<16x128xf32>
    %1649 = vector.broadcast %34 : f32 to vector<16x128xf32>
    %1650 = arith.mulf %1649, %1636 : vector<16x128xf32>
    %1651 = arith.addf %1622, %1650 : vector<16x128xf32>
    %1652 = vector.broadcast %61 : f32 to vector<16x128xf32>
    %1653 = arith.mulf %1652, %1636 : vector<16x128xf32>
    %1654 = arith.addf %1625, %1653 : vector<16x128xf32>
    %1655 = vector.broadcast %8 : f32 to vector<16x128xf32>
    %1656 = arith.mulf %1655, %1636 : vector<16x128xf32>
    %1657 = arith.addf %1628, %1656 : vector<16x128xf32>
    %1658 = vector.broadcast %35 : f32 to vector<16x128xf32>
    %1659 = arith.mulf %1658, %1636 : vector<16x128xf32>
    %1660 = arith.addf %1631, %1659 : vector<16x128xf32>
    %1661 = vector.broadcast %62 : f32 to vector<16x128xf32>
    %1662 = arith.mulf %1661, %1636 : vector<16x128xf32>
    %1663 = arith.addf %1634, %1662 : vector<16x128xf32>
    %c1_258 = arith.constant 1 : index
    %c79_259 = arith.constant 79 : index
    %c0_260 = arith.constant 0 : index
    %1664 = vector.load %arg0[%c1_258, %c79_259, %c0_260] : memref<3x128x128xf32, #tpu.memory_space<vmem>>, vector<1x16x128xf32>
    %1665 = vector.shape_cast %1664 : vector<1x16x128xf32> to vector<16x128xf32>
    %1666 = vector.broadcast %9 : f32 to vector<16x128xf32>
    %1667 = arith.mulf %1666, %1665 : vector<16x128xf32>
    %1668 = arith.addf %1639, %1667 : vector<16x128xf32>
    %1669 = vector.broadcast %36 : f32 to vector<16x128xf32>
    %1670 = arith.mulf %1669, %1665 : vector<16x128xf32>
    %1671 = arith.addf %1642, %1670 : vector<16x128xf32>
    %1672 = vector.broadcast %63 : f32 to vector<16x128xf32>
    %1673 = arith.mulf %1672, %1665 : vector<16x128xf32>
    %1674 = arith.addf %1645, %1673 : vector<16x128xf32>
    %1675 = vector.broadcast %10 : f32 to vector<16x128xf32>
    %1676 = arith.mulf %1675, %1665 : vector<16x128xf32>
    %1677 = arith.addf %1648, %1676 : vector<16x128xf32>
    %1678 = vector.broadcast %37 : f32 to vector<16x128xf32>
    %1679 = arith.mulf %1678, %1665 : vector<16x128xf32>
    %1680 = arith.addf %1651, %1679 : vector<16x128xf32>
    %1681 = vector.broadcast %64 : f32 to vector<16x128xf32>
    %1682 = arith.mulf %1681, %1665 : vector<16x128xf32>
    %1683 = arith.addf %1654, %1682 : vector<16x128xf32>
    %1684 = vector.broadcast %11 : f32 to vector<16x128xf32>
    %1685 = arith.mulf %1684, %1665 : vector<16x128xf32>
    %1686 = arith.addf %1657, %1685 : vector<16x128xf32>
    %1687 = vector.broadcast %38 : f32 to vector<16x128xf32>
    %1688 = arith.mulf %1687, %1665 : vector<16x128xf32>
    %1689 = arith.addf %1660, %1688 : vector<16x128xf32>
    %1690 = vector.broadcast %65 : f32 to vector<16x128xf32>
    %1691 = arith.mulf %1690, %1665 : vector<16x128xf32>
    %1692 = arith.addf %1663, %1691 : vector<16x128xf32>
    %c1_261 = arith.constant 1 : index
    %c80_262 = arith.constant 80 : index
    %c0_263 = arith.constant 0 : index
    %1693 = vector.load %arg0[%c1_261, %c80_262, %c0_263] : memref<3x128x128xf32, #tpu.memory_space<vmem>>, vector<1x16x128xf32>
    %1694 = vector.shape_cast %1693 : vector<1x16x128xf32> to vector<16x128xf32>
    %1695 = vector.broadcast %12 : f32 to vector<16x128xf32>
    %1696 = arith.mulf %1695, %1694 : vector<16x128xf32>
    %1697 = arith.addf %1668, %1696 : vector<16x128xf32>
    %1698 = vector.broadcast %39 : f32 to vector<16x128xf32>
    %1699 = arith.mulf %1698, %1694 : vector<16x128xf32>
    %1700 = arith.addf %1671, %1699 : vector<16x128xf32>
    %1701 = vector.broadcast %66 : f32 to vector<16x128xf32>
    %1702 = arith.mulf %1701, %1694 : vector<16x128xf32>
    %1703 = arith.addf %1674, %1702 : vector<16x128xf32>
    %1704 = vector.broadcast %13 : f32 to vector<16x128xf32>
    %1705 = arith.mulf %1704, %1694 : vector<16x128xf32>
    %1706 = arith.addf %1677, %1705 : vector<16x128xf32>
    %1707 = vector.broadcast %40 : f32 to vector<16x128xf32>
    %1708 = arith.mulf %1707, %1694 : vector<16x128xf32>
    %1709 = arith.addf %1680, %1708 : vector<16x128xf32>
    %1710 = vector.broadcast %67 : f32 to vector<16x128xf32>
    %1711 = arith.mulf %1710, %1694 : vector<16x128xf32>
    %1712 = arith.addf %1683, %1711 : vector<16x128xf32>
    %1713 = vector.broadcast %14 : f32 to vector<16x128xf32>
    %1714 = arith.mulf %1713, %1694 : vector<16x128xf32>
    %1715 = arith.addf %1686, %1714 : vector<16x128xf32>
    %1716 = vector.broadcast %41 : f32 to vector<16x128xf32>
    %1717 = arith.mulf %1716, %1694 : vector<16x128xf32>
    %1718 = arith.addf %1689, %1717 : vector<16x128xf32>
    %1719 = vector.broadcast %68 : f32 to vector<16x128xf32>
    %1720 = arith.mulf %1719, %1694 : vector<16x128xf32>
    %1721 = arith.addf %1692, %1720 : vector<16x128xf32>
    %c1_264 = arith.constant 1 : index
    %c81_265 = arith.constant 81 : index
    %c0_266 = arith.constant 0 : index
    %1722 = vector.load %arg0[%c1_264, %c81_265, %c0_266] : memref<3x128x128xf32, #tpu.memory_space<vmem>>, vector<1x16x128xf32>
    %1723 = vector.shape_cast %1722 : vector<1x16x128xf32> to vector<16x128xf32>
    %1724 = vector.broadcast %15 : f32 to vector<16x128xf32>
    %1725 = arith.mulf %1724, %1723 : vector<16x128xf32>
    %1726 = arith.addf %1697, %1725 : vector<16x128xf32>
    %1727 = vector.broadcast %42 : f32 to vector<16x128xf32>
    %1728 = arith.mulf %1727, %1723 : vector<16x128xf32>
    %1729 = arith.addf %1700, %1728 : vector<16x128xf32>
    %1730 = vector.broadcast %69 : f32 to vector<16x128xf32>
    %1731 = arith.mulf %1730, %1723 : vector<16x128xf32>
    %1732 = arith.addf %1703, %1731 : vector<16x128xf32>
    %1733 = vector.broadcast %16 : f32 to vector<16x128xf32>
    %1734 = arith.mulf %1733, %1723 : vector<16x128xf32>
    %1735 = arith.addf %1706, %1734 : vector<16x128xf32>
    %1736 = vector.broadcast %43 : f32 to vector<16x128xf32>
    %1737 = arith.mulf %1736, %1723 : vector<16x128xf32>
    %1738 = arith.addf %1709, %1737 : vector<16x128xf32>
    %1739 = vector.broadcast %70 : f32 to vector<16x128xf32>
    %1740 = arith.mulf %1739, %1723 : vector<16x128xf32>
    %1741 = arith.addf %1712, %1740 : vector<16x128xf32>
    %1742 = vector.broadcast %17 : f32 to vector<16x128xf32>
    %1743 = arith.mulf %1742, %1723 : vector<16x128xf32>
    %1744 = arith.addf %1715, %1743 : vector<16x128xf32>
    %1745 = vector.broadcast %44 : f32 to vector<16x128xf32>
    %1746 = arith.mulf %1745, %1723 : vector<16x128xf32>
    %1747 = arith.addf %1718, %1746 : vector<16x128xf32>
    %1748 = vector.broadcast %71 : f32 to vector<16x128xf32>
    %1749 = arith.mulf %1748, %1723 : vector<16x128xf32>
    %1750 = arith.addf %1721, %1749 : vector<16x128xf32>
    %c2_267 = arith.constant 2 : index
    %c79_268 = arith.constant 79 : index
    %c0_269 = arith.constant 0 : index
    %1751 = vector.load %arg0[%c2_267, %c79_268, %c0_269] : memref<3x128x128xf32, #tpu.memory_space<vmem>>, vector<1x16x128xf32>
    %1752 = vector.shape_cast %1751 : vector<1x16x128xf32> to vector<16x128xf32>
    %1753 = vector.broadcast %18 : f32 to vector<16x128xf32>
    %1754 = arith.mulf %1753, %1752 : vector<16x128xf32>
    %1755 = arith.addf %1726, %1754 : vector<16x128xf32>
    %1756 = vector.broadcast %45 : f32 to vector<16x128xf32>
    %1757 = arith.mulf %1756, %1752 : vector<16x128xf32>
    %1758 = arith.addf %1729, %1757 : vector<16x128xf32>
    %1759 = vector.broadcast %72 : f32 to vector<16x128xf32>
    %1760 = arith.mulf %1759, %1752 : vector<16x128xf32>
    %1761 = arith.addf %1732, %1760 : vector<16x128xf32>
    %1762 = vector.broadcast %19 : f32 to vector<16x128xf32>
    %1763 = arith.mulf %1762, %1752 : vector<16x128xf32>
    %1764 = arith.addf %1735, %1763 : vector<16x128xf32>
    %1765 = vector.broadcast %46 : f32 to vector<16x128xf32>
    %1766 = arith.mulf %1765, %1752 : vector<16x128xf32>
    %1767 = arith.addf %1738, %1766 : vector<16x128xf32>
    %1768 = vector.broadcast %73 : f32 to vector<16x128xf32>
    %1769 = arith.mulf %1768, %1752 : vector<16x128xf32>
    %1770 = arith.addf %1741, %1769 : vector<16x128xf32>
    %1771 = vector.broadcast %20 : f32 to vector<16x128xf32>
    %1772 = arith.mulf %1771, %1752 : vector<16x128xf32>
    %1773 = arith.addf %1744, %1772 : vector<16x128xf32>
    %1774 = vector.broadcast %47 : f32 to vector<16x128xf32>
    %1775 = arith.mulf %1774, %1752 : vector<16x128xf32>
    %1776 = arith.addf %1747, %1775 : vector<16x128xf32>
    %1777 = vector.broadcast %74 : f32 to vector<16x128xf32>
    %1778 = arith.mulf %1777, %1752 : vector<16x128xf32>
    %1779 = arith.addf %1750, %1778 : vector<16x128xf32>
    %c2_270 = arith.constant 2 : index
    %c80_271 = arith.constant 80 : index
    %c0_272 = arith.constant 0 : index
    %1780 = vector.load %arg0[%c2_270, %c80_271, %c0_272] : memref<3x128x128xf32, #tpu.memory_space<vmem>>, vector<1x16x128xf32>
    %1781 = vector.shape_cast %1780 : vector<1x16x128xf32> to vector<16x128xf32>
    %1782 = vector.broadcast %21 : f32 to vector<16x128xf32>
    %1783 = arith.mulf %1782, %1781 : vector<16x128xf32>
    %1784 = arith.addf %1755, %1783 : vector<16x128xf32>
    %1785 = vector.broadcast %48 : f32 to vector<16x128xf32>
    %1786 = arith.mulf %1785, %1781 : vector<16x128xf32>
    %1787 = arith.addf %1758, %1786 : vector<16x128xf32>
    %1788 = vector.broadcast %75 : f32 to vector<16x128xf32>
    %1789 = arith.mulf %1788, %1781 : vector<16x128xf32>
    %1790 = arith.addf %1761, %1789 : vector<16x128xf32>
    %1791 = vector.broadcast %22 : f32 to vector<16x128xf32>
    %1792 = arith.mulf %1791, %1781 : vector<16x128xf32>
    %1793 = arith.addf %1764, %1792 : vector<16x128xf32>
    %1794 = vector.broadcast %49 : f32 to vector<16x128xf32>
    %1795 = arith.mulf %1794, %1781 : vector<16x128xf32>
    %1796 = arith.addf %1767, %1795 : vector<16x128xf32>
    %1797 = vector.broadcast %76 : f32 to vector<16x128xf32>
    %1798 = arith.mulf %1797, %1781 : vector<16x128xf32>
    %1799 = arith.addf %1770, %1798 : vector<16x128xf32>
    %1800 = vector.broadcast %23 : f32 to vector<16x128xf32>
    %1801 = arith.mulf %1800, %1781 : vector<16x128xf32>
    %1802 = arith.addf %1773, %1801 : vector<16x128xf32>
    %1803 = vector.broadcast %50 : f32 to vector<16x128xf32>
    %1804 = arith.mulf %1803, %1781 : vector<16x128xf32>
    %1805 = arith.addf %1776, %1804 : vector<16x128xf32>
    %1806 = vector.broadcast %77 : f32 to vector<16x128xf32>
    %1807 = arith.mulf %1806, %1781 : vector<16x128xf32>
    %1808 = arith.addf %1779, %1807 : vector<16x128xf32>
    %c2_273 = arith.constant 2 : index
    %c81_274 = arith.constant 81 : index
    %c0_275 = arith.constant 0 : index
    %1809 = vector.load %arg0[%c2_273, %c81_274, %c0_275] : memref<3x128x128xf32, #tpu.memory_space<vmem>>, vector<1x16x128xf32>
    %1810 = vector.shape_cast %1809 : vector<1x16x128xf32> to vector<16x128xf32>
    %1811 = vector.broadcast %24 : f32 to vector<16x128xf32>
    %1812 = arith.mulf %1811, %1810 : vector<16x128xf32>
    %1813 = arith.addf %1784, %1812 : vector<16x128xf32>
    %1814 = vector.broadcast %51 : f32 to vector<16x128xf32>
    %1815 = arith.mulf %1814, %1810 : vector<16x128xf32>
    %1816 = arith.addf %1787, %1815 : vector<16x128xf32>
    %1817 = vector.broadcast %78 : f32 to vector<16x128xf32>
    %1818 = arith.mulf %1817, %1810 : vector<16x128xf32>
    %1819 = arith.addf %1790, %1818 : vector<16x128xf32>
    %1820 = vector.broadcast %25 : f32 to vector<16x128xf32>
    %1821 = arith.mulf %1820, %1810 : vector<16x128xf32>
    %1822 = arith.addf %1793, %1821 : vector<16x128xf32>
    %1823 = vector.broadcast %52 : f32 to vector<16x128xf32>
    %1824 = arith.mulf %1823, %1810 : vector<16x128xf32>
    %1825 = arith.addf %1796, %1824 : vector<16x128xf32>
    %1826 = vector.broadcast %79 : f32 to vector<16x128xf32>
    %1827 = arith.mulf %1826, %1810 : vector<16x128xf32>
    %1828 = arith.addf %1799, %1827 : vector<16x128xf32>
    %1829 = vector.broadcast %26 : f32 to vector<16x128xf32>
    %1830 = arith.mulf %1829, %1810 : vector<16x128xf32>
    %1831 = arith.addf %1802, %1830 : vector<16x128xf32>
    %1832 = vector.broadcast %53 : f32 to vector<16x128xf32>
    %1833 = arith.mulf %1832, %1810 : vector<16x128xf32>
    %1834 = arith.addf %1805, %1833 : vector<16x128xf32>
    %1835 = vector.broadcast %80 : f32 to vector<16x128xf32>
    %1836 = arith.mulf %1835, %1810 : vector<16x128xf32>
    %1837 = arith.addf %1808, %1836 : vector<16x128xf32>
    %c1_i32_276 = arith.constant 1 : i32
    %1838 = tpu.dynamic_rotate %1813 by %c1_i32_276 dim 1 : vector<16x128xf32>, i32 -> vector<16x128xf32>
    %cst_277 = arith.constant 0.000000e+00 : f32
    %1839 = vector.broadcast %cst_277 : f32 to vector<16x128xf32>
    %1840 = arith.select %87, %1838, %1839 : vector<16x128xi1>, vector<16x128xf32>
    %1841 = arith.addf %1822, %1840 : vector<16x128xf32>
    %c127_i32_278 = arith.constant 127 : i32
    %1842 = tpu.dynamic_rotate %1831 by %c127_i32_278 dim 1 : vector<16x128xf32>, i32 -> vector<16x128xf32>
    %cst_279 = arith.constant 0.000000e+00 : f32
    %1843 = vector.broadcast %cst_279 : f32 to vector<16x128xf32>
    %1844 = arith.select %89, %1842, %1843 : vector<16x128xi1>, vector<16x128xf32>
    %1845 = arith.addf %1841, %1844 : vector<16x128xf32>
    %c0_280 = arith.constant 0 : index
    %c80_281 = arith.constant 80 : index
    %c0_282 = arith.constant 0 : index
    %1846 = vector.load %arg3[%c0_280, %c80_281, %c0_282] : memref<3x128x128xf32, #tpu.memory_space<vmem>>, vector<1x16x128xf32>
    %1847 = vector.shape_cast %1846 : vector<1x16x128xf32> to vector<16x128xf32>
    %1848 = vector.shape_cast %1845 : vector<16x128xf32> to vector<1x16x128xf32>
    tpu.vector_store %arg3[%c0_280, %c80_281, %c0_282], %1848 {strides = array<i32>} : memref<3x128x128xf32, #tpu.memory_space<vmem>>, vector<1x16x128xf32>,
    %c1_i32_283 = arith.constant 1 : i32
    %1849 = tpu.dynamic_rotate %1816 by %c1_i32_283 dim 1 : vector<16x128xf32>, i32 -> vector<16x128xf32>
    %cst_284 = arith.constant 0.000000e+00 : f32
    %1850 = vector.broadcast %cst_284 : f32 to vector<16x128xf32>
    %1851 = arith.select %87, %1849, %1850 : vector<16x128xi1>, vector<16x128xf32>
    %1852 = arith.addf %1825, %1851 : vector<16x128xf32>
    %c127_i32_285 = arith.constant 127 : i32
    %1853 = tpu.dynamic_rotate %1834 by %c127_i32_285 dim 1 : vector<16x128xf32>, i32 -> vector<16x128xf32>
    %cst_286 = arith.constant 0.000000e+00 : f32
    %1854 = vector.broadcast %cst_286 : f32 to vector<16x128xf32>
    %1855 = arith.select %89, %1853, %1854 : vector<16x128xi1>, vector<16x128xf32>
    %1856 = arith.addf %1852, %1855 : vector<16x128xf32>
    %c1_287 = arith.constant 1 : index
    %c80_288 = arith.constant 80 : index
    %c0_289 = arith.constant 0 : index
    %1857 = vector.load %arg3[%c1_287, %c80_288, %c0_289] : memref<3x128x128xf32, #tpu.memory_space<vmem>>, vector<1x16x128xf32>
    %1858 = vector.shape_cast %1857 : vector<1x16x128xf32> to vector<16x128xf32>
    %1859 = vector.shape_cast %1856 : vector<16x128xf32> to vector<1x16x128xf32>
    tpu.vector_store %arg3[%c1_287, %c80_288, %c0_289], %1859 {strides = array<i32>} : memref<3x128x128xf32, #tpu.memory_space<vmem>>, vector<1x16x128xf32>,
    %c1_i32_290 = arith.constant 1 : i32
    %1860 = tpu.dynamic_rotate %1819 by %c1_i32_290 dim 1 : vector<16x128xf32>, i32 -> vector<16x128xf32>
    %cst_291 = arith.constant 0.000000e+00 : f32
    %1861 = vector.broadcast %cst_291 : f32 to vector<16x128xf32>
    %1862 = arith.select %87, %1860, %1861 : vector<16x128xi1>, vector<16x128xf32>
    %1863 = arith.addf %1828, %1862 : vector<16x128xf32>
    %c127_i32_292 = arith.constant 127 : i32
    %1864 = tpu.dynamic_rotate %1837 by %c127_i32_292 dim 1 : vector<16x128xf32>, i32 -> vector<16x128xf32>
    %cst_293 = arith.constant 0.000000e+00 : f32
    %1865 = vector.broadcast %cst_293 : f32 to vector<16x128xf32>
    %1866 = arith.select %89, %1864, %1865 : vector<16x128xi1>, vector<16x128xf32>
    %1867 = arith.addf %1863, %1866 : vector<16x128xf32>
    %c2_294 = arith.constant 2 : index
    %c80_295 = arith.constant 80 : index
    %c0_296 = arith.constant 0 : index
    %1868 = vector.load %arg3[%c2_294, %c80_295, %c0_296] : memref<3x128x128xf32, #tpu.memory_space<vmem>>, vector<1x16x128xf32>
    %1869 = vector.shape_cast %1868 : vector<1x16x128xf32> to vector<16x128xf32>
    %1870 = vector.shape_cast %1867 : vector<16x128xf32> to vector<1x16x128xf32>
    tpu.vector_store %arg3[%c2_294, %c80_295, %c0_296], %1870 {strides = array<i32>} : memref<3x128x128xf32, #tpu.memory_space<vmem>>, vector<1x16x128xf32>,
    %c0_297 = arith.constant 0 : index
    %c95 = arith.constant 95 : index
    %c0_298 = arith.constant 0 : index
    %1871 = vector.load %arg0[%c0_297, %c95, %c0_298] : memref<3x128x128xf32, #tpu.memory_space<vmem>>, vector<1x16x128xf32>
    %1872 = vector.shape_cast %1871 : vector<1x16x128xf32> to vector<16x128xf32>
    %1873 = vector.broadcast %0 : f32 to vector<16x128xf32>
    %1874 = arith.mulf %1873, %1872 : vector<16x128xf32>
    %1875 = arith.addf %94, %1874 : vector<16x128xf32>
    %1876 = vector.broadcast %27 : f32 to vector<16x128xf32>
    %1877 = arith.mulf %1876, %1872 : vector<16x128xf32>
    %1878 = arith.addf %94, %1877 : vector<16x128xf32>
    %1879 = vector.broadcast %54 : f32 to vector<16x128xf32>
    %1880 = arith.mulf %1879, %1872 : vector<16x128xf32>
    %1881 = arith.addf %94, %1880 : vector<16x128xf32>
    %1882 = vector.broadcast %1 : f32 to vector<16x128xf32>
    %1883 = arith.mulf %1882, %1872 : vector<16x128xf32>
    %1884 = arith.addf %95, %1883 : vector<16x128xf32>
    %1885 = vector.broadcast %28 : f32 to vector<16x128xf32>
    %1886 = arith.mulf %1885, %1872 : vector<16x128xf32>
    %1887 = arith.addf %96, %1886 : vector<16x128xf32>
    %1888 = vector.broadcast %55 : f32 to vector<16x128xf32>
    %1889 = arith.mulf %1888, %1872 : vector<16x128xf32>
    %1890 = arith.addf %97, %1889 : vector<16x128xf32>
    %1891 = vector.broadcast %2 : f32 to vector<16x128xf32>
    %1892 = arith.mulf %1891, %1872 : vector<16x128xf32>
    %1893 = arith.addf %94, %1892 : vector<16x128xf32>
    %1894 = vector.broadcast %29 : f32 to vector<16x128xf32>
    %1895 = arith.mulf %1894, %1872 : vector<16x128xf32>
    %1896 = arith.addf %94, %1895 : vector<16x128xf32>
    %1897 = vector.broadcast %56 : f32 to vector<16x128xf32>
    %1898 = arith.mulf %1897, %1872 : vector<16x128xf32>
    %1899 = arith.addf %94, %1898 : vector<16x128xf32>
    %c0_299 = arith.constant 0 : index
    %c96 = arith.constant 96 : index
    %c0_300 = arith.constant 0 : index
    %1900 = vector.load %arg0[%c0_299, %c96, %c0_300] : memref<3x128x128xf32, #tpu.memory_space<vmem>>, vector<1x16x128xf32>
    %1901 = vector.shape_cast %1900 : vector<1x16x128xf32> to vector<16x128xf32>
    %1902 = vector.broadcast %3 : f32 to vector<16x128xf32>
    %1903 = arith.mulf %1902, %1901 : vector<16x128xf32>
    %1904 = arith.addf %1875, %1903 : vector<16x128xf32>
    %1905 = vector.broadcast %30 : f32 to vector<16x128xf32>
    %1906 = arith.mulf %1905, %1901 : vector<16x128xf32>
    %1907 = arith.addf %1878, %1906 : vector<16x128xf32>
    %1908 = vector.broadcast %57 : f32 to vector<16x128xf32>
    %1909 = arith.mulf %1908, %1901 : vector<16x128xf32>
    %1910 = arith.addf %1881, %1909 : vector<16x128xf32>
    %1911 = vector.broadcast %4 : f32 to vector<16x128xf32>
    %1912 = arith.mulf %1911, %1901 : vector<16x128xf32>
    %1913 = arith.addf %1884, %1912 : vector<16x128xf32>
    %1914 = vector.broadcast %31 : f32 to vector<16x128xf32>
    %1915 = arith.mulf %1914, %1901 : vector<16x128xf32>
    %1916 = arith.addf %1887, %1915 : vector<16x128xf32>
    %1917 = vector.broadcast %58 : f32 to vector<16x128xf32>
    %1918 = arith.mulf %1917, %1901 : vector<16x128xf32>
    %1919 = arith.addf %1890, %1918 : vector<16x128xf32>
    %1920 = vector.broadcast %5 : f32 to vector<16x128xf32>
    %1921 = arith.mulf %1920, %1901 : vector<16x128xf32>
    %1922 = arith.addf %1893, %1921 : vector<16x128xf32>
    %1923 = vector.broadcast %32 : f32 to vector<16x128xf32>
    %1924 = arith.mulf %1923, %1901 : vector<16x128xf32>
    %1925 = arith.addf %1896, %1924 : vector<16x128xf32>
    %1926 = vector.broadcast %59 : f32 to vector<16x128xf32>
    %1927 = arith.mulf %1926, %1901 : vector<16x128xf32>
    %1928 = arith.addf %1899, %1927 : vector<16x128xf32>
    %c0_301 = arith.constant 0 : index
    %c97 = arith.constant 97 : index
    %c0_302 = arith.constant 0 : index
    %1929 = vector.load %arg0[%c0_301, %c97, %c0_302] : memref<3x128x128xf32, #tpu.memory_space<vmem>>, vector<1x16x128xf32>
    %1930 = vector.shape_cast %1929 : vector<1x16x128xf32> to vector<16x128xf32>
    %1931 = vector.broadcast %6 : f32 to vector<16x128xf32>
    %1932 = arith.mulf %1931, %1930 : vector<16x128xf32>
    %1933 = arith.addf %1904, %1932 : vector<16x128xf32>
    %1934 = vector.broadcast %33 : f32 to vector<16x128xf32>
    %1935 = arith.mulf %1934, %1930 : vector<16x128xf32>
    %1936 = arith.addf %1907, %1935 : vector<16x128xf32>
    %1937 = vector.broadcast %60 : f32 to vector<16x128xf32>
    %1938 = arith.mulf %1937, %1930 : vector<16x128xf32>
    %1939 = arith.addf %1910, %1938 : vector<16x128xf32>
    %1940 = vector.broadcast %7 : f32 to vector<16x128xf32>
    %1941 = arith.mulf %1940, %1930 : vector<16x128xf32>
    %1942 = arith.addf %1913, %1941 : vector<16x128xf32>
    %1943 = vector.broadcast %34 : f32 to vector<16x128xf32>
    %1944 = arith.mulf %1943, %1930 : vector<16x128xf32>
    %1945 = arith.addf %1916, %1944 : vector<16x128xf32>
    %1946 = vector.broadcast %61 : f32 to vector<16x128xf32>
    %1947 = arith.mulf %1946, %1930 : vector<16x128xf32>
    %1948 = arith.addf %1919, %1947 : vector<16x128xf32>
    %1949 = vector.broadcast %8 : f32 to vector<16x128xf32>
    %1950 = arith.mulf %1949, %1930 : vector<16x128xf32>
    %1951 = arith.addf %1922, %1950 : vector<16x128xf32>
    %1952 = vector.broadcast %35 : f32 to vector<16x128xf32>
    %1953 = arith.mulf %1952, %1930 : vector<16x128xf32>
    %1954 = arith.addf %1925, %1953 : vector<16x128xf32>
    %1955 = vector.broadcast %62 : f32 to vector<16x128xf32>
    %1956 = arith.mulf %1955, %1930 : vector<16x128xf32>
    %1957 = arith.addf %1928, %1956 : vector<16x128xf32>
    %c1_303 = arith.constant 1 : index
    %c95_304 = arith.constant 95 : index
    %c0_305 = arith.constant 0 : index
    %1958 = vector.load %arg0[%c1_303, %c95_304, %c0_305] : memref<3x128x128xf32, #tpu.memory_space<vmem>>, vector<1x16x128xf32>
    %1959 = vector.shape_cast %1958 : vector<1x16x128xf32> to vector<16x128xf32>
    %1960 = vector.broadcast %9 : f32 to vector<16x128xf32>
    %1961 = arith.mulf %1960, %1959 : vector<16x128xf32>
    %1962 = arith.addf %1933, %1961 : vector<16x128xf32>
    %1963 = vector.broadcast %36 : f32 to vector<16x128xf32>
    %1964 = arith.mulf %1963, %1959 : vector<16x128xf32>
    %1965 = arith.addf %1936, %1964 : vector<16x128xf32>
    %1966 = vector.broadcast %63 : f32 to vector<16x128xf32>
    %1967 = arith.mulf %1966, %1959 : vector<16x128xf32>
    %1968 = arith.addf %1939, %1967 : vector<16x128xf32>
    %1969 = vector.broadcast %10 : f32 to vector<16x128xf32>
    %1970 = arith.mulf %1969, %1959 : vector<16x128xf32>
    %1971 = arith.addf %1942, %1970 : vector<16x128xf32>
    %1972 = vector.broadcast %37 : f32 to vector<16x128xf32>
    %1973 = arith.mulf %1972, %1959 : vector<16x128xf32>
    %1974 = arith.addf %1945, %1973 : vector<16x128xf32>
    %1975 = vector.broadcast %64 : f32 to vector<16x128xf32>
    %1976 = arith.mulf %1975, %1959 : vector<16x128xf32>
    %1977 = arith.addf %1948, %1976 : vector<16x128xf32>
    %1978 = vector.broadcast %11 : f32 to vector<16x128xf32>
    %1979 = arith.mulf %1978, %1959 : vector<16x128xf32>
    %1980 = arith.addf %1951, %1979 : vector<16x128xf32>
    %1981 = vector.broadcast %38 : f32 to vector<16x128xf32>
    %1982 = arith.mulf %1981, %1959 : vector<16x128xf32>
    %1983 = arith.addf %1954, %1982 : vector<16x128xf32>
    %1984 = vector.broadcast %65 : f32 to vector<16x128xf32>
    %1985 = arith.mulf %1984, %1959 : vector<16x128xf32>
    %1986 = arith.addf %1957, %1985 : vector<16x128xf32>
    %c1_306 = arith.constant 1 : index
    %c96_307 = arith.constant 96 : index
    %c0_308 = arith.constant 0 : index
    %1987 = vector.load %arg0[%c1_306, %c96_307, %c0_308] : memref<3x128x128xf32, #tpu.memory_space<vmem>>, vector<1x16x128xf32>
    %1988 = vector.shape_cast %1987 : vector<1x16x128xf32> to vector<16x128xf32>
    %1989 = vector.broadcast %12 : f32 to vector<16x128xf32>
    %1990 = arith.mulf %1989, %1988 : vector<16x128xf32>
    %1991 = arith.addf %1962, %1990 : vector<16x128xf32>
    %1992 = vector.broadcast %39 : f32 to vector<16x128xf32>
    %1993 = arith.mulf %1992, %1988 : vector<16x128xf32>
    %1994 = arith.addf %1965, %1993 : vector<16x128xf32>
    %1995 = vector.broadcast %66 : f32 to vector<16x128xf32>
    %1996 = arith.mulf %1995, %1988 : vector<16x128xf32>
    %1997 = arith.addf %1968, %1996 : vector<16x128xf32>
    %1998 = vector.broadcast %13 : f32 to vector<16x128xf32>
    %1999 = arith.mulf %1998, %1988 : vector<16x128xf32>
    %2000 = arith.addf %1971, %1999 : vector<16x128xf32>
    %2001 = vector.broadcast %40 : f32 to vector<16x128xf32>
    %2002 = arith.mulf %2001, %1988 : vector<16x128xf32>
    %2003 = arith.addf %1974, %2002 : vector<16x128xf32>
    %2004 = vector.broadcast %67 : f32 to vector<16x128xf32>
    %2005 = arith.mulf %2004, %1988 : vector<16x128xf32>
    %2006 = arith.addf %1977, %2005 : vector<16x128xf32>
    %2007 = vector.broadcast %14 : f32 to vector<16x128xf32>
    %2008 = arith.mulf %2007, %1988 : vector<16x128xf32>
    %2009 = arith.addf %1980, %2008 : vector<16x128xf32>
    %2010 = vector.broadcast %41 : f32 to vector<16x128xf32>
    %2011 = arith.mulf %2010, %1988 : vector<16x128xf32>
    %2012 = arith.addf %1983, %2011 : vector<16x128xf32>
    %2013 = vector.broadcast %68 : f32 to vector<16x128xf32>
    %2014 = arith.mulf %2013, %1988 : vector<16x128xf32>
    %2015 = arith.addf %1986, %2014 : vector<16x128xf32>
    %c1_309 = arith.constant 1 : index
    %c97_310 = arith.constant 97 : index
    %c0_311 = arith.constant 0 : index
    %2016 = vector.load %arg0[%c1_309, %c97_310, %c0_311] : memref<3x128x128xf32, #tpu.memory_space<vmem>>, vector<1x16x128xf32>
    %2017 = vector.shape_cast %2016 : vector<1x16x128xf32> to vector<16x128xf32>
    %2018 = vector.broadcast %15 : f32 to vector<16x128xf32>
    %2019 = arith.mulf %2018, %2017 : vector<16x128xf32>
    %2020 = arith.addf %1991, %2019 : vector<16x128xf32>
    %2021 = vector.broadcast %42 : f32 to vector<16x128xf32>
    %2022 = arith.mulf %2021, %2017 : vector<16x128xf32>
    %2023 = arith.addf %1994, %2022 : vector<16x128xf32>
    %2024 = vector.broadcast %69 : f32 to vector<16x128xf32>
    %2025 = arith.mulf %2024, %2017 : vector<16x128xf32>
    %2026 = arith.addf %1997, %2025 : vector<16x128xf32>
    %2027 = vector.broadcast %16 : f32 to vector<16x128xf32>
    %2028 = arith.mulf %2027, %2017 : vector<16x128xf32>
    %2029 = arith.addf %2000, %2028 : vector<16x128xf32>
    %2030 = vector.broadcast %43 : f32 to vector<16x128xf32>
    %2031 = arith.mulf %2030, %2017 : vector<16x128xf32>
    %2032 = arith.addf %2003, %2031 : vector<16x128xf32>
    %2033 = vector.broadcast %70 : f32 to vector<16x128xf32>
    %2034 = arith.mulf %2033, %2017 : vector<16x128xf32>
    %2035 = arith.addf %2006, %2034 : vector<16x128xf32>
    %2036 = vector.broadcast %17 : f32 to vector<16x128xf32>
    %2037 = arith.mulf %2036, %2017 : vector<16x128xf32>
    %2038 = arith.addf %2009, %2037 : vector<16x128xf32>
    %2039 = vector.broadcast %44 : f32 to vector<16x128xf32>
    %2040 = arith.mulf %2039, %2017 : vector<16x128xf32>
    %2041 = arith.addf %2012, %2040 : vector<16x128xf32>
    %2042 = vector.broadcast %71 : f32 to vector<16x128xf32>
    %2043 = arith.mulf %2042, %2017 : vector<16x128xf32>
    %2044 = arith.addf %2015, %2043 : vector<16x128xf32>
    %c2_312 = arith.constant 2 : index
    %c95_313 = arith.constant 95 : index
    %c0_314 = arith.constant 0 : index
    %2045 = vector.load %arg0[%c2_312, %c95_313, %c0_314] : memref<3x128x128xf32, #tpu.memory_space<vmem>>, vector<1x16x128xf32>
    %2046 = vector.shape_cast %2045 : vector<1x16x128xf32> to vector<16x128xf32>
    %2047 = vector.broadcast %18 : f32 to vector<16x128xf32>
    %2048 = arith.mulf %2047, %2046 : vector<16x128xf32>
    %2049 = arith.addf %2020, %2048 : vector<16x128xf32>
    %2050 = vector.broadcast %45 : f32 to vector<16x128xf32>
    %2051 = arith.mulf %2050, %2046 : vector<16x128xf32>
    %2052 = arith.addf %2023, %2051 : vector<16x128xf32>
    %2053 = vector.broadcast %72 : f32 to vector<16x128xf32>
    %2054 = arith.mulf %2053, %2046 : vector<16x128xf32>
    %2055 = arith.addf %2026, %2054 : vector<16x128xf32>
    %2056 = vector.broadcast %19 : f32 to vector<16x128xf32>
    %2057 = arith.mulf %2056, %2046 : vector<16x128xf32>
    %2058 = arith.addf %2029, %2057 : vector<16x128xf32>
    %2059 = vector.broadcast %46 : f32 to vector<16x128xf32>
    %2060 = arith.mulf %2059, %2046 : vector<16x128xf32>
    %2061 = arith.addf %2032, %2060 : vector<16x128xf32>
    %2062 = vector.broadcast %73 : f32 to vector<16x128xf32>
    %2063 = arith.mulf %2062, %2046 : vector<16x128xf32>
    %2064 = arith.addf %2035, %2063 : vector<16x128xf32>
    %2065 = vector.broadcast %20 : f32 to vector<16x128xf32>
    %2066 = arith.mulf %2065, %2046 : vector<16x128xf32>
    %2067 = arith.addf %2038, %2066 : vector<16x128xf32>
    %2068 = vector.broadcast %47 : f32 to vector<16x128xf32>
    %2069 = arith.mulf %2068, %2046 : vector<16x128xf32>
    %2070 = arith.addf %2041, %2069 : vector<16x128xf32>
    %2071 = vector.broadcast %74 : f32 to vector<16x128xf32>
    %2072 = arith.mulf %2071, %2046 : vector<16x128xf32>
    %2073 = arith.addf %2044, %2072 : vector<16x128xf32>
    %c2_315 = arith.constant 2 : index
    %c96_316 = arith.constant 96 : index
    %c0_317 = arith.constant 0 : index
    %2074 = vector.load %arg0[%c2_315, %c96_316, %c0_317] : memref<3x128x128xf32, #tpu.memory_space<vmem>>, vector<1x16x128xf32>
    %2075 = vector.shape_cast %2074 : vector<1x16x128xf32> to vector<16x128xf32>
    %2076 = vector.broadcast %21 : f32 to vector<16x128xf32>
    %2077 = arith.mulf %2076, %2075 : vector<16x128xf32>
    %2078 = arith.addf %2049, %2077 : vector<16x128xf32>
    %2079 = vector.broadcast %48 : f32 to vector<16x128xf32>
    %2080 = arith.mulf %2079, %2075 : vector<16x128xf32>
    %2081 = arith.addf %2052, %2080 : vector<16x128xf32>
    %2082 = vector.broadcast %75 : f32 to vector<16x128xf32>
    %2083 = arith.mulf %2082, %2075 : vector<16x128xf32>
    %2084 = arith.addf %2055, %2083 : vector<16x128xf32>
    %2085 = vector.broadcast %22 : f32 to vector<16x128xf32>
    %2086 = arith.mulf %2085, %2075 : vector<16x128xf32>
    %2087 = arith.addf %2058, %2086 : vector<16x128xf32>
    %2088 = vector.broadcast %49 : f32 to vector<16x128xf32>
    %2089 = arith.mulf %2088, %2075 : vector<16x128xf32>
    %2090 = arith.addf %2061, %2089 : vector<16x128xf32>
    %2091 = vector.broadcast %76 : f32 to vector<16x128xf32>
    %2092 = arith.mulf %2091, %2075 : vector<16x128xf32>
    %2093 = arith.addf %2064, %2092 : vector<16x128xf32>
    %2094 = vector.broadcast %23 : f32 to vector<16x128xf32>
    %2095 = arith.mulf %2094, %2075 : vector<16x128xf32>
    %2096 = arith.addf %2067, %2095 : vector<16x128xf32>
    %2097 = vector.broadcast %50 : f32 to vector<16x128xf32>
    %2098 = arith.mulf %2097, %2075 : vector<16x128xf32>
    %2099 = arith.addf %2070, %2098 : vector<16x128xf32>
    %2100 = vector.broadcast %77 : f32 to vector<16x128xf32>
    %2101 = arith.mulf %2100, %2075 : vector<16x128xf32>
    %2102 = arith.addf %2073, %2101 : vector<16x128xf32>
    %c2_318 = arith.constant 2 : index
    %c97_319 = arith.constant 97 : index
    %c0_320 = arith.constant 0 : index
    %2103 = vector.load %arg0[%c2_318, %c97_319, %c0_320] : memref<3x128x128xf32, #tpu.memory_space<vmem>>, vector<1x16x128xf32>
    %2104 = vector.shape_cast %2103 : vector<1x16x128xf32> to vector<16x128xf32>
    %2105 = vector.broadcast %24 : f32 to vector<16x128xf32>
    %2106 = arith.mulf %2105, %2104 : vector<16x128xf32>
    %2107 = arith.addf %2078, %2106 : vector<16x128xf32>
    %2108 = vector.broadcast %51 : f32 to vector<16x128xf32>
    %2109 = arith.mulf %2108, %2104 : vector<16x128xf32>
    %2110 = arith.addf %2081, %2109 : vector<16x128xf32>
    %2111 = vector.broadcast %78 : f32 to vector<16x128xf32>
    %2112 = arith.mulf %2111, %2104 : vector<16x128xf32>
    %2113 = arith.addf %2084, %2112 : vector<16x128xf32>
    %2114 = vector.broadcast %25 : f32 to vector<16x128xf32>
    %2115 = arith.mulf %2114, %2104 : vector<16x128xf32>
    %2116 = arith.addf %2087, %2115 : vector<16x128xf32>
    %2117 = vector.broadcast %52 : f32 to vector<16x128xf32>
    %2118 = arith.mulf %2117, %2104 : vector<16x128xf32>
    %2119 = arith.addf %2090, %2118 : vector<16x128xf32>
    %2120 = vector.broadcast %79 : f32 to vector<16x128xf32>
    %2121 = arith.mulf %2120, %2104 : vector<16x128xf32>
    %2122 = arith.addf %2093, %2121 : vector<16x128xf32>
    %2123 = vector.broadcast %26 : f32 to vector<16x128xf32>
    %2124 = arith.mulf %2123, %2104 : vector<16x128xf32>
    %2125 = arith.addf %2096, %2124 : vector<16x128xf32>
    %2126 = vector.broadcast %53 : f32 to vector<16x128xf32>
    %2127 = arith.mulf %2126, %2104 : vector<16x128xf32>
    %2128 = arith.addf %2099, %2127 : vector<16x128xf32>
    %2129 = vector.broadcast %80 : f32 to vector<16x128xf32>
    %2130 = arith.mulf %2129, %2104 : vector<16x128xf32>
    %2131 = arith.addf %2102, %2130 : vector<16x128xf32>
    %c1_i32_321 = arith.constant 1 : i32
    %2132 = tpu.dynamic_rotate %2107 by %c1_i32_321 dim 1 : vector<16x128xf32>, i32 -> vector<16x128xf32>
    %cst_322 = arith.constant 0.000000e+00 : f32
    %2133 = vector.broadcast %cst_322 : f32 to vector<16x128xf32>
    %2134 = arith.select %87, %2132, %2133 : vector<16x128xi1>, vector<16x128xf32>
    %2135 = arith.addf %2116, %2134 : vector<16x128xf32>
    %c127_i32_323 = arith.constant 127 : i32
    %2136 = tpu.dynamic_rotate %2125 by %c127_i32_323 dim 1 : vector<16x128xf32>, i32 -> vector<16x128xf32>
    %cst_324 = arith.constant 0.000000e+00 : f32
    %2137 = vector.broadcast %cst_324 : f32 to vector<16x128xf32>
    %2138 = arith.select %89, %2136, %2137 : vector<16x128xi1>, vector<16x128xf32>
    %2139 = arith.addf %2135, %2138 : vector<16x128xf32>
    %c0_325 = arith.constant 0 : index
    %c96_326 = arith.constant 96 : index
    %c0_327 = arith.constant 0 : index
    %2140 = vector.load %arg3[%c0_325, %c96_326, %c0_327] : memref<3x128x128xf32, #tpu.memory_space<vmem>>, vector<1x16x128xf32>
    %2141 = vector.shape_cast %2140 : vector<1x16x128xf32> to vector<16x128xf32>
    %2142 = vector.shape_cast %2139 : vector<16x128xf32> to vector<1x16x128xf32>
    tpu.vector_store %arg3[%c0_325, %c96_326, %c0_327], %2142 {strides = array<i32>} : memref<3x128x128xf32, #tpu.memory_space<vmem>>, vector<1x16x128xf32>,
    %c1_i32_328 = arith.constant 1 : i32
    %2143 = tpu.dynamic_rotate %2110 by %c1_i32_328 dim 1 : vector<16x128xf32>, i32 -> vector<16x128xf32>
    %cst_329 = arith.constant 0.000000e+00 : f32
    %2144 = vector.broadcast %cst_329 : f32 to vector<16x128xf32>
    %2145 = arith.select %87, %2143, %2144 : vector<16x128xi1>, vector<16x128xf32>
    %2146 = arith.addf %2119, %2145 : vector<16x128xf32>
    %c127_i32_330 = arith.constant 127 : i32
    %2147 = tpu.dynamic_rotate %2128 by %c127_i32_330 dim 1 : vector<16x128xf32>, i32 -> vector<16x128xf32>
    %cst_331 = arith.constant 0.000000e+00 : f32
    %2148 = vector.broadcast %cst_331 : f32 to vector<16x128xf32>
    %2149 = arith.select %89, %2147, %2148 : vector<16x128xi1>, vector<16x128xf32>
    %2150 = arith.addf %2146, %2149 : vector<16x128xf32>
    %c1_332 = arith.constant 1 : index
    %c96_333 = arith.constant 96 : index
    %c0_334 = arith.constant 0 : index
    %2151 = vector.load %arg3[%c1_332, %c96_333, %c0_334] : memref<3x128x128xf32, #tpu.memory_space<vmem>>, vector<1x16x128xf32>
    %2152 = vector.shape_cast %2151 : vector<1x16x128xf32> to vector<16x128xf32>
    %2153 = vector.shape_cast %2150 : vector<16x128xf32> to vector<1x16x128xf32>
    tpu.vector_store %arg3[%c1_332, %c96_333, %c0_334], %2153 {strides = array<i32>} : memref<3x128x128xf32, #tpu.memory_space<vmem>>, vector<1x16x128xf32>,
    %c1_i32_335 = arith.constant 1 : i32
    %2154 = tpu.dynamic_rotate %2113 by %c1_i32_335 dim 1 : vector<16x128xf32>, i32 -> vector<16x128xf32>
    %cst_336 = arith.constant 0.000000e+00 : f32
    %2155 = vector.broadcast %cst_336 : f32 to vector<16x128xf32>
    %2156 = arith.select %87, %2154, %2155 : vector<16x128xi1>, vector<16x128xf32>
    %2157 = arith.addf %2122, %2156 : vector<16x128xf32>
    %c127_i32_337 = arith.constant 127 : i32
    %2158 = tpu.dynamic_rotate %2131 by %c127_i32_337 dim 1 : vector<16x128xf32>, i32 -> vector<16x128xf32>
    %cst_338 = arith.constant 0.000000e+00 : f32
    %2159 = vector.broadcast %cst_338 : f32 to vector<16x128xf32>
    %2160 = arith.select %89, %2158, %2159 : vector<16x128xi1>, vector<16x128xf32>
    %2161 = arith.addf %2157, %2160 : vector<16x128xf32>
    %c2_339 = arith.constant 2 : index
    %c96_340 = arith.constant 96 : index
    %c0_341 = arith.constant 0 : index
    %2162 = vector.load %arg3[%c2_339, %c96_340, %c0_341] : memref<3x128x128xf32, #tpu.memory_space<vmem>>, vector<1x16x128xf32>
    %2163 = vector.shape_cast %2162 : vector<1x16x128xf32> to vector<16x128xf32>
    %2164 = vector.shape_cast %2161 : vector<16x128xf32> to vector<1x16x128xf32>
    tpu.vector_store %arg3[%c2_339, %c96_340, %c0_341], %2164 {strides = array<i32>} : memref<3x128x128xf32, #tpu.memory_space<vmem>>, vector<1x16x128xf32>,
    %c0_342 = arith.constant 0 : index
    %c111 = arith.constant 111 : index
    %c0_343 = arith.constant 0 : index
    %2165 = vector.load %arg0[%c0_342, %c111, %c0_343] : memref<3x128x128xf32, #tpu.memory_space<vmem>>, vector<1x16x128xf32>
    %2166 = vector.shape_cast %2165 : vector<1x16x128xf32> to vector<16x128xf32>
    %2167 = vector.broadcast %0 : f32 to vector<16x128xf32>
    %2168 = arith.mulf %2167, %2166 : vector<16x128xf32>
    %2169 = arith.addf %94, %2168 : vector<16x128xf32>
    %2170 = vector.broadcast %27 : f32 to vector<16x128xf32>
    %2171 = arith.mulf %2170, %2166 : vector<16x128xf32>
    %2172 = arith.addf %94, %2171 : vector<16x128xf32>
    %2173 = vector.broadcast %54 : f32 to vector<16x128xf32>
    %2174 = arith.mulf %2173, %2166 : vector<16x128xf32>
    %2175 = arith.addf %94, %2174 : vector<16x128xf32>
    %2176 = vector.broadcast %1 : f32 to vector<16x128xf32>
    %2177 = arith.mulf %2176, %2166 : vector<16x128xf32>
    %2178 = arith.addf %95, %2177 : vector<16x128xf32>
    %2179 = vector.broadcast %28 : f32 to vector<16x128xf32>
    %2180 = arith.mulf %2179, %2166 : vector<16x128xf32>
    %2181 = arith.addf %96, %2180 : vector<16x128xf32>
    %2182 = vector.broadcast %55 : f32 to vector<16x128xf32>
    %2183 = arith.mulf %2182, %2166 : vector<16x128xf32>
    %2184 = arith.addf %97, %2183 : vector<16x128xf32>
    %2185 = vector.broadcast %2 : f32 to vector<16x128xf32>
    %2186 = arith.mulf %2185, %2166 : vector<16x128xf32>
    %2187 = arith.addf %94, %2186 : vector<16x128xf32>
    %2188 = vector.broadcast %29 : f32 to vector<16x128xf32>
    %2189 = arith.mulf %2188, %2166 : vector<16x128xf32>
    %2190 = arith.addf %94, %2189 : vector<16x128xf32>
    %2191 = vector.broadcast %56 : f32 to vector<16x128xf32>
    %2192 = arith.mulf %2191, %2166 : vector<16x128xf32>
    %2193 = arith.addf %94, %2192 : vector<16x128xf32>
    %c0_344 = arith.constant 0 : index
    %c112 = arith.constant 112 : index
    %c0_345 = arith.constant 0 : index
    %2194 = vector.load %arg0[%c0_344, %c112, %c0_345] : memref<3x128x128xf32, #tpu.memory_space<vmem>>, vector<1x16x128xf32>
    %2195 = vector.shape_cast %2194 : vector<1x16x128xf32> to vector<16x128xf32>
    %2196 = vector.broadcast %3 : f32 to vector<16x128xf32>
    %2197 = arith.mulf %2196, %2195 : vector<16x128xf32>
    %2198 = arith.addf %2169, %2197 : vector<16x128xf32>
    %2199 = vector.broadcast %30 : f32 to vector<16x128xf32>
    %2200 = arith.mulf %2199, %2195 : vector<16x128xf32>
    %2201 = arith.addf %2172, %2200 : vector<16x128xf32>
    %2202 = vector.broadcast %57 : f32 to vector<16x128xf32>
    %2203 = arith.mulf %2202, %2195 : vector<16x128xf32>
    %2204 = arith.addf %2175, %2203 : vector<16x128xf32>
    %2205 = vector.broadcast %4 : f32 to vector<16x128xf32>
    %2206 = arith.mulf %2205, %2195 : vector<16x128xf32>
    %2207 = arith.addf %2178, %2206 : vector<16x128xf32>
    %2208 = vector.broadcast %31 : f32 to vector<16x128xf32>
    %2209 = arith.mulf %2208, %2195 : vector<16x128xf32>
    %2210 = arith.addf %2181, %2209 : vector<16x128xf32>
    %2211 = vector.broadcast %58 : f32 to vector<16x128xf32>
    %2212 = arith.mulf %2211, %2195 : vector<16x128xf32>
    %2213 = arith.addf %2184, %2212 : vector<16x128xf32>
    %2214 = vector.broadcast %5 : f32 to vector<16x128xf32>
    %2215 = arith.mulf %2214, %2195 : vector<16x128xf32>
    %2216 = arith.addf %2187, %2215 : vector<16x128xf32>
    %2217 = vector.broadcast %32 : f32 to vector<16x128xf32>
    %2218 = arith.mulf %2217, %2195 : vector<16x128xf32>
    %2219 = arith.addf %2190, %2218 : vector<16x128xf32>
    %2220 = vector.broadcast %59 : f32 to vector<16x128xf32>
    %2221 = arith.mulf %2220, %2195 : vector<16x128xf32>
    %2222 = arith.addf %2193, %2221 : vector<16x128xf32>
    %c0_346 = arith.constant 0 : index
    %c112_347 = arith.constant 112 : index
    %c0_348 = arith.constant 0 : index
    %2223 = vector.load %arg0[%c0_346, %c112_347, %c0_348] : memref<3x128x128xf32, #tpu.memory_space<vmem>>, vector<1x16x128xf32>
    %2224 = vector.shape_cast %2223 : vector<1x16x128xf32> to vector<16x128xf32>
    %c15_i32_349 = arith.constant 15 : i32
    %2225 = tpu.dynamic_rotate %2224 by %c15_i32_349 dim 0 : vector<16x128xf32>, i32 -> vector<16x128xf32>
    %cst_350 = arith.constant 0.000000e+00 : f32
    %2226 = vector.broadcast %cst_350 : f32 to vector<16x128xf32>
    %2227 = arith.select %93, %2225, %2226 : vector<16x128xi1>, vector<16x128xf32>
    %2228 = vector.broadcast %6 : f32 to vector<16x128xf32>
    %2229 = arith.mulf %2228, %2227 : vector<16x128xf32>
    %2230 = arith.addf %2198, %2229 : vector<16x128xf32>
    %2231 = vector.broadcast %33 : f32 to vector<16x128xf32>
    %2232 = arith.mulf %2231, %2227 : vector<16x128xf32>
    %2233 = arith.addf %2201, %2232 : vector<16x128xf32>
    %2234 = vector.broadcast %60 : f32 to vector<16x128xf32>
    %2235 = arith.mulf %2234, %2227 : vector<16x128xf32>
    %2236 = arith.addf %2204, %2235 : vector<16x128xf32>
    %2237 = vector.broadcast %7 : f32 to vector<16x128xf32>
    %2238 = arith.mulf %2237, %2227 : vector<16x128xf32>
    %2239 = arith.addf %2207, %2238 : vector<16x128xf32>
    %2240 = vector.broadcast %34 : f32 to vector<16x128xf32>
    %2241 = arith.mulf %2240, %2227 : vector<16x128xf32>
    %2242 = arith.addf %2210, %2241 : vector<16x128xf32>
    %2243 = vector.broadcast %61 : f32 to vector<16x128xf32>
    %2244 = arith.mulf %2243, %2227 : vector<16x128xf32>
    %2245 = arith.addf %2213, %2244 : vector<16x128xf32>
    %2246 = vector.broadcast %8 : f32 to vector<16x128xf32>
    %2247 = arith.mulf %2246, %2227 : vector<16x128xf32>
    %2248 = arith.addf %2216, %2247 : vector<16x128xf32>
    %2249 = vector.broadcast %35 : f32 to vector<16x128xf32>
    %2250 = arith.mulf %2249, %2227 : vector<16x128xf32>
    %2251 = arith.addf %2219, %2250 : vector<16x128xf32>
    %2252 = vector.broadcast %62 : f32 to vector<16x128xf32>
    %2253 = arith.mulf %2252, %2227 : vector<16x128xf32>
    %2254 = arith.addf %2222, %2253 : vector<16x128xf32>
    %c1_351 = arith.constant 1 : index
    %c111_352 = arith.constant 111 : index
    %c0_353 = arith.constant 0 : index
    %2255 = vector.load %arg0[%c1_351, %c111_352, %c0_353] : memref<3x128x128xf32, #tpu.memory_space<vmem>>, vector<1x16x128xf32>
    %2256 = vector.shape_cast %2255 : vector<1x16x128xf32> to vector<16x128xf32>
    %2257 = vector.broadcast %9 : f32 to vector<16x128xf32>
    %2258 = arith.mulf %2257, %2256 : vector<16x128xf32>
    %2259 = arith.addf %2230, %2258 : vector<16x128xf32>
    %2260 = vector.broadcast %36 : f32 to vector<16x128xf32>
    %2261 = arith.mulf %2260, %2256 : vector<16x128xf32>
    %2262 = arith.addf %2233, %2261 : vector<16x128xf32>
    %2263 = vector.broadcast %63 : f32 to vector<16x128xf32>
    %2264 = arith.mulf %2263, %2256 : vector<16x128xf32>
    %2265 = arith.addf %2236, %2264 : vector<16x128xf32>
    %2266 = vector.broadcast %10 : f32 to vector<16x128xf32>
    %2267 = arith.mulf %2266, %2256 : vector<16x128xf32>
    %2268 = arith.addf %2239, %2267 : vector<16x128xf32>
    %2269 = vector.broadcast %37 : f32 to vector<16x128xf32>
    %2270 = arith.mulf %2269, %2256 : vector<16x128xf32>
    %2271 = arith.addf %2242, %2270 : vector<16x128xf32>
    %2272 = vector.broadcast %64 : f32 to vector<16x128xf32>
    %2273 = arith.mulf %2272, %2256 : vector<16x128xf32>
    %2274 = arith.addf %2245, %2273 : vector<16x128xf32>
    %2275 = vector.broadcast %11 : f32 to vector<16x128xf32>
    %2276 = arith.mulf %2275, %2256 : vector<16x128xf32>
    %2277 = arith.addf %2248, %2276 : vector<16x128xf32>
    %2278 = vector.broadcast %38 : f32 to vector<16x128xf32>
    %2279 = arith.mulf %2278, %2256 : vector<16x128xf32>
    %2280 = arith.addf %2251, %2279 : vector<16x128xf32>
    %2281 = vector.broadcast %65 : f32 to vector<16x128xf32>
    %2282 = arith.mulf %2281, %2256 : vector<16x128xf32>
    %2283 = arith.addf %2254, %2282 : vector<16x128xf32>
    %c1_354 = arith.constant 1 : index
    %c112_355 = arith.constant 112 : index
    %c0_356 = arith.constant 0 : index
    %2284 = vector.load %arg0[%c1_354, %c112_355, %c0_356] : memref<3x128x128xf32, #tpu.memory_space<vmem>>, vector<1x16x128xf32>
    %2285 = vector.shape_cast %2284 : vector<1x16x128xf32> to vector<16x128xf32>
    %2286 = vector.broadcast %12 : f32 to vector<16x128xf32>
    %2287 = arith.mulf %2286, %2285 : vector<16x128xf32>
    %2288 = arith.addf %2259, %2287 : vector<16x128xf32>
    %2289 = vector.broadcast %39 : f32 to vector<16x128xf32>
    %2290 = arith.mulf %2289, %2285 : vector<16x128xf32>
    %2291 = arith.addf %2262, %2290 : vector<16x128xf32>
    %2292 = vector.broadcast %66 : f32 to vector<16x128xf32>
    %2293 = arith.mulf %2292, %2285 : vector<16x128xf32>
    %2294 = arith.addf %2265, %2293 : vector<16x128xf32>
    %2295 = vector.broadcast %13 : f32 to vector<16x128xf32>
    %2296 = arith.mulf %2295, %2285 : vector<16x128xf32>
    %2297 = arith.addf %2268, %2296 : vector<16x128xf32>
    %2298 = vector.broadcast %40 : f32 to vector<16x128xf32>
    %2299 = arith.mulf %2298, %2285 : vector<16x128xf32>
    %2300 = arith.addf %2271, %2299 : vector<16x128xf32>
    %2301 = vector.broadcast %67 : f32 to vector<16x128xf32>
    %2302 = arith.mulf %2301, %2285 : vector<16x128xf32>
    %2303 = arith.addf %2274, %2302 : vector<16x128xf32>
    %2304 = vector.broadcast %14 : f32 to vector<16x128xf32>
    %2305 = arith.mulf %2304, %2285 : vector<16x128xf32>
    %2306 = arith.addf %2277, %2305 : vector<16x128xf32>
    %2307 = vector.broadcast %41 : f32 to vector<16x128xf32>
    %2308 = arith.mulf %2307, %2285 : vector<16x128xf32>
    %2309 = arith.addf %2280, %2308 : vector<16x128xf32>
    %2310 = vector.broadcast %68 : f32 to vector<16x128xf32>
    %2311 = arith.mulf %2310, %2285 : vector<16x128xf32>
    %2312 = arith.addf %2283, %2311 : vector<16x128xf32>
    %c1_357 = arith.constant 1 : index
    %c112_358 = arith.constant 112 : index
    %c0_359 = arith.constant 0 : index
    %2313 = vector.load %arg0[%c1_357, %c112_358, %c0_359] : memref<3x128x128xf32, #tpu.memory_space<vmem>>, vector<1x16x128xf32>
    %2314 = vector.shape_cast %2313 : vector<1x16x128xf32> to vector<16x128xf32>
    %c15_i32_360 = arith.constant 15 : i32
    %2315 = tpu.dynamic_rotate %2314 by %c15_i32_360 dim 0 : vector<16x128xf32>, i32 -> vector<16x128xf32>
    %cst_361 = arith.constant 0.000000e+00 : f32
    %2316 = vector.broadcast %cst_361 : f32 to vector<16x128xf32>
    %2317 = arith.select %93, %2315, %2316 : vector<16x128xi1>, vector<16x128xf32>
    %2318 = vector.broadcast %15 : f32 to vector<16x128xf32>
    %2319 = arith.mulf %2318, %2317 : vector<16x128xf32>
    %2320 = arith.addf %2288, %2319 : vector<16x128xf32>
    %2321 = vector.broadcast %42 : f32 to vector<16x128xf32>
    %2322 = arith.mulf %2321, %2317 : vector<16x128xf32>
    %2323 = arith.addf %2291, %2322 : vector<16x128xf32>
    %2324 = vector.broadcast %69 : f32 to vector<16x128xf32>
    %2325 = arith.mulf %2324, %2317 : vector<16x128xf32>
    %2326 = arith.addf %2294, %2325 : vector<16x128xf32>
    %2327 = vector.broadcast %16 : f32 to vector<16x128xf32>
    %2328 = arith.mulf %2327, %2317 : vector<16x128xf32>
    %2329 = arith.addf %2297, %2328 : vector<16x128xf32>
    %2330 = vector.broadcast %43 : f32 to vector<16x128xf32>
    %2331 = arith.mulf %2330, %2317 : vector<16x128xf32>
    %2332 = arith.addf %2300, %2331 : vector<16x128xf32>
    %2333 = vector.broadcast %70 : f32 to vector<16x128xf32>
    %2334 = arith.mulf %2333, %2317 : vector<16x128xf32>
    %2335 = arith.addf %2303, %2334 : vector<16x128xf32>
    %2336 = vector.broadcast %17 : f32 to vector<16x128xf32>
    %2337 = arith.mulf %2336, %2317 : vector<16x128xf32>
    %2338 = arith.addf %2306, %2337 : vector<16x128xf32>
    %2339 = vector.broadcast %44 : f32 to vector<16x128xf32>
    %2340 = arith.mulf %2339, %2317 : vector<16x128xf32>
    %2341 = arith.addf %2309, %2340 : vector<16x128xf32>
    %2342 = vector.broadcast %71 : f32 to vector<16x128xf32>
    %2343 = arith.mulf %2342, %2317 : vector<16x128xf32>
    %2344 = arith.addf %2312, %2343 : vector<16x128xf32>
    %c2_362 = arith.constant 2 : index
    %c111_363 = arith.constant 111 : index
    %c0_364 = arith.constant 0 : index
    %2345 = vector.load %arg0[%c2_362, %c111_363, %c0_364] : memref<3x128x128xf32, #tpu.memory_space<vmem>>, vector<1x16x128xf32>
    %2346 = vector.shape_cast %2345 : vector<1x16x128xf32> to vector<16x128xf32>
    %2347 = vector.broadcast %18 : f32 to vector<16x128xf32>
    %2348 = arith.mulf %2347, %2346 : vector<16x128xf32>
    %2349 = arith.addf %2320, %2348 : vector<16x128xf32>
    %2350 = vector.broadcast %45 : f32 to vector<16x128xf32>
    %2351 = arith.mulf %2350, %2346 : vector<16x128xf32>
    %2352 = arith.addf %2323, %2351 : vector<16x128xf32>
    %2353 = vector.broadcast %72 : f32 to vector<16x128xf32>
    %2354 = arith.mulf %2353, %2346 : vector<16x128xf32>
    %2355 = arith.addf %2326, %2354 : vector<16x128xf32>
    %2356 = vector.broadcast %19 : f32 to vector<16x128xf32>
    %2357 = arith.mulf %2356, %2346 : vector<16x128xf32>
    %2358 = arith.addf %2329, %2357 : vector<16x128xf32>
    %2359 = vector.broadcast %46 : f32 to vector<16x128xf32>
    %2360 = arith.mulf %2359, %2346 : vector<16x128xf32>
    %2361 = arith.addf %2332, %2360 : vector<16x128xf32>
    %2362 = vector.broadcast %73 : f32 to vector<16x128xf32>
    %2363 = arith.mulf %2362, %2346 : vector<16x128xf32>
    %2364 = arith.addf %2335, %2363 : vector<16x128xf32>
    %2365 = vector.broadcast %20 : f32 to vector<16x128xf32>
    %2366 = arith.mulf %2365, %2346 : vector<16x128xf32>
    %2367 = arith.addf %2338, %2366 : vector<16x128xf32>
    %2368 = vector.broadcast %47 : f32 to vector<16x128xf32>
    %2369 = arith.mulf %2368, %2346 : vector<16x128xf32>
    %2370 = arith.addf %2341, %2369 : vector<16x128xf32>
    %2371 = vector.broadcast %74 : f32 to vector<16x128xf32>
    %2372 = arith.mulf %2371, %2346 : vector<16x128xf32>
    %2373 = arith.addf %2344, %2372 : vector<16x128xf32>
    %c2_365 = arith.constant 2 : index
    %c112_366 = arith.constant 112 : index
    %c0_367 = arith.constant 0 : index
    %2374 = vector.load %arg0[%c2_365, %c112_366, %c0_367] : memref<3x128x128xf32, #tpu.memory_space<vmem>>, vector<1x16x128xf32>
    %2375 = vector.shape_cast %2374 : vector<1x16x128xf32> to vector<16x128xf32>
    %2376 = vector.broadcast %21 : f32 to vector<16x128xf32>
    %2377 = arith.mulf %2376, %2375 : vector<16x128xf32>
    %2378 = arith.addf %2349, %2377 : vector<16x128xf32>
    %2379 = vector.broadcast %48 : f32 to vector<16x128xf32>
    %2380 = arith.mulf %2379, %2375 : vector<16x128xf32>
    %2381 = arith.addf %2352, %2380 : vector<16x128xf32>
    %2382 = vector.broadcast %75 : f32 to vector<16x128xf32>
    %2383 = arith.mulf %2382, %2375 : vector<16x128xf32>
    %2384 = arith.addf %2355, %2383 : vector<16x128xf32>
    %2385 = vector.broadcast %22 : f32 to vector<16x128xf32>
    %2386 = arith.mulf %2385, %2375 : vector<16x128xf32>
    %2387 = arith.addf %2358, %2386 : vector<16x128xf32>
    %2388 = vector.broadcast %49 : f32 to vector<16x128xf32>
    %2389 = arith.mulf %2388, %2375 : vector<16x128xf32>
    %2390 = arith.addf %2361, %2389 : vector<16x128xf32>
    %2391 = vector.broadcast %76 : f32 to vector<16x128xf32>
    %2392 = arith.mulf %2391, %2375 : vector<16x128xf32>
    %2393 = arith.addf %2364, %2392 : vector<16x128xf32>
    %2394 = vector.broadcast %23 : f32 to vector<16x128xf32>
    %2395 = arith.mulf %2394, %2375 : vector<16x128xf32>
    %2396 = arith.addf %2367, %2395 : vector<16x128xf32>
    %2397 = vector.broadcast %50 : f32 to vector<16x128xf32>
    %2398 = arith.mulf %2397, %2375 : vector<16x128xf32>
    %2399 = arith.addf %2370, %2398 : vector<16x128xf32>
    %2400 = vector.broadcast %77 : f32 to vector<16x128xf32>
    %2401 = arith.mulf %2400, %2375 : vector<16x128xf32>
    %2402 = arith.addf %2373, %2401 : vector<16x128xf32>
    %c2_368 = arith.constant 2 : index
    %c112_369 = arith.constant 112 : index
    %c0_370 = arith.constant 0 : index
    %2403 = vector.load %arg0[%c2_368, %c112_369, %c0_370] : memref<3x128x128xf32, #tpu.memory_space<vmem>>, vector<1x16x128xf32>
    %2404 = vector.shape_cast %2403 : vector<1x16x128xf32> to vector<16x128xf32>
    %c15_i32_371 = arith.constant 15 : i32
    %2405 = tpu.dynamic_rotate %2404 by %c15_i32_371 dim 0 : vector<16x128xf32>, i32 -> vector<16x128xf32>
    %cst_372 = arith.constant 0.000000e+00 : f32
    %2406 = vector.broadcast %cst_372 : f32 to vector<16x128xf32>
    %2407 = arith.select %93, %2405, %2406 : vector<16x128xi1>, vector<16x128xf32>
    %2408 = vector.broadcast %24 : f32 to vector<16x128xf32>
    %2409 = arith.mulf %2408, %2407 : vector<16x128xf32>
    %2410 = arith.addf %2378, %2409 : vector<16x128xf32>
    %2411 = vector.broadcast %51 : f32 to vector<16x128xf32>
    %2412 = arith.mulf %2411, %2407 : vector<16x128xf32>
    %2413 = arith.addf %2381, %2412 : vector<16x128xf32>
    %2414 = vector.broadcast %78 : f32 to vector<16x128xf32>
    %2415 = arith.mulf %2414, %2407 : vector<16x128xf32>
    %2416 = arith.addf %2384, %2415 : vector<16x128xf32>
    %2417 = vector.broadcast %25 : f32 to vector<16x128xf32>
    %2418 = arith.mulf %2417, %2407 : vector<16x128xf32>
    %2419 = arith.addf %2387, %2418 : vector<16x128xf32>
    %2420 = vector.broadcast %52 : f32 to vector<16x128xf32>
    %2421 = arith.mulf %2420, %2407 : vector<16x128xf32>
    %2422 = arith.addf %2390, %2421 : vector<16x128xf32>
    %2423 = vector.broadcast %79 : f32 to vector<16x128xf32>
    %2424 = arith.mulf %2423, %2407 : vector<16x128xf32>
    %2425 = arith.addf %2393, %2424 : vector<16x128xf32>
    %2426 = vector.broadcast %26 : f32 to vector<16x128xf32>
    %2427 = arith.mulf %2426, %2407 : vector<16x128xf32>
    %2428 = arith.addf %2396, %2427 : vector<16x128xf32>
    %2429 = vector.broadcast %53 : f32 to vector<16x128xf32>
    %2430 = arith.mulf %2429, %2407 : vector<16x128xf32>
    %2431 = arith.addf %2399, %2430 : vector<16x128xf32>
    %2432 = vector.broadcast %80 : f32 to vector<16x128xf32>
    %2433 = arith.mulf %2432, %2407 : vector<16x128xf32>
    %2434 = arith.addf %2402, %2433 : vector<16x128xf32>
    %c1_i32_373 = arith.constant 1 : i32
    %2435 = tpu.dynamic_rotate %2410 by %c1_i32_373 dim 1 : vector<16x128xf32>, i32 -> vector<16x128xf32>
    %cst_374 = arith.constant 0.000000e+00 : f32
    %2436 = vector.broadcast %cst_374 : f32 to vector<16x128xf32>
    %2437 = arith.select %87, %2435, %2436 : vector<16x128xi1>, vector<16x128xf32>
    %2438 = arith.addf %2419, %2437 : vector<16x128xf32>
    %c127_i32_375 = arith.constant 127 : i32
    %2439 = tpu.dynamic_rotate %2428 by %c127_i32_375 dim 1 : vector<16x128xf32>, i32 -> vector<16x128xf32>
    %cst_376 = arith.constant 0.000000e+00 : f32
    %2440 = vector.broadcast %cst_376 : f32 to vector<16x128xf32>
    %2441 = arith.select %89, %2439, %2440 : vector<16x128xi1>, vector<16x128xf32>
    %2442 = arith.addf %2438, %2441 : vector<16x128xf32>
    %c0_377 = arith.constant 0 : index
    %c112_378 = arith.constant 112 : index
    %c0_379 = arith.constant 0 : index
    %2443 = vector.load %arg3[%c0_377, %c112_378, %c0_379] : memref<3x128x128xf32, #tpu.memory_space<vmem>>, vector<1x16x128xf32>
    %2444 = vector.shape_cast %2443 : vector<1x16x128xf32> to vector<16x128xf32>
    %2445 = vector.shape_cast %2442 : vector<16x128xf32> to vector<1x16x128xf32>
    tpu.vector_store %arg3[%c0_377, %c112_378, %c0_379], %2445 {strides = array<i32>} : memref<3x128x128xf32, #tpu.memory_space<vmem>>, vector<1x16x128xf32>,
    %c1_i32_380 = arith.constant 1 : i32
    %2446 = tpu.dynamic_rotate %2413 by %c1_i32_380 dim 1 : vector<16x128xf32>, i32 -> vector<16x128xf32>
    %cst_381 = arith.constant 0.000000e+00 : f32
    %2447 = vector.broadcast %cst_381 : f32 to vector<16x128xf32>
    %2448 = arith.select %87, %2446, %2447 : vector<16x128xi1>, vector<16x128xf32>
    %2449 = arith.addf %2422, %2448 : vector<16x128xf32>
    %c127_i32_382 = arith.constant 127 : i32
    %2450 = tpu.dynamic_rotate %2431 by %c127_i32_382 dim 1 : vector<16x128xf32>, i32 -> vector<16x128xf32>
    %cst_383 = arith.constant 0.000000e+00 : f32
    %2451 = vector.broadcast %cst_383 : f32 to vector<16x128xf32>
    %2452 = arith.select %89, %2450, %2451 : vector<16x128xi1>, vector<16x128xf32>
    %2453 = arith.addf %2449, %2452 : vector<16x128xf32>
    %c1_384 = arith.constant 1 : index
    %c112_385 = arith.constant 112 : index
    %c0_386 = arith.constant 0 : index
    %2454 = vector.load %arg3[%c1_384, %c112_385, %c0_386] : memref<3x128x128xf32, #tpu.memory_space<vmem>>, vector<1x16x128xf32>
    %2455 = vector.shape_cast %2454 : vector<1x16x128xf32> to vector<16x128xf32>
    %2456 = vector.shape_cast %2453 : vector<16x128xf32> to vector<1x16x128xf32>
    tpu.vector_store %arg3[%c1_384, %c112_385, %c0_386], %2456 {strides = array<i32>} : memref<3x128x128xf32, #tpu.memory_space<vmem>>, vector<1x16x128xf32>,
    %c1_i32_387 = arith.constant 1 : i32
    %2457 = tpu.dynamic_rotate %2416 by %c1_i32_387 dim 1 : vector<16x128xf32>, i32 -> vector<16x128xf32>
    %cst_388 = arith.constant 0.000000e+00 : f32
    %2458 = vector.broadcast %cst_388 : f32 to vector<16x128xf32>
    %2459 = arith.select %87, %2457, %2458 : vector<16x128xi1>, vector<16x128xf32>
    %2460 = arith.addf %2425, %2459 : vector<16x128xf32>
    %c127_i32_389 = arith.constant 127 : i32
    %2461 = tpu.dynamic_rotate %2434 by %c127_i32_389 dim 1 : vector<16x128xf32>, i32 -> vector<16x128xf32>
    %cst_390 = arith.constant 0.000000e+00 : f32
    %2462 = vector.broadcast %cst_390 : f32 to vector<16x128xf32>
    %2463 = arith.select %89, %2461, %2462 : vector<16x128xi1>, vector<16x128xf32>
    %2464 = arith.addf %2460, %2463 : vector<16x128xf32>
    %c2_391 = arith.constant 2 : index
    %c112_392 = arith.constant 112 : index
    %c0_393 = arith.constant 0 : index
    %2465 = vector.load %arg3[%c2_391, %c112_392, %c0_393] : memref<3x128x128xf32, #tpu.memory_space<vmem>>, vector<1x16x128xf32>
    %2466 = vector.shape_cast %2465 : vector<1x16x128xf32> to vector<16x128xf32>
    %2467 = vector.shape_cast %2464 : vector<16x128xf32> to vector<1x16x128xf32>
    tpu.vector_store %arg3[%c2_391, %c112_392, %c0_393], %2467 {strides = array<i32>} : memref<3x128x128xf32, #tpu.memory_space<vmem>>, vector<1x16x128xf32>,
    %c0_394 = arith.constant 0 : index
    %c0_395 = arith.constant 0 : index
    %c0_396 = arith.constant 0 : index
    %2468 = vector.load %arg3[%c0_394, %c0_395, %c0_396] : memref<3x128x128xf32, #tpu.memory_space<vmem>>, vector<1x6x128xf32>
    %2469 = vector.shape_cast %2468 : vector<1x6x128xf32> to vector<6x128xf32>
    %c0_397 = arith.constant 0 : index
    %c0_398 = arith.constant 0 : index
    %c0_399 = arith.constant 0 : index
    %2470 = vector.load %arg4[%c0_397, %c0_398, %c0_399] : memref<3x6x128xf32, #tpu.memory_space<vmem>>, vector<1x6x128xf32>
    %2471 = vector.shape_cast %2470 : vector<1x6x128xf32> to vector<6x128xf32>
    %2472 = vector.shape_cast %2469 : vector<6x128xf32> to vector<1x6x128xf32>
    tpu.vector_store %arg4[%c0_397, %c0_398, %c0_399], %2472 {strides = array<i32>} : memref<3x6x128xf32, #tpu.memory_space<vmem>>, vector<1x6x128xf32>,
    %c1_400 = arith.constant 1 : index
    %c0_401 = arith.constant 0 : index
    %c0_402 = arith.constant 0 : index
    %2473 = vector.load %arg3[%c1_400, %c0_401, %c0_402] : memref<3x128x128xf32, #tpu.memory_space<vmem>>, vector<1x6x128xf32>
    %2474 = vector.shape_cast %2473 : vector<1x6x128xf32> to vector<6x128xf32>
    %c1_403 = arith.constant 1 : index
    %c0_404 = arith.constant 0 : index
    %c0_405 = arith.constant 0 : index
    %2475 = vector.load %arg4[%c1_403, %c0_404, %c0_405] : memref<3x6x128xf32, #tpu.memory_space<vmem>>, vector<1x6x128xf32>
    %2476 = vector.shape_cast %2475 : vector<1x6x128xf32> to vector<6x128xf32>
    %2477 = vector.shape_cast %2474 : vector<6x128xf32> to vector<1x6x128xf32>
    tpu.vector_store %arg4[%c1_403, %c0_404, %c0_405], %2477 {strides = array<i32>} : memref<3x6x128xf32, #tpu.memory_space<vmem>>, vector<1x6x128xf32>,
    %c2_406 = arith.constant 2 : index
    %c0_407 = arith.constant 0 : index
    %c0_408 = arith.constant 0 : index
    %2478 = vector.load %arg3[%c2_406, %c0_407, %c0_408] : memref<3x128x128xf32, #tpu.memory_space<vmem>>, vector<1x6x128xf32>
    %2479 = vector.shape_cast %2478 : vector<1x6x128xf32> to vector<6x128xf32>
    %c2_409 = arith.constant 2 : index
    %c0_410 = arith.constant 0 : index
    %c0_411 = arith.constant 0 : index
    %2480 = vector.load %arg4[%c2_409, %c0_410, %c0_411] : memref<3x6x128xf32, #tpu.memory_space<vmem>>, vector<1x6x128xf32>
    %2481 = vector.shape_cast %2480 : vector<1x6x128xf32> to vector<6x128xf32>
    %2482 = vector.shape_cast %2479 : vector<6x128xf32> to vector<1x6x128xf32>
    tpu.vector_store %arg4[%c2_409, %c0_410, %c0_411], %2482 {strides = array<i32>} : memref<3x6x128xf32, #tpu.memory_space<vmem>>, vector<1x6x128xf32>,
    %c0_412 = arith.constant 0 : index
    %c6_413 = arith.constant 6 : index
    %c0_414 = arith.constant 0 : index
    %2483 = vector.load %arg3[%c0_412, %c6_413, %c0_414] : memref<3x128x128xf32, #tpu.memory_space<vmem>>, vector<1x100x128xf32>
    %2484 = vector.shape_cast %2483 : vector<1x100x128xf32> to vector<100x128xf32>
    %c0_415 = arith.constant 0 : index
    %c0_416 = arith.constant 0 : index
    %c0_417 = arith.constant 0 : index
    %2485 = vector.load %arg5[%c0_415, %c0_416, %c0_417] : memref<3x100x128xf32, #tpu.memory_space<vmem>>, vector<1x100x128xf32>
    %2486 = vector.shape_cast %2485 : vector<1x100x128xf32> to vector<100x128xf32>
    %2487 = vector.shape_cast %2484 : vector<100x128xf32> to vector<1x100x128xf32>
    tpu.vector_store %arg5[%c0_415, %c0_416, %c0_417], %2487 {strides = array<i32>} : memref<3x100x128xf32, #tpu.memory_space<vmem>>, vector<1x100x128xf32>,
    %c1_418 = arith.constant 1 : index
    %c6_419 = arith.constant 6 : index
    %c0_420 = arith.constant 0 : index
    %2488 = vector.load %arg3[%c1_418, %c6_419, %c0_420] : memref<3x128x128xf32, #tpu.memory_space<vmem>>, vector<1x100x128xf32>
    %2489 = vector.shape_cast %2488 : vector<1x100x128xf32> to vector<100x128xf32>
    %c1_421 = arith.constant 1 : index
    %c0_422 = arith.constant 0 : index
    %c0_423 = arith.constant 0 : index
    %2490 = vector.load %arg5[%c1_421, %c0_422, %c0_423] : memref<3x100x128xf32, #tpu.memory_space<vmem>>, vector<1x100x128xf32>
    %2491 = vector.shape_cast %2490 : vector<1x100x128xf32> to vector<100x128xf32>
    %2492 = vector.shape_cast %2489 : vector<100x128xf32> to vector<1x100x128xf32>
    tpu.vector_store %arg5[%c1_421, %c0_422, %c0_423], %2492 {strides = array<i32>} : memref<3x100x128xf32, #tpu.memory_space<vmem>>, vector<1x100x128xf32>,
    %c2_424 = arith.constant 2 : index
    %c6_425 = arith.constant 6 : index
    %c0_426 = arith.constant 0 : index
    %2493 = vector.load %arg3[%c2_424, %c6_425, %c0_426] : memref<3x128x128xf32, #tpu.memory_space<vmem>>, vector<1x100x128xf32>
    %2494 = vector.shape_cast %2493 : vector<1x100x128xf32> to vector<100x128xf32>
    %c2_427 = arith.constant 2 : index
    %c0_428 = arith.constant 0 : index
    %c0_429 = arith.constant 0 : index
    %2495 = vector.load %arg5[%c2_427, %c0_428, %c0_429] : memref<3x100x128xf32, #tpu.memory_space<vmem>>, vector<1x100x128xf32>
    %2496 = vector.shape_cast %2495 : vector<1x100x128xf32> to vector<100x128xf32>
    %2497 = vector.shape_cast %2494 : vector<100x128xf32> to vector<1x100x128xf32>
    tpu.vector_store %arg5[%c2_427, %c0_428, %c0_429], %2497 {strides = array<i32>} : memref<3x100x128xf32, #tpu.memory_space<vmem>>, vector<1x100x128xf32>,
    %c0_430 = arith.constant 0 : index
    %c106 = arith.constant 106 : index
    %c0_431 = arith.constant 0 : index
    %2498 = vector.load %arg3[%c0_430, %c106, %c0_431] : memref<3x128x128xf32, #tpu.memory_space<vmem>>, vector<1x22x128xf32>
    %2499 = vector.shape_cast %2498 : vector<1x22x128xf32> to vector<22x128xf32>
    %c0_432 = arith.constant 0 : index
    %c0_433 = arith.constant 0 : index
    %c0_434 = arith.constant 0 : index
    %2500 = vector.load %arg6[%c0_432, %c0_433, %c0_434] : memref<3x22x128xf32, #tpu.memory_space<vmem>>, vector<1x22x128xf32>
    %2501 = vector.shape_cast %2500 : vector<1x22x128xf32> to vector<22x128xf32>
    %2502 = vector.shape_cast %2499 : vector<22x128xf32> to vector<1x22x128xf32>
    tpu.vector_store %arg6[%c0_432, %c0_433, %c0_434], %2502 {strides = array<i32>} : memref<3x22x128xf32, #tpu.memory_space<vmem>>, vector<1x22x128xf32>,
    %c1_435 = arith.constant 1 : index
    %c106_436 = arith.constant 106 : index
    %c0_437 = arith.constant 0 : index
    %2503 = vector.load %arg3[%c1_435, %c106_436, %c0_437] : memref<3x128x128xf32, #tpu.memory_space<vmem>>, vector<1x22x128xf32>
    %2504 = vector.shape_cast %2503 : vector<1x22x128xf32> to vector<22x128xf32>
    %c1_438 = arith.constant 1 : index
    %c0_439 = arith.constant 0 : index
    %c0_440 = arith.constant 0 : index
    %2505 = vector.load %arg6[%c1_438, %c0_439, %c0_440] : memref<3x22x128xf32, #tpu.memory_space<vmem>>, vector<1x22x128xf32>
    %2506 = vector.shape_cast %2505 : vector<1x22x128xf32> to vector<22x128xf32>
    %2507 = vector.shape_cast %2504 : vector<22x128xf32> to vector<1x22x128xf32>
    tpu.vector_store %arg6[%c1_438, %c0_439, %c0_440], %2507 {strides = array<i32>} : memref<3x22x128xf32, #tpu.memory_space<vmem>>, vector<1x22x128xf32>,
    %c2_441 = arith.constant 2 : index
    %c106_442 = arith.constant 106 : index
    %c0_443 = arith.constant 0 : index
    %2508 = vector.load %arg3[%c2_441, %c106_442, %c0_443] : memref<3x128x128xf32, #tpu.memory_space<vmem>>, vector<1x22x128xf32>
    %2509 = vector.shape_cast %2508 : vector<1x22x128xf32> to vector<22x128xf32>
    %c2_444 = arith.constant 2 : index
    %c0_445 = arith.constant 0 : index
    %c0_446 = arith.constant 0 : index
    %2510 = vector.load %arg6[%c2_444, %c0_445, %c0_446] : memref<3x22x128xf32, #tpu.memory_space<vmem>>, vector<1x22x128xf32>
    %2511 = vector.shape_cast %2510 : vector<1x22x128xf32> to vector<22x128xf32>
    %2512 = vector.shape_cast %2509 : vector<22x128xf32> to vector<1x22x128xf32>
    tpu.vector_store %arg6[%c2_444, %c0_445, %c0_446], %2512 {strides = array<i32>} : memref<3x22x128xf32, #tpu.memory_space<vmem>>, vector<1x22x128xf32>,
    return
  }
}

</mosaic_0001>

<llo_original>
// kernel: model_forward.1
$region0: #{model_forward.1}
  #allocation0 [shape = 'u32[]', space=smem, size = 0x4, offset = 0x4, fixed_abs, tag = 'smem constant byte address 0x4 - core index']
  #allocation1 [shape = 'u32[144,128]{1,0:T(1,128)}', space=vmem, size = 0x12000, scoped, tag = 'internal scratch']
  %s0 = inlined_call_operand.hbm [shape: f32[3,128,128], index: 0, kind: input, shape index: {}]
  %s1 = inlined_call_operand.vmem [shape: f32[81], index: 1, kind: input, shape index: {}]
  %s2 = inlined_call_operand.vmem [shape: f32[3], index: 2, kind: input, shape index: {}]
  %s3 = inlined_call_operand.hbm [shape: f32[3,128,128], index: 3, kind: output, shape index: {0}]
  %s4 = inlined_call_operand.vmem [shape: f32[3,6,128], index: 4, kind: output, shape index: {1}]
  %s5 = inlined_call_operand.vmem [shape: f32[3,100,128], index: 5, kind: output, shape index: {2}]
  %s6 = inlined_call_operand.vmem [shape: f32[3,22,128], index: 6, kind: output, shape index: {3}]
  %7 = xla_tuple %s3, %s4, %s5, %s6
  %s8 = sld [smem:[#allocation0]]
  $region58: #{model_forward.1} parent=0
    _
  %s10 = ssub.s32 1, %s8
  %s11 = scalar_select 0, %s10, %s8
  $region1: #{model_forward.1} parent=0
    #allocation2 [shape = 'u8[196608]{0}', space=vmem, size = 0x30000, scoped, tag = 'input window, operand 0, single buffered']
    #allocation3 [shape = 's32[1]{0}', space=sflag, size = 0x4, scoped, tag = 'scoped memory for model_forward.1']
    #allocation4 [shape = 's32[1]{0}', space=sflag, size = 0x4, scoped, tag = 'scoped memory for model_forward.1']
    #allocation5 [shape = 's32[1]{0}', space=sflag, size = 0x4, scoped, tag = 'scoped memory for model_forward.1']
    #allocation6 [shape = 'u8[512]{0}', space=smem, size = 0x200, scoped, tag = 'input window, operand 1, single buffered']
    #allocation7 [shape = 'u8[512]{0}', space=smem, size = 0x200, scoped, tag = 'input window, operand 2, single buffered']
    #allocation8 [shape = 's32[1]{0}', space=sflag, size = 0x4, scoped, tag = 'scoped memory for model_forward.1']
    #allocation9 [shape = 'u8[196608]{0}', space=vmem, size = 0x30000, scoped, tag = 'output window, operand 0, single buffered']
    %12 = vsyncpa [#allocation3], 0
    %13 = vsyncpa [#allocation5], 0
    %14 = vsyncpa [#allocation8], 0
    %15 = vsyncpa [#allocation4], 0
    // Predicated region
    $region2: #{model_forward.1} parent=1 // pred_check
      _
    $region3: #{model_forward.1} parent=1 // pred_check_branch
      %17 = sbr.rel (0) target = $region5
    $region4: #{model_forward.1} parent=1 // pred_region
      %s19 = ssub.s32 6144, 6144
      %20 = vsyncadd [#allocation3], %s19
      %s21 = sshll.u32 [#allocation2], 4
      %s22 = int_to_ptr.vmem [resolvable:$true] %s21
      %27 = dma.hbm_to_vmem [thread:$0]  %s0, 6144, %s22, [#allocation3], 128, 128, 8
    $region5: #{model_forward.1} parent=1 // pred_fallthru
      _
    // Predicated region
    $region6: #{model_forward.1} parent=1 // pred_check
      _
    $region7: #{model_forward.1} parent=1 // pred_check_branch
      %29 = sbr.rel (0) target = $region9
    $region8: #{model_forward.1} parent=1 // pred_region
      %s31 = ssub.s32 16, 16
      %32 = vsyncadd [#allocation5], %s31
      %s34 = sshll.u32 %s1, 4
      %s35 = int_to_ptr.vmem [resolvable:$true] %s34
      %37 = dma.vmem_to_smem %s35, 16, [#allocation6], [#allocation5]
    $region9: #{model_forward.1} parent=1 // pred_fallthru
      _
    // Predicated region
    $region10: #{model_forward.1} parent=1 // pred_check
      _
    $region11: #{model_forward.1} parent=1 // pred_check_branch
      %39 = sbr.rel (0) target = $region13
    $region12: #{model_forward.1} parent=1 // pred_region
      %s41 = ssub.s32 16, 16
      %42 = vsyncadd [#allocation8], %s41
      %s44 = sshll.u32 %s2, 4
      %s45 = int_to_ptr.vmem [resolvable:$true] %s44
      %47 = dma.vmem_to_smem %s45, 16, [#allocation7], [#allocation8]
    $region13: #{model_forward.1} parent=1 // pred_fallthru
      _
    // Predicated region
    $region14: #{model_forward.1} parent=1 // pred_check
      _
    $region15: #{model_forward.1} parent=1 // pred_check_branch
      %49 = sbr.rel (0) target = $region17
    $region16: #{model_forward.1} parent=1 // pred_region
      %50 = dma.done [#allocation3], 6144
    $region17: #{model_forward.1} parent=1 // pred_fallthru
      _
    // Predicated region
    $region18: #{model_forward.1} parent=1 // pred_check
      _
    $region19: #{model_forward.1} parent=1 // pred_check_branch
      %52 = sbr.rel (0) target = $region21
    $region20: #{model_forward.1} parent=1 // pred_region
      %53 = dma.done [#allocation5], 16
    $region21: #{model_forward.1} parent=1 // pred_fallthru
      _
    // Predicated region
    $region22: #{model_forward.1} parent=1 // pred_check
      _
    $region23: #{model_forward.1} parent=1 // pred_check_branch
      %55 = sbr.rel (0) target = $region25
    $region24: #{model_forward.1} parent=1 // pred_region
      %56 = dma.done [#allocation8], 16
    $region25: #{model_forward.1} parent=1 // pred_fallthru
      _
    %57 = sfence
    %s58 = sld [smem:[#allocation6]]
    %s59 = sld [smem:[#allocation6 + $0x1]]
    %s60 = sld [smem:[#allocation6 + $0x2]]
    %s61 = sld [smem:[#allocation6 + $0x3]]
    %s62 = sld [smem:[#allocation6 + $0x4]]
    %s63 = sld [smem:[#allocation6 + $0x5]]
    %s64 = sld [smem:[#allocation6 + $0x6]]
    %s65 = sld [smem:[#allocation6 + $0x7]]
    %s66 = sld [smem:[#allocation6 + $0x8]]
    %s67 = sld [smem:[#allocation6 + $0x9]]
    %s68 = sld [smem:[#allocation6 + $0xa]]
    %s69 = sld [smem:[#allocation6 + $0xb]]
    %s70 = sld [smem:[#allocation6 + $0xc]]
    %s71 = sld [smem:[#allocation6 + $0xd]]
    %s72 = sld [smem:[#allocation6 + $0xe]]
    %s73 = sld [smem:[#allocation6 + $0xf]]
    %s74 = sld [smem:[#allocation6 + $0x10]]
    %s75 = sld [smem:[#allocation6 + $0x11]]
    %s76 = sld [smem:[#allocation6 + $0x12]]
    %s77 = sld [smem:[#allocation6 + $0x13]]
    %s78 = sld [smem:[#allocation6 + $0x14]]
    %s79 = sld [smem:[#allocation6 + $0x15]]
    %s80 = sld [smem:[#allocation6 + $0x16]]
    %s81 = sld [smem:[#allocation6 + $0x17]]
    %s82 = sld [smem:[#allocation6 + $0x18]]
    %s83 = sld [smem:[#allocation6 + $0x19]]
    %s84 = sld [smem:[#allocation6 + $0x1a]]
    %s85 = sld [smem:[#allocation6 + $0x1b]]
    %s86 = sld [smem:[#allocation6 + $0x1c]]
    %s87 = sld [smem:[#allocation6 + $0x1d]]
    %s88 = sld [smem:[#allocation6 + $0x1e]]
    %s89 = sld [smem:[#allocation6 + $0x1f]]
    %s90 = sld [smem:[#allocation6 + $0x20]]
    %s91 = sld [smem:[#allocation6 + $0x21]]
    %s92 = sld [smem:[#allocation6 + $0x22]]
    %s93 = sld [smem:[#allocation6 + $0x23]]
    %s94 = sld [smem:[#allocation6 + $0x24]]
    %s95 = sld [smem:[#allocation6 + $0x25]]
    %s96 = sld [smem:[#allocation6 + $0x26]]
    %s97 = sld [smem:[#allocation6 + $0x27]]
    %s98 = sld [smem:[#allocation6 + $0x28]]
    %s99 = sld [smem:[#allocation6 + $0x29]]
    %s100 = sld [smem:[#allocation6 + $0x2a]]
    %s101 = sld [smem:[#allocation6 + $0x2b]]
    %s102 = sld [smem:[#allocation6 + $0x2c]]
    %s103 = sld [smem:[#allocation6 + $0x2d]]
    %s104 = sld [smem:[#allocation6 + $0x2e]]
    %s105 = sld [smem:[#allocation6 + $0x2f]]
    %s106 = sld [smem:[#allocation6 + $0x30]]
    %s107 = sld [smem:[#allocation6 + $0x31]]
    %s108 = sld [smem:[#allocation6 + $0x32]]
    %s109 = sld [smem:[#allocation6 + $0x33]]
    %s110 = sld [smem:[#allocation6 + $0x34]]
    %s111 = sld [smem:[#allocation6 + $0x35]]
    %s112 = sld [smem:[#allocation6 + $0x36]]
    %s113 = sld [smem:[#allocation6 + $0x37]]
    %s114 = sld [smem:[#allocation6 + $0x38]]
    %s115 = sld [smem:[#allocation6 + $0x39]]
    %s116 = sld [smem:[#allocation6 + $0x3a]]
    %s117 = sld [smem:[#allocation6 + $0x3b]]
    %s118 = sld [smem:[#allocation6 + $0x3c]]
    %s119 = sld [smem:[#allocation6 + $0x3d]]
    %s120 = sld [smem:[#allocation6 + $0x3e]]
    %s121 = sld [smem:[#allocation6 + $0x3f]]
    %s122 = sld [smem:[#allocation6 + $0x40]]
    %s123 = sld [smem:[#allocation6 + $0x41]]
    %s124 = sld [smem:[#allocation6 + $0x42]]
    %s125 = sld [smem:[#allocation6 + $0x43]]
    %s126 = sld [smem:[#allocation6 + $0x44]]
    %s127 = sld [smem:[#allocation6 + $0x45]]
    %s128 = sld [smem:[#allocation6 + $0x46]]
    %s129 = sld [smem:[#allocation6 + $0x47]]
    %s130 = sld [smem:[#allocation6 + $0x48]]
    %s131 = sld [smem:[#allocation6 + $0x49]]
    %s132 = sld [smem:[#allocation6 + $0x4a]]
    %s133 = sld [smem:[#allocation6 + $0x4b]]
    %s134 = sld [smem:[#allocation6 + $0x4c]]
    %s135 = sld [smem:[#allocation6 + $0x4d]]
    %s136 = sld [smem:[#allocation6 + $0x4e]]
    %s137 = sld [smem:[#allocation6 + $0x4f]]
    %s138 = sld [smem:[#allocation6 + $0x50]]
    %s139 = sld [smem:[#allocation7]]
    %s140 = sld [smem:[#allocation7 + $0x1]]
    %s141 = sld [smem:[#allocation7 + $0x2]]
    %v142 = vlaneseq
    %v143 = vand.u32 %v142, 127
    %v144 = vlaneseq
    %v145 = vshrl.u32 %v144, 7
    %v146 = vadd.s32 %v145, 8
    %vm147 = vcmp.ge.s32.totalorder %v143, 1
    %vm148 = vcmp.lt.s32.totalorder %v143, 127
    %vm149 = vcmp.ge.s32.totalorder %v145, 1
    %vm150 = vcmp.ge.s32.totalorder %v146, 1
    %vm151 = vcmp.lt.s32.totalorder %v145, 15
    %vm152 = vcmp.lt.s32.totalorder %v146, 15
    %v153 = vstv %s139
    %v154 = vstv %s140
    %v155 = vstv %s141
    %v156 = vld [vmem:[#allocation2] sm:$0xff]
    %v157 = vld [vmem:[#allocation2 + $0x8] sm:$0xff]
    %v158 = vrot.slane %v156, 7
    %v159 = vrot.slane %v157, 7
    %vm160 = vcmp.lt.s32.totalorder %v145, 1
    %v161 = vsel %vm160, %v158, %v159
    %v162 = vsel %vm160, %v159, %v158
    %v163 = vsel %vm149, %v162, 0.0
    %v164 = vsel %vm150, %v161, 0.0
    %v165 = vstv %s58
    %v166 = vmul.f32 %v165, %v163
    %v167 = vmul.f32 %v165, %v164
    %v168 = vadd.f32 %v166, 0.0
    %v169 = vadd.f32 %v167, 0.0
    %v170 = vstv %s85
    %v171 = vmul.f32 %v170, %v163
    %v172 = vmul.f32 %v170, %v164
    %v173 = vadd.f32 %v171, 0.0
    %v174 = vadd.f32 %v172, 0.0
    %v175 = vstv %s112
    %v176 = vmul.f32 %v175, %v163
    %v177 = vmul.f32 %v175, %v164
    %v178 = vadd.f32 %v176, 0.0
    %v179 = vadd.f32 %v177, 0.0
    %v180 = vstv %s59
    %v181 = vmul.f32 %v180, %v163
    %v182 = vmul.f32 %v180, %v164
    %v183 = vadd.f32 %v153, %v181
    %v184 = vadd.f32 %v153, %v182
    %v185 = vstv %s86
    %v186 = vmul.f32 %v185, %v163
    %v187 = vmul.f32 %v185, %v164
    %v188 = vadd.f32 %v154, %v186
    %v189 = vadd.f32 %v154, %v187
    %v190 = vstv %s113
    %v191 = vmul.f32 %v190, %v163
    %v192 = vmul.f32 %v190, %v164
    %v193 = vadd.f32 %v155, %v191
    %v194 = vadd.f32 %v155, %v192
    %v195 = vstv %s60
    %v196 = vmul.f32 %v195, %v163
    %v197 = vmul.f32 %v195, %v164
    %v198 = vadd.f32 %v196, 0.0
    %v199 = vadd.f32 %v197, 0.0
    %v200 = vstv %s87
    %v201 = vmul.f32 %v200, %v163
    %v202 = vmul.f32 %v200, %v164
    %v203 = vadd.f32 %v201, 0.0
    %v204 = vadd.f32 %v202, 0.0
    %v205 = vstv %s114
    %v206 = vmul.f32 %v205, %v163
    %v207 = vmul.f32 %v205, %v164
    %v208 = vadd.f32 %v206, 0.0
    %v209 = vadd.f32 %v207, 0.0
    %v210 = vstv %s61
    %v211 = vmul.f32 %v210, %v156
    %v212 = vmul.f32 %v210, %v157
    %v213 = vadd.f32 %v168, %v211
    %v214 = vadd.f32 %v169, %v212
    %v215 = vstv %s88
    %v216 = vmul.f32 %v215, %v156
    %v217 = vmul.f32 %v215, %v157
    %v218 = vadd.f32 %v173, %v216
    %v219 = vadd.f32 %v174, %v217
    %v220 = vstv %s115
    %v221 = vmul.f32 %v220, %v156
    %v222 = vmul.f32 %v220, %v157
    %v223 = vadd.f32 %v178, %v221
    %v224 = vadd.f32 %v179, %v222
    %v225 = vstv %s62
    %v226 = vmul.f32 %v225, %v156
    %v227 = vmul.f32 %v225, %v157
    %v228 = vadd.f32 %v183, %v226
    %v229 = vadd.f32 %v184, %v227
    %v230 = vstv %s89
    %v231 = vmul.f32 %v230, %v156
    %v232 = vmul.f32 %v230, %v157
    %v233 = vadd.f32 %v188, %v231
    %v234 = vadd.f32 %v189, %v232
    %v235 = vstv %s116
    %v236 = vmul.f32 %v235, %v156
    %v237 = vmul.f32 %v235, %v157
    %v238 = vadd.f32 %v193, %v236
    %v239 = vadd.f32 %v194, %v237
    %v240 = vstv %s63
    %v241 = vmul.f32 %v240, %v156
    %v242 = vmul.f32 %v240, %v157
    %v243 = vadd.f32 %v198, %v241
    %v244 = vadd.f32 %v199, %v242
    %v245 = vstv %s90
    %v246 = vmul.f32 %v245, %v156
    %v247 = vmul.f32 %v245, %v157
    %v248 = vadd.f32 %v203, %v246
    %v249 = vadd.f32 %v204, %v247
    %v250 = vstv %s117
    %v251 = vmul.f32 %v250, %v156
    %v252 = vmul.f32 %v250, %v157
    %v253 = vadd.f32 %v208, %v251
    %v254 = vadd.f32 %v209, %v252
    %v255 = vld [vmem:[#allocation2 + $0x1] sm:$0xff]
    %v256 = vld [vmem:[#allocation2 + $0x9] sm:$0xff]
    %v257 = vstv %s64
    %v258 = vmul.f32 %v257, %v255
    %v259 = vmul.f32 %v257, %v256
    %v260 = vadd.f32 %v213, %v258
    %v261 = vadd.f32 %v214, %v259
    %v262 = vstv %s91
    %v263 = vmul.f32 %v262, %v255
    %v264 = vmul.f32 %v262, %v256
    %v265 = vadd.f32 %v218, %v263
    %v266 = vadd.f32 %v219, %v264
    %v267 = vstv %s118
    %v268 = vmul.f32 %v267, %v255
    %v269 = vmul.f32 %v267, %v256
    %v270 = vadd.f32 %v223, %v268
    %v271 = vadd.f32 %v224, %v269
    %v272 = vstv %s65
    %v273 = vmul.f32 %v272, %v255
    %v274 = vmul.f32 %v272, %v256
    %v275 = vadd.f32 %v228, %v273
    %v276 = vadd.f32 %v229, %v274
    %v277 = vstv %s92
    %v278 = vmul.f32 %v277, %v255
    %v279 = vmul.f32 %v277, %v256
    %v280 = vadd.f32 %v233, %v278
    %v281 = vadd.f32 %v234, %v279
    %v282 = vstv %s119
    %v283 = vmul.f32 %v282, %v255
    %v284 = vmul.f32 %v282, %v256
    %v285 = vadd.f32 %v238, %v283
    %v286 = vadd.f32 %v239, %v284
    %v287 = vstv %s66
    %v288 = vmul.f32 %v287, %v255
    %v289 = vmul.f32 %v287, %v256
    %v290 = vadd.f32 %v243, %v288
    %v291 = vadd.f32 %v244, %v289
    %v292 = vstv %s93
    %v293 = vmul.f32 %v292, %v255
    %v294 = vmul.f32 %v292, %v256
    %v295 = vadd.f32 %v248, %v293
    %v296 = vadd.f32 %v249, %v294
    %v297 = vstv %s120
    %v298 = vmul.f32 %v297, %v255
    %v299 = vmul.f32 %v297, %v256
    %v300 = vadd.f32 %v253, %v298
    %v301 = vadd.f32 %v254, %v299
    %s302 = scalar_lea.vmem [#allocation2], 128
    %v303 = vld [vmem:[%s302] sm:$0xff]
    %v304 = vld [vmem:[%s302 + $0x8] sm:$0xff]
    %v305 = vrot.slane %v303, 7
    %v306 = vrot.slane %v304, 7
    %v307 = vsel %vm160, %v305, %v306
    %v308 = vsel %vm160, %v306, %v305
    %v309 = vsel %vm149, %v308, 0.0
    %v310 = vsel %vm150, %v307, 0.0
    %v311 = vstv %s67
    %v312 = vmul.f32 %v311, %v309
    %v313 = vmul.f32 %v311, %v310
    %v314 = vadd.f32 %v260, %v312
    %v315 = vadd.f32 %v261, %v313
    %v316 = vstv %s94
    %v317 = vmul.f32 %v316, %v309
    %v318 = vmul.f32 %v316, %v310
    %v319 = vadd.f32 %v265, %v317
    %v320 = vadd.f32 %v266, %v318
    %v321 = vstv %s121
    %v322 = vmul.f32 %v321, %v309
    %v323 = vmul.f32 %v321, %v310
    %v324 = vadd.f32 %v270, %v322
    %v325 = vadd.f32 %v271, %v323
    %v326 = vstv %s68
    %v327 = vmul.f32 %v326, %v309
    %v328 = vmul.f32 %v326, %v310
    %v329 = vadd.f32 %v275, %v327
    %v330 = vadd.f32 %v276, %v328
    %v331 = vstv %s95
    %v332 = vmul.f32 %v331, %v309
    %v333 = vmul.f32 %v331, %v310
    %v334 = vadd.f32 %v280, %v332
    %v335 = vadd.f32 %v281, %v333
    %v336 = vstv %s122
    %v337 = vmul.f32 %v336, %v309
    %v338 = vmul.f32 %v336, %v310
    %v339 = vadd.f32 %v285, %v337
    %v340 = vadd.f32 %v286, %v338
    %v341 = vstv %s69
    %v342 = vmul.f32 %v341, %v309
    %v343 = vmul.f32 %v341, %v310
    %v344 = vadd.f32 %v290, %v342
    %v345 = vadd.f32 %v291, %v343
    %v346 = vstv %s96
    %v347 = vmul.f32 %v346, %v309
    %v348 = vmul.f32 %v346, %v310
    %v349 = vadd.f32 %v295, %v347
    %v350 = vadd.f32 %v296, %v348
    %v351 = vstv %s123
    %v352 = vmul.f32 %v351, %v309
    %v353 = vmul.f32 %v351, %v310
    %v354 = vadd.f32 %v300, %v352
    %v355 = vadd.f32 %v301, %v353
    %v356 = vstv %s70
    %v357 = vmul.f32 %v356, %v303
    %v358 = vmul.f32 %v356, %v304
    %v359 = vadd.f32 %v314, %v357
    %v360 = vadd.f32 %v315, %v358
    %v361 = vstv %s97
    %v362 = vmul.f32 %v361, %v303
    %v363 = vmul.f32 %v361, %v304
    %v364 = vadd.f32 %v319, %v362
    %v365 = vadd.f32 %v320, %v363
    %v366 = vstv %s124
    %v367 = vmul.f32 %v366, %v303
    %v368 = vmul.f32 %v366, %v304
    %v369 = vadd.f32 %v324, %v367
    %v370 = vadd.f32 %v325, %v368
    %v371 = vstv %s71
    %v372 = vmul.f32 %v371, %v303
    %v373 = vmul.f32 %v371, %v304
    %v374 = vadd.f32 %v329, %v372
    %v375 = vadd.f32 %v330, %v373
    %v376 = vstv %s98
    %v377 = vmul.f32 %v376, %v303
    %v378 = vmul.f32 %v376, %v304
    %v379 = vadd.f32 %v334, %v377
    %v380 = vadd.f32 %v335, %v378
    %v381 = vstv %s125
    %v382 = vmul.f32 %v381, %v303
    %v383 = vmul.f32 %v381, %v304
    %v384 = vadd.f32 %v339, %v382
    %v385 = vadd.f32 %v340, %v383
    %v386 = vstv %s72
    %v387 = vmul.f32 %v386, %v303
    %v388 = vmul.f32 %v386, %v304
    %v389 = vadd.f32 %v344, %v387
    %v390 = vadd.f32 %v345, %v388
    %v391 = vstv %s99
    %v392 = vmul.f32 %v391, %v303
    %v393 = vmul.f32 %v391, %v304
    %v394 = vadd.f32 %v349, %v392
    %v395 = vadd.f32 %v350, %v393
    %v396 = vstv %s126
    %v397 = vmul.f32 %v396, %v303
    %v398 = vmul.f32 %v396, %v304
    %v399 = vadd.f32 %v354, %v397
    %v400 = vadd.f32 %v355, %v398
    %v401 = vld [vmem:[%s302 + $0x1] sm:$0xff]
    %v402 = vld [vmem:[%s302 + $0x9] sm:$0xff]
    %v403 = vstv %s73
    %v404 = vmul.f32 %v403, %v401
    %v405 = vmul.f32 %v403, %v402
    %v406 = vadd.f32 %v359, %v404
    %v407 = vadd.f32 %v360, %v405
    %v408 = vstv %s100
    %v409 = vmul.f32 %v408, %v401
    %v410 = vmul.f32 %v408, %v402
    %v411 = vadd.f32 %v364, %v409
    %v412 = vadd.f32 %v365, %v410
    %v413 = vstv %s127
    %v414 = vmul.f32 %v413, %v401
    %v415 = vmul.f32 %v413, %v402
    %v416 = vadd.f32 %v369, %v414
    %v417 = vadd.f32 %v370, %v415
    %v418 = vstv %s74
    %v419 = vmul.f32 %v418, %v401
    %v420 = vmul.f32 %v418, %v402
    %v421 = vadd.f32 %v374, %v419
    %v422 = vadd.f32 %v375, %v420
    %v423 = vstv %s101
    %v424 = vmul.f32 %v423, %v401
    %v425 = vmul.f32 %v423, %v402
    %v426 = vadd.f32 %v379, %v424
    %v427 = vadd.f32 %v380, %v425
    %v428 = vstv %s128
    %v429 = vmul.f32 %v428, %v401
    %v430 = vmul.f32 %v428, %v402
    %v431 = vadd.f32 %v384, %v429
    %v432 = vadd.f32 %v385, %v430
    %v433 = vstv %s75
    %v434 = vmul.f32 %v433, %v401
    %v435 = vmul.f32 %v433, %v402
    %v436 = vadd.f32 %v389, %v434
    %v437 = vadd.f32 %v390, %v435
    %v438 = vstv %s102
    %v439 = vmul.f32 %v438, %v401
    %v440 = vmul.f32 %v438, %v402
    %v441 = vadd.f32 %v394, %v439
    %v442 = vadd.f32 %v395, %v440
    %v443 = vstv %s129
    %v444 = vmul.f32 %v443, %v401
    %v445 = vmul.f32 %v443, %v402
    %v446 = vadd.f32 %v399, %v444
    %v447 = vadd.f32 %v400, %v445
    %s448 = scalar_lea.vmem [#allocation2], 256
    %v449 = vld [vmem:[%s448] sm:$0xff]
    %v450 = vld [vmem:[%s448 + $0x8] sm:$0xff]
    %v451 = vrot.slane %v449, 7
    %v452 = vrot.slane %v450, 7
    %v453 = vsel %vm160, %v451, %v452
    %v454 = vsel %vm160, %v452, %v451
    %v455 = vsel %vm149, %v454, 0.0
    %v456 = vsel %vm150, %v453, 0.0
    %v457 = vstv %s76
    %v458 = vmul.f32 %v457, %v455
    %v459 = vmul.f32 %v457, %v456
    %v460 = vadd.f32 %v406, %v458
    %v461 = vadd.f32 %v407, %v459
    %v462 = vstv %s103
    %v463 = vmul.f32 %v462, %v455
    %v464 = vmul.f32 %v462, %v456
    %v465 = vadd.f32 %v411, %v463
    %v466 = vadd.f32 %v412, %v464
    %v467 = vstv %s130
    %v468 = vmul.f32 %v467, %v455
    %v469 = vmul.f32 %v467, %v456
    %v470 = vadd.f32 %v416, %v468
    %v471 = vadd.f32 %v417, %v469
    %v472 = vstv %s77
    %v473 = vmul.f32 %v472, %v455
    %v474 = vmul.f32 %v472, %v456
    %v475 = vadd.f32 %v421, %v473
    %v476 = vadd.f32 %v422, %v474
    %v477 = vstv %s104
    %v478 = vmul.f32 %v477, %v455
    %v479 = vmul.f32 %v477, %v456
    %v480 = vadd.f32 %v426, %v478
    %v481 = vadd.f32 %v427, %v479
    %v482 = vstv %s131
    %v483 = vmul.f32 %v482, %v455
    %v484 = vmul.f32 %v482, %v456
    %v485 = vadd.f32 %v431, %v483
    %v486 = vadd.f32 %v432, %v484
    %v487 = vstv %s78
    %v488 = vmul.f32 %v487, %v455
    %v489 = vmul.f32 %v487, %v456
    %v490 = vadd.f32 %v436, %v488
    %v491 = vadd.f32 %v437, %v489
    %v492 = vstv %s105
    %v493 = vmul.f32 %v492, %v455
    %v494 = vmul.f32 %v492, %v456
    %v495 = vadd.f32 %v441, %v493
    %v496 = vadd.f32 %v442, %v494
    %v497 = vstv %s132
    %v498 = vmul.f32 %v497, %v455
    %v499 = vmul.f32 %v497, %v456
    %v500 = vadd.f32 %v446, %v498
    %v501 = vadd.f32 %v447, %v499
    %v502 = vstv %s79
    %v503 = vmul.f32 %v502, %v449
    %v504 = vmul.f32 %v502, %v450
    %v505 = vadd.f32 %v460, %v503
    %v506 = vadd.f32 %v461, %v504
    %v507 = vstv %s106
    %v508 = vmul.f32 %v507, %v449
    %v509 = vmul.f32 %v507, %v450
    %v510 = vadd.f32 %v465, %v508
    %v511 = vadd.f32 %v466, %v509
    %v512 = vstv %s133
    %v513 = vmul.f32 %v512, %v449
    %v514 = vmul.f32 %v512, %v450
    %v515 = vadd.f32 %v470, %v513
    %v516 = vadd.f32 %v471, %v514
    %v517 = vstv %s80
    %v518 = vmul.f32 %v517, %v449
    %v519 = vmul.f32 %v517, %v450
    %v520 = vadd.f32 %v475, %v518
    %v521 = vadd.f32 %v476, %v519
    %v522 = vstv %s107
    %v523 = vmul.f32 %v522, %v449
    %v524 = vmul.f32 %v522, %v450
    %v525 = vadd.f32 %v480, %v523
    %v526 = vadd.f32 %v481, %v524
    %v527 = vstv %s134
    %v528 = vmul.f32 %v527, %v449
    %v529 = vmul.f32 %v527, %v450
    %v530 = vadd.f32 %v485, %v528
    %v531 = vadd.f32 %v486, %v529
    %v532 = vstv %s81
    %v533 = vmul.f32 %v532, %v449
    %v534 = vmul.f32 %v532, %v450
    %v535 = vadd.f32 %v490, %v533
    %v536 = vadd.f32 %v491, %v534
    %v537 = vstv %s108
    %v538 = vmul.f32 %v537, %v449
    %v539 = vmul.f32 %v537, %v450
    %v540 = vadd.f32 %v495, %v538
    %v541 = vadd.f32 %v496, %v539
    %v542 = vstv %s135
    %v543 = vmul.f32 %v542, %v449
    %v544 = vmul.f32 %v542, %v450
    %v545 = vadd.f32 %v500, %v543
    %v546 = vadd.f32 %v501, %v544
    %v547 = vld [vmem:[%s448 + $0x1] sm:$0xff]
    %v548 = vld [vmem:[%s448 + $0x9] sm:$0xff]
    %v549 = vstv %s82
    %v550 = vmul.f32 %v549, %v547
    %v551 = vmul.f32 %v549, %v548
    %v552 = vadd.f32 %v505, %v550
    %v553 = vadd.f32 %v506, %v551
    %v554 = vstv %s109
    %v555 = vmul.f32 %v554, %v547
    %v556 = vmul.f32 %v554, %v548
    %v557 = vadd.f32 %v510, %v555
    %v558 = vadd.f32 %v511, %v556
    %v559 = vstv %s136
    %v560 = vmul.f32 %v559, %v547
    %v561 = vmul.f32 %v559, %v548
    %v562 = vadd.f32 %v515, %v560
    %v563 = vadd.f32 %v516, %v561
    %v564 = vstv %s83
    %v565 = vmul.f32 %v564, %v547
    %v566 = vmul.f32 %v564, %v548
    %v567 = vadd.f32 %v520, %v565
    %v568 = vadd.f32 %v521, %v566
    %v569 = vstv %s110
    %v570 = vmul.f32 %v569, %v547
    %v571 = vmul.f32 %v569, %v548
    %v572 = vadd.f32 %v525, %v570
    %v573 = vadd.f32 %v526, %v571
    %v574 = vstv %s137
    %v575 = vmul.f32 %v574, %v547
    %v576 = vmul.f32 %v574, %v548
    %v577 = vadd.f32 %v530, %v575
    %v578 = vadd.f32 %v531, %v576
    %v579 = vstv %s84
    %v580 = vmul.f32 %v579, %v547
    %v581 = vmul.f32 %v579, %v548
    %v582 = vadd.f32 %v535, %v580
    %v583 = vadd.f32 %v536, %v581
    %v584 = vstv %s111
    %v585 = vmul.f32 %v584, %v547
    %v586 = vmul.f32 %v584, %v548
    %v587 = vadd.f32 %v540, %v585
    %v588 = vadd.f32 %v541, %v586
    %v589 = vstv %s138
    %v590 = vmul.f32 %v589, %v547
    %v591 = vmul.f32 %v589, %v548
    %v592 = vadd.f32 %v545, %v590
    %v593 = vadd.f32 %v546, %v591
    %594 = vrot.lane.b32.xlu0 %v552, 1
    %v595 = vpop.permute.xlu0 %594
    %596 = vrot.lane.b32.xlu0 %v553, 1
    %v597 = vpop.permute.xlu0 %596
    %v598 = vsel %vm147, %v595, 0.0
    %v599 = vsel %vm147, %v597, 0.0
    %v600 = vadd.f32 %v567, %v598
    %v601 = vadd.f32 %v568, %v599
    %602 = vrot.lane.b32.xlu0 %v582, 127
    %v603 = vpop.permute.xlu0 %602
    %604 = vrot.lane.b32.xlu0 %v583, 127
    %v605 = vpop.permute.xlu0 %604
    %v606 = vsel %vm148, %v603, 0.0
    %v607 = vsel %vm148, %v605, 0.0
    %v608 = vadd.f32 %v600, %v606
    %v609 = vadd.f32 %v601, %v607
    %610 = vst [vmem:[#allocation9] sm:$0xff] %v608
    %611 = vst [vmem:[#allocation9 + $0x8] sm:$0xff] %v609
    %612 = vrot.lane.b32.xlu0 %v557, 1
    %v613 = vpop.permute.xlu0 %612
    %614 = vrot.lane.b32.xlu0 %v558, 1
    %v615 = vpop.permute.xlu0 %614
    %v616 = vsel %vm147, %v613, 0.0
    %v617 = vsel %vm147, %v615, 0.0
    %v618 = vadd.f32 %v572, %v616
    %v619 = vadd.f32 %v573, %v617
    %620 = vrot.lane.b32.xlu0 %v587, 127
    %v621 = vpop.permute.xlu0 %620
    %622 = vrot.lane.b32.xlu0 %v588, 127
    %v623 = vpop.permute.xlu0 %622
    %v624 = vsel %vm148, %v621, 0.0
    %v625 = vsel %vm148, %v623, 0.0
    %v626 = vadd.f32 %v618, %v624
    %v627 = vadd.f32 %v619, %v625
    %s628 = scalar_lea.vmem [#allocation9], 128
    %629 = vst [vmem:[%s628] sm:$0xff] %v626
    %630 = vst [vmem:[%s628 + $0x8] sm:$0xff] %v627
    %631 = vrot.lane.b32.xlu0 %v562, 1
    %v632 = vpop.permute.xlu0 %631
    %633 = vrot.lane.b32.xlu0 %v563, 1
    %v634 = vpop.permute.xlu0 %633
    %v635 = vsel %vm147, %v632, 0.0
    %v636 = vsel %vm147, %v634, 0.0
    %v637 = vadd.f32 %v577, %v635
    %v638 = vadd.f32 %v578, %v636
    %639 = vrot.lane.b32.xlu0 %v592, 127
    %v640 = vpop.permute.xlu0 %639
    %641 = vrot.lane.b32.xlu0 %v593, 127
    %v642 = vpop.permute.xlu0 %641
    %v643 = vsel %vm148, %v640, 0.0
    %v644 = vsel %vm148, %v642, 0.0
    %v645 = vadd.f32 %v637, %v643
    %v646 = vadd.f32 %v638, %v644
    %s647 = scalar_lea.vmem [#allocation9], 256
    %648 = vst [vmem:[%s647] sm:$0xff] %v645
    %649 = vst [vmem:[%s647 + $0x8] sm:$0xff] %v646
    %v650 = vld [vmem:[#allocation2 + $0xf] sm:$0xff]
    %v651 = vld [vmem:[#allocation2 + $0x17] sm:$0xff]
    %v652 = vmul.f32 %v165, %v650
    %v653 = vmul.f32 %v165, %v651
    %v654 = vadd.f32 %v652, 0.0
    %v655 = vadd.f32 %v653, 0.0
    %v656 = vmul.f32 %v170, %v650
    %v657 = vmul.f32 %v170, %v651
    %v658 = vadd.f32 %v656, 0.0
    %v659 = vadd.f32 %v657, 0.0
    %v660 = vmul.f32 %v175, %v650
    %v661 = vmul.f32 %v175, %v651
    %v662 = vadd.f32 %v660, 0.0
    %v663 = vadd.f32 %v661, 0.0
    %v664 = vmul.f32 %v180, %v650
    %v665 = vmul.f32 %v180, %v651
    %v666 = vadd.f32 %v153, %v664
    %v667 = vadd.f32 %v153, %v665
    %v668 = vmul.f32 %v185, %v650
    %v669 = vmul.f32 %v185, %v651
    %v670 = vadd.f32 %v154, %v668
    %v671 = vadd.f32 %v154, %v669
    %v672 = vmul.f32 %v190, %v650
    %v673 = vmul.f32 %v190, %v651
    %v674 = vadd.f32 %v155, %v672
    %v675 = vadd.f32 %v155, %v673
    %v676 = vmul.f32 %v195, %v650
    %v677 = vmul.f32 %v195, %v651
    %v678 = vadd.f32 %v676, 0.0
    %v679 = vadd.f32 %v677, 0.0
    %v680 = vmul.f32 %v200, %v650
    %v681 = vmul.f32 %v200, %v651
    %v682 = vadd.f32 %v680, 0.0
    %v683 = vadd.f32 %v681, 0.0
    %v684 = vmul.f32 %v205, %v650
    %v685 = vmul.f32 %v205, %v651
    %v686 = vadd.f32 %v684, 0.0
    %v687 = vadd.f32 %v685, 0.0
    %v688 = vld [vmem:[#allocation2 + $0x10] sm:$0xff]
    %v689 = vld [vmem:[#allocation2 + $0x18] sm:$0xff]
    %v690 = vmul.f32 %v210, %v688
    %v691 = vmul.f32 %v210, %v689
    %v692 = vadd.f32 %v654, %v690
    %v693 = vadd.f32 %v655, %v691
    %v694 = vmul.f32 %v215, %v688
    %v695 = vmul.f32 %v215, %v689
    %v696 = vadd.f32 %v658, %v694
    %v697 = vadd.f32 %v659, %v695
    %v698 = vmul.f32 %v220, %v688
    %v699 = vmul.f32 %v220, %v689
    %v700 = vadd.f32 %v662, %v698
    %v701 = vadd.f32 %v663, %v699
    %v702 = vmul.f32 %v225, %v688
    %v703 = vmul.f32 %v225, %v689
    %v704 = vadd.f32 %v666, %v702
    %v705 = vadd.f32 %v667, %v703
    %v706 = vmul.f32 %v230, %v688
    %v707 = vmul.f32 %v230, %v689
    %v708 = vadd.f32 %v670, %v706
    %v709 = vadd.f32 %v671, %v707
    %v710 = vmul.f32 %v235, %v688
    %v711 = vmul.f32 %v235, %v689
    %v712 = vadd.f32 %v674, %v710
    %v713 = vadd.f32 %v675, %v711
    %v714 = vmul.f32 %v240, %v688
    %v715 = vmul.f32 %v240, %v689
    %v716 = vadd.f32 %v678, %v714
    %v717 = vadd.f32 %v679, %v715
    %v718 = vmul.f32 %v245, %v688
    %v719 = vmul.f32 %v245, %v689
    %v720 = vadd.f32 %v682, %v718
    %v721 = vadd.f32 %v683, %v719
    %v722 = vmul.f32 %v250, %v688
    %v723 = vmul.f32 %v250, %v689
    %v724 = vadd.f32 %v686, %v722
    %v725 = vadd.f32 %v687, %v723
    %v726 = vld [vmem:[#allocation2 + $0x11] sm:$0xff]
    %v727 = vld [vmem:[#allocation2 + $0x19] sm:$0xff]
    %v728 = vmul.f32 %v257, %v726
    %v729 = vmul.f32 %v257, %v727
    %v730 = vadd.f32 %v692, %v728
    %v731 = vadd.f32 %v693, %v729
    %v732 = vmul.f32 %v262, %v726
    %v733 = vmul.f32 %v262, %v727
    %v734 = vadd.f32 %v696, %v732
    %v735 = vadd.f32 %v697, %v733
    %v736 = vmul.f32 %v267, %v726
    %v737 = vmul.f32 %v267, %v727
    %v738 = vadd.f32 %v700, %v736
    %v739 = vadd.f32 %v701, %v737
    %v740 = vmul.f32 %v272, %v726
    %v741 = vmul.f32 %v272, %v727
    %v742 = vadd.f32 %v704, %v740
    %v743 = vadd.f32 %v705, %v741
    %v744 = vmul.f32 %v277, %v726
    %v745 = vmul.f32 %v277, %v727
    %v746 = vadd.f32 %v708, %v744
    %v747 = vadd.f32 %v709, %v745
    %v748 = vmul.f32 %v282, %v726
    %v749 = vmul.f32 %v282, %v727
    %v750 = vadd.f32 %v712, %v748
    %v751 = vadd.f32 %v713, %v749
    %v752 = vmul.f32 %v287, %v726
    %v753 = vmul.f32 %v287, %v727
    %v754 = vadd.f32 %v716, %v752
    %v755 = vadd.f32 %v717, %v753
    %v756 = vmul.f32 %v292, %v726
    %v757 = vmul.f32 %v292, %v727
    %v758 = vadd.f32 %v720, %v756
    %v759 = vadd.f32 %v721, %v757
    %v760 = vmul.f32 %v297, %v726
    %v761 = vmul.f32 %v297, %v727
    %v762 = vadd.f32 %v724, %v760
    %v763 = vadd.f32 %v725, %v761
    %v764 = vld [vmem:[%s302 + $0xf] sm:$0xff]
    %v765 = vld [vmem:[%s302 + $0x17] sm:$0xff]
    %v766 = vmul.f32 %v311, %v764
    %v767 = vmul.f32 %v311, %v765
    %v768 = vadd.f32 %v730, %v766
    %v769 = vadd.f32 %v731, %v767
    %v770 = vmul.f32 %v316, %v764
    %v771 = vmul.f32 %v316, %v765
    %v772 = vadd.f32 %v734, %v770
    %v773 = vadd.f32 %v735, %v771
    %v774 = vmul.f32 %v321, %v764
    %v775 = vmul.f32 %v321, %v765
    %v776 = vadd.f32 %v738, %v774
    %v777 = vadd.f32 %v739, %v775
    %v778 = vmul.f32 %v326, %v764
    %v779 = vmul.f32 %v326, %v765
    %v780 = vadd.f32 %v742, %v778
    %v781 = vadd.f32 %v743, %v779
    %v782 = vmul.f32 %v331, %v764
    %v783 = vmul.f32 %v331, %v765
    %v784 = vadd.f32 %v746, %v782
    %v785 = vadd.f32 %v747, %v783
    %v786 = vmul.f32 %v336, %v764
    %v787 = vmul.f32 %v336, %v765
    %v788 = vadd.f32 %v750, %v786
    %v789 = vadd.f32 %v751, %v787
    %v790 = vmul.f32 %v341, %v764
    %v791 = vmul.f32 %v341, %v765
    %v792 = vadd.f32 %v754, %v790
    %v793 = vadd.f32 %v755, %v791
    %v794 = vmul.f32 %v346, %v764
    %v795 = vmul.f32 %v346, %v765
    %v796 = vadd.f32 %v758, %v794
    %v797 = vadd.f32 %v759, %v795
    %v798 = vmul.f32 %v351, %v764
    %v799 = vmul.f32 %v351, %v765
    %v800 = vadd.f32 %v762, %v798
    %v801 = vadd.f32 %v763, %v799
    %v802 = vld [vmem:[%s302 + $0x10] sm:$0xff]
    %v803 = vld [vmem:[%s302 + $0x18] sm:$0xff]
    %v804 = vmul.f32 %v356, %v802
    %v805 = vmul.f32 %v356, %v803
    %v806 = vadd.f32 %v768, %v804
    %v807 = vadd.f32 %v769, %v805
    %v808 = vmul.f32 %v361, %v802
    %v809 = vmul.f32 %v361, %v803
    %v810 = vadd.f32 %v772, %v808
    %v811 = vadd.f32 %v773, %v809
    %v812 = vmul.f32 %v366, %v802
    %v813 = vmul.f32 %v366, %v803
    %v814 = vadd.f32 %v776, %v812
    %v815 = vadd.f32 %v777, %v813
    %v816 = vmul.f32 %v371, %v802
    %v817 = vmul.f32 %v371, %v803
    %v818 = vadd.f32 %v780, %v816
    %v819 = vadd.f32 %v781, %v817
    %v820 = vmul.f32 %v376, %v802
    %v821 = vmul.f32 %v376, %v803
    %v822 = vadd.f32 %v784, %v820
    %v823 = vadd.f32 %v785, %v821
    %v824 = vmul.f32 %v381, %v802
    %v825 = vmul.f32 %v381, %v803
    %v826 = vadd.f32 %v788, %v824
    %v827 = vadd.f32 %v789, %v825
    %v828 = vmul.f32 %v386, %v802
    %v829 = vmul.f32 %v386, %v803
    %v830 = vadd.f32 %v792, %v828
    %v831 = vadd.f32 %v793, %v829
    %v832 = vmul.f32 %v391, %v802
    %v833 = vmul.f32 %v391, %v803
    %v834 = vadd.f32 %v796, %v832
    %v835 = vadd.f32 %v797, %v833
    %v836 = vmul.f32 %v396, %v802
    %v837 = vmul.f32 %v396, %v803
    %v838 = vadd.f32 %v800, %v836
    %v839 = vadd.f32 %v801, %v837
    %v840 = vld [vmem:[%s302 + $0x11] sm:$0xff]
    %v841 = vld [vmem:[%s302 + $0x19] sm:$0xff]
    %v842 = vmul.f32 %v403, %v840
    %v843 = vmul.f32 %v403, %v841
    %v844 = vadd.f32 %v806, %v842
    %v845 = vadd.f32 %v807, %v843
    %v846 = vmul.f32 %v408, %v840
    %v847 = vmul.f32 %v408, %v841
    %v848 = vadd.f32 %v810, %v846
    %v849 = vadd.f32 %v811, %v847
    %v850 = vmul.f32 %v413, %v840
    %v851 = vmul.f32 %v413, %v841
    %v852 = vadd.f32 %v814, %v850
    %v853 = vadd.f32 %v815, %v851
    %v854 = vmul.f32 %v418, %v840
    %v855 = vmul.f32 %v418, %v841
    %v856 = vadd.f32 %v818, %v854
    %v857 = vadd.f32 %v819, %v855
    %v858 = vmul.f32 %v423, %v840
    %v859 = vmul.f32 %v423, %v841
    %v860 = vadd.f32 %v822, %v858
    %v861 = vadd.f32 %v823, %v859
    %v862 = vmul.f32 %v428, %v840
    %v863 = vmul.f32 %v428, %v841
    %v864 = vadd.f32 %v826, %v862
    %v865 = vadd.f32 %v827, %v863
    %v866 = vmul.f32 %v433, %v840
    %v867 = vmul.f32 %v433, %v841
    %v868 = vadd.f32 %v830, %v866
    %v869 = vadd.f32 %v831, %v867
    %v870 = vmul.f32 %v438, %v840
    %v871 = vmul.f32 %v438, %v841
    %v872 = vadd.f32 %v834, %v870
    %v873 = vadd.f32 %v835, %v871
    %v874 = vmul.f32 %v443, %v840
    %v875 = vmul.f32 %v443, %v841
    %v876 = vadd.f32 %v838, %v874
    %v877 = vadd.f32 %v839, %v875
    %v878 = vld [vmem:[%s448 + $0xf] sm:$0xff]
    %v879 = vld [vmem:[%s448 + $0x17] sm:$0xff]
    %v880 = vmul.f32 %v457, %v878
    %v881 = vmul.f32 %v457, %v879
    %v882 = vadd.f32 %v844, %v880
    %v883 = vadd.f32 %v845, %v881
    %v884 = vmul.f32 %v462, %v878
    %v885 = vmul.f32 %v462, %v879
    %v886 = vadd.f32 %v848, %v884
    %v887 = vadd.f32 %v849, %v885
    %v888 = vmul.f32 %v467, %v878
    %v889 = vmul.f32 %v467, %v879
    %v890 = vadd.f32 %v852, %v888
    %v891 = vadd.f32 %v853, %v889
    %v892 = vmul.f32 %v472, %v878
    %v893 = vmul.f32 %v472, %v879
    %v894 = vadd.f32 %v856, %v892
    %v895 = vadd.f32 %v857, %v893
    %v896 = vmul.f32 %v477, %v878
    %v897 = vmul.f32 %v477, %v879
    %v898 = vadd.f32 %v860, %v896
    %v899 = vadd.f32 %v861, %v897
    %v900 = vmul.f32 %v482, %v878
    %v901 = vmul.f32 %v482, %v879
    %v902 = vadd.f32 %v864, %v900
    %v903 = vadd.f32 %v865, %v901
    %v904 = vmul.f32 %v487, %v878
    %v905 = vmul.f32 %v487, %v879
    %v906 = vadd.f32 %v868, %v904
    %v907 = vadd.f32 %v869, %v905
    %v908 = vmul.f32 %v492, %v878
    %v909 = vmul.f32 %v492, %v879
    %v910 = vadd.f32 %v872, %v908
    %v911 = vadd.f32 %v873, %v909
    %v912 = vmul.f32 %v497, %v878
    %v913 = vmul.f32 %v497, %v879
    %v914 = vadd.f32 %v876, %v912
    %v915 = vadd.f32 %v877, %v913
    %v916 = vld [vmem:[%s448 + $0x10] sm:$0xff]
    %v917 = vld [vmem:[%s448 + $0x18] sm:$0xff]
    %v918 = vmul.f32 %v502, %v916
    %v919 = vmul.f32 %v502, %v917
    %v920 = vadd.f32 %v882, %v918
    %v921 = vadd.f32 %v883, %v919
    %v922 = vmul.f32 %v507, %v916
    %v923 = vmul.f32 %v507, %v917
    %v924 = vadd.f32 %v886, %v922
    %v925 = vadd.f32 %v887, %v923
    %v926 = vmul.f32 %v512, %v916
    %v927 = vmul.f32 %v512, %v917
    %v928 = vadd.f32 %v890, %v926
    %v929 = vadd.f32 %v891, %v927
    %v930 = vmul.f32 %v517, %v916
    %v931 = vmul.f32 %v517, %v917
    %v932 = vadd.f32 %v894, %v930
    %v933 = vadd.f32 %v895, %v931
    %v934 = vmul.f32 %v522, %v916
    %v935 = vmul.f32 %v522, %v917
    %v936 = vadd.f32 %v898, %v934
    %v937 = vadd.f32 %v899, %v935
    %v938 = vmul.f32 %v527, %v916
    %v939 = vmul.f32 %v527, %v917
    %v940 = vadd.f32 %v902, %v938
    %v941 = vadd.f32 %v903, %v939
    %v942 = vmul.f32 %v532, %v916
    %v943 = vmul.f32 %v532, %v917
    %v944 = vadd.f32 %v906, %v942
    %v945 = vadd.f32 %v907, %v943
    %v946 = vmul.f32 %v537, %v916
    %v947 = vmul.f32 %v537, %v917
    %v948 = vadd.f32 %v910, %v946
    %v949 = vadd.f32 %v911, %v947
    %v950 = vmul.f32 %v542, %v916
    %v951 = vmul.f32 %v542, %v917
    %v952 = vadd.f32 %v914, %v950
    %v953 = vadd.f32 %v915, %v951
    %v954 = vld [vmem:[%s448 + $0x11] sm:$0xff]
    %v955 = vld [vmem:[%s448 + $0x19] sm:$0xff]
    %v956 = vmul.f32 %v549, %v954
    %v957 = vmul.f32 %v549, %v955
    %v958 = vadd.f32 %v920, %v956
    %v959 = vadd.f32 %v921, %v957
    %v960 = vmul.f32 %v554, %v954
    %v961 = vmul.f32 %v554, %v955
    %v962 = vadd.f32 %v924, %v960
    %v963 = vadd.f32 %v925, %v961
    %v964 = vmul.f32 %v559, %v954
    %v965 = vmul.f32 %v559, %v955
    %v966 = vadd.f32 %v928, %v964
    %v967 = vadd.f32 %v929, %v965
    %v968 = vmul.f32 %v564, %v954
    %v969 = vmul.f32 %v564, %v955
    %v970 = vadd.f32 %v932, %v968
    %v971 = vadd.f32 %v933, %v969
    %v972 = vmul.f32 %v569, %v954
    %v973 = vmul.f32 %v569, %v955
    %v974 = vadd.f32 %v936, %v972
    %v975 = vadd.f32 %v937, %v973
    %v976 = vmul.f32 %v574, %v954
    %v977 = vmul.f32 %v574, %v955
    %v978 = vadd.f32 %v940, %v976
    %v979 = vadd.f32 %v941, %v977
    %v980 = vmul.f32 %v579, %v954
    %v981 = vmul.f32 %v579, %v955
    %v982 = vadd.f32 %v944, %v980
    %v983 = vadd.f32 %v945, %v981
    %v984 = vmul.f32 %v584, %v954
    %v985 = vmul.f32 %v584, %v955
    %v986 = vadd.f32 %v948, %v984
    %v987 = vadd.f32 %v949, %v985
    %v988 = vmul.f32 %v589, %v954
    %v989 = vmul.f32 %v589, %v955
    %v990 = vadd.f32 %v952, %v988
    %v991 = vadd.f32 %v953, %v989
    %992 = vrot.lane.b32.xlu0 %v958, 1
    %v993 = vpop.permute.xlu0 %992
    %994 = vrot.lane.b32.xlu0 %v959, 1
    %v995 = vpop.permute.xlu0 %994
    %v996 = vsel %vm147, %v993, 0.0
    %v997 = vsel %vm147, %v995, 0.0
    %v998 = vadd.f32 %v970, %v996
    %v999 = vadd.f32 %v971, %v997
    %1000 = vrot.lane.b32.xlu0 %v982, 127
    %v1001 = vpop.permute.xlu0 %1000
    %1002 = vrot.lane.b32.xlu0 %v983, 127
    %v1003 = vpop.permute.xlu0 %1002
    %v1004 = vsel %vm148, %v1001, 0.0
    %v1005 = vsel %vm148, %v1003, 0.0
    %v1006 = vadd.f32 %v998, %v1004
    %v1007 = vadd.f32 %v999, %v1005
    %1008 = vst [vmem:[#allocation9 + $0x10] sm:$0xff] %v1006
    %1009 = vst [vmem:[#allocation9 + $0x18] sm:$0xff] %v1007
    %1010 = vrot.lane.b32.xlu0 %v962, 1
    %v1011 = vpop.permute.xlu0 %1010
    %1012 = vrot.lane.b32.xlu0 %v963, 1
    %v1013 = vpop.permute.xlu0 %1012
    %v1014 = vsel %vm147, %v1011, 0.0
    %v1015 = vsel %vm147, %v1013, 0.0
    %v1016 = vadd.f32 %v974, %v1014
    %v1017 = vadd.f32 %v975, %v1015
    %1018 = vrot.lane.b32.xlu0 %v986, 127
    %v1019 = vpop.permute.xlu0 %1018
    %1020 = vrot.lane.b32.xlu0 %v987, 127
    %v1021 = vpop.permute.xlu0 %1020
    %v1022 = vsel %vm148, %v1019, 0.0
    %v1023 = vsel %vm148, %v1021, 0.0
    %v1024 = vadd.f32 %v1016, %v1022
    %v1025 = vadd.f32 %v1017, %v1023
    %1026 = vst [vmem:[%s628 + $0x10] sm:$0xff] %v1024
    %1027 = vst [vmem:[%s628 + $0x18] sm:$0xff] %v1025
    %1028 = vrot.lane.b32.xlu0 %v966, 1
    %v1029 = vpop.permute.xlu0 %1028
    %1030 = vrot.lane.b32.xlu0 %v967, 1
    %v1031 = vpop.permute.xlu0 %1030
    %v1032 = vsel %vm147, %v1029, 0.0
    %v1033 = vsel %vm147, %v1031, 0.0
    %v1034 = vadd.f32 %v978, %v1032
    %v1035 = vadd.f32 %v979, %v1033
    %1036 = vrot.lane.b32.xlu0 %v990, 127
    %v1037 = vpop.permute.xlu0 %1036
    %1038 = vrot.lane.b32.xlu0 %v991, 127
    %v1039 = vpop.permute.xlu0 %1038
    %v1040 = vsel %vm148, %v1037, 0.0
    %v1041 = vsel %vm148, %v1039, 0.0
    %v1042 = vadd.f32 %v1034, %v1040
    %v1043 = vadd.f32 %v1035, %v1041
    %1044 = vst [vmem:[%s647 + $0x10] sm:$0xff] %v1042
    %1045 = vst [vmem:[%s647 + $0x18] sm:$0xff] %v1043
    %v1046 = vld [vmem:[#allocation2 + $0x1f] sm:$0xff]
    %v1047 = vld [vmem:[#allocation2 + $0x27] sm:$0xff]
    %v1048 = vmul.f32 %v165, %v1046
    %v1049 = vmul.f32 %v165, %v1047
    %v1050 = vadd.f32 %v1048, 0.0
    %v1051 = vadd.f32 %v1049, 0.0
    %v1052 = vmul.f32 %v170, %v1046
    %v1053 = vmul.f32 %v170, %v1047
    %v1054 = vadd.f32 %v1052, 0.0
    %v1055 = vadd.f32 %v1053, 0.0
    %v1056 = vmul.f32 %v175, %v1046
    %v1057 = vmul.f32 %v175, %v1047
    %v1058 = vadd.f32 %v1056, 0.0
    %v1059 = vadd.f32 %v1057, 0.0
    %v1060 = vmul.f32 %v180, %v1046
    %v1061 = vmul.f32 %v180, %v1047
    %v1062 = vadd.f32 %v153, %v1060
    %v1063 = vadd.f32 %v153, %v1061
    %v1064 = vmul.f32 %v185, %v1046
    %v1065 = vmul.f32 %v185, %v1047
    %v1066 = vadd.f32 %v154, %v1064
    %v1067 = vadd.f32 %v154, %v1065
    %v1068 = vmul.f32 %v190, %v1046
    %v1069 = vmul.f32 %v190, %v1047
    %v1070 = vadd.f32 %v155, %v1068
    %v1071 = vadd.f32 %v155, %v1069
    %v1072 = vmul.f32 %v195, %v1046
    %v1073 = vmul.f32 %v195, %v1047
    %v1074 = vadd.f32 %v1072, 0.0
    %v1075 = vadd.f32 %v1073, 0.0
    %v1076 = vmul.f32 %v200, %v1046
    %v1077 = vmul.f32 %v200, %v1047
    %v1078 = vadd.f32 %v1076, 0.0
    %v1079 = vadd.f32 %v1077, 0.0
    %v1080 = vmul.f32 %v205, %v1046
    %v1081 = vmul.f32 %v205, %v1047
    %v1082 = vadd.f32 %v1080, 0.0
    %v1083 = vadd.f32 %v1081, 0.0
    %v1084 = vld [vmem:[#allocation2 + $0x20] sm:$0xff]
    %v1085 = vld [vmem:[#allocation2 + $0x28] sm:$0xff]
    %v1086 = vmul.f32 %v210, %v1084
    %v1087 = vmul.f32 %v210, %v1085
    %v1088 = vadd.f32 %v1050, %v1086
    %v1089 = vadd.f32 %v1051, %v1087
    %v1090 = vmul.f32 %v215, %v1084
    %v1091 = vmul.f32 %v215, %v1085
    %v1092 = vadd.f32 %v1054, %v1090
    %v1093 = vadd.f32 %v1055, %v1091
    %v1094 = vmul.f32 %v220, %v1084
    %v1095 = vmul.f32 %v220, %v1085
    %v1096 = vadd.f32 %v1058, %v1094
    %v1097 = vadd.f32 %v1059, %v1095
    %v1098 = vmul.f32 %v225, %v1084
    %v1099 = vmul.f32 %v225, %v1085
    %v1100 = vadd.f32 %v1062, %v1098
    %v1101 = vadd.f32 %v1063, %v1099
    %v1102 = vmul.f32 %v230, %v1084
    %v1103 = vmul.f32 %v230, %v1085
    %v1104 = vadd.f32 %v1066, %v1102
    %v1105 = vadd.f32 %v1067, %v1103
    %v1106 = vmul.f32 %v235, %v1084
    %v1107 = vmul.f32 %v235, %v1085
    %v1108 = vadd.f32 %v1070, %v1106
    %v1109 = vadd.f32 %v1071, %v1107
    %v1110 = vmul.f32 %v240, %v1084
    %v1111 = vmul.f32 %v240, %v1085
    %v1112 = vadd.f32 %v1074, %v1110
    %v1113 = vadd.f32 %v1075, %v1111
    %v1114 = vmul.f32 %v245, %v1084
    %v1115 = vmul.f32 %v245, %v1085
    %v1116 = vadd.f32 %v1078, %v1114
    %v1117 = vadd.f32 %v1079, %v1115
    %v1118 = vmul.f32 %v250, %v1084
    %v1119 = vmul.f32 %v250, %v1085
    %v1120 = vadd.f32 %v1082, %v1118
    %v1121 = vadd.f32 %v1083, %v1119
    %v1122 = vld [vmem:[#allocation2 + $0x21] sm:$0xff]
    %v1123 = vld [vmem:[#allocation2 + $0x29] sm:$0xff]
    %v1124 = vmul.f32 %v257, %v1122
    %v1125 = vmul.f32 %v257, %v1123
    %v1126 = vadd.f32 %v1088, %v1124
    %v1127 = vadd.f32 %v1089, %v1125
    %v1128 = vmul.f32 %v262, %v1122
    %v1129 = vmul.f32 %v262, %v1123
    %v1130 = vadd.f32 %v1092, %v1128
    %v1131 = vadd.f32 %v1093, %v1129
    %v1132 = vmul.f32 %v267, %v1122
    %v1133 = vmul.f32 %v267, %v1123
    %v1134 = vadd.f32 %v1096, %v1132
    %v1135 = vadd.f32 %v1097, %v1133
    %v1136 = vmul.f32 %v272, %v1122
    %v1137 = vmul.f32 %v272, %v1123
    %v1138 = vadd.f32 %v1100, %v1136
    %v1139 = vadd.f32 %v1101, %v1137
    %v1140 = vmul.f32 %v277, %v1122
    %v1141 = vmul.f32 %v277, %v1123
    %v1142 = vadd.f32 %v1104, %v1140
    %v1143 = vadd.f32 %v1105, %v1141
    %v1144 = vmul.f32 %v282, %v1122
    %v1145 = vmul.f32 %v282, %v1123
    %v1146 = vadd.f32 %v1108, %v1144
    %v1147 = vadd.f32 %v1109, %v1145
    %v1148 = vmul.f32 %v287, %v1122
    %v1149 = vmul.f32 %v287, %v1123
    %v1150 = vadd.f32 %v1112, %v1148
    %v1151 = vadd.f32 %v1113, %v1149
    %v1152 = vmul.f32 %v292, %v1122
    %v1153 = vmul.f32 %v292, %v1123
    %v1154 = vadd.f32 %v1116, %v1152
    %v1155 = vadd.f32 %v1117, %v1153
    %v1156 = vmul.f32 %v297, %v1122
    %v1157 = vmul.f32 %v297, %v1123
    %v1158 = vadd.f32 %v1120, %v1156
    %v1159 = vadd.f32 %v1121, %v1157
    %v1160 = vld [vmem:[%s302 + $0x1f] sm:$0xff]
    %v1161 = vld [vmem:[%s302 + $0x27] sm:$0xff]
    %v1162 = vmul.f32 %v311, %v1160
    %v1163 = vmul.f32 %v311, %v1161
    %v1164 = vadd.f32 %v1126, %v1162
    %v1165 = vadd.f32 %v1127, %v1163
    %v1166 = vmul.f32 %v316, %v1160
    %v1167 = vmul.f32 %v316, %v1161
    %v1168 = vadd.f32 %v1130, %v1166
    %v1169 = vadd.f32 %v1131, %v1167
    %v1170 = vmul.f32 %v321, %v1160
    %v1171 = vmul.f32 %v321, %v1161
    %v1172 = vadd.f32 %v1134, %v1170
    %v1173 = vadd.f32 %v1135, %v1171
    %v1174 = vmul.f32 %v326, %v1160
    %v1175 = vmul.f32 %v326, %v1161
    %v1176 = vadd.f32 %v1138, %v1174
    %v1177 = vadd.f32 %v1139, %v1175
    %v1178 = vmul.f32 %v331, %v1160
    %v1179 = vmul.f32 %v331, %v1161
    %v1180 = vadd.f32 %v1142, %v1178
    %v1181 = vadd.f32 %v1143, %v1179
    %v1182 = vmul.f32 %v336, %v1160
    %v1183 = vmul.f32 %v336, %v1161
    %v1184 = vadd.f32 %v1146, %v1182
    %v1185 = vadd.f32 %v1147, %v1183
    %v1186 = vmul.f32 %v341, %v1160
    %v1187 = vmul.f32 %v341, %v1161
    %v1188 = vadd.f32 %v1150, %v1186
    %v1189 = vadd.f32 %v1151, %v1187
    %v1190 = vmul.f32 %v346, %v1160
    %v1191 = vmul.f32 %v346, %v1161
    %v1192 = vadd.f32 %v1154, %v1190
    %v1193 = vadd.f32 %v1155, %v1191
    %v1194 = vmul.f32 %v351, %v1160
    %v1195 = vmul.f32 %v351, %v1161
    %v1196 = vadd.f32 %v1158, %v1194
    %v1197 = vadd.f32 %v1159, %v1195
    %v1198 = vld [vmem:[%s302 + $0x20] sm:$0xff]
    %v1199 = vld [vmem:[%s302 + $0x28] sm:$0xff]
    %v1200 = vmul.f32 %v356, %v1198
    %v1201 = vmul.f32 %v356, %v1199
    %v1202 = vadd.f32 %v1164, %v1200
    %v1203 = vadd.f32 %v1165, %v1201
    %v1204 = vmul.f32 %v361, %v1198
    %v1205 = vmul.f32 %v361, %v1199
    %v1206 = vadd.f32 %v1168, %v1204
    %v1207 = vadd.f32 %v1169, %v1205
    %v1208 = vmul.f32 %v366, %v1198
    %v1209 = vmul.f32 %v366, %v1199
    %v1210 = vadd.f32 %v1172, %v1208
    %v1211 = vadd.f32 %v1173, %v1209
    %v1212 = vmul.f32 %v371, %v1198
    %v1213 = vmul.f32 %v371, %v1199
    %v1214 = vadd.f32 %v1176, %v1212
    %v1215 = vadd.f32 %v1177, %v1213
    %v1216 = vmul.f32 %v376, %v1198
    %v1217 = vmul.f32 %v376, %v1199
    %v1218 = vadd.f32 %v1180, %v1216
    %v1219 = vadd.f32 %v1181, %v1217
    %v1220 = vmul.f32 %v381, %v1198
    %v1221 = vmul.f32 %v381, %v1199
    %v1222 = vadd.f32 %v1184, %v1220
    %v1223 = vadd.f32 %v1185, %v1221
    %v1224 = vmul.f32 %v386, %v1198
    %v1225 = vmul.f32 %v386, %v1199
    %v1226 = vadd.f32 %v1188, %v1224
    %v1227 = vadd.f32 %v1189, %v1225
    %v1228 = vmul.f32 %v391, %v1198
    %v1229 = vmul.f32 %v391, %v1199
    %v1230 = vadd.f32 %v1192, %v1228
    %v1231 = vadd.f32 %v1193, %v1229
    %v1232 = vmul.f32 %v396, %v1198
    %v1233 = vmul.f32 %v396, %v1199
    %v1234 = vadd.f32 %v1196, %v1232
    %v1235 = vadd.f32 %v1197, %v1233
    %v1236 = vld [vmem:[%s302 + $0x21] sm:$0xff]
    %v1237 = vld [vmem:[%s302 + $0x29] sm:$0xff]
    %v1238 = vmul.f32 %v403, %v1236
    %v1239 = vmul.f32 %v403, %v1237
    %v1240 = vadd.f32 %v1202, %v1238
    %v1241 = vadd.f32 %v1203, %v1239
    %v1242 = vmul.f32 %v408, %v1236
    %v1243 = vmul.f32 %v408, %v1237
    %v1244 = vadd.f32 %v1206, %v1242
    %v1245 = vadd.f32 %v1207, %v1243
    %v1246 = vmul.f32 %v413, %v1236
    %v1247 = vmul.f32 %v413, %v1237
    %v1248 = vadd.f32 %v1210, %v1246
    %v1249 = vadd.f32 %v1211, %v1247
    %v1250 = vmul.f32 %v418, %v1236
    %v1251 = vmul.f32 %v418, %v1237
    %v1252 = vadd.f32 %v1214, %v1250
    %v1253 = vadd.f32 %v1215, %v1251
    %v1254 = vmul.f32 %v423, %v1236
    %v1255 = vmul.f32 %v423, %v1237
    %v1256 = vadd.f32 %v1218, %v1254
    %v1257 = vadd.f32 %v1219, %v1255
    %v1258 = vmul.f32 %v428, %v1236
    %v1259 = vmul.f32 %v428, %v1237
    %v1260 = vadd.f32 %v1222, %v1258
    %v1261 = vadd.f32 %v1223, %v1259
    %v1262 = vmul.f32 %v433, %v1236
    %v1263 = vmul.f32 %v433, %v1237
    %v1264 = vadd.f32 %v1226, %v1262
    %v1265 = vadd.f32 %v1227, %v1263
    %v1266 = vmul.f32 %v438, %v1236
    %v1267 = vmul.f32 %v438, %v1237
    %v1268 = vadd.f32 %v1230, %v1266
    %v1269 = vadd.f32 %v1231, %v1267
    %v1270 = vmul.f32 %v443, %v1236
    %v1271 = vmul.f32 %v443, %v1237
    %v1272 = vadd.f32 %v1234, %v1270
    %v1273 = vadd.f32 %v1235, %v1271
    %v1274 = vld [vmem:[%s448 + $0x1f] sm:$0xff]
    %v1275 = vld [vmem:[%s448 + $0x27] sm:$0xff]
    %v1276 = vmul.f32 %v457, %v1274
    %v1277 = vmul.f32 %v457, %v1275
    %v1278 = vadd.f32 %v1240, %v1276
    %v1279 = vadd.f32 %v1241, %v1277
    %v1280 = vmul.f32 %v462, %v1274
    %v1281 = vmul.f32 %v462, %v1275
    %v1282 = vadd.f32 %v1244, %v1280
    %v1283 = vadd.f32 %v1245, %v1281
    %v1284 = vmul.f32 %v467, %v1274
    %v1285 = vmul.f32 %v467, %v1275
    %v1286 = vadd.f32 %v1248, %v1284
    %v1287 = vadd.f32 %v1249, %v1285
    %v1288 = vmul.f32 %v472, %v1274
    %v1289 = vmul.f32 %v472, %v1275
    %v1290 = vadd.f32 %v1252, %v1288
    %v1291 = vadd.f32 %v1253, %v1289
    %v1292 = vmul.f32 %v477, %v1274
    %v1293 = vmul.f32 %v477, %v1275
    %v1294 = vadd.f32 %v1256, %v1292
    %v1295 = vadd.f32 %v1257, %v1293
    %v1296 = vmul.f32 %v482, %v1274
    %v1297 = vmul.f32 %v482, %v1275
    %v1298 = vadd.f32 %v1260, %v1296
    %v1299 = vadd.f32 %v1261, %v1297
    %v1300 = vmul.f32 %v487, %v1274
    %v1301 = vmul.f32 %v487, %v1275
    %v1302 = vadd.f32 %v1264, %v1300
    %v1303 = vadd.f32 %v1265, %v1301
    %v1304 = vmul.f32 %v492, %v1274
    %v1305 = vmul.f32 %v492, %v1275
    %v1306 = vadd.f32 %v1268, %v1304
    %v1307 = vadd.f32 %v1269, %v1305
    %v1308 = vmul.f32 %v497, %v1274
    %v1309 = vmul.f32 %v497, %v1275
    %v1310 = vadd.f32 %v1272, %v1308
    %v1311 = vadd.f32 %v1273, %v1309
    %v1312 = vld [vmem:[%s448 + $0x20] sm:$0xff]
    %v1313 = vld [vmem:[%s448 + $0x28] sm:$0xff]
    %v1314 = vmul.f32 %v502, %v1312
    %v1315 = vmul.f32 %v502, %v1313
    %v1316 = vadd.f32 %v1278, %v1314
    %v1317 = vadd.f32 %v1279, %v1315
    %v1318 = vmul.f32 %v507, %v1312
    %v1319 = vmul.f32 %v507, %v1313
    %v1320 = vadd.f32 %v1282, %v1318
    %v1321 = vadd.f32 %v1283, %v1319
    %v1322 = vmul.f32 %v512, %v1312
    %v1323 = vmul.f32 %v512, %v1313
    %v1324 = vadd.f32 %v1286, %v1322
    %v1325 = vadd.f32 %v1287, %v1323
    %v1326 = vmul.f32 %v517, %v1312
    %v1327 = vmul.f32 %v517, %v1313
    %v1328 = vadd.f32 %v1290, %v1326
    %v1329 = vadd.f32 %v1291, %v1327
    %v1330 = vmul.f32 %v522, %v1312
    %v1331 = vmul.f32 %v522, %v1313
    %v1332 = vadd.f32 %v1294, %v1330
    %v1333 = vadd.f32 %v1295, %v1331
    %v1334 = vmul.f32 %v527, %v1312
    %v1335 = vmul.f32 %v527, %v1313
    %v1336 = vadd.f32 %v1298, %v1334
    %v1337 = vadd.f32 %v1299, %v1335
    %v1338 = vmul.f32 %v532, %v1312
    %v1339 = vmul.f32 %v532, %v1313
    %v1340 = vadd.f32 %v1302, %v1338
    %v1341 = vadd.f32 %v1303, %v1339
    %v1342 = vmul.f32 %v537, %v1312
    %v1343 = vmul.f32 %v537, %v1313
    %v1344 = vadd.f32 %v1306, %v1342
    %v1345 = vadd.f32 %v1307, %v1343
    %v1346 = vmul.f32 %v542, %v1312
    %v1347 = vmul.f32 %v542, %v1313
    %v1348 = vadd.f32 %v1310, %v1346
    %v1349 = vadd.f32 %v1311, %v1347
    %v1350 = vld [vmem:[%s448 + $0x21] sm:$0xff]
    %v1351 = vld [vmem:[%s448 + $0x29] sm:$0xff]
    %v1352 = vmul.f32 %v549, %v1350
    %v1353 = vmul.f32 %v549, %v1351
    %v1354 = vadd.f32 %v1316, %v1352
    %v1355 = vadd.f32 %v1317, %v1353
    %v1356 = vmul.f32 %v554, %v1350
    %v1357 = vmul.f32 %v554, %v1351
    %v1358 = vadd.f32 %v1320, %v1356
    %v1359 = vadd.f32 %v1321, %v1357
    %v1360 = vmul.f32 %v559, %v1350
    %v1361 = vmul.f32 %v559, %v1351
    %v1362 = vadd.f32 %v1324, %v1360
    %v1363 = vadd.f32 %v1325, %v1361
    %v1364 = vmul.f32 %v564, %v1350
    %v1365 = vmul.f32 %v564, %v1351
    %v1366 = vadd.f32 %v1328, %v1364
    %v1367 = vadd.f32 %v1329, %v1365
    %v1368 = vmul.f32 %v569, %v1350
    %v1369 = vmul.f32 %v569, %v1351
    %v1370 = vadd.f32 %v1332, %v1368
    %v1371 = vadd.f32 %v1333, %v1369
    %v1372 = vmul.f32 %v574, %v1350
    %v1373 = vmul.f32 %v574, %v1351
    %v1374 = vadd.f32 %v1336, %v1372
    %v1375 = vadd.f32 %v1337, %v1373
    %v1376 = vmul.f32 %v579, %v1350
    %v1377 = vmul.f32 %v579, %v1351
    %v1378 = vadd.f32 %v1340, %v1376
    %v1379 = vadd.f32 %v1341, %v1377
    %v1380 = vmul.f32 %v584, %v1350
    %v1381 = vmul.f32 %v584, %v1351
    %v1382 = vadd.f32 %v1344, %v1380
    %v1383 = vadd.f32 %v1345, %v1381
    %v1384 = vmul.f32 %v589, %v1350
    %v1385 = vmul.f32 %v589, %v1351
    %v1386 = vadd.f32 %v1348, %v1384
    %v1387 = vadd.f32 %v1349, %v1385
    %1388 = vrot.lane.b32.xlu0 %v1354, 1
    %v1389 = vpop.permute.xlu0 %1388
    %1390 = vrot.lane.b32.xlu0 %v1355, 1
    %v1391 = vpop.permute.xlu0 %1390
    %v1392 = vsel %vm147, %v1389, 0.0
    %v1393 = vsel %vm147, %v1391, 0.0
    %v1394 = vadd.f32 %v1366, %v1392
    %v1395 = vadd.f32 %v1367, %v1393
    %1396 = vrot.lane.b32.xlu0 %v1378, 127
    %v1397 = vpop.permute.xlu0 %1396
    %1398 = vrot.lane.b32.xlu0 %v1379, 127
    %v1399 = vpop.permute.xlu0 %1398
    %v1400 = vsel %vm148, %v1397, 0.0
    %v1401 = vsel %vm148, %v1399, 0.0
    %v1402 = vadd.f32 %v1394, %v1400
    %v1403 = vadd.f32 %v1395, %v1401
    %1404 = vst [vmem:[#allocation9 + $0x20] sm:$0xff] %v1402
    %1405 = vst [vmem:[#allocation9 + $0x28] sm:$0xff] %v1403
    %1406 = vrot.lane.b32.xlu0 %v1358, 1
    %v1407 = vpop.permute.xlu0 %1406
    %1408 = vrot.lane.b32.xlu0 %v1359, 1
    %v1409 = vpop.permute.xlu0 %1408
    %v1410 = vsel %vm147, %v1407, 0.0
    %v1411 = vsel %vm147, %v1409, 0.0
    %v1412 = vadd.f32 %v1370, %v1410
    %v1413 = vadd.f32 %v1371, %v1411
    %1414 = vrot.lane.b32.xlu0 %v1382, 127
    %v1415 = vpop.permute.xlu0 %1414
    %1416 = vrot.lane.b32.xlu0 %v1383, 127
    %v1417 = vpop.permute.xlu0 %1416
    %v1418 = vsel %vm148, %v1415, 0.0
    %v1419 = vsel %vm148, %v1417, 0.0
    %v1420 = vadd.f32 %v1412, %v1418
    %v1421 = vadd.f32 %v1413, %v1419
    %1422 = vst [vmem:[%s628 + $0x20] sm:$0xff] %v1420
    %1423 = vst [vmem:[%s628 + $0x28] sm:$0xff] %v1421
    %1424 = vrot.lane.b32.xlu0 %v1362, 1
    %v1425 = vpop.permute.xlu0 %1424
    %1426 = vrot.lane.b32.xlu0 %v1363, 1
    %v1427 = vpop.permute.xlu0 %1426
    %v1428 = vsel %vm147, %v1425, 0.0
    %v1429 = vsel %vm147, %v1427, 0.0
    %v1430 = vadd.f32 %v1374, %v1428
    %v1431 = vadd.f32 %v1375, %v1429
    %1432 = vrot.lane.b32.xlu0 %v1386, 127
    %v1433 = vpop.permute.xlu0 %1432
    %1434 = vrot.lane.b32.xlu0 %v1387, 127
    %v1435 = vpop.permute.xlu0 %1434
    %v1436 = vsel %vm148, %v1433, 0.0
    %v1437 = vsel %vm148, %v1435, 0.0
    %v1438 = vadd.f32 %v1430, %v1436
    %v1439 = vadd.f32 %v1431, %v1437
    %1440 = vst [vmem:[%s647 + $0x20] sm:$0xff] %v1438
    %1441 = vst [vmem:[%s647 + $0x28] sm:$0xff] %v1439
    %v1442 = vld [vmem:[#allocation2 + $0x2f] sm:$0xff]
    %v1443 = vld [vmem:[#allocation2 + $0x37] sm:$0xff]
    %v1444 = vmul.f32 %v165, %v1442
    %v1445 = vmul.f32 %v165, %v1443
    %v1446 = vadd.f32 %v1444, 0.0
    %v1447 = vadd.f32 %v1445, 0.0
    %v1448 = vmul.f32 %v170, %v1442
    %v1449 = vmul.f32 %v170, %v1443
    %v1450 = vadd.f32 %v1448, 0.0
    %v1451 = vadd.f32 %v1449, 0.0
    %v1452 = vmul.f32 %v175, %v1442
    %v1453 = vmul.f32 %v175, %v1443
    %v1454 = vadd.f32 %v1452, 0.0
    %v1455 = vadd.f32 %v1453, 0.0
    %v1456 = vmul.f32 %v180, %v1442
    %v1457 = vmul.f32 %v180, %v1443
    %v1458 = vadd.f32 %v153, %v1456
    %v1459 = vadd.f32 %v153, %v1457
    %v1460 = vmul.f32 %v185, %v1442
    %v1461 = vmul.f32 %v185, %v1443
    %v1462 = vadd.f32 %v154, %v1460
    %v1463 = vadd.f32 %v154, %v1461
    %v1464 = vmul.f32 %v190, %v1442
    %v1465 = vmul.f32 %v190, %v1443
    %v1466 = vadd.f32 %v155, %v1464
    %v1467 = vadd.f32 %v155, %v1465
    %v1468 = vmul.f32 %v195, %v1442
    %v1469 = vmul.f32 %v195, %v1443
    %v1470 = vadd.f32 %v1468, 0.0
    %v1471 = vadd.f32 %v1469, 0.0
    %v1472 = vmul.f32 %v200, %v1442
    %v1473 = vmul.f32 %v200, %v1443
    %v1474 = vadd.f32 %v1472, 0.0
    %v1475 = vadd.f32 %v1473, 0.0
    %v1476 = vmul.f32 %v205, %v1442
    %v1477 = vmul.f32 %v205, %v1443
    %v1478 = vadd.f32 %v1476, 0.0
    %v1479 = vadd.f32 %v1477, 0.0
    %v1480 = vld [vmem:[#allocation2 + $0x30] sm:$0xff]
    %v1481 = vld [vmem:[#allocation2 + $0x38] sm:$0xff]
    %v1482 = vmul.f32 %v210, %v1480
    %v1483 = vmul.f32 %v210, %v1481
    %v1484 = vadd.f32 %v1446, %v1482
    %v1485 = vadd.f32 %v1447, %v1483
    %v1486 = vmul.f32 %v215, %v1480
    %v1487 = vmul.f32 %v215, %v1481
    %v1488 = vadd.f32 %v1450, %v1486
    %v1489 = vadd.f32 %v1451, %v1487
    %v1490 = vmul.f32 %v220, %v1480
    %v1491 = vmul.f32 %v220, %v1481
    %v1492 = vadd.f32 %v1454, %v1490
    %v1493 = vadd.f32 %v1455, %v1491
    %v1494 = vmul.f32 %v225, %v1480
    %v1495 = vmul.f32 %v225, %v1481
    %v1496 = vadd.f32 %v1458, %v1494
    %v1497 = vadd.f32 %v1459, %v1495
    %v1498 = vmul.f32 %v230, %v1480
    %v1499 = vmul.f32 %v230, %v1481
    %v1500 = vadd.f32 %v1462, %v1498
    %v1501 = vadd.f32 %v1463, %v1499
    %v1502 = vmul.f32 %v235, %v1480
    %v1503 = vmul.f32 %v235, %v1481
    %v1504 = vadd.f32 %v1466, %v1502
    %v1505 = vadd.f32 %v1467, %v1503
    %v1506 = vmul.f32 %v240, %v1480
    %v1507 = vmul.f32 %v240, %v1481
    %v1508 = vadd.f32 %v1470, %v1506
    %v1509 = vadd.f32 %v1471, %v1507
    %v1510 = vmul.f32 %v245, %v1480
    %v1511 = vmul.f32 %v245, %v1481
    %v1512 = vadd.f32 %v1474, %v1510
    %v1513 = vadd.f32 %v1475, %v1511
    %v1514 = vmul.f32 %v250, %v1480
    %v1515 = vmul.f32 %v250, %v1481
    %v1516 = vadd.f32 %v1478, %v1514
    %v1517 = vadd.f32 %v1479, %v1515
    %v1518 = vld [vmem:[#allocation2 + $0x31] sm:$0xff]
    %v1519 = vld [vmem:[#allocation2 + $0x39] sm:$0xff]
    %v1520 = vmul.f32 %v257, %v1518
    %v1521 = vmul.f32 %v257, %v1519
    %v1522 = vadd.f32 %v1484, %v1520
    %v1523 = vadd.f32 %v1485, %v1521
    %v1524 = vmul.f32 %v262, %v1518
    %v1525 = vmul.f32 %v262, %v1519
    %v1526 = vadd.f32 %v1488, %v1524
    %v1527 = vadd.f32 %v1489, %v1525
    %v1528 = vmul.f32 %v267, %v1518
    %v1529 = vmul.f32 %v267, %v1519
    %v1530 = vadd.f32 %v1492, %v1528
    %v1531 = vadd.f32 %v1493, %v1529
    %v1532 = vmul.f32 %v272, %v1518
    %v1533 = vmul.f32 %v272, %v1519
    %v1534 = vadd.f32 %v1496, %v1532
    %v1535 = vadd.f32 %v1497, %v1533
    %v1536 = vmul.f32 %v277, %v1518
    %v1537 = vmul.f32 %v277, %v1519
    %v1538 = vadd.f32 %v1500, %v1536
    %v1539 = vadd.f32 %v1501, %v1537
    %v1540 = vmul.f32 %v282, %v1518
    %v1541 = vmul.f32 %v282, %v1519
    %v1542 = vadd.f32 %v1504, %v1540
    %v1543 = vadd.f32 %v1505, %v1541
    %v1544 = vmul.f32 %v287, %v1518
    %v1545 = vmul.f32 %v287, %v1519
    %v1546 = vadd.f32 %v1508, %v1544
    %v1547 = vadd.f32 %v1509, %v1545
    %v1548 = vmul.f32 %v292, %v1518
    %v1549 = vmul.f32 %v292, %v1519
    %v1550 = vadd.f32 %v1512, %v1548
    %v1551 = vadd.f32 %v1513, %v1549
    %v1552 = vmul.f32 %v297, %v1518
    %v1553 = vmul.f32 %v297, %v1519
    %v1554 = vadd.f32 %v1516, %v1552
    %v1555 = vadd.f32 %v1517, %v1553
    %v1556 = vld [vmem:[%s302 + $0x2f] sm:$0xff]
    %v1557 = vld [vmem:[%s302 + $0x37] sm:$0xff]
    %v1558 = vmul.f32 %v311, %v1556
    %v1559 = vmul.f32 %v311, %v1557
    %v1560 = vadd.f32 %v1522, %v1558
    %v1561 = vadd.f32 %v1523, %v1559
    %v1562 = vmul.f32 %v316, %v1556
    %v1563 = vmul.f32 %v316, %v1557
    %v1564 = vadd.f32 %v1526, %v1562
    %v1565 = vadd.f32 %v1527, %v1563
    %v1566 = vmul.f32 %v321, %v1556
    %v1567 = vmul.f32 %v321, %v1557
    %v1568 = vadd.f32 %v1530, %v1566
    %v1569 = vadd.f32 %v1531, %v1567
    %v1570 = vmul.f32 %v326, %v1556
    %v1571 = vmul.f32 %v326, %v1557
    %v1572 = vadd.f32 %v1534, %v1570
    %v1573 = vadd.f32 %v1535, %v1571
    %v1574 = vmul.f32 %v331, %v1556
    %v1575 = vmul.f32 %v331, %v1557
    %v1576 = vadd.f32 %v1538, %v1574
    %v1577 = vadd.f32 %v1539, %v1575
    %v1578 = vmul.f32 %v336, %v1556
    %v1579 = vmul.f32 %v336, %v1557
    %v1580 = vadd.f32 %v1542, %v1578
    %v1581 = vadd.f32 %v1543, %v1579
    %v1582 = vmul.f32 %v341, %v1556
    %v1583 = vmul.f32 %v341, %v1557
    %v1584 = vadd.f32 %v1546, %v1582
    %v1585 = vadd.f32 %v1547, %v1583
    %v1586 = vmul.f32 %v346, %v1556
    %v1587 = vmul.f32 %v346, %v1557
    %v1588 = vadd.f32 %v1550, %v1586
    %v1589 = vadd.f32 %v1551, %v1587
    %v1590 = vmul.f32 %v351, %v1556
    %v1591 = vmul.f32 %v351, %v1557
    %v1592 = vadd.f32 %v1554, %v1590
    %v1593 = vadd.f32 %v1555, %v1591
    %v1594 = vld [vmem:[%s302 + $0x30] sm:$0xff]
    %v1595 = vld [vmem:[%s302 + $0x38] sm:$0xff]
    %v1596 = vmul.f32 %v356, %v1594
    %v1597 = vmul.f32 %v356, %v1595
    %v1598 = vadd.f32 %v1560, %v1596
    %v1599 = vadd.f32 %v1561, %v1597
    %v1600 = vmul.f32 %v361, %v1594
    %v1601 = vmul.f32 %v361, %v1595
    %v1602 = vadd.f32 %v1564, %v1600
    %v1603 = vadd.f32 %v1565, %v1601
    %v1604 = vmul.f32 %v366, %v1594
    %v1605 = vmul.f32 %v366, %v1595
    %v1606 = vadd.f32 %v1568, %v1604
    %v1607 = vadd.f32 %v1569, %v1605
    %v1608 = vmul.f32 %v371, %v1594
    %v1609 = vmul.f32 %v371, %v1595
    %v1610 = vadd.f32 %v1572, %v1608
    %v1611 = vadd.f32 %v1573, %v1609
    %v1612 = vmul.f32 %v376, %v1594
    %v1613 = vmul.f32 %v376, %v1595
    %v1614 = vadd.f32 %v1576, %v1612
    %v1615 = vadd.f32 %v1577, %v1613
    %v1616 = vmul.f32 %v381, %v1594
    %v1617 = vmul.f32 %v381, %v1595
    %v1618 = vadd.f32 %v1580, %v1616
    %v1619 = vadd.f32 %v1581, %v1617
    %v1620 = vmul.f32 %v386, %v1594
    %v1621 = vmul.f32 %v386, %v1595
    %v1622 = vadd.f32 %v1584, %v1620
    %v1623 = vadd.f32 %v1585, %v1621
    %v1624 = vmul.f32 %v391, %v1594
    %v1625 = vmul.f32 %v391, %v1595
    %v1626 = vadd.f32 %v1588, %v1624
    %v1627 = vadd.f32 %v1589, %v1625
    %v1628 = vmul.f32 %v396, %v1594
    %v1629 = vmul.f32 %v396, %v1595
    %v1630 = vadd.f32 %v1592, %v1628
    %v1631 = vadd.f32 %v1593, %v1629
    %v1632 = vld [vmem:[%s302 + $0x31] sm:$0xff]
    %v1633 = vld [vmem:[%s302 + $0x39] sm:$0xff]
    %v1634 = vmul.f32 %v403, %v1632
    %v1635 = vmul.f32 %v403, %v1633
    %v1636 = vadd.f32 %v1598, %v1634
    %v1637 = vadd.f32 %v1599, %v1635
    %v1638 = vmul.f32 %v408, %v1632
    %v1639 = vmul.f32 %v408, %v1633
    %v1640 = vadd.f32 %v1602, %v1638
    %v1641 = vadd.f32 %v1603, %v1639
    %v1642 = vmul.f32 %v413, %v1632
    %v1643 = vmul.f32 %v413, %v1633
    %v1644 = vadd.f32 %v1606, %v1642
    %v1645 = vadd.f32 %v1607, %v1643
    %v1646 = vmul.f32 %v418, %v1632
    %v1647 = vmul.f32 %v418, %v1633
    %v1648 = vadd.f32 %v1610, %v1646
    %v1649 = vadd.f32 %v1611, %v1647
    %v1650 = vmul.f32 %v423, %v1632
    %v1651 = vmul.f32 %v423, %v1633
    %v1652 = vadd.f32 %v1614, %v1650
    %v1653 = vadd.f32 %v1615, %v1651
    %v1654 = vmul.f32 %v428, %v1632
    %v1655 = vmul.f32 %v428, %v1633
    %v1656 = vadd.f32 %v1618, %v1654
    %v1657 = vadd.f32 %v1619, %v1655
    %v1658 = vmul.f32 %v433, %v1632
    %v1659 = vmul.f32 %v433, %v1633
    %v1660 = vadd.f32 %v1622, %v1658
    %v1661 = vadd.f32 %v1623, %v1659
    %v1662 = vmul.f32 %v438, %v1632
    %v1663 = vmul.f32 %v438, %v1633
    %v1664 = vadd.f32 %v1626, %v1662
    %v1665 = vadd.f32 %v1627, %v1663
    %v1666 = vmul.f32 %v443, %v1632
    %v1667 = vmul.f32 %v443, %v1633
    %v1668 = vadd.f32 %v1630, %v1666
    %v1669 = vadd.f32 %v1631, %v1667
    %v1670 = vld [vmem:[%s448 + $0x2f] sm:$0xff]
    %v1671 = vld [vmem:[%s448 + $0x37] sm:$0xff]
    %v1672 = vmul.f32 %v457, %v1670
    %v1673 = vmul.f32 %v457, %v1671
    %v1674 = vadd.f32 %v1636, %v1672
    %v1675 = vadd.f32 %v1637, %v1673
    %v1676 = vmul.f32 %v462, %v1670
    %v1677 = vmul.f32 %v462, %v1671
    %v1678 = vadd.f32 %v1640, %v1676
    %v1679 = vadd.f32 %v1641, %v1677
    %v1680 = vmul.f32 %v467, %v1670
    %v1681 = vmul.f32 %v467, %v1671
    %v1682 = vadd.f32 %v1644, %v1680
    %v1683 = vadd.f32 %v1645, %v1681
    %v1684 = vmul.f32 %v472, %v1670
    %v1685 = vmul.f32 %v472, %v1671
    %v1686 = vadd.f32 %v1648, %v1684
    %v1687 = vadd.f32 %v1649, %v1685
    %v1688 = vmul.f32 %v477, %v1670
    %v1689 = vmul.f32 %v477, %v1671
    %v1690 = vadd.f32 %v1652, %v1688
    %v1691 = vadd.f32 %v1653, %v1689
    %v1692 = vmul.f32 %v482, %v1670
    %v1693 = vmul.f32 %v482, %v1671
    %v1694 = vadd.f32 %v1656, %v1692
    %v1695 = vadd.f32 %v1657, %v1693
    %v1696 = vmul.f32 %v487, %v1670
    %v1697 = vmul.f32 %v487, %v1671
    %v1698 = vadd.f32 %v1660, %v1696
    %v1699 = vadd.f32 %v1661, %v1697
    %v1700 = vmul.f32 %v492, %v1670
    %v1701 = vmul.f32 %v492, %v1671
    %v1702 = vadd.f32 %v1664, %v1700
    %v1703 = vadd.f32 %v1665, %v1701
    %v1704 = vmul.f32 %v497, %v1670
    %v1705 = vmul.f32 %v497, %v1671
    %v1706 = vadd.f32 %v1668, %v1704
    %v1707 = vadd.f32 %v1669, %v1705
    %v1708 = vld [vmem:[%s448 + $0x30] sm:$0xff]
    %v1709 = vld [vmem:[%s448 + $0x38] sm:$0xff]
    %v1710 = vmul.f32 %v502, %v1708
    %v1711 = vmul.f32 %v502, %v1709
    %v1712 = vadd.f32 %v1674, %v1710
    %v1713 = vadd.f32 %v1675, %v1711
    %v1714 = vmul.f32 %v507, %v1708
    %v1715 = vmul.f32 %v507, %v1709
    %v1716 = vadd.f32 %v1678, %v1714
    %v1717 = vadd.f32 %v1679, %v1715
    %v1718 = vmul.f32 %v512, %v1708
    %v1719 = vmul.f32 %v512, %v1709
    %v1720 = vadd.f32 %v1682, %v1718
    %v1721 = vadd.f32 %v1683, %v1719
    %v1722 = vmul.f32 %v517, %v1708
    %v1723 = vmul.f32 %v517, %v1709
    %v1724 = vadd.f32 %v1686, %v1722
    %v1725 = vadd.f32 %v1687, %v1723
    %v1726 = vmul.f32 %v522, %v1708
    %v1727 = vmul.f32 %v522, %v1709
    %v1728 = vadd.f32 %v1690, %v1726
    %v1729 = vadd.f32 %v1691, %v1727
    %v1730 = vmul.f32 %v527, %v1708
    %v1731 = vmul.f32 %v527, %v1709
    %v1732 = vadd.f32 %v1694, %v1730
    %v1733 = vadd.f32 %v1695, %v1731
    %v1734 = vmul.f32 %v532, %v1708
    %v1735 = vmul.f32 %v532, %v1709
    %v1736 = vadd.f32 %v1698, %v1734
    %v1737 = vadd.f32 %v1699, %v1735
    %v1738 = vmul.f32 %v537, %v1708
    %v1739 = vmul.f32 %v537, %v1709
    %v1740 = vadd.f32 %v1702, %v1738
    %v1741 = vadd.f32 %v1703, %v1739
    %v1742 = vmul.f32 %v542, %v1708
    %v1743 = vmul.f32 %v542, %v1709
    %v1744 = vadd.f32 %v1706, %v1742
    %v1745 = vadd.f32 %v1707, %v1743
    %v1746 = vld [vmem:[%s448 + $0x31] sm:$0xff]
    %v1747 = vld [vmem:[%s448 + $0x39] sm:$0xff]
    %v1748 = vmul.f32 %v549, %v1746
    %v1749 = vmul.f32 %v549, %v1747
    %v1750 = vadd.f32 %v1712, %v1748
    %v1751 = vadd.f32 %v1713, %v1749
    %v1752 = vmul.f32 %v554, %v1746
    %v1753 = vmul.f32 %v554, %v1747
    %v1754 = vadd.f32 %v1716, %v1752
    %v1755 = vadd.f32 %v1717, %v1753
    %v1756 = vmul.f32 %v559, %v1746
    %v1757 = vmul.f32 %v559, %v1747
    %v1758 = vadd.f32 %v1720, %v1756
    %v1759 = vadd.f32 %v1721, %v1757
    %v1760 = vmul.f32 %v564, %v1746
    %v1761 = vmul.f32 %v564, %v1747
    %v1762 = vadd.f32 %v1724, %v1760
    %v1763 = vadd.f32 %v1725, %v1761
    %v1764 = vmul.f32 %v569, %v1746
    %v1765 = vmul.f32 %v569, %v1747
    %v1766 = vadd.f32 %v1728, %v1764
    %v1767 = vadd.f32 %v1729, %v1765
    %v1768 = vmul.f32 %v574, %v1746
    %v1769 = vmul.f32 %v574, %v1747
    %v1770 = vadd.f32 %v1732, %v1768
    %v1771 = vadd.f32 %v1733, %v1769
    %v1772 = vmul.f32 %v579, %v1746
    %v1773 = vmul.f32 %v579, %v1747
    %v1774 = vadd.f32 %v1736, %v1772
    %v1775 = vadd.f32 %v1737, %v1773
    %v1776 = vmul.f32 %v584, %v1746
    %v1777 = vmul.f32 %v584, %v1747
    %v1778 = vadd.f32 %v1740, %v1776
    %v1779 = vadd.f32 %v1741, %v1777
    %v1780 = vmul.f32 %v589, %v1746
    %v1781 = vmul.f32 %v589, %v1747
    %v1782 = vadd.f32 %v1744, %v1780
    %v1783 = vadd.f32 %v1745, %v1781
    %1784 = vrot.lane.b32.xlu0 %v1750, 1
    %v1785 = vpop.permute.xlu0 %1784
    %1786 = vrot.lane.b32.xlu0 %v1751, 1
    %v1787 = vpop.permute.xlu0 %1786
    %v1788 = vsel %vm147, %v1785, 0.0
    %v1789 = vsel %vm147, %v1787, 0.0
    %v1790 = vadd.f32 %v1762, %v1788
    %v1791 = vadd.f32 %v1763, %v1789
    %1792 = vrot.lane.b32.xlu0 %v1774, 127
    %v1793 = vpop.permute.xlu0 %1792
    %1794 = vrot.lane.b32.xlu0 %v1775, 127
    %v1795 = vpop.permute.xlu0 %1794
    %v1796 = vsel %vm148, %v1793, 0.0
    %v1797 = vsel %vm148, %v1795, 0.0
    %v1798 = vadd.f32 %v1790, %v1796
    %v1799 = vadd.f32 %v1791, %v1797
    %1800 = vst [vmem:[#allocation9 + $0x30] sm:$0xff] %v1798
    %1801 = vst [vmem:[#allocation9 + $0x38] sm:$0xff] %v1799
    %1802 = vrot.lane.b32.xlu0 %v1754, 1
    %v1803 = vpop.permute.xlu0 %1802
    %1804 = vrot.lane.b32.xlu0 %v1755, 1
    %v1805 = vpop.permute.xlu0 %1804
    %v1806 = vsel %vm147, %v1803, 0.0
    %v1807 = vsel %vm147, %v1805, 0.0
    %v1808 = vadd.f32 %v1766, %v1806
    %v1809 = vadd.f32 %v1767, %v1807
    %1810 = vrot.lane.b32.xlu0 %v1778, 127
    %v1811 = vpop.permute.xlu0 %1810
    %1812 = vrot.lane.b32.xlu0 %v1779, 127
    %v1813 = vpop.permute.xlu0 %1812
    %v1814 = vsel %vm148, %v1811, 0.0
    %v1815 = vsel %vm148, %v1813, 0.0
    %v1816 = vadd.f32 %v1808, %v1814
    %v1817 = vadd.f32 %v1809, %v1815
    %1818 = vst [vmem:[%s628 + $0x30] sm:$0xff] %v1816
    %1819 = vst [vmem:[%s628 + $0x38] sm:$0xff] %v1817
    %1820 = vrot.lane.b32.xlu0 %v1758, 1
    %v1821 = vpop.permute.xlu0 %1820
    %1822 = vrot.lane.b32.xlu0 %v1759, 1
    %v1823 = vpop.permute.xlu0 %1822
    %v1824 = vsel %vm147, %v1821, 0.0
    %v1825 = vsel %vm147, %v1823, 0.0
    %v1826 = vadd.f32 %v1770, %v1824
    %v1827 = vadd.f32 %v1771, %v1825
    %1828 = vrot.lane.b32.xlu0 %v1782, 127
    %v1829 = vpop.permute.xlu0 %1828
    %1830 = vrot.lane.b32.xlu0 %v1783, 127
    %v1831 = vpop.permute.xlu0 %1830
    %v1832 = vsel %vm148, %v1829, 0.0
    %v1833 = vsel %vm148, %v1831, 0.0
    %v1834 = vadd.f32 %v1826, %v1832
    %v1835 = vadd.f32 %v1827, %v1833
    %1836 = vst [vmem:[%s647 + $0x30] sm:$0xff] %v1834
    %1837 = vst [vmem:[%s647 + $0x38] sm:$0xff] %v1835
    %v1838 = vld [vmem:[#allocation2 + $0x3f] sm:$0xff]
    %v1839 = vld [vmem:[#allocation2 + $0x47] sm:$0xff]
    %v1840 = vmul.f32 %v165, %v1838
    %v1841 = vmul.f32 %v165, %v1839
    %v1842 = vadd.f32 %v1840, 0.0
    %v1843 = vadd.f32 %v1841, 0.0
    %v1844 = vmul.f32 %v170, %v1838
    %v1845 = vmul.f32 %v170, %v1839
    %v1846 = vadd.f32 %v1844, 0.0
    %v1847 = vadd.f32 %v1845, 0.0
    %v1848 = vmul.f32 %v175, %v1838
    %v1849 = vmul.f32 %v175, %v1839
    %v1850 = vadd.f32 %v1848, 0.0
    %v1851 = vadd.f32 %v1849, 0.0
    %v1852 = vmul.f32 %v180, %v1838
    %v1853 = vmul.f32 %v180, %v1839
    %v1854 = vadd.f32 %v153, %v1852
    %v1855 = vadd.f32 %v153, %v1853
    %v1856 = vmul.f32 %v185, %v1838
    %v1857 = vmul.f32 %v185, %v1839
    %v1858 = vadd.f32 %v154, %v1856
    %v1859 = vadd.f32 %v154, %v1857
    %v1860 = vmul.f32 %v190, %v1838
    %v1861 = vmul.f32 %v190, %v1839
    %v1862 = vadd.f32 %v155, %v1860
    %v1863 = vadd.f32 %v155, %v1861
    %v1864 = vmul.f32 %v195, %v1838
    %v1865 = vmul.f32 %v195, %v1839
    %v1866 = vadd.f32 %v1864, 0.0
    %v1867 = vadd.f32 %v1865, 0.0
    %v1868 = vmul.f32 %v200, %v1838
    %v1869 = vmul.f32 %v200, %v1839
    %v1870 = vadd.f32 %v1868, 0.0
    %v1871 = vadd.f32 %v1869, 0.0
    %v1872 = vmul.f32 %v205, %v1838
    %v1873 = vmul.f32 %v205, %v1839
    %v1874 = vadd.f32 %v1872, 0.0
    %v1875 = vadd.f32 %v1873, 0.0
    %v1876 = vld [vmem:[#allocation2 + $0x40] sm:$0xff]
    %v1877 = vld [vmem:[#allocation2 + $0x48] sm:$0xff]
    %v1878 = vmul.f32 %v210, %v1876
    %v1879 = vmul.f32 %v210, %v1877
    %v1880 = vadd.f32 %v1842, %v1878
    %v1881 = vadd.f32 %v1843, %v1879
    %v1882 = vmul.f32 %v215, %v1876
    %v1883 = vmul.f32 %v215, %v1877
    %v1884 = vadd.f32 %v1846, %v1882
    %v1885 = vadd.f32 %v1847, %v1883
    %v1886 = vmul.f32 %v220, %v1876
    %v1887 = vmul.f32 %v220, %v1877
    %v1888 = vadd.f32 %v1850, %v1886
    %v1889 = vadd.f32 %v1851, %v1887
    %v1890 = vmul.f32 %v225, %v1876
    %v1891 = vmul.f32 %v225, %v1877
    %v1892 = vadd.f32 %v1854, %v1890
    %v1893 = vadd.f32 %v1855, %v1891
    %v1894 = vmul.f32 %v230, %v1876
    %v1895 = vmul.f32 %v230, %v1877
    %v1896 = vadd.f32 %v1858, %v1894
    %v1897 = vadd.f32 %v1859, %v1895
    %v1898 = vmul.f32 %v235, %v1876
    %v1899 = vmul.f32 %v235, %v1877
    %v1900 = vadd.f32 %v1862, %v1898
    %v1901 = vadd.f32 %v1863, %v1899
    %v1902 = vmul.f32 %v240, %v1876
    %v1903 = vmul.f32 %v240, %v1877
    %v1904 = vadd.f32 %v1866, %v1902
    %v1905 = vadd.f32 %v1867, %v1903
    %v1906 = vmul.f32 %v245, %v1876
    %v1907 = vmul.f32 %v245, %v1877
    %v1908 = vadd.f32 %v1870, %v1906
    %v1909 = vadd.f32 %v1871, %v1907
    %v1910 = vmul.f32 %v250, %v1876
    %v1911 = vmul.f32 %v250, %v1877
    %v1912 = vadd.f32 %v1874, %v1910
    %v1913 = vadd.f32 %v1875, %v1911
    %v1914 = vld [vmem:[#allocation2 + $0x41] sm:$0xff]
    %v1915 = vld [vmem:[#allocation2 + $0x49] sm:$0xff]
    %v1916 = vmul.f32 %v257, %v1914
    %v1917 = vmul.f32 %v257, %v1915
    %v1918 = vadd.f32 %v1880, %v1916
    %v1919 = vadd.f32 %v1881, %v1917
    %v1920 = vmul.f32 %v262, %v1914
    %v1921 = vmul.f32 %v262, %v1915
    %v1922 = vadd.f32 %v1884, %v1920
    %v1923 = vadd.f32 %v1885, %v1921
    %v1924 = vmul.f32 %v267, %v1914
    %v1925 = vmul.f32 %v267, %v1915
    %v1926 = vadd.f32 %v1888, %v1924
    %v1927 = vadd.f32 %v1889, %v1925
    %v1928 = vmul.f32 %v272, %v1914
    %v1929 = vmul.f32 %v272, %v1915
    %v1930 = vadd.f32 %v1892, %v1928
    %v1931 = vadd.f32 %v1893, %v1929
    %v1932 = vmul.f32 %v277, %v1914
    %v1933 = vmul.f32 %v277, %v1915
    %v1934 = vadd.f32 %v1896, %v1932
    %v1935 = vadd.f32 %v1897, %v1933
    %v1936 = vmul.f32 %v282, %v1914
    %v1937 = vmul.f32 %v282, %v1915
    %v1938 = vadd.f32 %v1900, %v1936
    %v1939 = vadd.f32 %v1901, %v1937
    %v1940 = vmul.f32 %v287, %v1914
    %v1941 = vmul.f32 %v287, %v1915
    %v1942 = vadd.f32 %v1904, %v1940
    %v1943 = vadd.f32 %v1905, %v1941
    %v1944 = vmul.f32 %v292, %v1914
    %v1945 = vmul.f32 %v292, %v1915
    %v1946 = vadd.f32 %v1908, %v1944
    %v1947 = vadd.f32 %v1909, %v1945
    %v1948 = vmul.f32 %v297, %v1914
    %v1949 = vmul.f32 %v297, %v1915
    %v1950 = vadd.f32 %v1912, %v1948
    %v1951 = vadd.f32 %v1913, %v1949
    %v1952 = vld [vmem:[%s302 + $0x3f] sm:$0xff]
    %v1953 = vld [vmem:[%s302 + $0x47] sm:$0xff]
    %v1954 = vmul.f32 %v311, %v1952
    %v1955 = vmul.f32 %v311, %v1953
    %v1956 = vadd.f32 %v1918, %v1954
    %v1957 = vadd.f32 %v1919, %v1955
    %v1958 = vmul.f32 %v316, %v1952
    %v1959 = vmul.f32 %v316, %v1953
    %v1960 = vadd.f32 %v1922, %v1958
    %v1961 = vadd.f32 %v1923, %v1959
    %v1962 = vmul.f32 %v321, %v1952
    %v1963 = vmul.f32 %v321, %v1953
    %v1964 = vadd.f32 %v1926, %v1962
    %v1965 = vadd.f32 %v1927, %v1963
    %v1966 = vmul.f32 %v326, %v1952
    %v1967 = vmul.f32 %v326, %v1953
    %v1968 = vadd.f32 %v1930, %v1966
    %v1969 = vadd.f32 %v1931, %v1967
    %v1970 = vmul.f32 %v331, %v1952
    %v1971 = vmul.f32 %v331, %v1953
    %v1972 = vadd.f32 %v1934, %v1970
    %v1973 = vadd.f32 %v1935, %v1971
    %v1974 = vmul.f32 %v336, %v1952
    %v1975 = vmul.f32 %v336, %v1953
    %v1976 = vadd.f32 %v1938, %v1974
    %v1977 = vadd.f32 %v1939, %v1975
    %v1978 = vmul.f32 %v341, %v1952
    %v1979 = vmul.f32 %v341, %v1953
    %v1980 = vadd.f32 %v1942, %v1978
    %v1981 = vadd.f32 %v1943, %v1979
    %v1982 = vmul.f32 %v346, %v1952
    %v1983 = vmul.f32 %v346, %v1953
    %v1984 = vadd.f32 %v1946, %v1982
    %v1985 = vadd.f32 %v1947, %v1983
    %v1986 = vmul.f32 %v351, %v1952
    %v1987 = vmul.f32 %v351, %v1953
    %v1988 = vadd.f32 %v1950, %v1986
    %v1989 = vadd.f32 %v1951, %v1987
    %v1990 = vld [vmem:[%s302 + $0x40] sm:$0xff]
    %v1991 = vld [vmem:[%s302 + $0x48] sm:$0xff]
    %v1992 = vmul.f32 %v356, %v1990
    %v1993 = vmul.f32 %v356, %v1991
    %v1994 = vadd.f32 %v1956, %v1992
    %v1995 = vadd.f32 %v1957, %v1993
    %v1996 = vmul.f32 %v361, %v1990
    %v1997 = vmul.f32 %v361, %v1991
    %v1998 = vadd.f32 %v1960, %v1996
    %v1999 = vadd.f32 %v1961, %v1997
    %v2000 = vmul.f32 %v366, %v1990
    %v2001 = vmul.f32 %v366, %v1991
    %v2002 = vadd.f32 %v1964, %v2000
    %v2003 = vadd.f32 %v1965, %v2001
    %v2004 = vmul.f32 %v371, %v1990
    %v2005 = vmul.f32 %v371, %v1991
    %v2006 = vadd.f32 %v1968, %v2004
    %v2007 = vadd.f32 %v1969, %v2005
    %v2008 = vmul.f32 %v376, %v1990
    %v2009 = vmul.f32 %v376, %v1991
    %v2010 = vadd.f32 %v1972, %v2008
    %v2011 = vadd.f32 %v1973, %v2009
    %v2012 = vmul.f32 %v381, %v1990
    %v2013 = vmul.f32 %v381, %v1991
    %v2014 = vadd.f32 %v1976, %v2012
    %v2015 = vadd.f32 %v1977, %v2013
    %v2016 = vmul.f32 %v386, %v1990
    %v2017 = vmul.f32 %v386, %v1991
    %v2018 = vadd.f32 %v1980, %v2016
    %v2019 = vadd.f32 %v1981, %v2017
    %v2020 = vmul.f32 %v391, %v1990
    %v2021 = vmul.f32 %v391, %v1991
    %v2022 = vadd.f32 %v1984, %v2020
    %v2023 = vadd.f32 %v1985, %v2021
    %v2024 = vmul.f32 %v396, %v1990
    %v2025 = vmul.f32 %v396, %v1991
    %v2026 = vadd.f32 %v1988, %v2024
    %v2027 = vadd.f32 %v1989, %v2025
    %v2028 = vld [vmem:[%s302 + $0x41] sm:$0xff]
    %v2029 = vld [vmem:[%s302 + $0x49] sm:$0xff]
    %v2030 = vmul.f32 %v403, %v2028
    %v2031 = vmul.f32 %v403, %v2029
    %v2032 = vadd.f32 %v1994, %v2030
    %v2033 = vadd.f32 %v1995, %v2031
    %v2034 = vmul.f32 %v408, %v2028
    %v2035 = vmul.f32 %v408, %v2029
    %v2036 = vadd.f32 %v1998, %v2034
    %v2037 = vadd.f32 %v1999, %v2035
    %v2038 = vmul.f32 %v413, %v2028
    %v2039 = vmul.f32 %v413, %v2029
    %v2040 = vadd.f32 %v2002, %v2038
    %v2041 = vadd.f32 %v2003, %v2039
    %v2042 = vmul.f32 %v418, %v2028
    %v2043 = vmul.f32 %v418, %v2029
    %v2044 = vadd.f32 %v2006, %v2042
    %v2045 = vadd.f32 %v2007, %v2043
    %v2046 = vmul.f32 %v423, %v2028
    %v2047 = vmul.f32 %v423, %v2029
    %v2048 = vadd.f32 %v2010, %v2046
    %v2049 = vadd.f32 %v2011, %v2047
    %v2050 = vmul.f32 %v428, %v2028
    %v2051 = vmul.f32 %v428, %v2029
    %v2052 = vadd.f32 %v2014, %v2050
    %v2053 = vadd.f32 %v2015, %v2051
    %v2054 = vmul.f32 %v433, %v2028
    %v2055 = vmul.f32 %v433, %v2029
    %v2056 = vadd.f32 %v2018, %v2054
    %v2057 = vadd.f32 %v2019, %v2055
    %v2058 = vmul.f32 %v438, %v2028
    %v2059 = vmul.f32 %v438, %v2029
    %v2060 = vadd.f32 %v2022, %v2058
    %v2061 = vadd.f32 %v2023, %v2059
    %v2062 = vmul.f32 %v443, %v2028
    %v2063 = vmul.f32 %v443, %v2029
    %v2064 = vadd.f32 %v2026, %v2062
    %v2065 = vadd.f32 %v2027, %v2063
    %v2066 = vld [vmem:[%s448 + $0x3f] sm:$0xff]
    %v2067 = vld [vmem:[%s448 + $0x47] sm:$0xff]
    %v2068 = vmul.f32 %v457, %v2066
    %v2069 = vmul.f32 %v457, %v2067
    %v2070 = vadd.f32 %v2032, %v2068
    %v2071 = vadd.f32 %v2033, %v2069
    %v2072 = vmul.f32 %v462, %v2066
    %v2073 = vmul.f32 %v462, %v2067
    %v2074 = vadd.f32 %v2036, %v2072
    %v2075 = vadd.f32 %v2037, %v2073
    %v2076 = vmul.f32 %v467, %v2066
    %v2077 = vmul.f32 %v467, %v2067
    %v2078 = vadd.f32 %v2040, %v2076
    %v2079 = vadd.f32 %v2041, %v2077
    %v2080 = vmul.f32 %v472, %v2066
    %v2081 = vmul.f32 %v472, %v2067
    %v2082 = vadd.f32 %v2044, %v2080
    %v2083 = vadd.f32 %v2045, %v2081
    %v2084 = vmul.f32 %v477, %v2066
    %v2085 = vmul.f32 %v477, %v2067
    %v2086 = vadd.f32 %v2048, %v2084
    %v2087 = vadd.f32 %v2049, %v2085
    %v2088 = vmul.f32 %v482, %v2066
    %v2089 = vmul.f32 %v482, %v2067
    %v2090 = vadd.f32 %v2052, %v2088
    %v2091 = vadd.f32 %v2053, %v2089
    %v2092 = vmul.f32 %v487, %v2066
    %v2093 = vmul.f32 %v487, %v2067
    %v2094 = vadd.f32 %v2056, %v2092
    %v2095 = vadd.f32 %v2057, %v2093
    %v2096 = vmul.f32 %v492, %v2066
    %v2097 = vmul.f32 %v492, %v2067
    %v2098 = vadd.f32 %v2060, %v2096
    %v2099 = vadd.f32 %v2061, %v2097
    %v2100 = vmul.f32 %v497, %v2066
    %v2101 = vmul.f32 %v497, %v2067
    %v2102 = vadd.f32 %v2064, %v2100
    %v2103 = vadd.f32 %v2065, %v2101
    %v2104 = vld [vmem:[%s448 + $0x40] sm:$0xff]
    %v2105 = vld [vmem:[%s448 + $0x48] sm:$0xff]
    %v2106 = vmul.f32 %v502, %v2104
    %v2107 = vmul.f32 %v502, %v2105
    %v2108 = vadd.f32 %v2070, %v2106
    %v2109 = vadd.f32 %v2071, %v2107
    %v2110 = vmul.f32 %v507, %v2104
    %v2111 = vmul.f32 %v507, %v2105
    %v2112 = vadd.f32 %v2074, %v2110
    %v2113 = vadd.f32 %v2075, %v2111
    %v2114 = vmul.f32 %v512, %v2104
    %v2115 = vmul.f32 %v512, %v2105
    %v2116 = vadd.f32 %v2078, %v2114
    %v2117 = vadd.f32 %v2079, %v2115
    %v2118 = vmul.f32 %v517, %v2104
    %v2119 = vmul.f32 %v517, %v2105
    %v2120 = vadd.f32 %v2082, %v2118
    %v2121 = vadd.f32 %v2083, %v2119
    %v2122 = vmul.f32 %v522, %v2104
    %v2123 = vmul.f32 %v522, %v2105
    %v2124 = vadd.f32 %v2086, %v2122
    %v2125 = vadd.f32 %v2087, %v2123
    %v2126 = vmul.f32 %v527, %v2104
    %v2127 = vmul.f32 %v527, %v2105
    %v2128 = vadd.f32 %v2090, %v2126
    %v2129 = vadd.f32 %v2091, %v2127
    %v2130 = vmul.f32 %v532, %v2104
    %v2131 = vmul.f32 %v532, %v2105
    %v2132 = vadd.f32 %v2094, %v2130
    %v2133 = vadd.f32 %v2095, %v2131
    %v2134 = vmul.f32 %v537, %v2104
    %v2135 = vmul.f32 %v537, %v2105
    %v2136 = vadd.f32 %v2098, %v2134
    %v2137 = vadd.f32 %v2099, %v2135
    %v2138 = vmul.f32 %v542, %v2104
    %v2139 = vmul.f32 %v542, %v2105
    %v2140 = vadd.f32 %v2102, %v2138
    %v2141 = vadd.f32 %v2103, %v2139
    %v2142 = vld [vmem:[%s448 + $0x41] sm:$0xff]
    %v2143 = vld [vmem:[%s448 + $0x49] sm:$0xff]
    %v2144 = vmul.f32 %v549, %v2142
    %v2145 = vmul.f32 %v549, %v2143
    %v2146 = vadd.f32 %v2108, %v2144
    %v2147 = vadd.f32 %v2109, %v2145
    %v2148 = vmul.f32 %v554, %v2142
    %v2149 = vmul.f32 %v554, %v2143
    %v2150 = vadd.f32 %v2112, %v2148
    %v2151 = vadd.f32 %v2113, %v2149
    %v2152 = vmul.f32 %v559, %v2142
    %v2153 = vmul.f32 %v559, %v2143
    %v2154 = vadd.f32 %v2116, %v2152
    %v2155 = vadd.f32 %v2117, %v2153
    %v2156 = vmul.f32 %v564, %v2142
    %v2157 = vmul.f32 %v564, %v2143
    %v2158 = vadd.f32 %v2120, %v2156
    %v2159 = vadd.f32 %v2121, %v2157
    %v2160 = vmul.f32 %v569, %v2142
    %v2161 = vmul.f32 %v569, %v2143
    %v2162 = vadd.f32 %v2124, %v2160
    %v2163 = vadd.f32 %v2125, %v2161
    %v2164 = vmul.f32 %v574, %v2142
    %v2165 = vmul.f32 %v574, %v2143
    %v2166 = vadd.f32 %v2128, %v2164
    %v2167 = vadd.f32 %v2129, %v2165
    %v2168 = vmul.f32 %v579, %v2142
    %v2169 = vmul.f32 %v579, %v2143
    %v2170 = vadd.f32 %v2132, %v2168
    %v2171 = vadd.f32 %v2133, %v2169
    %v2172 = vmul.f32 %v584, %v2142
    %v2173 = vmul.f32 %v584, %v2143
    %v2174 = vadd.f32 %v2136, %v2172
    %v2175 = vadd.f32 %v2137, %v2173
    %v2176 = vmul.f32 %v589, %v2142
    %v2177 = vmul.f32 %v589, %v2143
    %v2178 = vadd.f32 %v2140, %v2176
    %v2179 = vadd.f32 %v2141, %v2177
    %2180 = vrot.lane.b32.xlu0 %v2146, 1
    %v2181 = vpop.permute.xlu0 %2180
    %2182 = vrot.lane.b32.xlu0 %v2147, 1
    %v2183 = vpop.permute.xlu0 %2182
    %v2184 = vsel %vm147, %v2181, 0.0
    %v2185 = vsel %vm147, %v2183, 0.0
    %v2186 = vadd.f32 %v2158, %v2184
    %v2187 = vadd.f32 %v2159, %v2185
    %2188 = vrot.lane.b32.xlu0 %v2170, 127
    %v2189 = vpop.permute.xlu0 %2188
    %2190 = vrot.lane.b32.xlu0 %v2171, 127
    %v2191 = vpop.permute.xlu0 %2190
    %v2192 = vsel %vm148, %v2189, 0.0
    %v2193 = vsel %vm148, %v2191, 0.0
    %v2194 = vadd.f32 %v2186, %v2192
    %v2195 = vadd.f32 %v2187, %v2193
    %2196 = vst [vmem:[#allocation9 + $0x40] sm:$0xff] %v2194
    %2197 = vst [vmem:[#allocation9 + $0x48] sm:$0xff] %v2195
    %2198 = vrot.lane.b32.xlu0 %v2150, 1
    %v2199 = vpop.permute.xlu0 %2198
    %2200 = vrot.lane.b32.xlu0 %v2151, 1
    %v2201 = vpop.permute.xlu0 %2200
    %v2202 = vsel %vm147, %v2199, 0.0
    %v2203 = vsel %vm147, %v2201, 0.0
    %v2204 = vadd.f32 %v2162, %v2202
    %v2205 = vadd.f32 %v2163, %v2203
    %2206 = vrot.lane.b32.xlu0 %v2174, 127
    %v2207 = vpop.permute.xlu0 %2206
    %2208 = vrot.lane.b32.xlu0 %v2175, 127
    %v2209 = vpop.permute.xlu0 %2208
    %v2210 = vsel %vm148, %v2207, 0.0
    %v2211 = vsel %vm148, %v2209, 0.0
    %v2212 = vadd.f32 %v2204, %v2210
    %v2213 = vadd.f32 %v2205, %v2211
    %2214 = vst [vmem:[%s628 + $0x40] sm:$0xff] %v2212
    %2215 = vst [vmem:[%s628 + $0x48] sm:$0xff] %v2213
    %2216 = vrot.lane.b32.xlu0 %v2154, 1
    %v2217 = vpop.permute.xlu0 %2216
    %2218 = vrot.lane.b32.xlu0 %v2155, 1
    %v2219 = vpop.permute.xlu0 %2218
    %v2220 = vsel %vm147, %v2217, 0.0
    %v2221 = vsel %vm147, %v2219, 0.0
    %v2222 = vadd.f32 %v2166, %v2220
    %v2223 = vadd.f32 %v2167, %v2221
    %2224 = vrot.lane.b32.xlu0 %v2178, 127
    %v2225 = vpop.permute.xlu0 %2224
    %2226 = vrot.lane.b32.xlu0 %v2179, 127
    %v2227 = vpop.permute.xlu0 %2226
    %v2228 = vsel %vm148, %v2225, 0.0
    %v2229 = vsel %vm148, %v2227, 0.0
    %v2230 = vadd.f32 %v2222, %v2228
    %v2231 = vadd.f32 %v2223, %v2229
    %2232 = vst [vmem:[%s647 + $0x40] sm:$0xff] %v2230
    %2233 = vst [vmem:[%s647 + $0x48] sm:$0xff] %v2231
    %v2234 = vld [vmem:[#allocation2 + $0x4f] sm:$0xff]
    %v2235 = vld [vmem:[#allocation2 + $0x57] sm:$0xff]
    %v2236 = vmul.f32 %v165, %v2234
    %v2237 = vmul.f32 %v165, %v2235
    %v2238 = vadd.f32 %v2236, 0.0
    %v2239 = vadd.f32 %v2237, 0.0
    %v2240 = vmul.f32 %v170, %v2234
    %v2241 = vmul.f32 %v170, %v2235
    %v2242 = vadd.f32 %v2240, 0.0
    %v2243 = vadd.f32 %v2241, 0.0
    %v2244 = vmul.f32 %v175, %v2234
    %v2245 = vmul.f32 %v175, %v2235
    %v2246 = vadd.f32 %v2244, 0.0
    %v2247 = vadd.f32 %v2245, 0.0
    %v2248 = vmul.f32 %v180, %v2234
    %v2249 = vmul.f32 %v180, %v2235
    %v2250 = vadd.f32 %v153, %v2248
    %v2251 = vadd.f32 %v153, %v2249
    %v2252 = vmul.f32 %v185, %v2234
    %v2253 = vmul.f32 %v185, %v2235
    %v2254 = vadd.f32 %v154, %v2252
    %v2255 = vadd.f32 %v154, %v2253
    %v2256 = vmul.f32 %v190, %v2234
    %v2257 = vmul.f32 %v190, %v2235
    %v2258 = vadd.f32 %v155, %v2256
    %v2259 = vadd.f32 %v155, %v2257
    %v2260 = vmul.f32 %v195, %v2234
    %v2261 = vmul.f32 %v195, %v2235
    %v2262 = vadd.f32 %v2260, 0.0
    %v2263 = vadd.f32 %v2261, 0.0
    %v2264 = vmul.f32 %v200, %v2234
    %v2265 = vmul.f32 %v200, %v2235
    %v2266 = vadd.f32 %v2264, 0.0
    %v2267 = vadd.f32 %v2265, 0.0
    %v2268 = vmul.f32 %v205, %v2234
    %v2269 = vmul.f32 %v205, %v2235
    %v2270 = vadd.f32 %v2268, 0.0
    %v2271 = vadd.f32 %v2269, 0.0
    %v2272 = vld [vmem:[#allocation2 + $0x50] sm:$0xff]
    %v2273 = vld [vmem:[#allocation2 + $0x58] sm:$0xff]
    %v2274 = vmul.f32 %v210, %v2272
    %v2275 = vmul.f32 %v210, %v2273
    %v2276 = vadd.f32 %v2238, %v2274
    %v2277 = vadd.f32 %v2239, %v2275
    %v2278 = vmul.f32 %v215, %v2272
    %v2279 = vmul.f32 %v215, %v2273
    %v2280 = vadd.f32 %v2242, %v2278
    %v2281 = vadd.f32 %v2243, %v2279
    %v2282 = vmul.f32 %v220, %v2272
    %v2283 = vmul.f32 %v220, %v2273
    %v2284 = vadd.f32 %v2246, %v2282
    %v2285 = vadd.f32 %v2247, %v2283
    %v2286 = vmul.f32 %v225, %v2272
    %v2287 = vmul.f32 %v225, %v2273
    %v2288 = vadd.f32 %v2250, %v2286
    %v2289 = vadd.f32 %v2251, %v2287
    %v2290 = vmul.f32 %v230, %v2272
    %v2291 = vmul.f32 %v230, %v2273
    %v2292 = vadd.f32 %v2254, %v2290
    %v2293 = vadd.f32 %v2255, %v2291
    %v2294 = vmul.f32 %v235, %v2272
    %v2295 = vmul.f32 %v235, %v2273
    %v2296 = vadd.f32 %v2258, %v2294
    %v2297 = vadd.f32 %v2259, %v2295
    %v2298 = vmul.f32 %v240, %v2272
    %v2299 = vmul.f32 %v240, %v2273
    %v2300 = vadd.f32 %v2262, %v2298
    %v2301 = vadd.f32 %v2263, %v2299
    %v2302 = vmul.f32 %v245, %v2272
    %v2303 = vmul.f32 %v245, %v2273
    %v2304 = vadd.f32 %v2266, %v2302
    %v2305 = vadd.f32 %v2267, %v2303
    %v2306 = vmul.f32 %v250, %v2272
    %v2307 = vmul.f32 %v250, %v2273
    %v2308 = vadd.f32 %v2270, %v2306
    %v2309 = vadd.f32 %v2271, %v2307
    %v2310 = vld [vmem:[#allocation2 + $0x51] sm:$0xff]
    %v2311 = vld [vmem:[#allocation2 + $0x59] sm:$0xff]
    %v2312 = vmul.f32 %v257, %v2310
    %v2313 = vmul.f32 %v257, %v2311
    %v2314 = vadd.f32 %v2276, %v2312
    %v2315 = vadd.f32 %v2277, %v2313
    %v2316 = vmul.f32 %v262, %v2310
    %v2317 = vmul.f32 %v262, %v2311
    %v2318 = vadd.f32 %v2280, %v2316
    %v2319 = vadd.f32 %v2281, %v2317
    %v2320 = vmul.f32 %v267, %v2310
    %v2321 = vmul.f32 %v267, %v2311
    %v2322 = vadd.f32 %v2284, %v2320
    %v2323 = vadd.f32 %v2285, %v2321
    %v2324 = vmul.f32 %v272, %v2310
    %v2325 = vmul.f32 %v272, %v2311
    %v2326 = vadd.f32 %v2288, %v2324
    %v2327 = vadd.f32 %v2289, %v2325
    %v2328 = vmul.f32 %v277, %v2310
    %v2329 = vmul.f32 %v277, %v2311
    %v2330 = vadd.f32 %v2292, %v2328
    %v2331 = vadd.f32 %v2293, %v2329
    %v2332 = vmul.f32 %v282, %v2310
    %v2333 = vmul.f32 %v282, %v2311
    %v2334 = vadd.f32 %v2296, %v2332
    %v2335 = vadd.f32 %v2297, %v2333
    %v2336 = vmul.f32 %v287, %v2310
    %v2337 = vmul.f32 %v287, %v2311
    %v2338 = vadd.f32 %v2300, %v2336
    %v2339 = vadd.f32 %v2301, %v2337
    %v2340 = vmul.f32 %v292, %v2310
    %v2341 = vmul.f32 %v292, %v2311
    %v2342 = vadd.f32 %v2304, %v2340
    %v2343 = vadd.f32 %v2305, %v2341
    %v2344 = vmul.f32 %v297, %v2310
    %v2345 = vmul.f32 %v297, %v2311
    %v2346 = vadd.f32 %v2308, %v2344
    %v2347 = vadd.f32 %v2309, %v2345
    %v2348 = vld [vmem:[%s302 + $0x4f] sm:$0xff]
    %v2349 = vld [vmem:[%s302 + $0x57] sm:$0xff]
    %v2350 = vmul.f32 %v311, %v2348
    %v2351 = vmul.f32 %v311, %v2349
    %v2352 = vadd.f32 %v2314, %v2350
    %v2353 = vadd.f32 %v2315, %v2351
    %v2354 = vmul.f32 %v316, %v2348
    %v2355 = vmul.f32 %v316, %v2349
    %v2356 = vadd.f32 %v2318, %v2354
    %v2357 = vadd.f32 %v2319, %v2355
    %v2358 = vmul.f32 %v321, %v2348
    %v2359 = vmul.f32 %v321, %v2349
    %v2360 = vadd.f32 %v2322, %v2358
    %v2361 = vadd.f32 %v2323, %v2359
    %v2362 = vmul.f32 %v326, %v2348
    %v2363 = vmul.f32 %v326, %v2349
    %v2364 = vadd.f32 %v2326, %v2362
    %v2365 = vadd.f32 %v2327, %v2363
    %v2366 = vmul.f32 %v331, %v2348
    %v2367 = vmul.f32 %v331, %v2349
    %v2368 = vadd.f32 %v2330, %v2366
    %v2369 = vadd.f32 %v2331, %v2367
    %v2370 = vmul.f32 %v336, %v2348
    %v2371 = vmul.f32 %v336, %v2349
    %v2372 = vadd.f32 %v2334, %v2370
    %v2373 = vadd.f32 %v2335, %v2371
    %v2374 = vmul.f32 %v341, %v2348
    %v2375 = vmul.f32 %v341, %v2349
    %v2376 = vadd.f32 %v2338, %v2374
    %v2377 = vadd.f32 %v2339, %v2375
    %v2378 = vmul.f32 %v346, %v2348
    %v2379 = vmul.f32 %v346, %v2349
    %v2380 = vadd.f32 %v2342, %v2378
    %v2381 = vadd.f32 %v2343, %v2379
    %v2382 = vmul.f32 %v351, %v2348
    %v2383 = vmul.f32 %v351, %v2349
    %v2384 = vadd.f32 %v2346, %v2382
    %v2385 = vadd.f32 %v2347, %v2383
    %v2386 = vld [vmem:[%s302 + $0x50] sm:$0xff]
    %v2387 = vld [vmem:[%s302 + $0x58] sm:$0xff]
    %v2388 = vmul.f32 %v356, %v2386
    %v2389 = vmul.f32 %v356, %v2387
    %v2390 = vadd.f32 %v2352, %v2388
    %v2391 = vadd.f32 %v2353, %v2389
    %v2392 = vmul.f32 %v361, %v2386
    %v2393 = vmul.f32 %v361, %v2387
    %v2394 = vadd.f32 %v2356, %v2392
    %v2395 = vadd.f32 %v2357, %v2393
    %v2396 = vmul.f32 %v366, %v2386
    %v2397 = vmul.f32 %v366, %v2387
    %v2398 = vadd.f32 %v2360, %v2396
    %v2399 = vadd.f32 %v2361, %v2397
    %v2400 = vmul.f32 %v371, %v2386
    %v2401 = vmul.f32 %v371, %v2387
    %v2402 = vadd.f32 %v2364, %v2400
    %v2403 = vadd.f32 %v2365, %v2401
    %v2404 = vmul.f32 %v376, %v2386
    %v2405 = vmul.f32 %v376, %v2387
    %v2406 = vadd.f32 %v2368, %v2404
    %v2407 = vadd.f32 %v2369, %v2405
    %v2408 = vmul.f32 %v381, %v2386
    %v2409 = vmul.f32 %v381, %v2387
    %v2410 = vadd.f32 %v2372, %v2408
    %v2411 = vadd.f32 %v2373, %v2409
    %v2412 = vmul.f32 %v386, %v2386
    %v2413 = vmul.f32 %v386, %v2387
    %v2414 = vadd.f32 %v2376, %v2412
    %v2415 = vadd.f32 %v2377, %v2413
    %v2416 = vmul.f32 %v391, %v2386
    %v2417 = vmul.f32 %v391, %v2387
    %v2418 = vadd.f32 %v2380, %v2416
    %v2419 = vadd.f32 %v2381, %v2417
    %v2420 = vmul.f32 %v396, %v2386
    %v2421 = vmul.f32 %v396, %v2387
    %v2422 = vadd.f32 %v2384, %v2420
    %v2423 = vadd.f32 %v2385, %v2421
    %v2424 = vld [vmem:[%s302 + $0x51] sm:$0xff]
    %v2425 = vld [vmem:[%s302 + $0x59] sm:$0xff]
    %v2426 = vmul.f32 %v403, %v2424
    %v2427 = vmul.f32 %v403, %v2425
    %v2428 = vadd.f32 %v2390, %v2426
    %v2429 = vadd.f32 %v2391, %v2427
    %v2430 = vmul.f32 %v408, %v2424
    %v2431 = vmul.f32 %v408, %v2425
    %v2432 = vadd.f32 %v2394, %v2430
    %v2433 = vadd.f32 %v2395, %v2431
    %v2434 = vmul.f32 %v413, %v2424
    %v2435 = vmul.f32 %v413, %v2425
    %v2436 = vadd.f32 %v2398, %v2434
    %v2437 = vadd.f32 %v2399, %v2435
    %v2438 = vmul.f32 %v418, %v2424
    %v2439 = vmul.f32 %v418, %v2425
    %v2440 = vadd.f32 %v2402, %v2438
    %v2441 = vadd.f32 %v2403, %v2439
    %v2442 = vmul.f32 %v423, %v2424
    %v2443 = vmul.f32 %v423, %v2425
    %v2444 = vadd.f32 %v2406, %v2442
    %v2445 = vadd.f32 %v2407, %v2443
    %v2446 = vmul.f32 %v428, %v2424
    %v2447 = vmul.f32 %v428, %v2425
    %v2448 = vadd.f32 %v2410, %v2446
    %v2449 = vadd.f32 %v2411, %v2447
    %v2450 = vmul.f32 %v433, %v2424
    %v2451 = vmul.f32 %v433, %v2425
    %v2452 = vadd.f32 %v2414, %v2450
    %v2453 = vadd.f32 %v2415, %v2451
    %v2454 = vmul.f32 %v438, %v2424
    %v2455 = vmul.f32 %v438, %v2425
    %v2456 = vadd.f32 %v2418, %v2454
    %v2457 = vadd.f32 %v2419, %v2455
    %v2458 = vmul.f32 %v443, %v2424
    %v2459 = vmul.f32 %v443, %v2425
    %v2460 = vadd.f32 %v2422, %v2458
    %v2461 = vadd.f32 %v2423, %v2459
    %v2462 = vld [vmem:[%s448 + $0x4f] sm:$0xff]
    %v2463 = vld [vmem:[%s448 + $0x57] sm:$0xff]
    %v2464 = vmul.f32 %v457, %v2462
    %v2465 = vmul.f32 %v457, %v2463
    %v2466 = vadd.f32 %v2428, %v2464
    %v2467 = vadd.f32 %v2429, %v2465
    %v2468 = vmul.f32 %v462, %v2462
    %v2469 = vmul.f32 %v462, %v2463
    %v2470 = vadd.f32 %v2432, %v2468
    %v2471 = vadd.f32 %v2433, %v2469
    %v2472 = vmul.f32 %v467, %v2462
    %v2473 = vmul.f32 %v467, %v2463
    %v2474 = vadd.f32 %v2436, %v2472
    %v2475 = vadd.f32 %v2437, %v2473
    %v2476 = vmul.f32 %v472, %v2462
    %v2477 = vmul.f32 %v472, %v2463
    %v2478 = vadd.f32 %v2440, %v2476
    %v2479 = vadd.f32 %v2441, %v2477
    %v2480 = vmul.f32 %v477, %v2462
    %v2481 = vmul.f32 %v477, %v2463
    %v2482 = vadd.f32 %v2444, %v2480
    %v2483 = vadd.f32 %v2445, %v2481
    %v2484 = vmul.f32 %v482, %v2462
    %v2485 = vmul.f32 %v482, %v2463
    %v2486 = vadd.f32 %v2448, %v2484
    %v2487 = vadd.f32 %v2449, %v2485
    %v2488 = vmul.f32 %v487, %v2462
    %v2489 = vmul.f32 %v487, %v2463
    %v2490 = vadd.f32 %v2452, %v2488
    %v2491 = vadd.f32 %v2453, %v2489
    %v2492 = vmul.f32 %v492, %v2462
    %v2493 = vmul.f32 %v492, %v2463
    %v2494 = vadd.f32 %v2456, %v2492
    %v2495 = vadd.f32 %v2457, %v2493
    %v2496 = vmul.f32 %v497, %v2462
    %v2497 = vmul.f32 %v497, %v2463
    %v2498 = vadd.f32 %v2460, %v2496
    %v2499 = vadd.f32 %v2461, %v2497
    %v2500 = vld [vmem:[%s448 + $0x50] sm:$0xff]
    %v2501 = vld [vmem:[%s448 + $0x58] sm:$0xff]
    %v2502 = vmul.f32 %v502, %v2500
    %v2503 = vmul.f32 %v502, %v2501
    %v2504 = vadd.f32 %v2466, %v2502
    %v2505 = vadd.f32 %v2467, %v2503
    %v2506 = vmul.f32 %v507, %v2500
    %v2507 = vmul.f32 %v507, %v2501
    %v2508 = vadd.f32 %v2470, %v2506
    %v2509 = vadd.f32 %v2471, %v2507
    %v2510 = vmul.f32 %v512, %v2500
    %v2511 = vmul.f32 %v512, %v2501
    %v2512 = vadd.f32 %v2474, %v2510
    %v2513 = vadd.f32 %v2475, %v2511
    %v2514 = vmul.f32 %v517, %v2500
    %v2515 = vmul.f32 %v517, %v2501
    %v2516 = vadd.f32 %v2478, %v2514
    %v2517 = vadd.f32 %v2479, %v2515
    %v2518 = vmul.f32 %v522, %v2500
    %v2519 = vmul.f32 %v522, %v2501
    %v2520 = vadd.f32 %v2482, %v2518
    %v2521 = vadd.f32 %v2483, %v2519
    %v2522 = vmul.f32 %v527, %v2500
    %v2523 = vmul.f32 %v527, %v2501
    %v2524 = vadd.f32 %v2486, %v2522
    %v2525 = vadd.f32 %v2487, %v2523
    %v2526 = vmul.f32 %v532, %v2500
    %v2527 = vmul.f32 %v532, %v2501
    %v2528 = vadd.f32 %v2490, %v2526
    %v2529 = vadd.f32 %v2491, %v2527
    %v2530 = vmul.f32 %v537, %v2500
    %v2531 = vmul.f32 %v537, %v2501
    %v2532 = vadd.f32 %v2494, %v2530
    %v2533 = vadd.f32 %v2495, %v2531
    %v2534 = vmul.f32 %v542, %v2500
    %v2535 = vmul.f32 %v542, %v2501
    %v2536 = vadd.f32 %v2498, %v2534
    %v2537 = vadd.f32 %v2499, %v2535
    %v2538 = vld [vmem:[%s448 + $0x51] sm:$0xff]
    %v2539 = vld [vmem:[%s448 + $0x59] sm:$0xff]
    %v2540 = vmul.f32 %v549, %v2538
    %v2541 = vmul.f32 %v549, %v2539
    %v2542 = vadd.f32 %v2504, %v2540
    %v2543 = vadd.f32 %v2505, %v2541
    %v2544 = vmul.f32 %v554, %v2538
    %v2545 = vmul.f32 %v554, %v2539
    %v2546 = vadd.f32 %v2508, %v2544
    %v2547 = vadd.f32 %v2509, %v2545
    %v2548 = vmul.f32 %v559, %v2538
    %v2549 = vmul.f32 %v559, %v2539
    %v2550 = vadd.f32 %v2512, %v2548
    %v2551 = vadd.f32 %v2513, %v2549
    %v2552 = vmul.f32 %v564, %v2538
    %v2553 = vmul.f32 %v564, %v2539
    %v2554 = vadd.f32 %v2516, %v2552
    %v2555 = vadd.f32 %v2517, %v2553
    %v2556 = vmul.f32 %v569, %v2538
    %v2557 = vmul.f32 %v569, %v2539
    %v2558 = vadd.f32 %v2520, %v2556
    %v2559 = vadd.f32 %v2521, %v2557
    %v2560 = vmul.f32 %v574, %v2538
    %v2561 = vmul.f32 %v574, %v2539
    %v2562 = vadd.f32 %v2524, %v2560
    %v2563 = vadd.f32 %v2525, %v2561
    %v2564 = vmul.f32 %v579, %v2538
    %v2565 = vmul.f32 %v579, %v2539
    %v2566 = vadd.f32 %v2528, %v2564
    %v2567 = vadd.f32 %v2529, %v2565
    %v2568 = vmul.f32 %v584, %v2538
    %v2569 = vmul.f32 %v584, %v2539
    %v2570 = vadd.f32 %v2532, %v2568
    %v2571 = vadd.f32 %v2533, %v2569
    %v2572 = vmul.f32 %v589, %v2538
    %v2573 = vmul.f32 %v589, %v2539
    %v2574 = vadd.f32 %v2536, %v2572
    %v2575 = vadd.f32 %v2537, %v2573
    %2576 = vrot.lane.b32.xlu0 %v2542, 1
    %v2577 = vpop.permute.xlu0 %2576
    %2578 = vrot.lane.b32.xlu0 %v2543, 1
    %v2579 = vpop.permute.xlu0 %2578
    %v2580 = vsel %vm147, %v2577, 0.0
    %v2581 = vsel %vm147, %v2579, 0.0
    %v2582 = vadd.f32 %v2554, %v2580
    %v2583 = vadd.f32 %v2555, %v2581
    %2584 = vrot.lane.b32.xlu0 %v2566, 127
    %v2585 = vpop.permute.xlu0 %2584
    %2586 = vrot.lane.b32.xlu0 %v2567, 127
    %v2587 = vpop.permute.xlu0 %2586
    %v2588 = vsel %vm148, %v2585, 0.0
    %v2589 = vsel %vm148, %v2587, 0.0
    %v2590 = vadd.f32 %v2582, %v2588
    %v2591 = vadd.f32 %v2583, %v2589
    %2592 = vst [vmem:[#allocation9 + $0x50] sm:$0xff] %v2590
    %2593 = vst [vmem:[#allocation9 + $0x58] sm:$0xff] %v2591
    %2594 = vrot.lane.b32.xlu0 %v2546, 1
    %v2595 = vpop.permute.xlu0 %2594
    %2596 = vrot.lane.b32.xlu0 %v2547, 1
    %v2597 = vpop.permute.xlu0 %2596
    %v2598 = vsel %vm147, %v2595, 0.0
    %v2599 = vsel %vm147, %v2597, 0.0
    %v2600 = vadd.f32 %v2558, %v2598
    %v2601 = vadd.f32 %v2559, %v2599
    %2602 = vrot.lane.b32.xlu0 %v2570, 127
    %v2603 = vpop.permute.xlu0 %2602
    %2604 = vrot.lane.b32.xlu0 %v2571, 127
    %v2605 = vpop.permute.xlu0 %2604
    %v2606 = vsel %vm148, %v2603, 0.0
    %v2607 = vsel %vm148, %v2605, 0.0
    %v2608 = vadd.f32 %v2600, %v2606
    %v2609 = vadd.f32 %v2601, %v2607
    %2610 = vst [vmem:[%s628 + $0x50] sm:$0xff] %v2608
    %2611 = vst [vmem:[%s628 + $0x58] sm:$0xff] %v2609
    %2612 = vrot.lane.b32.xlu0 %v2550, 1
    %v2613 = vpop.permute.xlu0 %2612
    %2614 = vrot.lane.b32.xlu0 %v2551, 1
    %v2615 = vpop.permute.xlu0 %2614
    %v2616 = vsel %vm147, %v2613, 0.0
    %v2617 = vsel %vm147, %v2615, 0.0
    %v2618 = vadd.f32 %v2562, %v2616
    %v2619 = vadd.f32 %v2563, %v2617
    %2620 = vrot.lane.b32.xlu0 %v2574, 127
    %v2621 = vpop.permute.xlu0 %2620
    %2622 = vrot.lane.b32.xlu0 %v2575, 127
    %v2623 = vpop.permute.xlu0 %2622
    %v2624 = vsel %vm148, %v2621, 0.0
    %v2625 = vsel %vm148, %v2623, 0.0
    %v2626 = vadd.f32 %v2618, %v2624
    %v2627 = vadd.f32 %v2619, %v2625
    %2628 = vst [vmem:[%s647 + $0x50] sm:$0xff] %v2626
    %2629 = vst [vmem:[%s647 + $0x58] sm:$0xff] %v2627
    %v2630 = vld [vmem:[#allocation2 + $0x5f] sm:$0xff]
    %v2631 = vld [vmem:[#allocation2 + $0x67] sm:$0xff]
    %v2632 = vmul.f32 %v165, %v2630
    %v2633 = vmul.f32 %v165, %v2631
    %v2634 = vadd.f32 %v2632, 0.0
    %v2635 = vadd.f32 %v2633, 0.0
    %v2636 = vmul.f32 %v170, %v2630
    %v2637 = vmul.f32 %v170, %v2631
    %v2638 = vadd.f32 %v2636, 0.0
    %v2639 = vadd.f32 %v2637, 0.0
    %v2640 = vmul.f32 %v175, %v2630
    %v2641 = vmul.f32 %v175, %v2631
    %v2642 = vadd.f32 %v2640, 0.0
    %v2643 = vadd.f32 %v2641, 0.0
    %v2644 = vmul.f32 %v180, %v2630
    %v2645 = vmul.f32 %v180, %v2631
    %v2646 = vadd.f32 %v153, %v2644
    %v2647 = vadd.f32 %v153, %v2645
    %v2648 = vmul.f32 %v185, %v2630
    %v2649 = vmul.f32 %v185, %v2631
    %v2650 = vadd.f32 %v154, %v2648
    %v2651 = vadd.f32 %v154, %v2649
    %v2652 = vmul.f32 %v190, %v2630
    %v2653 = vmul.f32 %v190, %v2631
    %v2654 = vadd.f32 %v155, %v2652
    %v2655 = vadd.f32 %v155, %v2653
    %v2656 = vmul.f32 %v195, %v2630
    %v2657 = vmul.f32 %v195, %v2631
    %v2658 = vadd.f32 %v2656, 0.0
    %v2659 = vadd.f32 %v2657, 0.0
    %v2660 = vmul.f32 %v200, %v2630
    %v2661 = vmul.f32 %v200, %v2631
    %v2662 = vadd.f32 %v2660, 0.0
    %v2663 = vadd.f32 %v2661, 0.0
    %v2664 = vmul.f32 %v205, %v2630
    %v2665 = vmul.f32 %v205, %v2631
    %v2666 = vadd.f32 %v2664, 0.0
    %v2667 = vadd.f32 %v2665, 0.0
    %v2668 = vld [vmem:[#allocation2 + $0x60] sm:$0xff]
    %v2669 = vld [vmem:[#allocation2 + $0x68] sm:$0xff]
    %v2670 = vmul.f32 %v210, %v2668
    %v2671 = vmul.f32 %v210, %v2669
    %v2672 = vadd.f32 %v2634, %v2670
    %v2673 = vadd.f32 %v2635, %v2671
    %v2674 = vmul.f32 %v215, %v2668
    %v2675 = vmul.f32 %v215, %v2669
    %v2676 = vadd.f32 %v2638, %v2674
    %v2677 = vadd.f32 %v2639, %v2675
    %v2678 = vmul.f32 %v220, %v2668
    %v2679 = vmul.f32 %v220, %v2669
    %v2680 = vadd.f32 %v2642, %v2678
    %v2681 = vadd.f32 %v2643, %v2679
    %v2682 = vmul.f32 %v225, %v2668
    %v2683 = vmul.f32 %v225, %v2669
    %v2684 = vadd.f32 %v2646, %v2682
    %v2685 = vadd.f32 %v2647, %v2683
    %v2686 = vmul.f32 %v230, %v2668
    %v2687 = vmul.f32 %v230, %v2669
    %v2688 = vadd.f32 %v2650, %v2686
    %v2689 = vadd.f32 %v2651, %v2687
    %v2690 = vmul.f32 %v235, %v2668
    %v2691 = vmul.f32 %v235, %v2669
    %v2692 = vadd.f32 %v2654, %v2690
    %v2693 = vadd.f32 %v2655, %v2691
    %v2694 = vmul.f32 %v240, %v2668
    %v2695 = vmul.f32 %v240, %v2669
    %v2696 = vadd.f32 %v2658, %v2694
    %v2697 = vadd.f32 %v2659, %v2695
    %v2698 = vmul.f32 %v245, %v2668
    %v2699 = vmul.f32 %v245, %v2669
    %v2700 = vadd.f32 %v2662, %v2698
    %v2701 = vadd.f32 %v2663, %v2699
    %v2702 = vmul.f32 %v250, %v2668
    %v2703 = vmul.f32 %v250, %v2669
    %v2704 = vadd.f32 %v2666, %v2702
    %v2705 = vadd.f32 %v2667, %v2703
    %v2706 = vld [vmem:[#allocation2 + $0x61] sm:$0xff]
    %v2707 = vld [vmem:[#allocation2 + $0x69] sm:$0xff]
    %v2708 = vmul.f32 %v257, %v2706
    %v2709 = vmul.f32 %v257, %v2707
    %v2710 = vadd.f32 %v2672, %v2708
    %v2711 = vadd.f32 %v2673, %v2709
    %v2712 = vmul.f32 %v262, %v2706
    %v2713 = vmul.f32 %v262, %v2707
    %v2714 = vadd.f32 %v2676, %v2712
    %v2715 = vadd.f32 %v2677, %v2713
    %v2716 = vmul.f32 %v267, %v2706
    %v2717 = vmul.f32 %v267, %v2707
    %v2718 = vadd.f32 %v2680, %v2716
    %v2719 = vadd.f32 %v2681, %v2717
    %v2720 = vmul.f32 %v272, %v2706
    %v2721 = vmul.f32 %v272, %v2707
    %v2722 = vadd.f32 %v2684, %v2720
    %v2723 = vadd.f32 %v2685, %v2721
    %v2724 = vmul.f32 %v277, %v2706
    %v2725 = vmul.f32 %v277, %v2707
    %v2726 = vadd.f32 %v2688, %v2724
    %v2727 = vadd.f32 %v2689, %v2725
    %v2728 = vmul.f32 %v282, %v2706
    %v2729 = vmul.f32 %v282, %v2707
    %v2730 = vadd.f32 %v2692, %v2728
    %v2731 = vadd.f32 %v2693, %v2729
    %v2732 = vmul.f32 %v287, %v2706
    %v2733 = vmul.f32 %v287, %v2707
    %v2734 = vadd.f32 %v2696, %v2732
    %v2735 = vadd.f32 %v2697, %v2733
    %v2736 = vmul.f32 %v292, %v2706
    %v2737 = vmul.f32 %v292, %v2707
    %v2738 = vadd.f32 %v2700, %v2736
    %v2739 = vadd.f32 %v2701, %v2737
    %v2740 = vmul.f32 %v297, %v2706
    %v2741 = vmul.f32 %v297, %v2707
    %v2742 = vadd.f32 %v2704, %v2740
    %v2743 = vadd.f32 %v2705, %v2741
    %v2744 = vld [vmem:[%s302 + $0x5f] sm:$0xff]
    %v2745 = vld [vmem:[%s302 + $0x67] sm:$0xff]
    %v2746 = vmul.f32 %v311, %v2744
    %v2747 = vmul.f32 %v311, %v2745
    %v2748 = vadd.f32 %v2710, %v2746
    %v2749 = vadd.f32 %v2711, %v2747
    %v2750 = vmul.f32 %v316, %v2744
    %v2751 = vmul.f32 %v316, %v2745
    %v2752 = vadd.f32 %v2714, %v2750
    %v2753 = vadd.f32 %v2715, %v2751
    %v2754 = vmul.f32 %v321, %v2744
    %v2755 = vmul.f32 %v321, %v2745
    %v2756 = vadd.f32 %v2718, %v2754
    %v2757 = vadd.f32 %v2719, %v2755
    %v2758 = vmul.f32 %v326, %v2744
    %v2759 = vmul.f32 %v326, %v2745
    %v2760 = vadd.f32 %v2722, %v2758
    %v2761 = vadd.f32 %v2723, %v2759
    %v2762 = vmul.f32 %v331, %v2744
    %v2763 = vmul.f32 %v331, %v2745
    %v2764 = vadd.f32 %v2726, %v2762
    %v2765 = vadd.f32 %v2727, %v2763
    %v2766 = vmul.f32 %v336, %v2744
    %v2767 = vmul.f32 %v336, %v2745
    %v2768 = vadd.f32 %v2730, %v2766
    %v2769 = vadd.f32 %v2731, %v2767
    %v2770 = vmul.f32 %v341, %v2744
    %v2771 = vmul.f32 %v341, %v2745
    %v2772 = vadd.f32 %v2734, %v2770
    %v2773 = vadd.f32 %v2735, %v2771
    %v2774 = vmul.f32 %v346, %v2744
    %v2775 = vmul.f32 %v346, %v2745
    %v2776 = vadd.f32 %v2738, %v2774
    %v2777 = vadd.f32 %v2739, %v2775
    %v2778 = vmul.f32 %v351, %v2744
    %v2779 = vmul.f32 %v351, %v2745
    %v2780 = vadd.f32 %v2742, %v2778
    %v2781 = vadd.f32 %v2743, %v2779
    %v2782 = vld [vmem:[%s302 + $0x60] sm:$0xff]
    %v2783 = vld [vmem:[%s302 + $0x68] sm:$0xff]
    %v2784 = vmul.f32 %v356, %v2782
    %v2785 = vmul.f32 %v356, %v2783
    %v2786 = vadd.f32 %v2748, %v2784
    %v2787 = vadd.f32 %v2749, %v2785
    %v2788 = vmul.f32 %v361, %v2782
    %v2789 = vmul.f32 %v361, %v2783
    %v2790 = vadd.f32 %v2752, %v2788
    %v2791 = vadd.f32 %v2753, %v2789
    %v2792 = vmul.f32 %v366, %v2782
    %v2793 = vmul.f32 %v366, %v2783
    %v2794 = vadd.f32 %v2756, %v2792
    %v2795 = vadd.f32 %v2757, %v2793
    %v2796 = vmul.f32 %v371, %v2782
    %v2797 = vmul.f32 %v371, %v2783
    %v2798 = vadd.f32 %v2760, %v2796
    %v2799 = vadd.f32 %v2761, %v2797
    %v2800 = vmul.f32 %v376, %v2782
    %v2801 = vmul.f32 %v376, %v2783
    %v2802 = vadd.f32 %v2764, %v2800
    %v2803 = vadd.f32 %v2765, %v2801
    %v2804 = vmul.f32 %v381, %v2782
    %v2805 = vmul.f32 %v381, %v2783
    %v2806 = vadd.f32 %v2768, %v2804
    %v2807 = vadd.f32 %v2769, %v2805
    %v2808 = vmul.f32 %v386, %v2782
    %v2809 = vmul.f32 %v386, %v2783
    %v2810 = vadd.f32 %v2772, %v2808
    %v2811 = vadd.f32 %v2773, %v2809
    %v2812 = vmul.f32 %v391, %v2782
    %v2813 = vmul.f32 %v391, %v2783
    %v2814 = vadd.f32 %v2776, %v2812
    %v2815 = vadd.f32 %v2777, %v2813
    %v2816 = vmul.f32 %v396, %v2782
    %v2817 = vmul.f32 %v396, %v2783
    %v2818 = vadd.f32 %v2780, %v2816
    %v2819 = vadd.f32 %v2781, %v2817
    %v2820 = vld [vmem:[%s302 + $0x61] sm:$0xff]
    %v2821 = vld [vmem:[%s302 + $0x69] sm:$0xff]
    %v2822 = vmul.f32 %v403, %v2820
    %v2823 = vmul.f32 %v403, %v2821
    %v2824 = vadd.f32 %v2786, %v2822
    %v2825 = vadd.f32 %v2787, %v2823
    %v2826 = vmul.f32 %v408, %v2820
    %v2827 = vmul.f32 %v408, %v2821
    %v2828 = vadd.f32 %v2790, %v2826
    %v2829 = vadd.f32 %v2791, %v2827
    %v2830 = vmul.f32 %v413, %v2820
    %v2831 = vmul.f32 %v413, %v2821
    %v2832 = vadd.f32 %v2794, %v2830
    %v2833 = vadd.f32 %v2795, %v2831
    %v2834 = vmul.f32 %v418, %v2820
    %v2835 = vmul.f32 %v418, %v2821
    %v2836 = vadd.f32 %v2798, %v2834
    %v2837 = vadd.f32 %v2799, %v2835
    %v2838 = vmul.f32 %v423, %v2820
    %v2839 = vmul.f32 %v423, %v2821
    %v2840 = vadd.f32 %v2802, %v2838
    %v2841 = vadd.f32 %v2803, %v2839
    %v2842 = vmul.f32 %v428, %v2820
    %v2843 = vmul.f32 %v428, %v2821
    %v2844 = vadd.f32 %v2806, %v2842
    %v2845 = vadd.f32 %v2807, %v2843
    %v2846 = vmul.f32 %v433, %v2820
    %v2847 = vmul.f32 %v433, %v2821
    %v2848 = vadd.f32 %v2810, %v2846
    %v2849 = vadd.f32 %v2811, %v2847
    %v2850 = vmul.f32 %v438, %v2820
    %v2851 = vmul.f32 %v438, %v2821
    %v2852 = vadd.f32 %v2814, %v2850
    %v2853 = vadd.f32 %v2815, %v2851
    %v2854 = vmul.f32 %v443, %v2820
    %v2855 = vmul.f32 %v443, %v2821
    %v2856 = vadd.f32 %v2818, %v2854
    %v2857 = vadd.f32 %v2819, %v2855
    %v2858 = vld [vmem:[%s448 + $0x5f] sm:$0xff]
    %v2859 = vld [vmem:[%s448 + $0x67] sm:$0xff]
    %v2860 = vmul.f32 %v457, %v2858
    %v2861 = vmul.f32 %v457, %v2859
    %v2862 = vadd.f32 %v2824, %v2860
    %v2863 = vadd.f32 %v2825, %v2861
    %v2864 = vmul.f32 %v462, %v2858
    %v2865 = vmul.f32 %v462, %v2859
    %v2866 = vadd.f32 %v2828, %v2864
    %v2867 = vadd.f32 %v2829, %v2865
    %v2868 = vmul.f32 %v467, %v2858
    %v2869 = vmul.f32 %v467, %v2859
    %v2870 = vadd.f32 %v2832, %v2868
    %v2871 = vadd.f32 %v2833, %v2869
    %v2872 = vmul.f32 %v472, %v2858
    %v2873 = vmul.f32 %v472, %v2859
    %v2874 = vadd.f32 %v2836, %v2872
    %v2875 = vadd.f32 %v2837, %v2873
    %v2876 = vmul.f32 %v477, %v2858
    %v2877 = vmul.f32 %v477, %v2859
    %v2878 = vadd.f32 %v2840, %v2876
    %v2879 = vadd.f32 %v2841, %v2877
    %v2880 = vmul.f32 %v482, %v2858
    %v2881 = vmul.f32 %v482, %v2859
    %v2882 = vadd.f32 %v2844, %v2880
    %v2883 = vadd.f32 %v2845, %v2881
    %v2884 = vmul.f32 %v487, %v2858
    %v2885 = vmul.f32 %v487, %v2859
    %v2886 = vadd.f32 %v2848, %v2884
    %v2887 = vadd.f32 %v2849, %v2885
    %v2888 = vmul.f32 %v492, %v2858
    %v2889 = vmul.f32 %v492, %v2859
    %v2890 = vadd.f32 %v2852, %v2888
    %v2891 = vadd.f32 %v2853, %v2889
    %v2892 = vmul.f32 %v497, %v2858
    %v2893 = vmul.f32 %v497, %v2859
    %v2894 = vadd.f32 %v2856, %v2892
    %v2895 = vadd.f32 %v2857, %v2893
    %v2896 = vld [vmem:[%s448 + $0x60] sm:$0xff]
    %v2897 = vld [vmem:[%s448 + $0x68] sm:$0xff]
    %v2898 = vmul.f32 %v502, %v2896
    %v2899 = vmul.f32 %v502, %v2897
    %v2900 = vadd.f32 %v2862, %v2898
    %v2901 = vadd.f32 %v2863, %v2899
    %v2902 = vmul.f32 %v507, %v2896
    %v2903 = vmul.f32 %v507, %v2897
    %v2904 = vadd.f32 %v2866, %v2902
    %v2905 = vadd.f32 %v2867, %v2903
    %v2906 = vmul.f32 %v512, %v2896
    %v2907 = vmul.f32 %v512, %v2897
    %v2908 = vadd.f32 %v2870, %v2906
    %v2909 = vadd.f32 %v2871, %v2907
    %v2910 = vmul.f32 %v517, %v2896
    %v2911 = vmul.f32 %v517, %v2897
    %v2912 = vadd.f32 %v2874, %v2910
    %v2913 = vadd.f32 %v2875, %v2911
    %v2914 = vmul.f32 %v522, %v2896
    %v2915 = vmul.f32 %v522, %v2897
    %v2916 = vadd.f32 %v2878, %v2914
    %v2917 = vadd.f32 %v2879, %v2915
    %v2918 = vmul.f32 %v527, %v2896
    %v2919 = vmul.f32 %v527, %v2897
    %v2920 = vadd.f32 %v2882, %v2918
    %v2921 = vadd.f32 %v2883, %v2919
    %v2922 = vmul.f32 %v532, %v2896
    %v2923 = vmul.f32 %v532, %v2897
    %v2924 = vadd.f32 %v2886, %v2922
    %v2925 = vadd.f32 %v2887, %v2923
    %v2926 = vmul.f32 %v537, %v2896
    %v2927 = vmul.f32 %v537, %v2897
    %v2928 = vadd.f32 %v2890, %v2926
    %v2929 = vadd.f32 %v2891, %v2927
    %v2930 = vmul.f32 %v542, %v2896
    %v2931 = vmul.f32 %v542, %v2897
    %v2932 = vadd.f32 %v2894, %v2930
    %v2933 = vadd.f32 %v2895, %v2931
    %v2934 = vld [vmem:[%s448 + $0x61] sm:$0xff]
    %v2935 = vld [vmem:[%s448 + $0x69] sm:$0xff]
    %v2936 = vmul.f32 %v549, %v2934
    %v2937 = vmul.f32 %v549, %v2935
    %v2938 = vadd.f32 %v2900, %v2936
    %v2939 = vadd.f32 %v2901, %v2937
    %v2940 = vmul.f32 %v554, %v2934
    %v2941 = vmul.f32 %v554, %v2935
    %v2942 = vadd.f32 %v2904, %v2940
    %v2943 = vadd.f32 %v2905, %v2941
    %v2944 = vmul.f32 %v559, %v2934
    %v2945 = vmul.f32 %v559, %v2935
    %v2946 = vadd.f32 %v2908, %v2944
    %v2947 = vadd.f32 %v2909, %v2945
    %v2948 = vmul.f32 %v564, %v2934
    %v2949 = vmul.f32 %v564, %v2935
    %v2950 = vadd.f32 %v2912, %v2948
    %v2951 = vadd.f32 %v2913, %v2949
    %v2952 = vmul.f32 %v569, %v2934
    %v2953 = vmul.f32 %v569, %v2935
    %v2954 = vadd.f32 %v2916, %v2952
    %v2955 = vadd.f32 %v2917, %v2953
    %v2956 = vmul.f32 %v574, %v2934
    %v2957 = vmul.f32 %v574, %v2935
    %v2958 = vadd.f32 %v2920, %v2956
    %v2959 = vadd.f32 %v2921, %v2957
    %v2960 = vmul.f32 %v579, %v2934
    %v2961 = vmul.f32 %v579, %v2935
    %v2962 = vadd.f32 %v2924, %v2960
    %v2963 = vadd.f32 %v2925, %v2961
    %v2964 = vmul.f32 %v584, %v2934
    %v2965 = vmul.f32 %v584, %v2935
    %v2966 = vadd.f32 %v2928, %v2964
    %v2967 = vadd.f32 %v2929, %v2965
    %v2968 = vmul.f32 %v589, %v2934
    %v2969 = vmul.f32 %v589, %v2935
    %v2970 = vadd.f32 %v2932, %v2968
    %v2971 = vadd.f32 %v2933, %v2969
    %2972 = vrot.lane.b32.xlu0 %v2938, 1
    %v2973 = vpop.permute.xlu0 %2972
    %2974 = vrot.lane.b32.xlu0 %v2939, 1
    %v2975 = vpop.permute.xlu0 %2974
    %v2976 = vsel %vm147, %v2973, 0.0
    %v2977 = vsel %vm147, %v2975, 0.0
    %v2978 = vadd.f32 %v2950, %v2976
    %v2979 = vadd.f32 %v2951, %v2977
    %2980 = vrot.lane.b32.xlu0 %v2962, 127
    %v2981 = vpop.permute.xlu0 %2980
    %2982 = vrot.lane.b32.xlu0 %v2963, 127
    %v2983 = vpop.permute.xlu0 %2982
    %v2984 = vsel %vm148, %v2981, 0.0
    %v2985 = vsel %vm148, %v2983, 0.0
    %v2986 = vadd.f32 %v2978, %v2984
    %v2987 = vadd.f32 %v2979, %v2985
    %2988 = vst [vmem:[#allocation9 + $0x60] sm:$0xff] %v2986
    %2989 = vst [vmem:[#allocation9 + $0x68] sm:$0xff] %v2987
    %2990 = vrot.lane.b32.xlu0 %v2942, 1
    %v2991 = vpop.permute.xlu0 %2990
    %2992 = vrot.lane.b32.xlu0 %v2943, 1
    %v2993 = vpop.permute.xlu0 %2992
    %v2994 = vsel %vm147, %v2991, 0.0
    %v2995 = vsel %vm147, %v2993, 0.0
    %v2996 = vadd.f32 %v2954, %v2994
    %v2997 = vadd.f32 %v2955, %v2995
    %2998 = vrot.lane.b32.xlu0 %v2966, 127
    %v2999 = vpop.permute.xlu0 %2998
    %3000 = vrot.lane.b32.xlu0 %v2967, 127
    %v3001 = vpop.permute.xlu0 %3000
    %v3002 = vsel %vm148, %v2999, 0.0
    %v3003 = vsel %vm148, %v3001, 0.0
    %v3004 = vadd.f32 %v2996, %v3002
    %v3005 = vadd.f32 %v2997, %v3003
    %3006 = vst [vmem:[%s628 + $0x60] sm:$0xff] %v3004
    %3007 = vst [vmem:[%s628 + $0x68] sm:$0xff] %v3005
    %3008 = vrot.lane.b32.xlu0 %v2946, 1
    %v3009 = vpop.permute.xlu0 %3008
    %3010 = vrot.lane.b32.xlu0 %v2947, 1
    %v3011 = vpop.permute.xlu0 %3010
    %v3012 = vsel %vm147, %v3009, 0.0
    %v3013 = vsel %vm147, %v3011, 0.0
    %v3014 = vadd.f32 %v2958, %v3012
    %v3015 = vadd.f32 %v2959, %v3013
    %3016 = vrot.lane.b32.xlu0 %v2970, 127
    %v3017 = vpop.permute.xlu0 %3016
    %3018 = vrot.lane.b32.xlu0 %v2971, 127
    %v3019 = vpop.permute.xlu0 %3018
    %v3020 = vsel %vm148, %v3017, 0.0
    %v3021 = vsel %vm148, %v3019, 0.0
    %v3022 = vadd.f32 %v3014, %v3020
    %v3023 = vadd.f32 %v3015, %v3021
    %3024 = vst [vmem:[%s647 + $0x60] sm:$0xff] %v3022
    %3025 = vst [vmem:[%s647 + $0x68] sm:$0xff] %v3023
    %v3026 = vld [vmem:[#allocation2 + $0x6f] sm:$0xff]
    %v3027 = vld [vmem:[#allocation2 + $0x77] sm:$0xff]
    %v3028 = vmul.f32 %v165, %v3026
    %v3029 = vmul.f32 %v165, %v3027
    %v3030 = vadd.f32 %v3028, 0.0
    %v3031 = vadd.f32 %v3029, 0.0
    %v3032 = vmul.f32 %v170, %v3026
    %v3033 = vmul.f32 %v170, %v3027
    %v3034 = vadd.f32 %v3032, 0.0
    %v3035 = vadd.f32 %v3033, 0.0
    %v3036 = vmul.f32 %v175, %v3026
    %v3037 = vmul.f32 %v175, %v3027
    %v3038 = vadd.f32 %v3036, 0.0
    %v3039 = vadd.f32 %v3037, 0.0
    %v3040 = vmul.f32 %v180, %v3026
    %v3041 = vmul.f32 %v180, %v3027
    %v3042 = vadd.f32 %v153, %v3040
    %v3043 = vadd.f32 %v153, %v3041
    %v3044 = vmul.f32 %v185, %v3026
    %v3045 = vmul.f32 %v185, %v3027
    %v3046 = vadd.f32 %v154, %v3044
    %v3047 = vadd.f32 %v154, %v3045
    %v3048 = vmul.f32 %v190, %v3026
    %v3049 = vmul.f32 %v190, %v3027
    %v3050 = vadd.f32 %v155, %v3048
    %v3051 = vadd.f32 %v155, %v3049
    %v3052 = vmul.f32 %v195, %v3026
    %v3053 = vmul.f32 %v195, %v3027
    %v3054 = vadd.f32 %v3052, 0.0
    %v3055 = vadd.f32 %v3053, 0.0
    %v3056 = vmul.f32 %v200, %v3026
    %v3057 = vmul.f32 %v200, %v3027
    %v3058 = vadd.f32 %v3056, 0.0
    %v3059 = vadd.f32 %v3057, 0.0
    %v3060 = vmul.f32 %v205, %v3026
    %v3061 = vmul.f32 %v205, %v3027
    %v3062 = vadd.f32 %v3060, 0.0
    %v3063 = vadd.f32 %v3061, 0.0
    %v3064 = vld [vmem:[#allocation2 + $0x70] sm:$0xff]
    %v3065 = vld [vmem:[#allocation2 + $0x78] sm:$0xff]
    %v3066 = vmul.f32 %v210, %v3064
    %v3067 = vmul.f32 %v210, %v3065
    %v3068 = vadd.f32 %v3030, %v3066
    %v3069 = vadd.f32 %v3031, %v3067
    %v3070 = vmul.f32 %v215, %v3064
    %v3071 = vmul.f32 %v215, %v3065
    %v3072 = vadd.f32 %v3034, %v3070
    %v3073 = vadd.f32 %v3035, %v3071
    %v3074 = vmul.f32 %v220, %v3064
    %v3075 = vmul.f32 %v220, %v3065
    %v3076 = vadd.f32 %v3038, %v3074
    %v3077 = vadd.f32 %v3039, %v3075
    %v3078 = vmul.f32 %v225, %v3064
    %v3079 = vmul.f32 %v225, %v3065
    %v3080 = vadd.f32 %v3042, %v3078
    %v3081 = vadd.f32 %v3043, %v3079
    %v3082 = vmul.f32 %v230, %v3064
    %v3083 = vmul.f32 %v230, %v3065
    %v3084 = vadd.f32 %v3046, %v3082
    %v3085 = vadd.f32 %v3047, %v3083
    %v3086 = vmul.f32 %v235, %v3064
    %v3087 = vmul.f32 %v235, %v3065
    %v3088 = vadd.f32 %v3050, %v3086
    %v3089 = vadd.f32 %v3051, %v3087
    %v3090 = vmul.f32 %v240, %v3064
    %v3091 = vmul.f32 %v240, %v3065
    %v3092 = vadd.f32 %v3054, %v3090
    %v3093 = vadd.f32 %v3055, %v3091
    %v3094 = vmul.f32 %v245, %v3064
    %v3095 = vmul.f32 %v245, %v3065
    %v3096 = vadd.f32 %v3058, %v3094
    %v3097 = vadd.f32 %v3059, %v3095
    %v3098 = vmul.f32 %v250, %v3064
    %v3099 = vmul.f32 %v250, %v3065
    %v3100 = vadd.f32 %v3062, %v3098
    %v3101 = vadd.f32 %v3063, %v3099
    %v3102 = vrot.slane %v3064, 1
    %v3103 = vrot.slane %v3065, 1
    %vm3104 = vcmp.lt.s32.totalorder %v145, 7
    %v3105 = vsel %vm3104, %v3102, %v3103
    %v3106 = vsel %vm3104, %v3103, %v3102
    %v3107 = vsel %vm151, %v3105, 0.0
    %v3108 = vsel %vm152, %v3106, 0.0
    %v3109 = vmul.f32 %v257, %v3107
    %v3110 = vmul.f32 %v257, %v3108
    %v3111 = vadd.f32 %v3068, %v3109
    %v3112 = vadd.f32 %v3069, %v3110
    %v3113 = vmul.f32 %v262, %v3107
    %v3114 = vmul.f32 %v262, %v3108
    %v3115 = vadd.f32 %v3072, %v3113
    %v3116 = vadd.f32 %v3073, %v3114
    %v3117 = vmul.f32 %v267, %v3107
    %v3118 = vmul.f32 %v267, %v3108
    %v3119 = vadd.f32 %v3076, %v3117
    %v3120 = vadd.f32 %v3077, %v3118
    %v3121 = vmul.f32 %v272, %v3107
    %v3122 = vmul.f32 %v272, %v3108
    %v3123 = vadd.f32 %v3080, %v3121
    %v3124 = vadd.f32 %v3081, %v3122
    %v3125 = vmul.f32 %v277, %v3107
    %v3126 = vmul.f32 %v277, %v3108
    %v3127 = vadd.f32 %v3084, %v3125
    %v3128 = vadd.f32 %v3085, %v3126
    %v3129 = vmul.f32 %v282, %v3107
    %v3130 = vmul.f32 %v282, %v3108
    %v3131 = vadd.f32 %v3088, %v3129
    %v3132 = vadd.f32 %v3089, %v3130
    %v3133 = vmul.f32 %v287, %v3107
    %v3134 = vmul.f32 %v287, %v3108
    %v3135 = vadd.f32 %v3092, %v3133
    %v3136 = vadd.f32 %v3093, %v3134
    %v3137 = vmul.f32 %v292, %v3107
    %v3138 = vmul.f32 %v292, %v3108
    %v3139 = vadd.f32 %v3096, %v3137
    %v3140 = vadd.f32 %v3097, %v3138
    %v3141 = vmul.f32 %v297, %v3107
    %v3142 = vmul.f32 %v297, %v3108
    %v3143 = vadd.f32 %v3100, %v3141
    %v3144 = vadd.f32 %v3101, %v3142
    %v3145 = vld [vmem:[%s302 + $0x6f] sm:$0xff]
    %v3146 = vld [vmem:[%s302 + $0x77] sm:$0xff]
    %v3147 = vmul.f32 %v311, %v3145
    %v3148 = vmul.f32 %v311, %v3146
    %v3149 = vadd.f32 %v3111, %v3147
    %v3150 = vadd.f32 %v3112, %v3148
    %v3151 = vmul.f32 %v316, %v3145
    %v3152 = vmul.f32 %v316, %v3146
    %v3153 = vadd.f32 %v3115, %v3151
    %v3154 = vadd.f32 %v3116, %v3152
    %v3155 = vmul.f32 %v321, %v3145
    %v3156 = vmul.f32 %v321, %v3146
    %v3157 = vadd.f32 %v3119, %v3155
    %v3158 = vadd.f32 %v3120, %v3156
    %v3159 = vmul.f32 %v326, %v3145
    %v3160 = vmul.f32 %v326, %v3146
    %v3161 = vadd.f32 %v3123, %v3159
    %v3162 = vadd.f32 %v3124, %v3160
    %v3163 = vmul.f32 %v331, %v3145
    %v3164 = vmul.f32 %v331, %v3146
    %v3165 = vadd.f32 %v3127, %v3163
    %v3166 = vadd.f32 %v3128, %v3164
    %v3167 = vmul.f32 %v336, %v3145
    %v3168 = vmul.f32 %v336, %v3146
    %v3169 = vadd.f32 %v3131, %v3167
    %v3170 = vadd.f32 %v3132, %v3168
    %v3171 = vmul.f32 %v341, %v3145
    %v3172 = vmul.f32 %v341, %v3146
    %v3173 = vadd.f32 %v3135, %v3171
    %v3174 = vadd.f32 %v3136, %v3172
    %v3175 = vmul.f32 %v346, %v3145
    %v3176 = vmul.f32 %v346, %v3146
    %v3177 = vadd.f32 %v3139, %v3175
    %v3178 = vadd.f32 %v3140, %v3176
    %v3179 = vmul.f32 %v351, %v3145
    %v3180 = vmul.f32 %v351, %v3146
    %v3181 = vadd.f32 %v3143, %v3179
    %v3182 = vadd.f32 %v3144, %v3180
    %v3183 = vld [vmem:[%s302 + $0x70] sm:$0xff]
    %v3184 = vld [vmem:[%s302 + $0x78] sm:$0xff]
    %v3185 = vmul.f32 %v356, %v3183
    %v3186 = vmul.f32 %v356, %v3184
    %v3187 = vadd.f32 %v3149, %v3185
    %v3188 = vadd.f32 %v3150, %v3186
    %v3189 = vmul.f32 %v361, %v3183
    %v3190 = vmul.f32 %v361, %v3184
    %v3191 = vadd.f32 %v3153, %v3189
    %v3192 = vadd.f32 %v3154, %v3190
    %v3193 = vmul.f32 %v366, %v3183
    %v3194 = vmul.f32 %v366, %v3184
    %v3195 = vadd.f32 %v3157, %v3193
    %v3196 = vadd.f32 %v3158, %v3194
    %v3197 = vmul.f32 %v371, %v3183
    %v3198 = vmul.f32 %v371, %v3184
    %v3199 = vadd.f32 %v3161, %v3197
    %v3200 = vadd.f32 %v3162, %v3198
    %v3201 = vmul.f32 %v376, %v3183
    %v3202 = vmul.f32 %v376, %v3184
    %v3203 = vadd.f32 %v3165, %v3201
    %v3204 = vadd.f32 %v3166, %v3202
    %v3205 = vmul.f32 %v381, %v3183
    %v3206 = vmul.f32 %v381, %v3184
    %v3207 = vadd.f32 %v3169, %v3205
    %v3208 = vadd.f32 %v3170, %v3206
    %v3209 = vmul.f32 %v386, %v3183
    %v3210 = vmul.f32 %v386, %v3184
    %v3211 = vadd.f32 %v3173, %v3209
    %v3212 = vadd.f32 %v3174, %v3210
    %v3213 = vmul.f32 %v391, %v3183
    %v3214 = vmul.f32 %v391, %v3184
    %v3215 = vadd.f32 %v3177, %v3213
    %v3216 = vadd.f32 %v3178, %v3214
    %v3217 = vmul.f32 %v396, %v3183
    %v3218 = vmul.f32 %v396, %v3184
    %v3219 = vadd.f32 %v3181, %v3217
    %v3220 = vadd.f32 %v3182, %v3218
    %v3221 = vrot.slane %v3183, 1
    %v3222 = vrot.slane %v3184, 1
    %v3223 = vsel %vm3104, %v3221, %v3222
    %v3224 = vsel %vm3104, %v3222, %v3221
    %v3225 = vsel %vm151, %v3223, 0.0
    %v3226 = vsel %vm152, %v3224, 0.0
    %v3227 = vmul.f32 %v403, %v3225
    %v3228 = vmul.f32 %v403, %v3226
    %v3229 = vadd.f32 %v3187, %v3227
    %v3230 = vadd.f32 %v3188, %v3228
    %v3231 = vmul.f32 %v408, %v3225
    %v3232 = vmul.f32 %v408, %v3226
    %v3233 = vadd.f32 %v3191, %v3231
    %v3234 = vadd.f32 %v3192, %v3232
    %v3235 = vmul.f32 %v413, %v3225
    %v3236 = vmul.f32 %v413, %v3226
    %v3237 = vadd.f32 %v3195, %v3235
    %v3238 = vadd.f32 %v3196, %v3236
    %v3239 = vmul.f32 %v418, %v3225
    %v3240 = vmul.f32 %v418, %v3226
    %v3241 = vadd.f32 %v3199, %v3239
    %v3242 = vadd.f32 %v3200, %v3240
    %v3243 = vmul.f32 %v423, %v3225
    %v3244 = vmul.f32 %v423, %v3226
    %v3245 = vadd.f32 %v3203, %v3243
    %v3246 = vadd.f32 %v3204, %v3244
    %v3247 = vmul.f32 %v428, %v3225
    %v3248 = vmul.f32 %v428, %v3226
    %v3249 = vadd.f32 %v3207, %v3247
    %v3250 = vadd.f32 %v3208, %v3248
    %v3251 = vmul.f32 %v433, %v3225
    %v3252 = vmul.f32 %v433, %v3226
    %v3253 = vadd.f32 %v3211, %v3251
    %v3254 = vadd.f32 %v3212, %v3252
    %v3255 = vmul.f32 %v438, %v3225
    %v3256 = vmul.f32 %v438, %v3226
    %v3257 = vadd.f32 %v3215, %v3255
    %v3258 = vadd.f32 %v3216, %v3256
    %v3259 = vmul.f32 %v443, %v3225
    %v3260 = vmul.f32 %v443, %v3226
    %v3261 = vadd.f32 %v3219, %v3259
    %v3262 = vadd.f32 %v3220, %v3260
    %v3263 = vld [vmem:[%s448 + $0x6f] sm:$0xff]
    %v3264 = vld [vmem:[%s448 + $0x77] sm:$0xff]
    %v3265 = vmul.f32 %v457, %v3263
    %v3266 = vmul.f32 %v457, %v3264
    %v3267 = vadd.f32 %v3229, %v3265
    %v3268 = vadd.f32 %v3230, %v3266
    %v3269 = vmul.f32 %v462, %v3263
    %v3270 = vmul.f32 %v462, %v3264
    %v3271 = vadd.f32 %v3233, %v3269
    %v3272 = vadd.f32 %v3234, %v3270
    %v3273 = vmul.f32 %v467, %v3263
    %v3274 = vmul.f32 %v467, %v3264
    %v3275 = vadd.f32 %v3237, %v3273
    %v3276 = vadd.f32 %v3238, %v3274
    %v3277 = vmul.f32 %v472, %v3263
    %v3278 = vmul.f32 %v472, %v3264
    %v3279 = vadd.f32 %v3241, %v3277
    %v3280 = vadd.f32 %v3242, %v3278
    %v3281 = vmul.f32 %v477, %v3263
    %v3282 = vmul.f32 %v477, %v3264
    %v3283 = vadd.f32 %v3245, %v3281
    %v3284 = vadd.f32 %v3246, %v3282
    %v3285 = vmul.f32 %v482, %v3263
    %v3286 = vmul.f32 %v482, %v3264
    %v3287 = vadd.f32 %v3249, %v3285
    %v3288 = vadd.f32 %v3250, %v3286
    %v3289 = vmul.f32 %v487, %v3263
    %v3290 = vmul.f32 %v487, %v3264
    %v3291 = vadd.f32 %v3253, %v3289
    %v3292 = vadd.f32 %v3254, %v3290
    %v3293 = vmul.f32 %v492, %v3263
    %v3294 = vmul.f32 %v492, %v3264
    %v3295 = vadd.f32 %v3257, %v3293
    %v3296 = vadd.f32 %v3258, %v3294
    %v3297 = vmul.f32 %v497, %v3263
    %v3298 = vmul.f32 %v497, %v3264
    %v3299 = vadd.f32 %v3261, %v3297
    %v3300 = vadd.f32 %v3262, %v3298
    %v3301 = vld [vmem:[%s448 + $0x70] sm:$0xff]
    %v3302 = vld [vmem:[%s448 + $0x78] sm:$0xff]
    %v3303 = vmul.f32 %v502, %v3301
    %v3304 = vmul.f32 %v502, %v3302
    %v3305 = vadd.f32 %v3267, %v3303
    %v3306 = vadd.f32 %v3268, %v3304
    %v3307 = vmul.f32 %v507, %v3301
    %v3308 = vmul.f32 %v507, %v3302
    %v3309 = vadd.f32 %v3271, %v3307
    %v3310 = vadd.f32 %v3272, %v3308
    %v3311 = vmul.f32 %v512, %v3301
    %v3312 = vmul.f32 %v512, %v3302
    %v3313 = vadd.f32 %v3275, %v3311
    %v3314 = vadd.f32 %v3276, %v3312
    %v3315 = vmul.f32 %v517, %v3301
    %v3316 = vmul.f32 %v517, %v3302
    %v3317 = vadd.f32 %v3279, %v3315
    %v3318 = vadd.f32 %v3280, %v3316
    %v3319 = vmul.f32 %v522, %v3301
    %v3320 = vmul.f32 %v522, %v3302
    %v3321 = vadd.f32 %v3283, %v3319
    %v3322 = vadd.f32 %v3284, %v3320
    %v3323 = vmul.f32 %v527, %v3301
    %v3324 = vmul.f32 %v527, %v3302
    %v3325 = vadd.f32 %v3287, %v3323
    %v3326 = vadd.f32 %v3288, %v3324
    %v3327 = vmul.f32 %v532, %v3301
    %v3328 = vmul.f32 %v532, %v3302
    %v3329 = vadd.f32 %v3291, %v3327
    %v3330 = vadd.f32 %v3292, %v3328
    %v3331 = vmul.f32 %v537, %v3301
    %v3332 = vmul.f32 %v537, %v3302
    %v3333 = vadd.f32 %v3295, %v3331
    %v3334 = vadd.f32 %v3296, %v3332
    %v3335 = vmul.f32 %v542, %v3301
    %v3336 = vmul.f32 %v542, %v3302
    %v3337 = vadd.f32 %v3299, %v3335
    %v3338 = vadd.f32 %v3300, %v3336
    %v3339 = vrot.slane %v3301, 1
    %v3340 = vrot.slane %v3302, 1
    %v3341 = vsel %vm3104, %v3339, %v3340
    %v3342 = vsel %vm3104, %v3340, %v3339
    %v3343 = vsel %vm151, %v3341, 0.0
    %v3344 = vsel %vm152, %v3342, 0.0
    %v3345 = vmul.f32 %v549, %v3343
    %v3346 = vmul.f32 %v549, %v3344
    %v3347 = vadd.f32 %v3305, %v3345
    %v3348 = vadd.f32 %v3306, %v3346
    %v3349 = vmul.f32 %v554, %v3343
    %v3350 = vmul.f32 %v554, %v3344
    %v3351 = vadd.f32 %v3309, %v3349
    %v3352 = vadd.f32 %v3310, %v3350
    %v3353 = vmul.f32 %v559, %v3343
    %v3354 = vmul.f32 %v559, %v3344
    %v3355 = vadd.f32 %v3313, %v3353
    %v3356 = vadd.f32 %v3314, %v3354
    %v3357 = vmul.f32 %v564, %v3343
    %v3358 = vmul.f32 %v564, %v3344
    %v3359 = vadd.f32 %v3317, %v3357
    %v3360 = vadd.f32 %v3318, %v3358
    %v3361 = vmul.f32 %v569, %v3343
    %v3362 = vmul.f32 %v569, %v3344
    %v3363 = vadd.f32 %v3321, %v3361
    %v3364 = vadd.f32 %v3322, %v3362
    %v3365 = vmul.f32 %v574, %v3343
    %v3366 = vmul.f32 %v574, %v3344
    %v3367 = vadd.f32 %v3325, %v3365
    %v3368 = vadd.f32 %v3326, %v3366
    %v3369 = vmul.f32 %v579, %v3343
    %v3370 = vmul.f32 %v579, %v3344
    %v3371 = vadd.f32 %v3329, %v3369
    %v3372 = vadd.f32 %v3330, %v3370
    %v3373 = vmul.f32 %v584, %v3343
    %v3374 = vmul.f32 %v584, %v3344
    %v3375 = vadd.f32 %v3333, %v3373
    %v3376 = vadd.f32 %v3334, %v3374
    %v3377 = vmul.f32 %v589, %v3343
    %v3378 = vmul.f32 %v589, %v3344
    %v3379 = vadd.f32 %v3337, %v3377
    %v3380 = vadd.f32 %v3338, %v3378
    %3381 = vrot.lane.b32.xlu0 %v3347, 1
    %v3382 = vpop.permute.xlu0 %3381
    %3383 = vrot.lane.b32.xlu0 %v3348, 1
    %v3384 = vpop.permute.xlu0 %3383
    %v3385 = vsel %vm147, %v3382, 0.0
    %v3386 = vsel %vm147, %v3384, 0.0
    %v3387 = vadd.f32 %v3359, %v3385
    %v3388 = vadd.f32 %v3360, %v3386
    %3389 = vrot.lane.b32.xlu0 %v3371, 127
    %v3390 = vpop.permute.xlu0 %3389
    %3391 = vrot.lane.b32.xlu0 %v3372, 127
    %v3392 = vpop.permute.xlu0 %3391
    %v3393 = vsel %vm148, %v3390, 0.0
    %v3394 = vsel %vm148, %v3392, 0.0
    %v3395 = vadd.f32 %v3387, %v3393
    %v3396 = vadd.f32 %v3388, %v3394
    %3397 = vst [vmem:[#allocation9 + $0x70] sm:$0xff] %v3395
    %3398 = vst [vmem:[#allocation9 + $0x78] sm:$0xff] %v3396
    %3399 = vrot.lane.b32.xlu0 %v3351, 1
    %v3400 = vpop.permute.xlu0 %3399
    %3401 = vrot.lane.b32.xlu0 %v3352, 1
    %v3402 = vpop.permute.xlu0 %3401
    %v3403 = vsel %vm147, %v3400, 0.0
    %v3404 = vsel %vm147, %v3402, 0.0
    %v3405 = vadd.f32 %v3363, %v3403
    %v3406 = vadd.f32 %v3364, %v3404
    %3407 = vrot.lane.b32.xlu0 %v3375, 127
    %v3408 = vpop.permute.xlu0 %3407
    %3409 = vrot.lane.b32.xlu0 %v3376, 127
    %v3410 = vpop.permute.xlu0 %3409
    %v3411 = vsel %vm148, %v3408, 0.0
    %v3412 = vsel %vm148, %v3410, 0.0
    %v3413 = vadd.f32 %v3405, %v3411
    %v3414 = vadd.f32 %v3406, %v3412
    %3415 = vst [vmem:[%s628 + $0x70] sm:$0xff] %v3413
    %3416 = vst [vmem:[%s628 + $0x78] sm:$0xff] %v3414
    %3417 = vrot.lane.b32.xlu0 %v3355, 1
    %v3418 = vpop.permute.xlu0 %3417
    %3419 = vrot.lane.b32.xlu0 %v3356, 1
    %v3420 = vpop.permute.xlu0 %3419
    %v3421 = vsel %vm147, %v3418, 0.0
    %v3422 = vsel %vm147, %v3420, 0.0
    %v3423 = vadd.f32 %v3367, %v3421
    %v3424 = vadd.f32 %v3368, %v3422
    %3425 = vrot.lane.b32.xlu0 %v3379, 127
    %v3426 = vpop.permute.xlu0 %3425
    %3427 = vrot.lane.b32.xlu0 %v3380, 127
    %v3428 = vpop.permute.xlu0 %3427
    %v3429 = vsel %vm148, %v3426, 0.0
    %v3430 = vsel %vm148, %v3428, 0.0
    %v3431 = vadd.f32 %v3423, %v3429
    %v3432 = vadd.f32 %v3424, %v3430
    %3433 = vst [vmem:[%s647 + $0x70] sm:$0xff] %v3431
    %3434 = vst [vmem:[%s647 + $0x78] sm:$0xff] %v3432
    %v3435 = vld [vmem:[#allocation9] sm:$0x3f]
    %3436 = vst [vmem:[%s4] sm:$0x3f] %v3435
    %v3437 = vld [vmem:[%s628] sm:$0x3f]
    %s3438 = scalar_lea.vmem %s4, 8
    %3439 = vst [vmem:[%s3438] sm:$0x3f] %v3437
    %v3440 = vld [vmem:[%s647] sm:$0x3f]
    %s3441 = scalar_lea.vmem %s4, 16
    %3442 = vst [vmem:[%s3441] sm:$0x3f] %v3440
    %v3443 = vld [vmem:[#allocation9 + $0x6] sm:$0xff]
    %v3444 = vld [vmem:[#allocation9 + $0xe] sm:$0xff]
    %v3445 = vld [vmem:[#allocation9 + $0x16] sm:$0xff]
    %v3446 = vld [vmem:[#allocation9 + $0x1e] sm:$0xff]
    %v3447 = vld [vmem:[#allocation9 + $0x26] sm:$0xff]
    %v3448 = vld [vmem:[#allocation9 + $0x2e] sm:$0xff]
    %v3449 = vld [vmem:[#allocation9 + $0x36] sm:$0xff]
    %v3450 = vld [vmem:[#allocation9 + $0x3e] sm:$0xff]
    %v3451 = vld [vmem:[#allocation9 + $0x46] sm:$0xff]
    %v3452 = vld [vmem:[#allocation9 + $0x4e] sm:$0xff]
    %v3453 = vld [vmem:[#allocation9 + $0x56] sm:$0xff]
    %v3454 = vld [vmem:[#allocation9 + $0x5e] sm:$0xff]
    %v3455 = vld [vmem:[#allocation9 + $0x66] sm:$0xf]
    %3456 = vst [vmem:[%s5] sm:$0xff] %v3443
    %3457 = vst [vmem:[%s5 + $0x8] sm:$0xff] %v3444
    %3458 = vst [vmem:[%s5 + $0x10] sm:$0xff] %v3445
    %3459 = vst [vmem:[%s5 + $0x18] sm:$0xff] %v3446
    %3460 = vst [vmem:[%s5 + $0x20] sm:$0xff] %v3447
    %3461 = vst [vmem:[%s5 + $0x28] sm:$0xff] %v3448
    %3462 = vst [vmem:[%s5 + $0x30] sm:$0xff] %v3449
    %3463 = vst [vmem:[%s5 + $0x38] sm:$0xff] %v3450
    %3464 = vst [vmem:[%s5 + $0x40] sm:$0xff] %v3451
    %3465 = vst [vmem:[%s5 + $0x48] sm:$0xff] %v3452
    %3466 = vst [vmem:[%s5 + $0x50] sm:$0xff] %v3453
    %3467 = vst [vmem:[%s5 + $0x58] sm:$0xff] %v3454
    %3468 = vst [vmem:[%s5 + $0x60] sm:$0xf] %v3455
    %v3469 = vld [vmem:[%s628 + $0x6] sm:$0xff]
    %v3470 = vld [vmem:[%s628 + $0xe] sm:$0xff]
    %v3471 = vld [vmem:[%s628 + $0x16] sm:$0xff]
    %v3472 = vld [vmem:[%s628 + $0x1e] sm:$0xff]
    %v3473 = vld [vmem:[%s628 + $0x26] sm:$0xff]
    %v3474 = vld [vmem:[%s628 + $0x2e] sm:$0xff]
    %v3475 = vld [vmem:[%s628 + $0x36] sm:$0xff]
    %v3476 = vld [vmem:[%s628 + $0x3e] sm:$0xff]
    %v3477 = vld [vmem:[%s628 + $0x46] sm:$0xff]
    %v3478 = vld [vmem:[%s628 + $0x4e] sm:$0xff]
    %v3479 = vld [vmem:[%s628 + $0x56] sm:$0xff]
    %v3480 = vld [vmem:[%s628 + $0x5e] sm:$0xff]
    %v3481 = vld [vmem:[%s628 + $0x66] sm:$0xf]
    %s3482 = scalar_lea.vmem %s5, 104
    %3483 = vst [vmem:[%s3482] sm:$0xff] %v3469
    %3484 = vst [vmem:[%s3482 + $0x8] sm:$0xff] %v3470
    %3485 = vst [vmem:[%s3482 + $0x10] sm:$0xff] %v3471
    %3486 = vst [vmem:[%s3482 + $0x18] sm:$0xff] %v3472
    %3487 = vst [vmem:[%s3482 + $0x20] sm:$0xff] %v3473
    %3488 = vst [vmem:[%s3482 + $0x28] sm:$0xff] %v3474
    %3489 = vst [vmem:[%s3482 + $0x30] sm:$0xff] %v3475
    %3490 = vst [vmem:[%s3482 + $0x38] sm:$0xff] %v3476
    %3491 = vst [vmem:[%s3482 + $0x40] sm:$0xff] %v3477
    %3492 = vst [vmem:[%s3482 + $0x48] sm:$0xff] %v3478
    %3493 = vst [vmem:[%s3482 + $0x50] sm:$0xff] %v3479
    %3494 = vst [vmem:[%s3482 + $0x58] sm:$0xff] %v3480
    %3495 = vst [vmem:[%s3482 + $0x60] sm:$0xf] %v3481
    %v3496 = vld [vmem:[%s647 + $0x6] sm:$0xff]
    %v3497 = vld [vmem:[%s647 + $0xe] sm:$0xff]
    %v3498 = vld [vmem:[%s647 + $0x16] sm:$0xff]
    %v3499 = vld [vmem:[%s647 + $0x1e] sm:$0xff]
    %v3500 = vld [vmem:[%s647 + $0x26] sm:$0xff]
    %v3501 = vld [vmem:[%s647 + $0x2e] sm:$0xff]
    %v3502 = vld [vmem:[%s647 + $0x36] sm:$0xff]
    %v3503 = vld [vmem:[%s647 + $0x3e] sm:$0xff]
    %v3504 = vld [vmem:[%s647 + $0x46] sm:$0xff]
    %v3505 = vld [vmem:[%s647 + $0x4e] sm:$0xff]
    %v3506 = vld [vmem:[%s647 + $0x56] sm:$0xff]
    %v3507 = vld [vmem:[%s647 + $0x5e] sm:$0xff]
    %v3508 = vld [vmem:[%s647 + $0x66] sm:$0xf]
    %s3509 = scalar_lea.vmem %s5, 208
    %3510 = vst [vmem:[%s3509] sm:$0xff] %v3496
    %3511 = vst [vmem:[%s3509 + $0x8] sm:$0xff] %v3497
    %3512 = vst [vmem:[%s3509 + $0x10] sm:$0xff] %v3498
    %3513 = vst [vmem:[%s3509 + $0x18] sm:$0xff] %v3499
    %3514 = vst [vmem:[%s3509 + $0x20] sm:$0xff] %v3500
    %3515 = vst [vmem:[%s3509 + $0x28] sm:$0xff] %v3501
    %3516 = vst [vmem:[%s3509 + $0x30] sm:$0xff] %v3502
    %3517 = vst [vmem:[%s3509 + $0x38] sm:$0xff] %v3503
    %3518 = vst [vmem:[%s3509 + $0x40] sm:$0xff] %v3504
    %3519 = vst [vmem:[%s3509 + $0x48] sm:$0xff] %v3505
    %3520 = vst [vmem:[%s3509 + $0x50] sm:$0xff] %v3506
    %3521 = vst [vmem:[%s3509 + $0x58] sm:$0xff] %v3507
    %3522 = vst [vmem:[%s3509 + $0x60] sm:$0xf] %v3508
    %v3523 = vld [vmem:[#allocation9 + $0x6a] sm:$0xff]
    %v3524 = vld [vmem:[#allocation9 + $0x72] sm:$0xff]
    %v3525 = vld [vmem:[#allocation9 + $0x7a] sm:$0x3f]
    %3526 = vst [vmem:[%s6] sm:$0xff] %v3523
    %3527 = vst [vmem:[%s6 + $0x8] sm:$0xff] %v3524
    %3528 = vst [vmem:[%s6 + $0x10] sm:$0x3f] %v3525
    %v3529 = vld [vmem:[%s628 + $0x6a] sm:$0xff]
    %v3530 = vld [vmem:[%s628 + $0x72] sm:$0xff]
    %v3531 = vld [vmem:[%s628 + $0x7a] sm:$0x3f]
    %s3532 = scalar_lea.vmem %s6, 24
    %3533 = vst [vmem:[%s3532] sm:$0xff] %v3529
    %3534 = vst [vmem:[%s3532 + $0x8] sm:$0xff] %v3530
    %3535 = vst [vmem:[%s3532 + $0x10] sm:$0x3f] %v3531
    %v3536 = vld [vmem:[%s647 + $0x6a] sm:$0xff]
    %v3537 = vld [vmem:[%s647 + $0x72] sm:$0xff]
    %v3538 = vld [vmem:[%s647 + $0x7a] sm:$0x3f]
    %s3539 = scalar_lea.vmem %s6, 48
    %3540 = vst [vmem:[%s3539] sm:$0xff] %v3536
    %3541 = vst [vmem:[%s3539 + $0x8] sm:$0xff] %v3537
    %3542 = vst [vmem:[%s3539 + $0x10] sm:$0x3f] %v3538
    // Predicated region
    $region26: #{model_forward.1} parent=1 // pred_check
      _
    $region27: #{model_forward.1} parent=1 // pred_check_branch
      %3544 = sbr.rel (0) target = $region29
    $region28: #{model_forward.1} parent=1 // pred_region
      %s3546 = ssub.s32 6144, 6144
      %3547 = vsyncadd [#allocation4], %s3546
      %s3548 = sshll.u32 [#allocation9], 4
      %s3549 = int_to_ptr.vmem [resolvable:$true] %s3548
      %3554 = dma.vmem_to_hbm [thread:$0]  %s3549, 6144, %s3, [#allocation4], 128, 128, 8
    $region29: #{model_forward.1} parent=1 // pred_fallthru
      _
    // Predicated region
    $region30: #{model_forward.1} parent=1 // pred_check
      _
    $region31: #{model_forward.1} parent=1 // pred_check_branch
      %3556 = sbr.rel (0) target = $region33
    $region32: #{model_forward.1} parent=1 // pred_region
      _
    $region33: #{model_forward.1} parent=1 // pred_fallthru
      _
    // Predicated region
    $region34: #{model_forward.1} parent=1 // pred_check
      _
    $region35: #{model_forward.1} parent=1 // pred_check_branch
      %3558 = sbr.rel (0) target = $region37
    $region36: #{model_forward.1} parent=1 // pred_region
      _
    $region37: #{model_forward.1} parent=1 // pred_fallthru
      _
    // Predicated region
    $region38: #{model_forward.1} parent=1 // pred_check
      _
    $region39: #{model_forward.1} parent=1 // pred_check_branch
      %3560 = sbr.rel (0) target = $region41
    $region40: #{model_forward.1} parent=1 // pred_region
      _
    $region41: #{model_forward.1} parent=1 // pred_fallthru
      _
    // Predicated region
    $region42: #{model_forward.1} parent=1 // pred_check
      _
    $region43: #{model_forward.1} parent=1 // pred_check_branch
      %3562 = sbr.rel (0) target = $region45
    $region44: #{model_forward.1} parent=1 // pred_region
      %3563 = dma.done [#allocation4], 6144
    $region45: #{model_forward.1} parent=1 // pred_fallthru
      _
    // Predicated region
    $region46: #{model_forward.1} parent=1 // pred_check
      _
    $region47: #{model_forward.1} parent=1 // pred_check_branch
      %3565 = sbr.rel (0) target = $region49
    $region48: #{model_forward.1} parent=1 // pred_region
      _
    $region49: #{model_forward.1} parent=1 // pred_fallthru
      _
    // Predicated region
    $region50: #{model_forward.1} parent=1 // pred_check
      _
    $region51: #{model_forward.1} parent=1 // pred_check_branch
      %3567 = sbr.rel (0) target = $region53
    $region52: #{model_forward.1} parent=1 // pred_region
      _
    $region53: #{model_forward.1} parent=1 // pred_fallthru
      _
    // Predicated region
    $region54: #{model_forward.1} parent=1 // pred_check
      _
    $region55: #{model_forward.1} parent=1 // pred_check_branch
      %3569 = sbr.rel (0) target = $region57
    $region56: #{model_forward.1} parent=1 // pred_region
      _
    $region57: #{model_forward.1} parent=1 // pred_fallthru
      _
    %3570 = vsyncpa [#allocation3], 1
    %3571 = vsyncpa [#allocation4], 1
    %3572 = vsyncpa [#allocation5], 1
    %3573 = vsyncpa [#allocation8], 1

</llo_original>
